<compile_context>
chip_gen: v7x
topology: tpu7x:2x2x1
jax: 0.10.0
libtpu: 0.0.40
codegen_flags: <defaults>
</compile_context>

<pallas_src>
import jax
import jax.numpy as jnp
from jax import lax
from jax.experimental import pallas as pl
from jax.experimental.pallas import tpu as pltpu

BB = 8  # samples per grid step; batch is padded up to a multiple of BB.


# ---------------------------------------------------------------------------
# Fused LeNet-5 kernel
# ---------------------------------------------------------------------------
def _lenet5_kernel(x_ref, w1_ref, b1_ref, w3_ref, b3_ref, w5_ref, b5_ref,
                   wf1_ref, bf1_ref, wf2_ref, bf2_ref, o_ref, a1_ref):
    f32 = jnp.float32
    bb = o_ref.shape[0]

    # ---- conv1: 5x5, 1 -> 6.  Contraction over the input width (lanes); the
    # 5 input-row offsets are 5 accumulating matmuls.  Output lane = c*28+ox,
    # output row = y*bb + sample.
    a1 = jnp.zeros((28 * bb, 168), f32)
    for di in range(5):
        lhs = x_ref[pl.ds(di * bb, 28 * bb), :]                   # (28*bb, 32)
        a1 = a1 + jnp.dot(lhs, w1_ref[di], preferred_element_type=f32)
    a1_ref[...] = jnp.tanh(a1 + b1_ref[...])                      # (28*bb, 168)

    # ---- conv3: 5x5, 6 -> 16 with pool1 folded into the weights (stride 2,
    # 10 row offsets).  Valid outputs live at even row offsets r = 2*py.
    a3 = jnp.zeros((19 * bb, 160), f32)
    for o in range(10):
        lhs = a1_ref[pl.ds(o * bb, 19 * bb), :]                   # (19*bb, 168)
        a3 = a3 + jnp.dot(lhs, w3_ref[o], preferred_element_type=f32)

    # ---- conv5: 5x5, 16 -> 120 with pool2 folded; spatial collapses to 1x1,
    # so it is 10 accumulating (bb,160)x(160,128) matmuls over the valid rows.
    acc5 = jnp.zeros((bb, 128), f32)
    for yp in range(10):
        row0 = 2 * yp * bb
        a3s = jnp.tanh(a3[row0:row0 + bb, :] + b3_ref[...])       # (bb, 160)
        acc5 = acc5 + jnp.dot(a3s, w5_ref[yp], preferred_element_type=f32)

    # ---- fc1 (tanh) + fc2: plain (bb,128)x(128,128) matmuls.
    h5 = jnp.tanh(acc5 + b5_ref[...])
    f1 = jnp.tanh(jnp.dot(h5, wf1_ref[...], preferred_element_type=f32)
                  + bf1_ref[...])
    o_ref[...] = (jnp.dot(f1, wf2_ref[...], preferred_element_type=f32)
                  + bf2_ref[...])


# ---------------------------------------------------------------------------
# Wrapper
# ---------------------------------------------------------------------------
def _rep_spec(a):
    zeros = (0,) * a.ndim
    return pl.BlockSpec(a.shape, lambda i, _z=zeros: _z)


@jax.jit
def lenet5_forward(packed, x):
    """x: (B, 1, 32, 32) float32 NCHW -> logits (B, 10)."""
    B = x.shape[0]
    bb = BB
    Bp = ((B + bb - 1) // bb) * bb
    G = Bp // bb

    xs = x[:, 0].astype(jnp.float32)                              # (B, 32, 32)
    xs = jnp.pad(xs, ((0, Bp - B), (0, 0), (0, 0)))
    # Per grid block: row = y*bb + sample; blocks stacked along rows.
    xp = jnp.transpose(xs.reshape(G, bb, 32, 32), (0, 2, 1, 3)).reshape(
        G * 32 * bb, 32)

    names = ("w1", "b1", "w3", "b3", "w5", "b5", "wf1", "bf1", "wf2", "bf2")
    weights = [packed[k] for k in names]

    out = pl.pallas_call(
        _lenet5_kernel,
        out_shape=jax.ShapeDtypeStruct((Bp, 128), jnp.float32),
        grid=(G,),
        in_specs=[pl.BlockSpec((32 * bb, 32), lambda i: (i, 0))]
        + [_rep_spec(w) for w in weights],
        out_specs=pl.BlockSpec((bb, 128), lambda i: (i, 0)),
        scratch_shapes=[pltpu.VMEM((28 * bb, 168), jnp.float32)],
        compiler_params=pltpu.CompilerParams(
            dimension_semantics=("parallel",)),
    )(xp, *weights)
    return out[:B, :10]


# ---------------------------------------------------------------------------
# One-time parameter packing (PyTorch layout -> banded kernel matrices)
# ---------------------------------------------------------------------------
def pack_params(p):
    f32 = jnp.float32
    w1, w3, w5 = p["c1_w"], p["c3_w"], p["c5_w"]

    # conv1 banded matrices: W1[di][j, c*28+ox] = w1[c,0,di,j-ox] if 0<=j-ox<5
    j = jnp.arange(32)[:, None]
    ox = jnp.arange(28)[None, :]
    dj = j - ox
    v1 = ((dj >= 0) & (dj < 5)).astype(f32)                        # (32, 28)
    dj = jnp.clip(dj, 0, 4)
    W1 = []
    for di in range(5):
        m = w1[:, 0, di, :][:, dj] * v1[None]                      # (6, 32, 28)
        W1.append(jnp.transpose(m, (1, 0, 2)).reshape(32, 6 * 28))
    W1 = jnp.stack(W1).astype(f32)                                 # (5, 32, 168)

    # conv3 + folded pool1:
    # W3[o][ci*28+ox, co*10+px] = 0.25*w3[co,ci,o//2,(ox-2px)//2], 0<=ox-2px<10
    ox = jnp.arange(28)[:, None]
    px = jnp.arange(10)[None, :]
    d = ox - 2 * px
    v3 = ((d >= 0) & (d < 10)).astype(f32)                         # (28, 10)
    dj3 = jnp.clip(d, 0, 9) // 2
    W3 = []
    for o in range(10):
        m = w3[:, :, o // 2, :][:, :, dj3] * v3[None, None]        # (16,6,28,10)
        m = 0.25 * jnp.transpose(m, (1, 2, 0, 3)).reshape(6 * 28, 16 * 10)
        W3.append(m)
    W3 = jnp.stack(W3).astype(f32)                                 # (10,168,160)

    # conv5 + folded pool2: W5[yp][co*10+xp, ko] = 0.25*w5[ko,co,yp//2,xp//2]
    xp_half = jnp.arange(10) // 2
    W5 = []
    for yp in range(10):
        m = w5[:, :, yp // 2, :][:, :, xp_half]                    # (120,16,10)
        m = 0.25 * jnp.transpose(m, (1, 2, 0)).reshape(16 * 10, 120)
        W5.append(jnp.pad(m, ((0, 0), (0, 8))))                    # ko -> 128
    W5 = jnp.stack(W5).astype(f32)                                 # (10,160,128)

    wf1 = jnp.zeros((128, 128), f32).at[:120, :84].set(p["fc1_w"].T)
    wf2 = jnp.zeros((128, 128), f32).at[:84, :10].set(p["fc2_w"].T)

    return {
        "w1": W1,
        "b1": jnp.repeat(p["c1_b"], 28).reshape(1, 168).astype(f32),
        "w3": W3,
        "b3": jnp.repeat(p["c3_b"], 10).reshape(1, 160).astype(f32),
        "w5": W5,
        "b5": jnp.pad(p["c5_b"], (0, 8)).reshape(1, 128).astype(f32),
        "wf1": wf1,
        "bf1": jnp.pad(p["fc1_b"], (0, 128 - 84)).reshape(1, 128).astype(f32),
        "wf2": wf2,
        "bf2": jnp.pad(p["fc2_b"], (0, 128 - 10)).reshape(1, 128).astype(f32),
    }


# ---------------------------------------------------------------------------
# Parameter init (deterministic, PyTorch-default-style uniform bounds)
# ---------------------------------------------------------------------------
def init_params(key):
    ks = jax.random.split(key, 10)

    def conv_init(kw, kb, cout, cin, ksz):
        bound = 1.0 / (cin * ksz * ksz) ** 0.5
        w = jax.random.uniform(kw, (cout, cin, ksz, ksz), jnp.float32, -bound, bound)
        b = jax.random.uniform(kb, (cout,), jnp.float32, -bound, bound)
        return w, b

    def fc_init(kw, kb, out_f, in_f):
        bound = 1.0 / in_f ** 0.5
        w = jax.random.uniform(kw, (out_f, in_f), jnp.float32, -bound, bound)
        b = jax.random.uniform(kb, (out_f,), jnp.float32, -bound, bound)
        return w, b

    p = {}
    p["c1_w"], p["c1_b"] = conv_init(ks[0], ks[1], 6, 1, 5)
    p["c3_w"], p["c3_b"] = conv_init(ks[2], ks[3], 16, 6, 5)
    p["c5_w"], p["c5_b"] = conv_init(ks[4], ks[5], 120, 16, 5)
    p["fc1_w"], p["fc1_b"] = fc_init(ks[6], ks[7], 84, 120)
    p["fc2_w"], p["fc2_b"] = fc_init(ks[8], ks[9], 10, 84)
    return p


# ---------------------------------------------------------------------------
# Pure-JAX reference (correctness check only)
# ---------------------------------------------------------------------------
def lenet5_reference(params, x):
    hp = lax.Precision.HIGHEST

    def conv(v, w, b):
        y = lax.conv_general_dilated(v, w, (1, 1), "VALID",
                                     dimension_numbers=("NCHW", "OIHW", "NCHW"),
                                     precision=hp)
        return y + b[None, :, None, None]

    def pool(v):
        return 0.25 * (v[:, :, 0::2, 0::2] + v[:, :, 0::2, 1::2]
                       + v[:, :, 1::2, 0::2] + v[:, :, 1::2, 1::2])

    y = pool(jnp.tanh(conv(x, params["c1_w"], params["c1_b"])))
    y = pool(jnp.tanh(conv(y, params["c3_w"], params["c3_b"])))
    y = jnp.tanh(conv(y, params["c5_w"], params["c5_b"]))
    y = y.reshape(y.shape[0], -1)
    y = jnp.tanh(jnp.dot(y, params["fc1_w"].T, precision=hp) + params["fc1_b"])
    y = jnp.dot(y, params["fc2_w"].T, precision=hp) + params["fc2_b"]
    return y


if __name__ == "__main__":
    key = jax.random.PRNGKey(0)
    k_param, k_x = jax.random.split(key)
    params = init_params(k_param)
    packed = pack_params(params)

    # LeNet-5 needs 32x32 single-channel input; batch=16 -> grid of 2 blocks.
    x = jax.random.normal(k_x, (16, 1, 32, 32), dtype=jnp.float32)

    out = jax.block_until_ready(lenet5_forward(packed, x))
    assert out.shape == (16, 10) and out.dtype == jnp.float32

    ref = jax.block_until_ready(lenet5_reference(params, x))
    max_err = float(jnp.max(jnp.abs(out - ref)))
    assert max_err < 1e-2, f"mismatch vs reference: max abs err {max_err}"
    print("KERNEL_OK")
</pallas_src>

<mosaic_0001>
module attributes {stable_mosaic.version = 11 : i64} {
  func.func @_lenet5_kernel(%arg0: i32, %arg1: memref<256x32xf32, #tpu.memory_space<vmem>>, %arg2: memref<5x32x168xf32, #tpu.memory_space<vmem>>, %arg3: memref<1x168xf32, #tpu.memory_space<vmem>>, %arg4: memref<10x168x160xf32, #tpu.memory_space<vmem>>, %arg5: memref<1x160xf32, #tpu.memory_space<vmem>>, %arg6: memref<10x160x128xf32, #tpu.memory_space<vmem>>, %arg7: memref<1x128xf32, #tpu.memory_space<vmem>>, %arg8: memref<128x128xf32, #tpu.memory_space<vmem>>, %arg9: memref<1x128xf32, #tpu.memory_space<vmem>>, %arg10: memref<128x128xf32, #tpu.memory_space<vmem>>, %arg11: memref<1x128xf32, #tpu.memory_space<vmem>>, %arg12: memref<8x128xf32, #tpu.memory_space<vmem>>, %arg13: memref<224x168xf32, #tpu.memory_space<vmem>>) attributes {dimension_semantics = [#tpu.dimension_semantics<parallel>], iteration_bounds = array<i64: 2>, scalar_prefetch = 0 : i64, scratch_operands = 1 : i64, tpu.core_type = #tpu.core_type<tc>, window_params = [{transform_indices = @transform_0, window_bounds = array<i64: 256, 32>}, {pipeline_mode = #tpu.pipeline_mode<synchronous>, transform_indices = @transform_1, window_bounds = array<i64: 5, 32, 168>}, {pipeline_mode = #tpu.pipeline_mode<synchronous>, transform_indices = @transform_2, window_bounds = array<i64: 1, 168>}, {pipeline_mode = #tpu.pipeline_mode<synchronous>, transform_indices = @transform_3, window_bounds = array<i64: 10, 168, 160>}, {pipeline_mode = #tpu.pipeline_mode<synchronous>, transform_indices = @transform_4, window_bounds = array<i64: 1, 160>}, {pipeline_mode = #tpu.pipeline_mode<synchronous>, transform_indices = @transform_5, window_bounds = array<i64: 10, 160, 128>}, {pipeline_mode = #tpu.pipeline_mode<synchronous>, transform_indices = @transform_6, window_bounds = array<i64: 1, 128>}, {pipeline_mode = #tpu.pipeline_mode<synchronous>, transform_indices = @transform_7, window_bounds = array<i64: 128, 128>}, {pipeline_mode = #tpu.pipeline_mode<synchronous>, transform_indices = @transform_8, window_bounds = array<i64: 1, 128>}, {pipeline_mode = #tpu.pipeline_mode<synchronous>, transform_indices = @transform_9, window_bounds = array<i64: 128, 128>}, {pipeline_mode = #tpu.pipeline_mode<synchronous>, transform_indices = @transform_10, window_bounds = array<i64: 1, 128>}, {transform_indices = @transform_11, window_bounds = array<i64: 8, 128>}]} {
    %cst = arith.constant 0.000000e+00 : f32
    %0 = vector.broadcast %cst : f32 to vector<224x168xf32>
    %c0 = arith.constant 0 : index
    %c0_0 = arith.constant 0 : index
    %1 = vector.load %arg1[%c0, %c0_0] : memref<256x32xf32, #tpu.memory_space<vmem>>, vector<224x32xf32>
    %c0_1 = arith.constant 0 : index
    %c0_2 = arith.constant 0 : index
    %c0_3 = arith.constant 0 : index
    %2 = vector.load %arg2[%c0_1, %c0_2, %c0_3] : memref<5x32x168xf32, #tpu.memory_space<vmem>>, vector<1x32x168xf32>
    %3 = vector.shape_cast %2 : vector<1x32x168xf32> to vector<32x168xf32>
    %cst_4 = arith.constant dense<0.000000e+00> : vector<224x168xf32>
    %4 = tpu.matmul %1, %3, %cst_4 {dimension_numbers = #tpu.dot_dimension_numbers<[1], [0], [0], [1], [0, 0, 1, 1], [], []>} : vector<224x32xf32>, vector<32x168xf32>, vector<224x168xf32> -> vector<224x168xf32>
    %5 = arith.addf %0, %4 : vector<224x168xf32>
    %c8 = arith.constant 8 : index
    %c0_5 = arith.constant 0 : index
    %6 = vector.load %arg1[%c8, %c0_5] : memref<256x32xf32, #tpu.memory_space<vmem>>, vector<224x32xf32>
    %c1 = arith.constant 1 : index
    %c0_6 = arith.constant 0 : index
    %c0_7 = arith.constant 0 : index
    %7 = vector.load %arg2[%c1, %c0_6, %c0_7] : memref<5x32x168xf32, #tpu.memory_space<vmem>>, vector<1x32x168xf32>
    %8 = vector.shape_cast %7 : vector<1x32x168xf32> to vector<32x168xf32>
    %cst_8 = arith.constant dense<0.000000e+00> : vector<224x168xf32>
    %9 = tpu.matmul %6, %8, %cst_8 {dimension_numbers = #tpu.dot_dimension_numbers<[1], [0], [0], [1], [0, 0, 1, 1], [], []>} : vector<224x32xf32>, vector<32x168xf32>, vector<224x168xf32> -> vector<224x168xf32>
    %10 = arith.addf %5, %9 : vector<224x168xf32>
    %c16 = arith.constant 16 : index
    %c0_9 = arith.constant 0 : index
    %11 = vector.load %arg1[%c16, %c0_9] : memref<256x32xf32, #tpu.memory_space<vmem>>, vector<224x32xf32>
    %c2 = arith.constant 2 : index
    %c0_10 = arith.constant 0 : index
    %c0_11 = arith.constant 0 : index
    %12 = vector.load %arg2[%c2, %c0_10, %c0_11] : memref<5x32x168xf32, #tpu.memory_space<vmem>>, vector<1x32x168xf32>
    %13 = vector.shape_cast %12 : vector<1x32x168xf32> to vector<32x168xf32>
    %cst_12 = arith.constant dense<0.000000e+00> : vector<224x168xf32>
    %14 = tpu.matmul %11, %13, %cst_12 {dimension_numbers = #tpu.dot_dimension_numbers<[1], [0], [0], [1], [0, 0, 1, 1], [], []>} : vector<224x32xf32>, vector<32x168xf32>, vector<224x168xf32> -> vector<224x168xf32>
    %15 = arith.addf %10, %14 : vector<224x168xf32>
    %c24 = arith.constant 24 : index
    %c0_13 = arith.constant 0 : index
    %16 = vector.load %arg1[%c24, %c0_13] : memref<256x32xf32, #tpu.memory_space<vmem>>, vector<224x32xf32>
    %c3 = arith.constant 3 : index
    %c0_14 = arith.constant 0 : index
    %c0_15 = arith.constant 0 : index
    %17 = vector.load %arg2[%c3, %c0_14, %c0_15] : memref<5x32x168xf32, #tpu.memory_space<vmem>>, vector<1x32x168xf32>
    %18 = vector.shape_cast %17 : vector<1x32x168xf32> to vector<32x168xf32>
    %cst_16 = arith.constant dense<0.000000e+00> : vector<224x168xf32>
    %19 = tpu.matmul %16, %18, %cst_16 {dimension_numbers = #tpu.dot_dimension_numbers<[1], [0], [0], [1], [0, 0, 1, 1], [], []>} : vector<224x32xf32>, vector<32x168xf32>, vector<224x168xf32> -> vector<224x168xf32>
    %20 = arith.addf %15, %19 : vector<224x168xf32>
    %c32 = arith.constant 32 : index
    %c0_17 = arith.constant 0 : index
    %21 = vector.load %arg1[%c32, %c0_17] : memref<256x32xf32, #tpu.memory_space<vmem>>, vector<224x32xf32>
    %c4 = arith.constant 4 : index
    %c0_18 = arith.constant 0 : index
    %c0_19 = arith.constant 0 : index
    %22 = vector.load %arg2[%c4, %c0_18, %c0_19] : memref<5x32x168xf32, #tpu.memory_space<vmem>>, vector<1x32x168xf32>
    %23 = vector.shape_cast %22 : vector<1x32x168xf32> to vector<32x168xf32>
    %cst_20 = arith.constant dense<0.000000e+00> : vector<224x168xf32>
    %24 = tpu.matmul %21, %23, %cst_20 {dimension_numbers = #tpu.dot_dimension_numbers<[1], [0], [0], [1], [0, 0, 1, 1], [], []>} : vector<224x32xf32>, vector<32x168xf32>, vector<224x168xf32> -> vector<224x168xf32>
    %25 = arith.addf %20, %24 : vector<224x168xf32>
    %c0_21 = arith.constant 0 : index
    %c0_22 = arith.constant 0 : index
    %26 = vector.load %arg3[%c0_21, %c0_22] : memref<1x168xf32, #tpu.memory_space<vmem>>, vector<1x168xf32>
    %27 = vector.broadcast %26 : vector<1x168xf32> to vector<224x168xf32>
    %28 = arith.addf %25, %27 : vector<224x168xf32>
    %29 = math.tanh %28 : vector<224x168xf32>
    %c0_23 = arith.constant 0 : index
    %c0_24 = arith.constant 0 : index
    %30 = vector.load %arg13[%c0_23, %c0_24] : memref<224x168xf32, #tpu.memory_space<vmem>>, vector<224x168xf32>
    tpu.vector_store %arg13[%c0_23, %c0_24], %29 {strides = array<i32>} : memref<224x168xf32, #tpu.memory_space<vmem>>, vector<224x168xf32>,
    %cst_25 = arith.constant 0.000000e+00 : f32
    %31 = vector.broadcast %cst_25 : f32 to vector<152x160xf32>
    %c0_26 = arith.constant 0 : index
    %c0_27 = arith.constant 0 : index
    %32 = vector.load %arg13[%c0_26, %c0_27] : memref<224x168xf32, #tpu.memory_space<vmem>>, vector<152x168xf32>
    %c0_28 = arith.constant 0 : index
    %c0_29 = arith.constant 0 : index
    %c0_30 = arith.constant 0 : index
    %33 = vector.load %arg4[%c0_28, %c0_29, %c0_30] : memref<10x168x160xf32, #tpu.memory_space<vmem>>, vector<1x168x160xf32>
    %34 = vector.shape_cast %33 : vector<1x168x160xf32> to vector<168x160xf32>
    %cst_31 = arith.constant dense<0.000000e+00> : vector<152x160xf32>
    %35 = tpu.matmul %32, %34, %cst_31 {dimension_numbers = #tpu.dot_dimension_numbers<[1], [0], [0], [1], [0, 0, 1, 1], [], []>} : vector<152x168xf32>, vector<168x160xf32>, vector<152x160xf32> -> vector<152x160xf32>
    %36 = arith.addf %31, %35 : vector<152x160xf32>
    %c8_32 = arith.constant 8 : index
    %c0_33 = arith.constant 0 : index
    %37 = vector.load %arg13[%c8_32, %c0_33] : memref<224x168xf32, #tpu.memory_space<vmem>>, vector<152x168xf32>
    %c1_34 = arith.constant 1 : index
    %c0_35 = arith.constant 0 : index
    %c0_36 = arith.constant 0 : index
    %38 = vector.load %arg4[%c1_34, %c0_35, %c0_36] : memref<10x168x160xf32, #tpu.memory_space<vmem>>, vector<1x168x160xf32>
    %39 = vector.shape_cast %38 : vector<1x168x160xf32> to vector<168x160xf32>
    %cst_37 = arith.constant dense<0.000000e+00> : vector<152x160xf32>
    %40 = tpu.matmul %37, %39, %cst_37 {dimension_numbers = #tpu.dot_dimension_numbers<[1], [0], [0], [1], [0, 0, 1, 1], [], []>} : vector<152x168xf32>, vector<168x160xf32>, vector<152x160xf32> -> vector<152x160xf32>
    %41 = arith.addf %36, %40 : vector<152x160xf32>
    %c16_38 = arith.constant 16 : index
    %c0_39 = arith.constant 0 : index
    %42 = vector.load %arg13[%c16_38, %c0_39] : memref<224x168xf32, #tpu.memory_space<vmem>>, vector<152x168xf32>
    %c2_40 = arith.constant 2 : index
    %c0_41 = arith.constant 0 : index
    %c0_42 = arith.constant 0 : index
    %43 = vector.load %arg4[%c2_40, %c0_41, %c0_42] : memref<10x168x160xf32, #tpu.memory_space<vmem>>, vector<1x168x160xf32>
    %44 = vector.shape_cast %43 : vector<1x168x160xf32> to vector<168x160xf32>
    %cst_43 = arith.constant dense<0.000000e+00> : vector<152x160xf32>
    %45 = tpu.matmul %42, %44, %cst_43 {dimension_numbers = #tpu.dot_dimension_numbers<[1], [0], [0], [1], [0, 0, 1, 1], [], []>} : vector<152x168xf32>, vector<168x160xf32>, vector<152x160xf32> -> vector<152x160xf32>
    %46 = arith.addf %41, %45 : vector<152x160xf32>
    %c24_44 = arith.constant 24 : index
    %c0_45 = arith.constant 0 : index
    %47 = vector.load %arg13[%c24_44, %c0_45] : memref<224x168xf32, #tpu.memory_space<vmem>>, vector<152x168xf32>
    %c3_46 = arith.constant 3 : index
    %c0_47 = arith.constant 0 : index
    %c0_48 = arith.constant 0 : index
    %48 = vector.load %arg4[%c3_46, %c0_47, %c0_48] : memref<10x168x160xf32, #tpu.memory_space<vmem>>, vector<1x168x160xf32>
    %49 = vector.shape_cast %48 : vector<1x168x160xf32> to vector<168x160xf32>
    %cst_49 = arith.constant dense<0.000000e+00> : vector<152x160xf32>
    %50 = tpu.matmul %47, %49, %cst_49 {dimension_numbers = #tpu.dot_dimension_numbers<[1], [0], [0], [1], [0, 0, 1, 1], [], []>} : vector<152x168xf32>, vector<168x160xf32>, vector<152x160xf32> -> vector<152x160xf32>
    %51 = arith.addf %46, %50 : vector<152x160xf32>
    %c32_50 = arith.constant 32 : index
    %c0_51 = arith.constant 0 : index
    %52 = vector.load %arg13[%c32_50, %c0_51] : memref<224x168xf32, #tpu.memory_space<vmem>>, vector<152x168xf32>
    %c4_52 = arith.constant 4 : index
    %c0_53 = arith.constant 0 : index
    %c0_54 = arith.constant 0 : index
    %53 = vector.load %arg4[%c4_52, %c0_53, %c0_54] : memref<10x168x160xf32, #tpu.memory_space<vmem>>, vector<1x168x160xf32>
    %54 = vector.shape_cast %53 : vector<1x168x160xf32> to vector<168x160xf32>
    %cst_55 = arith.constant dense<0.000000e+00> : vector<152x160xf32>
    %55 = tpu.matmul %52, %54, %cst_55 {dimension_numbers = #tpu.dot_dimension_numbers<[1], [0], [0], [1], [0, 0, 1, 1], [], []>} : vector<152x168xf32>, vector<168x160xf32>, vector<152x160xf32> -> vector<152x160xf32>
    %56 = arith.addf %51, %55 : vector<152x160xf32>
    %c40 = arith.constant 40 : index
    %c0_56 = arith.constant 0 : index
    %57 = vector.load %arg13[%c40, %c0_56] : memref<224x168xf32, #tpu.memory_space<vmem>>, vector<152x168xf32>
    %c5 = arith.constant 5 : index
    %c0_57 = arith.constant 0 : index
    %c0_58 = arith.constant 0 : index
    %58 = vector.load %arg4[%c5, %c0_57, %c0_58] : memref<10x168x160xf32, #tpu.memory_space<vmem>>, vector<1x168x160xf32>
    %59 = vector.shape_cast %58 : vector<1x168x160xf32> to vector<168x160xf32>
    %cst_59 = arith.constant dense<0.000000e+00> : vector<152x160xf32>
    %60 = tpu.matmul %57, %59, %cst_59 {dimension_numbers = #tpu.dot_dimension_numbers<[1], [0], [0], [1], [0, 0, 1, 1], [], []>} : vector<152x168xf32>, vector<168x160xf32>, vector<152x160xf32> -> vector<152x160xf32>
    %61 = arith.addf %56, %60 : vector<152x160xf32>
    %c48 = arith.constant 48 : index
    %c0_60 = arith.constant 0 : index
    %62 = vector.load %arg13[%c48, %c0_60] : memref<224x168xf32, #tpu.memory_space<vmem>>, vector<152x168xf32>
    %c6 = arith.constant 6 : index
    %c0_61 = arith.constant 0 : index
    %c0_62 = arith.constant 0 : index
    %63 = vector.load %arg4[%c6, %c0_61, %c0_62] : memref<10x168x160xf32, #tpu.memory_space<vmem>>, vector<1x168x160xf32>
    %64 = vector.shape_cast %63 : vector<1x168x160xf32> to vector<168x160xf32>
    %cst_63 = arith.constant dense<0.000000e+00> : vector<152x160xf32>
    %65 = tpu.matmul %62, %64, %cst_63 {dimension_numbers = #tpu.dot_dimension_numbers<[1], [0], [0], [1], [0, 0, 1, 1], [], []>} : vector<152x168xf32>, vector<168x160xf32>, vector<152x160xf32> -> vector<152x160xf32>
    %66 = arith.addf %61, %65 : vector<152x160xf32>
    %c56 = arith.constant 56 : index
    %c0_64 = arith.constant 0 : index
    %67 = vector.load %arg13[%c56, %c0_64] : memref<224x168xf32, #tpu.memory_space<vmem>>, vector<152x168xf32>
    %c7 = arith.constant 7 : index
    %c0_65 = arith.constant 0 : index
    %c0_66 = arith.constant 0 : index
    %68 = vector.load %arg4[%c7, %c0_65, %c0_66] : memref<10x168x160xf32, #tpu.memory_space<vmem>>, vector<1x168x160xf32>
    %69 = vector.shape_cast %68 : vector<1x168x160xf32> to vector<168x160xf32>
    %cst_67 = arith.constant dense<0.000000e+00> : vector<152x160xf32>
    %70 = tpu.matmul %67, %69, %cst_67 {dimension_numbers = #tpu.dot_dimension_numbers<[1], [0], [0], [1], [0, 0, 1, 1], [], []>} : vector<152x168xf32>, vector<168x160xf32>, vector<152x160xf32> -> vector<152x160xf32>
    %71 = arith.addf %66, %70 : vector<152x160xf32>
    %c64 = arith.constant 64 : index
    %c0_68 = arith.constant 0 : index
    %72 = vector.load %arg13[%c64, %c0_68] : memref<224x168xf32, #tpu.memory_space<vmem>>, vector<152x168xf32>
    %c8_69 = arith.constant 8 : index
    %c0_70 = arith.constant 0 : index
    %c0_71 = arith.constant 0 : index
    %73 = vector.load %arg4[%c8_69, %c0_70, %c0_71] : memref<10x168x160xf32, #tpu.memory_space<vmem>>, vector<1x168x160xf32>
    %74 = vector.shape_cast %73 : vector<1x168x160xf32> to vector<168x160xf32>
    %cst_72 = arith.constant dense<0.000000e+00> : vector<152x160xf32>
    %75 = tpu.matmul %72, %74, %cst_72 {dimension_numbers = #tpu.dot_dimension_numbers<[1], [0], [0], [1], [0, 0, 1, 1], [], []>} : vector<152x168xf32>, vector<168x160xf32>, vector<152x160xf32> -> vector<152x160xf32>
    %76 = arith.addf %71, %75 : vector<152x160xf32>
    %c72 = arith.constant 72 : index
    %c0_73 = arith.constant 0 : index
    %77 = vector.load %arg13[%c72, %c0_73] : memref<224x168xf32, #tpu.memory_space<vmem>>, vector<152x168xf32>
    %c9 = arith.constant 9 : index
    %c0_74 = arith.constant 0 : index
    %c0_75 = arith.constant 0 : index
    %78 = vector.load %arg4[%c9, %c0_74, %c0_75] : memref<10x168x160xf32, #tpu.memory_space<vmem>>, vector<1x168x160xf32>
    %79 = vector.shape_cast %78 : vector<1x168x160xf32> to vector<168x160xf32>
    %cst_76 = arith.constant dense<0.000000e+00> : vector<152x160xf32>
    %80 = tpu.matmul %77, %79, %cst_76 {dimension_numbers = #tpu.dot_dimension_numbers<[1], [0], [0], [1], [0, 0, 1, 1], [], []>} : vector<152x168xf32>, vector<168x160xf32>, vector<152x160xf32> -> vector<152x160xf32>
    %81 = arith.addf %76, %80 : vector<152x160xf32>
    %cst_77 = arith.constant 0.000000e+00 : f32
    %82 = vector.broadcast %cst_77 : f32 to vector<8x128xf32>
    %83 = vector.extract_strided_slice %81 {offsets = [0, 0], sizes = [8, 160], strides = [1, 1]} : vector<152x160xf32> to vector<8x160xf32>
    %c0_78 = arith.constant 0 : index
    %c0_79 = arith.constant 0 : index
    %84 = vector.load %arg5[%c0_78, %c0_79] : memref<1x160xf32, #tpu.memory_space<vmem>>, vector<1x160xf32>
    %85 = vector.broadcast %84 : vector<1x160xf32> to vector<8x160xf32>
    %86 = arith.addf %83, %85 : vector<8x160xf32>
    %87 = math.tanh %86 : vector<8x160xf32>
    %c0_80 = arith.constant 0 : index
    %c0_81 = arith.constant 0 : index
    %c0_82 = arith.constant 0 : index
    %88 = vector.load %arg6[%c0_80, %c0_81, %c0_82] : memref<10x160x128xf32, #tpu.memory_space<vmem>>, vector<1x160x128xf32>
    %89 = vector.shape_cast %88 : vector<1x160x128xf32> to vector<160x128xf32>
    %cst_83 = arith.constant dense<0.000000e+00> : vector<8x128xf32>
    %90 = tpu.matmul %87, %89, %cst_83 {dimension_numbers = #tpu.dot_dimension_numbers<[1], [0], [0], [1], [0, 0, 1, 1], [], []>} : vector<8x160xf32>, vector<160x128xf32>, vector<8x128xf32> -> vector<8x128xf32>
    %91 = arith.addf %82, %90 : vector<8x128xf32>
    %92 = vector.extract_strided_slice %81 {offsets = [16, 0], sizes = [8, 160], strides = [1, 1]} : vector<152x160xf32> to vector<8x160xf32>
    %c0_84 = arith.constant 0 : index
    %c0_85 = arith.constant 0 : index
    %93 = vector.load %arg5[%c0_84, %c0_85] : memref<1x160xf32, #tpu.memory_space<vmem>>, vector<1x160xf32>
    %94 = vector.broadcast %93 : vector<1x160xf32> to vector<8x160xf32>
    %95 = arith.addf %92, %94 : vector<8x160xf32>
    %96 = math.tanh %95 : vector<8x160xf32>
    %c1_86 = arith.constant 1 : index
    %c0_87 = arith.constant 0 : index
    %c0_88 = arith.constant 0 : index
    %97 = vector.load %arg6[%c1_86, %c0_87, %c0_88] : memref<10x160x128xf32, #tpu.memory_space<vmem>>, vector<1x160x128xf32>
    %98 = vector.shape_cast %97 : vector<1x160x128xf32> to vector<160x128xf32>
    %cst_89 = arith.constant dense<0.000000e+00> : vector<8x128xf32>
    %99 = tpu.matmul %96, %98, %cst_89 {dimension_numbers = #tpu.dot_dimension_numbers<[1], [0], [0], [1], [0, 0, 1, 1], [], []>} : vector<8x160xf32>, vector<160x128xf32>, vector<8x128xf32> -> vector<8x128xf32>
    %100 = arith.addf %91, %99 : vector<8x128xf32>
    %101 = vector.extract_strided_slice %81 {offsets = [32, 0], sizes = [8, 160], strides = [1, 1]} : vector<152x160xf32> to vector<8x160xf32>
    %c0_90 = arith.constant 0 : index
    %c0_91 = arith.constant 0 : index
    %102 = vector.load %arg5[%c0_90, %c0_91] : memref<1x160xf32, #tpu.memory_space<vmem>>, vector<1x160xf32>
    %103 = vector.broadcast %102 : vector<1x160xf32> to vector<8x160xf32>
    %104 = arith.addf %101, %103 : vector<8x160xf32>
    %105 = math.tanh %104 : vector<8x160xf32>
    %c2_92 = arith.constant 2 : index
    %c0_93 = arith.constant 0 : index
    %c0_94 = arith.constant 0 : index
    %106 = vector.load %arg6[%c2_92, %c0_93, %c0_94] : memref<10x160x128xf32, #tpu.memory_space<vmem>>, vector<1x160x128xf32>
    %107 = vector.shape_cast %106 : vector<1x160x128xf32> to vector<160x128xf32>
    %cst_95 = arith.constant dense<0.000000e+00> : vector<8x128xf32>
    %108 = tpu.matmul %105, %107, %cst_95 {dimension_numbers = #tpu.dot_dimension_numbers<[1], [0], [0], [1], [0, 0, 1, 1], [], []>} : vector<8x160xf32>, vector<160x128xf32>, vector<8x128xf32> -> vector<8x128xf32>
    %109 = arith.addf %100, %108 : vector<8x128xf32>
    %110 = vector.extract_strided_slice %81 {offsets = [48, 0], sizes = [8, 160], strides = [1, 1]} : vector<152x160xf32> to vector<8x160xf32>
    %c0_96 = arith.constant 0 : index
    %c0_97 = arith.constant 0 : index
    %111 = vector.load %arg5[%c0_96, %c0_97] : memref<1x160xf32, #tpu.memory_space<vmem>>, vector<1x160xf32>
    %112 = vector.broadcast %111 : vector<1x160xf32> to vector<8x160xf32>
    %113 = arith.addf %110, %112 : vector<8x160xf32>
    %114 = math.tanh %113 : vector<8x160xf32>
    %c3_98 = arith.constant 3 : index
    %c0_99 = arith.constant 0 : index
    %c0_100 = arith.constant 0 : index
    %115 = vector.load %arg6[%c3_98, %c0_99, %c0_100] : memref<10x160x128xf32, #tpu.memory_space<vmem>>, vector<1x160x128xf32>
    %116 = vector.shape_cast %115 : vector<1x160x128xf32> to vector<160x128xf32>
    %cst_101 = arith.constant dense<0.000000e+00> : vector<8x128xf32>
    %117 = tpu.matmul %114, %116, %cst_101 {dimension_numbers = #tpu.dot_dimension_numbers<[1], [0], [0], [1], [0, 0, 1, 1], [], []>} : vector<8x160xf32>, vector<160x128xf32>, vector<8x128xf32> -> vector<8x128xf32>
    %118 = arith.addf %109, %117 : vector<8x128xf32>
    %119 = vector.extract_strided_slice %81 {offsets = [64, 0], sizes = [8, 160], strides = [1, 1]} : vector<152x160xf32> to vector<8x160xf32>
    %c0_102 = arith.constant 0 : index
    %c0_103 = arith.constant 0 : index
    %120 = vector.load %arg5[%c0_102, %c0_103] : memref<1x160xf32, #tpu.memory_space<vmem>>, vector<1x160xf32>
    %121 = vector.broadcast %120 : vector<1x160xf32> to vector<8x160xf32>
    %122 = arith.addf %119, %121 : vector<8x160xf32>
    %123 = math.tanh %122 : vector<8x160xf32>
    %c4_104 = arith.constant 4 : index
    %c0_105 = arith.constant 0 : index
    %c0_106 = arith.constant 0 : index
    %124 = vector.load %arg6[%c4_104, %c0_105, %c0_106] : memref<10x160x128xf32, #tpu.memory_space<vmem>>, vector<1x160x128xf32>
    %125 = vector.shape_cast %124 : vector<1x160x128xf32> to vector<160x128xf32>
    %cst_107 = arith.constant dense<0.000000e+00> : vector<8x128xf32>
    %126 = tpu.matmul %123, %125, %cst_107 {dimension_numbers = #tpu.dot_dimension_numbers<[1], [0], [0], [1], [0, 0, 1, 1], [], []>} : vector<8x160xf32>, vector<160x128xf32>, vector<8x128xf32> -> vector<8x128xf32>
    %127 = arith.addf %118, %126 : vector<8x128xf32>
    %128 = vector.extract_strided_slice %81 {offsets = [80, 0], sizes = [8, 160], strides = [1, 1]} : vector<152x160xf32> to vector<8x160xf32>
    %c0_108 = arith.constant 0 : index
    %c0_109 = arith.constant 0 : index
    %129 = vector.load %arg5[%c0_108, %c0_109] : memref<1x160xf32, #tpu.memory_space<vmem>>, vector<1x160xf32>
    %130 = vector.broadcast %129 : vector<1x160xf32> to vector<8x160xf32>
    %131 = arith.addf %128, %130 : vector<8x160xf32>
    %132 = math.tanh %131 : vector<8x160xf32>
    %c5_110 = arith.constant 5 : index
    %c0_111 = arith.constant 0 : index
    %c0_112 = arith.constant 0 : index
    %133 = vector.load %arg6[%c5_110, %c0_111, %c0_112] : memref<10x160x128xf32, #tpu.memory_space<vmem>>, vector<1x160x128xf32>
    %134 = vector.shape_cast %133 : vector<1x160x128xf32> to vector<160x128xf32>
    %cst_113 = arith.constant dense<0.000000e+00> : vector<8x128xf32>
    %135 = tpu.matmul %132, %134, %cst_113 {dimension_numbers = #tpu.dot_dimension_numbers<[1], [0], [0], [1], [0, 0, 1, 1], [], []>} : vector<8x160xf32>, vector<160x128xf32>, vector<8x128xf32> -> vector<8x128xf32>
    %136 = arith.addf %127, %135 : vector<8x128xf32>
    %137 = vector.extract_strided_slice %81 {offsets = [96, 0], sizes = [8, 160], strides = [1, 1]} : vector<152x160xf32> to vector<8x160xf32>
    %c0_114 = arith.constant 0 : index
    %c0_115 = arith.constant 0 : index
    %138 = vector.load %arg5[%c0_114, %c0_115] : memref<1x160xf32, #tpu.memory_space<vmem>>, vector<1x160xf32>
    %139 = vector.broadcast %138 : vector<1x160xf32> to vector<8x160xf32>
    %140 = arith.addf %137, %139 : vector<8x160xf32>
    %141 = math.tanh %140 : vector<8x160xf32>
    %c6_116 = arith.constant 6 : index
    %c0_117 = arith.constant 0 : index
    %c0_118 = arith.constant 0 : index
    %142 = vector.load %arg6[%c6_116, %c0_117, %c0_118] : memref<10x160x128xf32, #tpu.memory_space<vmem>>, vector<1x160x128xf32>
    %143 = vector.shape_cast %142 : vector<1x160x128xf32> to vector<160x128xf32>
    %cst_119 = arith.constant dense<0.000000e+00> : vector<8x128xf32>
    %144 = tpu.matmul %141, %143, %cst_119 {dimension_numbers = #tpu.dot_dimension_numbers<[1], [0], [0], [1], [0, 0, 1, 1], [], []>} : vector<8x160xf32>, vector<160x128xf32>, vector<8x128xf32> -> vector<8x128xf32>
    %145 = arith.addf %136, %144 : vector<8x128xf32>
    %146 = vector.extract_strided_slice %81 {offsets = [112, 0], sizes = [8, 160], strides = [1, 1]} : vector<152x160xf32> to vector<8x160xf32>
    %c0_120 = arith.constant 0 : index
    %c0_121 = arith.constant 0 : index
    %147 = vector.load %arg5[%c0_120, %c0_121] : memref<1x160xf32, #tpu.memory_space<vmem>>, vector<1x160xf32>
    %148 = vector.broadcast %147 : vector<1x160xf32> to vector<8x160xf32>
    %149 = arith.addf %146, %148 : vector<8x160xf32>
    %150 = math.tanh %149 : vector<8x160xf32>
    %c7_122 = arith.constant 7 : index
    %c0_123 = arith.constant 0 : index
    %c0_124 = arith.constant 0 : index
    %151 = vector.load %arg6[%c7_122, %c0_123, %c0_124] : memref<10x160x128xf32, #tpu.memory_space<vmem>>, vector<1x160x128xf32>
    %152 = vector.shape_cast %151 : vector<1x160x128xf32> to vector<160x128xf32>
    %cst_125 = arith.constant dense<0.000000e+00> : vector<8x128xf32>
    %153 = tpu.matmul %150, %152, %cst_125 {dimension_numbers = #tpu.dot_dimension_numbers<[1], [0], [0], [1], [0, 0, 1, 1], [], []>} : vector<8x160xf32>, vector<160x128xf32>, vector<8x128xf32> -> vector<8x128xf32>
    %154 = arith.addf %145, %153 : vector<8x128xf32>
    %155 = vector.extract_strided_slice %81 {offsets = [128, 0], sizes = [8, 160], strides = [1, 1]} : vector<152x160xf32> to vector<8x160xf32>
    %c0_126 = arith.constant 0 : index
    %c0_127 = arith.constant 0 : index
    %156 = vector.load %arg5[%c0_126, %c0_127] : memref<1x160xf32, #tpu.memory_space<vmem>>, vector<1x160xf32>
    %157 = vector.broadcast %156 : vector<1x160xf32> to vector<8x160xf32>
    %158 = arith.addf %155, %157 : vector<8x160xf32>
    %159 = math.tanh %158 : vector<8x160xf32>
    %c8_128 = arith.constant 8 : index
    %c0_129 = arith.constant 0 : index
    %c0_130 = arith.constant 0 : index
    %160 = vector.load %arg6[%c8_128, %c0_129, %c0_130] : memref<10x160x128xf32, #tpu.memory_space<vmem>>, vector<1x160x128xf32>
    %161 = vector.shape_cast %160 : vector<1x160x128xf32> to vector<160x128xf32>
    %cst_131 = arith.constant dense<0.000000e+00> : vector<8x128xf32>
    %162 = tpu.matmul %159, %161, %cst_131 {dimension_numbers = #tpu.dot_dimension_numbers<[1], [0], [0], [1], [0, 0, 1, 1], [], []>} : vector<8x160xf32>, vector<160x128xf32>, vector<8x128xf32> -> vector<8x128xf32>
    %163 = arith.addf %154, %162 : vector<8x128xf32>
    %164 = vector.extract_strided_slice %81 {offsets = [144, 0], sizes = [8, 160], strides = [1, 1]} : vector<152x160xf32> to vector<8x160xf32>
    %c0_132 = arith.constant 0 : index
    %c0_133 = arith.constant 0 : index
    %165 = vector.load %arg5[%c0_132, %c0_133] : memref<1x160xf32, #tpu.memory_space<vmem>>, vector<1x160xf32>
    %166 = vector.broadcast %165 : vector<1x160xf32> to vector<8x160xf32>
    %167 = arith.addf %164, %166 : vector<8x160xf32>
    %168 = math.tanh %167 : vector<8x160xf32>
    %c9_134 = arith.constant 9 : index
    %c0_135 = arith.constant 0 : index
    %c0_136 = arith.constant 0 : index
    %169 = vector.load %arg6[%c9_134, %c0_135, %c0_136] : memref<10x160x128xf32, #tpu.memory_space<vmem>>, vector<1x160x128xf32>
    %170 = vector.shape_cast %169 : vector<1x160x128xf32> to vector<160x128xf32>
    %cst_137 = arith.constant dense<0.000000e+00> : vector<8x128xf32>
    %171 = tpu.matmul %168, %170, %cst_137 {dimension_numbers = #tpu.dot_dimension_numbers<[1], [0], [0], [1], [0, 0, 1, 1], [], []>} : vector<8x160xf32>, vector<160x128xf32>, vector<8x128xf32> -> vector<8x128xf32>
    %172 = arith.addf %163, %171 : vector<8x128xf32>
    %c0_138 = arith.constant 0 : index
    %c0_139 = arith.constant 0 : index
    %173 = vector.load %arg7[%c0_138, %c0_139] : memref<1x128xf32, #tpu.memory_space<vmem>>, vector<1x128xf32>
    %174 = vector.broadcast %173 : vector<1x128xf32> to vector<8x128xf32>
    %175 = arith.addf %172, %174 : vector<8x128xf32>
    %176 = math.tanh %175 : vector<8x128xf32>
    %c0_140 = arith.constant 0 : index
    %c0_141 = arith.constant 0 : index
    %177 = vector.load %arg8[%c0_140, %c0_141] : memref<128x128xf32, #tpu.memory_space<vmem>>, vector<128x128xf32>
    %cst_142 = arith.constant dense<0.000000e+00> : vector<8x128xf32>
    %178 = tpu.matmul %176, %177, %cst_142 {dimension_numbers = #tpu.dot_dimension_numbers<[1], [0], [0], [1], [0, 0, 1, 1], [], []>} : vector<8x128xf32>, vector<128x128xf32>, vector<8x128xf32> -> vector<8x128xf32>
    %c0_143 = arith.constant 0 : index
    %c0_144 = arith.constant 0 : index
    %179 = vector.load %arg9[%c0_143, %c0_144] : memref<1x128xf32, #tpu.memory_space<vmem>>, vector<1x128xf32>
    %180 = vector.broadcast %179 : vector<1x128xf32> to vector<8x128xf32>
    %181 = arith.addf %178, %180 : vector<8x128xf32>
    %182 = math.tanh %181 : vector<8x128xf32>
    %c0_145 = arith.constant 0 : index
    %c0_146 = arith.constant 0 : index
    %183 = vector.load %arg10[%c0_145, %c0_146] : memref<128x128xf32, #tpu.memory_space<vmem>>, vector<128x128xf32>
    %cst_147 = arith.constant dense<0.000000e+00> : vector<8x128xf32>
    %184 = tpu.matmul %182, %183, %cst_147 {dimension_numbers = #tpu.dot_dimension_numbers<[1], [0], [0], [1], [0, 0, 1, 1], [], []>} : vector<8x128xf32>, vector<128x128xf32>, vector<8x128xf32> -> vector<8x128xf32>
    %c0_148 = arith.constant 0 : index
    %c0_149 = arith.constant 0 : index
    %185 = vector.load %arg11[%c0_148, %c0_149] : memref<1x128xf32, #tpu.memory_space<vmem>>, vector<1x128xf32>
    %186 = vector.broadcast %185 : vector<1x128xf32> to vector<8x128xf32>
    %187 = arith.addf %184, %186 : vector<8x128xf32>
    %c0_150 = arith.constant 0 : index
    %c0_151 = arith.constant 0 : index
    %188 = vector.load %arg12[%c0_150, %c0_151] : memref<8x128xf32, #tpu.memory_space<vmem>>, vector<8x128xf32>
    tpu.vector_store %arg12[%c0_150, %c0_151], %187 {strides = array<i32>} : memref<8x128xf32, #tpu.memory_space<vmem>>, vector<8x128xf32>,
    return
  }
  func.func @transform_0(%arg0: i32) -> (i32, i32) {
    %c0_i32 = arith.constant 0 : i32
    %c0_i32_0 = arith.constant 0 : i32
    return %arg0, %c0_i32 : i32, i32
  }
  func.func @transform_1(%arg0: i32) -> (i32, i32, i32) {
    %c0_i32 = arith.constant 0 : i32
    %c0_i32_0 = arith.constant 0 : i32
    %c0_i32_1 = arith.constant 0 : i32
    %c0_i32_2 = arith.constant 0 : i32
    return %c0_i32, %c0_i32_0, %c0_i32_1 : i32, i32, i32
  }
  func.func @transform_2(%arg0: i32) -> (i32, i32) {
    %c0_i32 = arith.constant 0 : i32
    %c0_i32_0 = arith.constant 0 : i32
    %c0_i32_1 = arith.constant 0 : i32
    return %c0_i32, %c0_i32_0 : i32, i32
  }
  func.func @transform_3(%arg0: i32) -> (i32, i32, i32) {
    %c0_i32 = arith.constant 0 : i32
    %c0_i32_0 = arith.constant 0 : i32
    %c0_i32_1 = arith.constant 0 : i32
    %c0_i32_2 = arith.constant 0 : i32
    return %c0_i32, %c0_i32_0, %c0_i32_1 : i32, i32, i32
  }
  func.func @transform_4(%arg0: i32) -> (i32, i32) {
    %c0_i32 = arith.constant 0 : i32
    %c0_i32_0 = arith.constant 0 : i32
    %c0_i32_1 = arith.constant 0 : i32
    return %c0_i32, %c0_i32_0 : i32, i32
  }
  func.func @transform_5(%arg0: i32) -> (i32, i32, i32) {
    %c0_i32 = arith.constant 0 : i32
    %c0_i32_0 = arith.constant 0 : i32
    %c0_i32_1 = arith.constant 0 : i32
    %c0_i32_2 = arith.constant 0 : i32
    return %c0_i32, %c0_i32_0, %c0_i32_1 : i32, i32, i32
  }
  func.func @transform_6(%arg0: i32) -> (i32, i32) {
    %c0_i32 = arith.constant 0 : i32
    %c0_i32_0 = arith.constant 0 : i32
    %c0_i32_1 = arith.constant 0 : i32
    return %c0_i32, %c0_i32_0 : i32, i32
  }
  func.func @transform_7(%arg0: i32) -> (i32, i32) {
    %c0_i32 = arith.constant 0 : i32
    %c0_i32_0 = arith.constant 0 : i32
    %c0_i32_1 = arith.constant 0 : i32
    return %c0_i32, %c0_i32_0 : i32, i32
  }
  func.func @transform_8(%arg0: i32) -> (i32, i32) {
    %c0_i32 = arith.constant 0 : i32
    %c0_i32_0 = arith.constant 0 : i32
    %c0_i32_1 = arith.constant 0 : i32
    return %c0_i32, %c0_i32_0 : i32, i32
  }
  func.func @transform_9(%arg0: i32) -> (i32, i32) {
    %c0_i32 = arith.constant 0 : i32
    %c0_i32_0 = arith.constant 0 : i32
    %c0_i32_1 = arith.constant 0 : i32
    return %c0_i32, %c0_i32_0 : i32, i32
  }
  func.func @transform_10(%arg0: i32) -> (i32, i32) {
    %c0_i32 = arith.constant 0 : i32
    %c0_i32_0 = arith.constant 0 : i32
    %c0_i32_1 = arith.constant 0 : i32
    return %c0_i32, %c0_i32_0 : i32, i32
  }
  func.func @transform_11(%arg0: i32) -> (i32, i32) {
    %c0_i32 = arith.constant 0 : i32
    %c0_i32_0 = arith.constant 0 : i32
    return %arg0, %c0_i32 : i32, i32
  }
}

</mosaic_0001>

<llo_original>
// kernel: lenet5_forward.1
$region0: #{lenet5_forward.1}
  #allocation0 [shape = 'u32[]', space=smem, size = 0x4, offset = 0x4, fixed_abs, tag = 'smem constant byte address 0x4 - core index']
  #allocation1 [shape = 'u32[144,128]{1,0:T(1,128)}', space=vmem, size = 0x12000, scoped, tag = 'internal scratch']
  #allocation2 [shape = 'f32[224,168]{1,0:T(8,128)}', space=vmem, size = 0x38000, scoped, tag = 'scratch operand']
  %s0 = inlined_call_operand.vmem [shape: f32[512,32], index: 0, kind: input, shape index: {}]
  %s1 = inlined_call_operand.vmem [shape: f32[5,32,168], index: 1, kind: input, shape index: {}]
  %s2 = inlined_call_operand.vmem [shape: f32[1,168], index: 2, kind: input, shape index: {}]
  %s3 = inlined_call_operand.vmem [shape: f32[10,168,160], index: 3, kind: input, shape index: {}]
  %s4 = inlined_call_operand.vmem [shape: f32[1,160], index: 4, kind: input, shape index: {}]
  %s5 = inlined_call_operand.vmem [shape: f32[10,160,128], index: 5, kind: input, shape index: {}]
  %s6 = inlined_call_operand.vmem [shape: f32[1,128], index: 6, kind: input, shape index: {}]
  %s7 = inlined_call_operand.vmem [shape: f32[128,128], index: 7, kind: input, shape index: {}]
  %s8 = inlined_call_operand.vmem [shape: f32[1,128], index: 8, kind: input, shape index: {}]
  %s9 = inlined_call_operand.vmem [shape: f32[128,128], index: 9, kind: input, shape index: {}]
  %s10 = inlined_call_operand.vmem [shape: f32[1,128], index: 10, kind: input, shape index: {}]
  %s11 = inlined_call_operand.hbm [shape: f32[16,128], index: 11, kind: output, shape index: {}]
  %s12 = sld [smem:[#allocation0]]
  $region77: #{lenet5_forward.1} parent=0
    _
  %s14 = ssub.s32 1, %s12
  %s15 = scalar_select 0, %s14, %s12
  $region1: #{lenet5_forward.1} parent=0
    #allocation3 [shape = 'u8[8192]{0}', space=vmem, size = 0x2000, scoped, tag = 'output window, operand 0']
    #allocation4 [shape = 's32[2]{0}', space=sflag, size = 0x8, scoped, tag = 'scoped memory for lenet5_forward.1']
    %16 = vsyncpa [#allocation4], 0
    %s17 = scalar_lea.sflag [#allocation4], 1
    %18 = vsyncpa %s17, 0
    loop: start=0, step=1, limit=4
    $region2: #{lenet5_forward.1} parent=1 // loop_pre_header
      _
    $region3: #{lenet5_forward.1} parent=1 // loop_header
      %s20 = sphi 0, %s24
      %p21 = scmp.ge.s32.totalorder %s20, 4
      %s30 = sphi 0, %s32
      %s33 = sphi 0, %s30
      %s34 = sphi 0, %s33
      %s50 = sphi 0, %s34
      %s54 = sphi 0, %s54
      %s56 = sphi 0, %s54
      %s57 = sphi 0, %s56
      %s71 = sphi 0, %s57
      %s75 = sphi 0, %s75
      %s77 = sphi 0, %s75
      %s78 = sphi 0, %s77
      %s92 = sphi 0, %s78
      %s96 = sphi 0, %s96
      %s98 = sphi 0, %s96
      %s99 = sphi 0, %s98
      %s113 = sphi 0, %s99
      %s117 = sphi 0, %s117
      %s119 = sphi 0, %s117
      %s120 = sphi 0, %s119
      %s134 = sphi 0, %s120
      %s138 = sphi 0, %s138
      %s140 = sphi 0, %s138
      %s141 = sphi 0, %s140
      %s155 = sphi 0, %s141
      %s159 = sphi 0, %s159
      %s161 = sphi 0, %s159
      %s162 = sphi 0, %s161
      %s176 = sphi 0, %s162
      %s180 = sphi 0, %s180
      %s182 = sphi 0, %s180
      %s183 = sphi 0, %s182
      %s197 = sphi 0, %s183
      %s201 = sphi 0, %s201
      %s203 = sphi 0, %s201
      %s204 = sphi 0, %s203
      %s218 = sphi 0, %s204
      %s222 = sphi 0, %s222
      %s224 = sphi 0, %s222
      %s225 = sphi 0, %s224
      %s239 = sphi 0, %s225
      %s243 = sphi 0, %s243
      %s245 = sphi 0, %s243
      %s246 = sphi 0, %s245
      %s260 = sphi 0, %s246
      %s266 = sphi 0, %s268
      %s269 = sphi 0, %s266
      %s270 = sphi 0, %s269
      %s286 = sphi 0, %s270
    $region4: #{lenet5_forward.1} parent=1 // loop_header_branch
      %23 = sbr.rel (%p21) target = $region8
    $region5: #{lenet5_forward.1} parent=1 // loop_body
      %s25 = ssub.s32 %s20, 1
      %s26 = ssub.s32 %s20, 2
      %s27 = sadd.s32 %s20, 1
      %s28 = ssub.s32 %s20, %s27
      %p29 = scmp.eq.s32.totalorder %s28, 0
      %s31 = sadd.s32 %s30, 1
      %s32 = scalar_select %p29, %s30, %s31
      %p35 = pneg %p29
      %p36 = scmp.eq.s32.totalorder %s20, 1
      %p37 = por %p35, %p36
      %p38 = scmp.ne.s32.totalorder %s30, %s33
      %p39 = scmp.eq.s32.totalorder %s20, 0
      %p40 = por %p38, %p39
      %p41 = scmp.ne.s32.totalorder %s30, %s33
      %p42 = scmp.eq.s32.totalorder %s25, 1
      %p43 = por %p41, %p42
      %p44 = scmp.ne.s32.totalorder %s33, %s34
      %p45 = scmp.eq.s32.totalorder %s25, 0
      %p46 = por %p44, %p45
      %p47 = scmp.ne.s32.totalorder %s33, %s34
      %p48 = scmp.eq.s32.totalorder %s26, 1
      %p49 = por %p47, %p48
      %p51 = scmp.ne.s32.totalorder %s34, %s50
      %p52 = scmp.eq.s32.totalorder %s26, 0
      %p53 = por %p51, %p52
      %s55 = sadd.s32 %s54, 1
      %p58 = scmp.eq.s32.totalorder %s20, 1
      %p59 = scmp.ne.s32.totalorder %s54, %s56
      %p60 = scmp.eq.s32.totalorder %s20, 0
      %p61 = por %p59, %p60
      %p62 = scmp.ne.s32.totalorder %s54, %s56
      %p63 = scmp.eq.s32.totalorder %s25, 1
      %p64 = por %p62, %p63
      %p65 = scmp.ne.s32.totalorder %s56, %s57
      %p66 = scmp.eq.s32.totalorder %s25, 0
      %p67 = por %p65, %p66
      %p68 = scmp.ne.s32.totalorder %s56, %s57
      %p69 = scmp.eq.s32.totalorder %s26, 1
      %p70 = por %p68, %p69
      %p72 = scmp.ne.s32.totalorder %s57, %s71
      %p73 = scmp.eq.s32.totalorder %s26, 0
      %p74 = por %p72, %p73
      %s76 = sadd.s32 %s75, 1
      %p79 = scmp.eq.s32.totalorder %s20, 1
      %p80 = scmp.ne.s32.totalorder %s75, %s77
      %p81 = scmp.eq.s32.totalorder %s20, 0
      %p82 = por %p80, %p81
      %p83 = scmp.ne.s32.totalorder %s75, %s77
      %p84 = scmp.eq.s32.totalorder %s25, 1
      %p85 = por %p83, %p84
      %p86 = scmp.ne.s32.totalorder %s77, %s78
      %p87 = scmp.eq.s32.totalorder %s25, 0
      %p88 = por %p86, %p87
      %p89 = scmp.ne.s32.totalorder %s77, %s78
      %p90 = scmp.eq.s32.totalorder %s26, 1
      %p91 = por %p89, %p90
      %p93 = scmp.ne.s32.totalorder %s78, %s92
      %p94 = scmp.eq.s32.totalorder %s26, 0
      %p95 = por %p93, %p94
      %s97 = sadd.s32 %s96, 1
      %p100 = scmp.eq.s32.totalorder %s20, 1
      %p101 = scmp.ne.s32.totalorder %s96, %s98
      %p102 = scmp.eq.s32.totalorder %s20, 0
      %p103 = por %p101, %p102
      %p104 = scmp.ne.s32.totalorder %s96, %s98
      %p105 = scmp.eq.s32.totalorder %s25, 1
      %p106 = por %p104, %p105
      %p107 = scmp.ne.s32.totalorder %s98, %s99
      %p108 = scmp.eq.s32.totalorder %s25, 0
      %p109 = por %p107, %p108
      %p110 = scmp.ne.s32.totalorder %s98, %s99
      %p111 = scmp.eq.s32.totalorder %s26, 1
      %p112 = por %p110, %p111
      %p114 = scmp.ne.s32.totalorder %s99, %s113
      %p115 = scmp.eq.s32.totalorder %s26, 0
      %p116 = por %p114, %p115
      %s118 = sadd.s32 %s117, 1
      %p121 = scmp.eq.s32.totalorder %s20, 1
      %p122 = scmp.ne.s32.totalorder %s117, %s119
      %p123 = scmp.eq.s32.totalorder %s20, 0
      %p124 = por %p122, %p123
      %p125 = scmp.ne.s32.totalorder %s117, %s119
      %p126 = scmp.eq.s32.totalorder %s25, 1
      %p127 = por %p125, %p126
      %p128 = scmp.ne.s32.totalorder %s119, %s120
      %p129 = scmp.eq.s32.totalorder %s25, 0
      %p130 = por %p128, %p129
      %p131 = scmp.ne.s32.totalorder %s119, %s120
      %p132 = scmp.eq.s32.totalorder %s26, 1
      %p133 = por %p131, %p132
      %p135 = scmp.ne.s32.totalorder %s120, %s134
      %p136 = scmp.eq.s32.totalorder %s26, 0
      %p137 = por %p135, %p136
      %s139 = sadd.s32 %s138, 1
      %p142 = scmp.eq.s32.totalorder %s20, 1
      %p143 = scmp.ne.s32.totalorder %s138, %s140
      %p144 = scmp.eq.s32.totalorder %s20, 0
      %p145 = por %p143, %p144
      %p146 = scmp.ne.s32.totalorder %s138, %s140
      %p147 = scmp.eq.s32.totalorder %s25, 1
      %p148 = por %p146, %p147
      %p149 = scmp.ne.s32.totalorder %s140, %s141
      %p150 = scmp.eq.s32.totalorder %s25, 0
      %p151 = por %p149, %p150
      %p152 = scmp.ne.s32.totalorder %s140, %s141
      %p153 = scmp.eq.s32.totalorder %s26, 1
      %p154 = por %p152, %p153
      %p156 = scmp.ne.s32.totalorder %s141, %s155
      %p157 = scmp.eq.s32.totalorder %s26, 0
      %p158 = por %p156, %p157
      %s160 = sadd.s32 %s159, 1
      %p163 = scmp.eq.s32.totalorder %s20, 1
      %p164 = scmp.ne.s32.totalorder %s159, %s161
      %p165 = scmp.eq.s32.totalorder %s20, 0
      %p166 = por %p164, %p165
      %p167 = scmp.ne.s32.totalorder %s159, %s161
      %p168 = scmp.eq.s32.totalorder %s25, 1
      %p169 = por %p167, %p168
      %p170 = scmp.ne.s32.totalorder %s161, %s162
      %p171 = scmp.eq.s32.totalorder %s25, 0
      %p172 = por %p170, %p171
      %p173 = scmp.ne.s32.totalorder %s161, %s162
      %p174 = scmp.eq.s32.totalorder %s26, 1
      %p175 = por %p173, %p174
      %p177 = scmp.ne.s32.totalorder %s162, %s176
      %p178 = scmp.eq.s32.totalorder %s26, 0
      %p179 = por %p177, %p178
      %s181 = sadd.s32 %s180, 1
      %p184 = scmp.eq.s32.totalorder %s20, 1
      %p185 = scmp.ne.s32.totalorder %s180, %s182
      %p186 = scmp.eq.s32.totalorder %s20, 0
      %p187 = por %p185, %p186
      %p188 = scmp.ne.s32.totalorder %s180, %s182
      %p189 = scmp.eq.s32.totalorder %s25, 1
      %p190 = por %p188, %p189
      %p191 = scmp.ne.s32.totalorder %s182, %s183
      %p192 = scmp.eq.s32.totalorder %s25, 0
      %p193 = por %p191, %p192
      %p194 = scmp.ne.s32.totalorder %s182, %s183
      %p195 = scmp.eq.s32.totalorder %s26, 1
      %p196 = por %p194, %p195
      %p198 = scmp.ne.s32.totalorder %s183, %s197
      %p199 = scmp.eq.s32.totalorder %s26, 0
      %p200 = por %p198, %p199
      %s202 = sadd.s32 %s201, 1
      %p205 = scmp.eq.s32.totalorder %s20, 1
      %p206 = scmp.ne.s32.totalorder %s201, %s203
      %p207 = scmp.eq.s32.totalorder %s20, 0
      %p208 = por %p206, %p207
      %p209 = scmp.ne.s32.totalorder %s201, %s203
      %p210 = scmp.eq.s32.totalorder %s25, 1
      %p211 = por %p209, %p210
      %p212 = scmp.ne.s32.totalorder %s203, %s204
      %p213 = scmp.eq.s32.totalorder %s25, 0
      %p214 = por %p212, %p213
      %p215 = scmp.ne.s32.totalorder %s203, %s204
      %p216 = scmp.eq.s32.totalorder %s26, 1
      %p217 = por %p215, %p216
      %p219 = scmp.ne.s32.totalorder %s204, %s218
      %p220 = scmp.eq.s32.totalorder %s26, 0
      %p221 = por %p219, %p220
      %s223 = sadd.s32 %s222, 1
      %p226 = scmp.eq.s32.totalorder %s20, 1
      %p227 = scmp.ne.s32.totalorder %s222, %s224
      %p228 = scmp.eq.s32.totalorder %s20, 0
      %p229 = por %p227, %p228
      %p230 = scmp.ne.s32.totalorder %s222, %s224
      %p231 = scmp.eq.s32.totalorder %s25, 1
      %p232 = por %p230, %p231
      %p233 = scmp.ne.s32.totalorder %s224, %s225
      %p234 = scmp.eq.s32.totalorder %s25, 0
      %p235 = por %p233, %p234
      %p236 = scmp.ne.s32.totalorder %s224, %s225
      %p237 = scmp.eq.s32.totalorder %s26, 1
      %p238 = por %p236, %p237
      %p240 = scmp.ne.s32.totalorder %s225, %s239
      %p241 = scmp.eq.s32.totalorder %s26, 0
      %p242 = por %p240, %p241
      %s244 = sadd.s32 %s243, 1
      %p247 = scmp.eq.s32.totalorder %s20, 1
      %p248 = scmp.ne.s32.totalorder %s243, %s245
      %p249 = scmp.eq.s32.totalorder %s20, 0
      %p250 = por %p248, %p249
      %p251 = scmp.ne.s32.totalorder %s243, %s245
      %p252 = scmp.eq.s32.totalorder %s25, 1
      %p253 = por %p251, %p252
      %p254 = scmp.ne.s32.totalorder %s245, %s246
      %p255 = scmp.eq.s32.totalorder %s25, 0
      %p256 = por %p254, %p255
      %p257 = scmp.ne.s32.totalorder %s245, %s246
      %p258 = scmp.eq.s32.totalorder %s26, 1
      %p259 = por %p257, %p258
      %p261 = scmp.ne.s32.totalorder %s246, %s260
      %p262 = scmp.eq.s32.totalorder %s26, 0
      %p263 = por %p261, %p262
      %s264 = ssub.s32 %s20, %s27
      %p265 = scmp.eq.s32.totalorder %s264, 0
      %s267 = sadd.s32 %s266, 1
      %s268 = scalar_select %p265, %s266, %s267
      %p271 = pneg %p265
      %p272 = scmp.eq.s32.totalorder %s20, 1
      %p273 = por %p271, %p272
      %p274 = scmp.ne.s32.totalorder %s266, %s269
      %p275 = scmp.eq.s32.totalorder %s20, 0
      %p276 = por %p274, %p275
      %p277 = scmp.ne.s32.totalorder %s266, %s269
      %p278 = scmp.eq.s32.totalorder %s25, 1
      %p279 = por %p277, %p278
      %p280 = scmp.ne.s32.totalorder %s269, %s270
      %p281 = scmp.eq.s32.totalorder %s25, 0
      %p282 = por %p280, %p281
      %p283 = scmp.ne.s32.totalorder %s269, %s270
      %p284 = scmp.eq.s32.totalorder %s26, 1
      %p285 = por %p283, %p284
      %p287 = scmp.ne.s32.totalorder %s270, %s286
      %p288 = scmp.eq.s32.totalorder %s26, 0
      %p289 = por %p287, %p288
      %p290 = scmp.le.s32.totalorder 1, %s20
      %p291 = scmp.lt.s32.totalorder %s20, 3
      %p292 = pnand %p290, %p291
      %p293 = pneg %p292
      // Predicated region
      $region9: #{lenet5_forward.1} parent=5 // pred_check
        _
      $region10: #{lenet5_forward.1} parent=5 // pred_check_branch
        %295 = sbr.rel (%p292) target = $region12
      $region11: #{lenet5_forward.1} parent=5 // pred_region
        %s296 = ssub.s32 %s20, 1
        // Predicated region
        $region13: #{lenet5_forward.1} parent=11 // pred_check
          %p297 = pneg %p67
        $region14: #{lenet5_forward.1} parent=11 // pred_check_branch
          %299 = sbr.rel (%p297) target = $region16
        $region15: #{lenet5_forward.1} parent=11 // pred_region
          _
        $region16: #{lenet5_forward.1} parent=11 // pred_fallthru
          _
        // Predicated region
        $region17: #{lenet5_forward.1} parent=11 // pred_check
          %p300 = pneg %p88
        $region18: #{lenet5_forward.1} parent=11 // pred_check_branch
          %302 = sbr.rel (%p300) target = $region20
        $region19: #{lenet5_forward.1} parent=11 // pred_region
          _
        $region20: #{lenet5_forward.1} parent=11 // pred_fallthru
          _
        // Predicated region
        $region21: #{lenet5_forward.1} parent=11 // pred_check
          %p303 = pneg %p109
        $region22: #{lenet5_forward.1} parent=11 // pred_check_branch
          %305 = sbr.rel (%p303) target = $region24
        $region23: #{lenet5_forward.1} parent=11 // pred_region
          _
        $region24: #{lenet5_forward.1} parent=11 // pred_fallthru
          _
        // Predicated region
        $region25: #{lenet5_forward.1} parent=11 // pred_check
          %p306 = pneg %p130
        $region26: #{lenet5_forward.1} parent=11 // pred_check_branch
          %308 = sbr.rel (%p306) target = $region28
        $region27: #{lenet5_forward.1} parent=11 // pred_region
          _
        $region28: #{lenet5_forward.1} parent=11 // pred_fallthru
          _
        // Predicated region
        $region29: #{lenet5_forward.1} parent=11 // pred_check
          %p309 = pneg %p151
        $region30: #{lenet5_forward.1} parent=11 // pred_check_branch
          %311 = sbr.rel (%p309) target = $region32
        $region31: #{lenet5_forward.1} parent=11 // pred_region
          _
        $region32: #{lenet5_forward.1} parent=11 // pred_fallthru
          _
        // Predicated region
        $region33: #{lenet5_forward.1} parent=11 // pred_check
          %p312 = pneg %p172
        $region34: #{lenet5_forward.1} parent=11 // pred_check_branch
          %314 = sbr.rel (%p312) target = $region36
        $region35: #{lenet5_forward.1} parent=11 // pred_region
          _
        $region36: #{lenet5_forward.1} parent=11 // pred_fallthru
          _
        // Predicated region
        $region37: #{lenet5_forward.1} parent=11 // pred_check
          %p315 = pneg %p193
        $region38: #{lenet5_forward.1} parent=11 // pred_check_branch
          %317 = sbr.rel (%p315) target = $region40
        $region39: #{lenet5_forward.1} parent=11 // pred_region
          _
        $region40: #{lenet5_forward.1} parent=11 // pred_fallthru
          _
        // Predicated region
        $region41: #{lenet5_forward.1} parent=11 // pred_check
          %p318 = pneg %p214
        $region42: #{lenet5_forward.1} parent=11 // pred_check_branch
          %320 = sbr.rel (%p318) target = $region44
        $region43: #{lenet5_forward.1} parent=11 // pred_region
          _
        $region44: #{lenet5_forward.1} parent=11 // pred_fallthru
          _
        // Predicated region
        $region45: #{lenet5_forward.1} parent=11 // pred_check
          %p321 = pneg %p235
        $region46: #{lenet5_forward.1} parent=11 // pred_check_branch
          %323 = sbr.rel (%p321) target = $region48
        $region47: #{lenet5_forward.1} parent=11 // pred_region
          _
        $region48: #{lenet5_forward.1} parent=11 // pred_fallthru
          _
        // Predicated region
        $region49: #{lenet5_forward.1} parent=11 // pred_check
          %p324 = pneg %p256
        $region50: #{lenet5_forward.1} parent=11 // pred_check_branch
          %326 = sbr.rel (%p324) target = $region52
        $region51: #{lenet5_forward.1} parent=11 // pred_region
          _
        $region52: #{lenet5_forward.1} parent=11 // pred_fallthru
          _
      $region12: #{lenet5_forward.1} parent=5 // pred_fallthru
        _
      %p327 = scmp.lt.s32.totalorder %s20, 2
      // Predicated region
      $region53: #{lenet5_forward.1} parent=5 // pred_check
        %p328 = pneg %p327
      $region54: #{lenet5_forward.1} parent=5 // pred_check_branch
        %330 = sbr.rel (%p328) target = $region56
      $region55: #{lenet5_forward.1} parent=5 // pred_region
        // Predicated region
        $region57: #{lenet5_forward.1} parent=55 // pred_check
          %p331 = pneg %p40
        $region58: #{lenet5_forward.1} parent=55 // pred_check_branch
          %333 = sbr.rel (%p331) target = $region60
        $region59: #{lenet5_forward.1} parent=55 // pred_region
          %s334 = smul.u32 32, %s20
          %p335 = scmp.lt.s32.totalorder %s334, 63
          %s336 = scalar_select %p335, %s334, 63
          %s337 = smul.addr %s336, 8
          %s338 = scalar_lea.vmem %s0, %s337
          %s339 = smul.u32 32, %s20
        $region60: #{lenet5_forward.1} parent=55 // pred_fallthru
          _
      $region56: #{lenet5_forward.1} parent=5 // pred_fallthru
        _
      %p340 = scmp.le.s32.totalorder 1, %s20
      %p341 = scmp.lt.s32.totalorder %s20, 3
      %p342 = pnand %p340, %p341
      %p343 = pneg %p342
      // Predicated region
      $region61: #{lenet5_forward.1} parent=5 // pred_check
        _
      $region62: #{lenet5_forward.1} parent=5 // pred_check_branch
        %345 = sbr.rel (%p342) target = $region64
      $region63: #{lenet5_forward.1} parent=5 // pred_region
        %s346 = ssub.s32 %s20, 1
        %s347 = smul.u32 32, %s25
        %p348 = scmp.lt.s32.totalorder %s347, 63
        %s349 = scalar_select %p348, %s347, 63
        %s350 = smul.addr %s349, 8
        %s351 = scalar_lea.vmem %s0, %s350
        %p352 = pneg %p46
        %p353 = pneg %p43
        %p354 = pneg %p67
        %p355 = pneg %p64
        %p356 = pneg %p88
        %p357 = pneg %p85
        %p358 = pneg %p109
        %p359 = pneg %p106
        %p360 = pneg %p130
        %p361 = pneg %p127
        %p362 = pneg %p151
        %p363 = pneg %p148
        %p364 = pneg %p172
        %p365 = pneg %p169
        %p366 = pneg %p193
        %p367 = pneg %p190
        %p368 = pneg %p214
        %p369 = pneg %p211
        %p370 = pneg %p235
        %p371 = pneg %p232
        %p372 = pneg %p256
        %p373 = pneg %p253
        %p374 = pneg %p282
        %p375 = pneg %p279
        %s376 = sand.u32 %s269, 1
        %s377 = scalar_lea.sflag [#allocation4], %s376
        %s378 = sand.u32 %s269, 1
        %s379 = smul.addr %s378, 8
        %s380 = scalar_lea.vmem [#allocation3], %s379
        %s381 = smul.u32 32, %s25
        %p382 = scmp.lt.s32.totalorder %s381, 63
        %s383 = scalar_select %p382, %s381, 63
        %s384 = smul.addr %s383, 8
        %s385 = scalar_lea.vmem %s0, %s384
        %s386 = smul.u32 32, %s25
        %v387 = vld [vmem:[%s385] sm:$0xff]
        %v388 = vld [vmem:[%s385 + $0x8] sm:$0xff]
        %v389 = vld [vmem:[%s385 + $0x10] sm:$0xff]
        %v390 = vld [vmem:[%s385 + $0x18] sm:$0xff]
        %v391 = vld [vmem:[%s385 + $0x20] sm:$0xff]
        %v392 = vld [vmem:[%s385 + $0x28] sm:$0xff]
        %v393 = vld [vmem:[%s385 + $0x30] sm:$0xff]
        %v394 = vld [vmem:[%s385 + $0x38] sm:$0xff]
        %v395 = vld [vmem:[%s385 + $0x40] sm:$0xff]
        %v396 = vld [vmem:[%s385 + $0x48] sm:$0xff]
        %v397 = vld [vmem:[%s385 + $0x50] sm:$0xff]
        %v398 = vld [vmem:[%s385 + $0x58] sm:$0xff]
        %v399 = vld [vmem:[%s385 + $0x60] sm:$0xff]
        %v400 = vld [vmem:[%s385 + $0x68] sm:$0xff]
        %v401 = vld [vmem:[%s385 + $0x70] sm:$0xff]
        %v402 = vld [vmem:[%s385 + $0x78] sm:$0xff]
        %v403 = vld [vmem:[%s385 + $0x80] sm:$0xff]
        %v404 = vld [vmem:[%s385 + $0x88] sm:$0xff]
        %v405 = vld [vmem:[%s385 + $0x90] sm:$0xff]
        %v406 = vld [vmem:[%s385 + $0x98] sm:$0xff]
        %v407 = vld [vmem:[%s385 + $0xa0] sm:$0xff]
        %v408 = vld [vmem:[%s385 + $0xa8] sm:$0xff]
        %v409 = vld [vmem:[%s385 + $0xb0] sm:$0xff]
        %v410 = vld [vmem:[%s385 + $0xb8] sm:$0xff]
        %v411 = vld [vmem:[%s385 + $0xc0] sm:$0xff]
        %v412 = vld [vmem:[%s385 + $0xc8] sm:$0xff]
        %v413 = vld [vmem:[%s385 + $0xd0] sm:$0xff]
        %v414 = vld [vmem:[%s385 + $0xd8] sm:$0xff]
        %v415 = vld [vmem:[%s1] sm:$0xff]
        %v416 = vld [vmem:[%s1 + $0x8] sm:$0xff]
        %v417 = vld [vmem:[%s1 + $0x10] sm:$0xff]
        %v418 = vld [vmem:[%s1 + $0x18] sm:$0xff]
        %v419 = vld [vmem:[%s1 + $0x20] sm:$0xff]
        %v420 = vld [vmem:[%s1 + $0x28] sm:$0xff]
        %v421 = vld [vmem:[%s1 + $0x30] sm:$0xff]
        %v422 = vld [vmem:[%s1 + $0x38] sm:$0xff]
        %v423 = vld [vmem:[%s385 + $0xe0] sm:$0xff]
        %s424 = scalar_lea.vmem %s1, 64
        %v425 = vld [vmem:[%s424] sm:$0xff]
        %v426 = vld [vmem:[%s424 + $0x8] sm:$0xff]
        %v427 = vld [vmem:[%s424 + $0x10] sm:$0xff]
        %v428 = vld [vmem:[%s424 + $0x18] sm:$0xff]
        %v429 = vld [vmem:[%s424 + $0x20] sm:$0xff]
        %v430 = vld [vmem:[%s424 + $0x28] sm:$0xff]
        %v431 = vld [vmem:[%s424 + $0x30] sm:$0xff]
        %v432 = vld [vmem:[%s424 + $0x38] sm:$0xff]
        %vm433 = vcmask 261120
        %v435 = vsel %vm433, %v388, 0
        %v438 = vsel %vm433, %v389, 0
        %v441 = vsel %vm433, %v390, 0
        %v444 = vsel %vm433, %v391, 0
        %v447 = vsel %vm433, %v392, 0
        %v450 = vsel %vm433, %v393, 0
        %v453 = vsel %vm433, %v394, 0
        %v456 = vsel %vm433, %v395, 0
        %v459 = vsel %vm433, %v396, 0
        %v462 = vsel %vm433, %v397, 0
        %v465 = vsel %vm433, %v398, 0
        %v468 = vsel %vm433, %v399, 0
        %v471 = vsel %vm433, %v400, 0
        %v474 = vsel %vm433, %v401, 0
        %v477 = vsel %vm433, %v402, 0
        %v480 = vsel %vm433, %v403, 0
        %v483 = vsel %vm433, %v404, 0
        %v486 = vsel %vm433, %v405, 0
        %v489 = vsel %vm433, %v406, 0
        %v492 = vsel %vm433, %v407, 0
        %v495 = vsel %vm433, %v408, 0
        %v498 = vsel %vm433, %v409, 0
        %v501 = vsel %vm433, %v410, 0
        %v504 = vsel %vm433, %v411, 0
        %v507 = vsel %vm433, %v412, 0
        %v510 = vsel %vm433, %v413, 0
        %v513 = vsel %vm433, %v414, 0
        %v516 = vsel %vm433, %v423, 0
        %518 = vmatprep.subr.mxu0 %v426
        %519 = vmatpush1.msra.mxu0 %v425
        %520 = vmatprep.subr.mxu0 %v428
        %521 = vmatpush1.msra.mxu0 %v427
        %522 = vmatprep.subr.mxu0 %v430
        %523 = vmatpush1.msra.mxu0 %v429
        %524 = vmatprep.subr.mxu0 %v432
        %525 = vmatpush1.msra.mxu0 %v431
        %526 = vmatprep.subr.mxu0 0.0
        %527 = vmatpush1.msra.mxu0 0.0
        %528 = vmatprep.subr.mxu0 0.0
        %529 = vmatpush1.msra.mxu0 0.0
        %530 = vmatprep.subr.mxu0 0.0
        %531 = vmatpush1.msra.mxu0 0.0
        %532 = vmatprep.subr.mxu0 0.0
        %533 = vmatpush1.msra.mxu0 0.0
        %534 = vmatprep.subr.mxu0 0.0
        %535 = vmatpush1.msra.mxu0 0.0
        %536 = vmatprep.subr.mxu0 0.0
        %537 = vmatpush1.msra.mxu0 0.0
        %538 = vmatprep.subr.mxu0 0.0
        %539 = vmatpush1.msra.mxu0 0.0
        %540 = vmatprep.subr.mxu0 0.0
        %541 = vmatpush1.msra.mxu0 0.0
        %542 = vmatprep.subr.mxu0 0.0
        %543 = vmatpush1.msra.mxu0 0.0
        %544 = vmatprep.subr.mxu0 0.0
        %545 = vmatpush1.msra.mxu0 0.0
        %546 = vmatprep.subr.mxu0 0.0
        %547 = vmatpush1.msra.mxu0 0.0
        %548 = vmatprep.subr.mxu0 0.0
        %549 = vmatpush1.msra.mxu0 0.0
        %550 = vmatprep.subr.mxu0 0.0
        %551 = vmatpush1.msra.mxu0 0.0
        %552 = vmatprep.subr.mxu0 0.0
        %553 = vmatpush1.msra.mxu0 0.0
        %554 = vmatprep.subr.mxu0 0.0
        %555 = vmatpush1.msra.mxu0 0.0
        %556 = vmatprep.subr.mxu0 0.0
        %557 = vmatpush1.msra.mxu0 0.0
        %558 = vmatprep.subr.mxu0 0.0
        %559 = vmatpush1.msra.mxu0 0.0
        %560 = vmatprep.subr.mxu0 0.0
        %561 = vmatpush1.msra.mxu0 0.0
        %562 = vmatprep.subr.mxu0 0.0
        %563 = vmatpush1.msra.mxu0 0.0
        %564 = vmatprep.subr.mxu0 0.0
        %565 = vmatpush1.msra.mxu0 0.0
        %566 = vmatprep.subr.mxu0 0.0
        %567 = vmatpush1.msra.mxu0 0.0
        %568 = vmatprep.subr.mxu0 0.0
        %569 = vmatpush1.msra.mxu0 0.0
        %570 = vmatprep.subr.mxu0 0.0
        %571 = vmatpush1.msra.mxu0 0.0
        %572 = vmatprep.subr.mxu0 0.0
        %573 = vmatpush1.msra.mxu0 0.0
        %574 = vmatprep.subr.mxu0 0.0
        %575 = vmatpush1.msra.mxu0 0.0
        %576 = vmatprep.subr.mxu0 0.0
        %577 = vmatpush1.msra.mxu0 0.0
        %578 = vmatprep.subr.mxu0 0.0
        %579 = vmatpush1.msra.mxu0 0.0
        %580 = vmatprep.subr.mxu0 0.0
        %581 = vmatpush1.msra.mxu0 0.0
        %582 = vmatprep.mubr.f32.mxu0 0.0
        %583 = vmatmul.mubr.f32.gmra.mrb[0].mxu0 %v435
        %v584 = vpop.f32.mrb[0].mxu0
        %v585 = vadd.f32 0.0, %v584
        %v586 = vpop.f32.mrb[0].mxu0
        %v587 = vadd.f32 0.0, %v586
        %588 = vmatprep.mubr.f32.mxu0 0.0
        %589 = vmatmul.mubr.f32.gmra.mrb[0].mxu0 %v438
        %v590 = vpop.f32.mrb[0].mxu0
        %v591 = vadd.f32 0.0, %v590
        %v592 = vpop.f32.mrb[0].mxu0
        %v593 = vadd.f32 0.0, %v592
        %594 = vmatprep.mubr.f32.mxu0 0.0
        %595 = vmatmul.mubr.f32.gmra.mrb[0].mxu0 %v441
        %v596 = vpop.f32.mrb[0].mxu0
        %v597 = vadd.f32 0.0, %v596
        %v598 = vpop.f32.mrb[0].mxu0
        %v599 = vadd.f32 0.0, %v598
        %600 = vmatprep.mubr.f32.mxu0 0.0
        %601 = vmatmul.mubr.f32.gmra.mrb[0].mxu0 %v444
        %v602 = vpop.f32.mrb[0].mxu0
        %v603 = vadd.f32 0.0, %v602
        %v604 = vpop.f32.mrb[0].mxu0
        %v605 = vadd.f32 0.0, %v604
        %606 = vmatprep.mubr.f32.mxu0 0.0
        %607 = vmatmul.mubr.f32.gmra.mrb[0].mxu0 %v447
        %v608 = vpop.f32.mrb[0].mxu0
        %v609 = vadd.f32 0.0, %v608
        %v610 = vpop.f32.mrb[0].mxu0
        %v611 = vadd.f32 0.0, %v610
        %612 = vmatprep.mubr.f32.mxu0 0.0
        %613 = vmatmul.mubr.f32.gmra.mrb[0].mxu0 %v450
        %v614 = vpop.f32.mrb[0].mxu0
        %v615 = vadd.f32 0.0, %v614
        %v616 = vpop.f32.mrb[0].mxu0
        %v617 = vadd.f32 0.0, %v616
        %618 = vmatprep.mubr.f32.mxu0 0.0
        %619 = vmatmul.mubr.f32.gmra.mrb[0].mxu0 %v453
        %v620 = vpop.f32.mrb[0].mxu0
        %v621 = vadd.f32 0.0, %v620
        %v622 = vpop.f32.mrb[0].mxu0
        %v623 = vadd.f32 0.0, %v622
        %624 = vmatprep.mubr.f32.mxu0 0.0
        %625 = vmatmul.mubr.f32.gmra.mrb[0].mxu0 %v456
        %v626 = vpop.f32.mrb[0].mxu0
        %v627 = vadd.f32 0.0, %v626
        %v628 = vpop.f32.mrb[0].mxu0
        %v629 = vadd.f32 0.0, %v628
        %630 = vmatprep.mubr.f32.mxu0 0.0
        %631 = vmatmul.mubr.f32.gmra.mrb[0].mxu0 %v459
        %v632 = vpop.f32.mrb[0].mxu0
        %v633 = vadd.f32 0.0, %v632
        %v634 = vpop.f32.mrb[0].mxu0
        %v635 = vadd.f32 0.0, %v634
        %636 = vmatprep.mubr.f32.mxu0 0.0
        %637 = vmatmul.mubr.f32.gmra.mrb[0].mxu0 %v462
        %v638 = vpop.f32.mrb[0].mxu0
        %v639 = vadd.f32 0.0, %v638
        %v640 = vpop.f32.mrb[0].mxu0
        %v641 = vadd.f32 0.0, %v640
        %642 = vmatprep.mubr.f32.mxu0 0.0
        %643 = vmatmul.mubr.f32.gmra.mrb[0].mxu0 %v465
        %v644 = vpop.f32.mrb[0].mxu0
        %v645 = vadd.f32 0.0, %v644
        %v646 = vpop.f32.mrb[0].mxu0
        %v647 = vadd.f32 0.0, %v646
        %648 = vmatprep.mubr.f32.mxu0 0.0
        %649 = vmatmul.mubr.f32.gmra.mrb[0].mxu0 %v468
        %v650 = vpop.f32.mrb[0].mxu0
        %v651 = vadd.f32 0.0, %v650
        %v652 = vpop.f32.mrb[0].mxu0
        %v653 = vadd.f32 0.0, %v652
        %654 = vmatprep.mubr.f32.mxu0 0.0
        %655 = vmatmul.mubr.f32.gmra.mrb[0].mxu0 %v471
        %v656 = vpop.f32.mrb[0].mxu0
        %v657 = vadd.f32 0.0, %v656
        %v658 = vpop.f32.mrb[0].mxu0
        %v659 = vadd.f32 0.0, %v658
        %660 = vmatprep.mubr.f32.mxu0 0.0
        %661 = vmatmul.mubr.f32.gmra.mrb[0].mxu0 %v474
        %v662 = vpop.f32.mrb[0].mxu0
        %v663 = vadd.f32 0.0, %v662
        %v664 = vpop.f32.mrb[0].mxu0
        %v665 = vadd.f32 0.0, %v664
        %666 = vmatprep.mubr.f32.mxu0 0.0
        %667 = vmatmul.mubr.f32.gmra.mrb[0].mxu0 %v477
        %v668 = vpop.f32.mrb[0].mxu0
        %v669 = vadd.f32 0.0, %v668
        %v670 = vpop.f32.mrb[0].mxu0
        %v671 = vadd.f32 0.0, %v670
        %672 = vmatprep.mubr.f32.mxu0 0.0
        %673 = vmatmul.mubr.f32.gmra.mrb[0].mxu0 %v480
        %v674 = vpop.f32.mrb[0].mxu0
        %v675 = vadd.f32 0.0, %v674
        %v676 = vpop.f32.mrb[0].mxu0
        %v677 = vadd.f32 0.0, %v676
        %678 = vmatprep.mubr.f32.mxu0 0.0
        %679 = vmatmul.mubr.f32.gmra.mrb[0].mxu0 %v483
        %v680 = vpop.f32.mrb[0].mxu0
        %v681 = vadd.f32 0.0, %v680
        %v682 = vpop.f32.mrb[0].mxu0
        %v683 = vadd.f32 0.0, %v682
        %684 = vmatprep.mubr.f32.mxu0 0.0
        %685 = vmatmul.mubr.f32.gmra.mrb[0].mxu0 %v486
        %v686 = vpop.f32.mrb[0].mxu0
        %v687 = vadd.f32 0.0, %v686
        %v688 = vpop.f32.mrb[0].mxu0
        %v689 = vadd.f32 0.0, %v688
        %690 = vmatprep.mubr.f32.mxu0 0.0
        %691 = vmatmul.mubr.f32.gmra.mrb[0].mxu0 %v489
        %v692 = vpop.f32.mrb[0].mxu0
        %v693 = vadd.f32 0.0, %v692
        %v694 = vpop.f32.mrb[0].mxu0
        %v695 = vadd.f32 0.0, %v694
        %696 = vmatprep.mubr.f32.mxu0 0.0
        %697 = vmatmul.mubr.f32.gmra.mrb[0].mxu0 %v492
        %v698 = vpop.f32.mrb[0].mxu0
        %v699 = vadd.f32 0.0, %v698
        %v700 = vpop.f32.mrb[0].mxu0
        %v701 = vadd.f32 0.0, %v700
        %702 = vmatprep.mubr.f32.mxu0 0.0
        %703 = vmatmul.mubr.f32.gmra.mrb[0].mxu0 %v495
        %v704 = vpop.f32.mrb[0].mxu0
        %v705 = vadd.f32 0.0, %v704
        %v706 = vpop.f32.mrb[0].mxu0
        %v707 = vadd.f32 0.0, %v706
        %708 = vmatprep.mubr.f32.mxu0 0.0
        %709 = vmatmul.mubr.f32.gmra.mrb[0].mxu0 %v498
        %v710 = vpop.f32.mrb[0].mxu0
        %v711 = vadd.f32 0.0, %v710
        %v712 = vpop.f32.mrb[0].mxu0
        %v713 = vadd.f32 0.0, %v712
        %714 = vmatprep.mubr.f32.mxu0 0.0
        %715 = vmatmul.mubr.f32.gmra.mrb[0].mxu0 %v501
        %v716 = vpop.f32.mrb[0].mxu0
        %v717 = vadd.f32 0.0, %v716
        %v718 = vpop.f32.mrb[0].mxu0
        %v719 = vadd.f32 0.0, %v718
        %720 = vmatprep.mubr.f32.mxu0 0.0
        %721 = vmatmul.mubr.f32.gmra.mrb[0].mxu0 %v504
        %v722 = vpop.f32.mrb[0].mxu0
        %v723 = vadd.f32 0.0, %v722
        %v724 = vpop.f32.mrb[0].mxu0
        %v725 = vadd.f32 0.0, %v724
        %726 = vmatprep.mubr.f32.mxu0 0.0
        %727 = vmatmul.mubr.f32.gmra.mrb[0].mxu0 %v507
        %v728 = vpop.f32.mrb[0].mxu0
        %v729 = vadd.f32 0.0, %v728
        %v730 = vpop.f32.mrb[0].mxu0
        %v731 = vadd.f32 0.0, %v730
        %732 = vmatprep.mubr.f32.mxu0 0.0
        %733 = vmatmul.mubr.f32.gmra.mrb[0].mxu0 %v510
        %v734 = vpop.f32.mrb[0].mxu0
        %v735 = vadd.f32 0.0, %v734
        %v736 = vpop.f32.mrb[0].mxu0
        %v737 = vadd.f32 0.0, %v736
        %738 = vmatprep.mubr.f32.mxu0 0.0
        %739 = vmatmul.mubr.f32.gmra.mrb[0].mxu0 %v513
        %v740 = vpop.f32.mrb[0].mxu0
        %v741 = vadd.f32 0.0, %v740
        %v742 = vpop.f32.mrb[0].mxu0
        %v743 = vadd.f32 0.0, %v742
        %744 = vmatprep.mubr.f32.mxu0 0.0
        %745 = vmatmul.mubr.f32.gmra.mrb[0].mxu0 %v516
        %v746 = vpop.f32.mrb[0].mxu0
        %v747 = vadd.f32 0.0, %v746
        %v748 = vpop.f32.mrb[0].mxu0
        %v749 = vadd.f32 0.0, %v748
        %750 = vdwg.mxu0
        %v752 = vsel %vm433, %v387, 0
        %754 = vmatprep.subr.mxu0 %v416
        %755 = vmatpush1.msra.mxu0 %v415
        %756 = vmatprep.subr.mxu0 %v418
        %757 = vmatpush1.msra.mxu0 %v417
        %758 = vmatprep.subr.mxu0 %v420
        %759 = vmatpush1.msra.mxu0 %v419
        %760 = vmatprep.subr.mxu0 %v422
        %761 = vmatpush1.msra.mxu0 %v421
        %762 = vmatprep.subr.mxu0 0.0
        %763 = vmatpush1.msra.mxu0 0.0
        %764 = vmatprep.subr.mxu0 0.0
        %765 = vmatpush1.msra.mxu0 0.0
        %766 = vmatprep.subr.mxu0 0.0
        %767 = vmatpush1.msra.mxu0 0.0
        %768 = vmatprep.subr.mxu0 0.0
        %769 = vmatpush1.msra.mxu0 0.0
        %770 = vmatprep.subr.mxu0 0.0
        %771 = vmatpush1.msra.mxu0 0.0
        %772 = vmatprep.subr.mxu0 0.0
        %773 = vmatpush1.msra.mxu0 0.0
        %774 = vmatprep.subr.mxu0 0.0
        %775 = vmatpush1.msra.mxu0 0.0
        %776 = vmatprep.subr.mxu0 0.0
        %777 = vmatpush1.msra.mxu0 0.0
        %778 = vmatprep.subr.mxu0 0.0
        %779 = vmatpush1.msra.mxu0 0.0
        %780 = vmatprep.subr.mxu0 0.0
        %781 = vmatpush1.msra.mxu0 0.0
        %782 = vmatprep.subr.mxu0 0.0
        %783 = vmatpush1.msra.mxu0 0.0
        %784 = vmatprep.subr.mxu0 0.0
        %785 = vmatpush1.msra.mxu0 0.0
        %786 = vmatprep.subr.mxu0 0.0
        %787 = vmatpush1.msra.mxu0 0.0
        %788 = vmatprep.subr.mxu0 0.0
        %789 = vmatpush1.msra.mxu0 0.0
        %790 = vmatprep.subr.mxu0 0.0
        %791 = vmatpush1.msra.mxu0 0.0
        %792 = vmatprep.subr.mxu0 0.0
        %793 = vmatpush1.msra.mxu0 0.0
        %794 = vmatprep.subr.mxu0 0.0
        %795 = vmatpush1.msra.mxu0 0.0
        %796 = vmatprep.subr.mxu0 0.0
        %797 = vmatpush1.msra.mxu0 0.0
        %798 = vmatprep.subr.mxu0 0.0
        %799 = vmatpush1.msra.mxu0 0.0
        %800 = vmatprep.subr.mxu0 0.0
        %801 = vmatpush1.msra.mxu0 0.0
        %802 = vmatprep.subr.mxu0 0.0
        %803 = vmatpush1.msra.mxu0 0.0
        %804 = vmatprep.subr.mxu0 0.0
        %805 = vmatpush1.msra.mxu0 0.0
        %806 = vmatprep.subr.mxu0 0.0
        %807 = vmatpush1.msra.mxu0 0.0
        %808 = vmatprep.subr.mxu0 0.0
        %809 = vmatpush1.msra.mxu0 0.0
        %810 = vmatprep.subr.mxu0 0.0
        %811 = vmatpush1.msra.mxu0 0.0
        %812 = vmatprep.subr.mxu0 0.0
        %813 = vmatpush1.msra.mxu0 0.0
        %814 = vmatprep.subr.mxu0 0.0
        %815 = vmatpush1.msra.mxu0 0.0
        %816 = vmatprep.subr.mxu0 0.0
        %817 = vmatpush1.msra.mxu0 0.0
        %818 = vmatprep.mubr.f32.mxu0 0.0
        %819 = vmatmul.mubr.f32.gmra.mrb[0].mxu0 %v752
        %v820 = vpop.f32.mrb[0].mxu0
        %v821 = vadd.f32 %v585, %v820
        %v822 = vpop.f32.mrb[0].mxu0
        %v823 = vadd.f32 %v587, %v822
        %824 = vmatprep.mubr.f32.mxu0 0.0
        %825 = vmatmul.mubr.f32.gmra.mrb[0].mxu0 %v435
        %v826 = vpop.f32.mrb[0].mxu0
        %v827 = vadd.f32 %v591, %v826
        %v828 = vpop.f32.mrb[0].mxu0
        %v829 = vadd.f32 %v593, %v828
        %830 = vmatprep.mubr.f32.mxu0 0.0
        %831 = vmatmul.mubr.f32.gmra.mrb[0].mxu0 %v438
        %v832 = vpop.f32.mrb[0].mxu0
        %v833 = vadd.f32 %v597, %v832
        %v834 = vpop.f32.mrb[0].mxu0
        %v835 = vadd.f32 %v599, %v834
        %836 = vmatprep.mubr.f32.mxu0 0.0
        %837 = vmatmul.mubr.f32.gmra.mrb[0].mxu0 %v441
        %v838 = vpop.f32.mrb[0].mxu0
        %v839 = vadd.f32 %v603, %v838
        %v840 = vpop.f32.mrb[0].mxu0
        %v841 = vadd.f32 %v605, %v840
        %842 = vmatprep.mubr.f32.mxu0 0.0
        %843 = vmatmul.mubr.f32.gmra.mrb[0].mxu0 %v444
        %v844 = vpop.f32.mrb[0].mxu0
        %v845 = vadd.f32 %v609, %v844
        %v846 = vpop.f32.mrb[0].mxu0
        %v847 = vadd.f32 %v611, %v846
        %848 = vmatprep.mubr.f32.mxu0 0.0
        %849 = vmatmul.mubr.f32.gmra.mrb[0].mxu0 %v447
        %v850 = vpop.f32.mrb[0].mxu0
        %v851 = vadd.f32 %v615, %v850
        %v852 = vpop.f32.mrb[0].mxu0
        %v853 = vadd.f32 %v617, %v852
        %854 = vmatprep.mubr.f32.mxu0 0.0
        %855 = vmatmul.mubr.f32.gmra.mrb[0].mxu0 %v450
        %v856 = vpop.f32.mrb[0].mxu0
        %v857 = vadd.f32 %v621, %v856
        %v858 = vpop.f32.mrb[0].mxu0
        %v859 = vadd.f32 %v623, %v858
        %860 = vmatprep.mubr.f32.mxu0 0.0
        %861 = vmatmul.mubr.f32.gmra.mrb[0].mxu0 %v453
        %v862 = vpop.f32.mrb[0].mxu0
        %v863 = vadd.f32 %v627, %v862
        %v864 = vpop.f32.mrb[0].mxu0
        %v865 = vadd.f32 %v629, %v864
        %866 = vmatprep.mubr.f32.mxu0 0.0
        %867 = vmatmul.mubr.f32.gmra.mrb[0].mxu0 %v456
        %v868 = vpop.f32.mrb[0].mxu0
        %v869 = vadd.f32 %v633, %v868
        %v870 = vpop.f32.mrb[0].mxu0
        %v871 = vadd.f32 %v635, %v870
        %872 = vmatprep.mubr.f32.mxu0 0.0
        %873 = vmatmul.mubr.f32.gmra.mrb[0].mxu0 %v459
        %v874 = vpop.f32.mrb[0].mxu0
        %v875 = vadd.f32 %v639, %v874
        %v876 = vpop.f32.mrb[0].mxu0
        %v877 = vadd.f32 %v641, %v876
        %878 = vmatprep.mubr.f32.mxu0 0.0
        %879 = vmatmul.mubr.f32.gmra.mrb[0].mxu0 %v462
        %v880 = vpop.f32.mrb[0].mxu0
        %v881 = vadd.f32 %v645, %v880
        %v882 = vpop.f32.mrb[0].mxu0
        %v883 = vadd.f32 %v647, %v882
        %884 = vmatprep.mubr.f32.mxu0 0.0
        %885 = vmatmul.mubr.f32.gmra.mrb[0].mxu0 %v465
        %v886 = vpop.f32.mrb[0].mxu0
        %v887 = vadd.f32 %v651, %v886
        %v888 = vpop.f32.mrb[0].mxu0
        %v889 = vadd.f32 %v653, %v888
        %890 = vmatprep.mubr.f32.mxu0 0.0
        %891 = vmatmul.mubr.f32.gmra.mrb[0].mxu0 %v468
        %v892 = vpop.f32.mrb[0].mxu0
        %v893 = vadd.f32 %v657, %v892
        %v894 = vpop.f32.mrb[0].mxu0
        %v895 = vadd.f32 %v659, %v894
        %896 = vmatprep.mubr.f32.mxu0 0.0
        %897 = vmatmul.mubr.f32.gmra.mrb[0].mxu0 %v471
        %v898 = vpop.f32.mrb[0].mxu0
        %v899 = vadd.f32 %v663, %v898
        %v900 = vpop.f32.mrb[0].mxu0
        %v901 = vadd.f32 %v665, %v900
        %902 = vmatprep.mubr.f32.mxu0 0.0
        %903 = vmatmul.mubr.f32.gmra.mrb[0].mxu0 %v474
        %v904 = vpop.f32.mrb[0].mxu0
        %v905 = vadd.f32 %v669, %v904
        %v906 = vpop.f32.mrb[0].mxu0
        %v907 = vadd.f32 %v671, %v906
        %908 = vmatprep.mubr.f32.mxu0 0.0
        %909 = vmatmul.mubr.f32.gmra.mrb[0].mxu0 %v477
        %v910 = vpop.f32.mrb[0].mxu0
        %v911 = vadd.f32 %v675, %v910
        %v912 = vpop.f32.mrb[0].mxu0
        %v913 = vadd.f32 %v677, %v912
        %914 = vmatprep.mubr.f32.mxu0 0.0
        %915 = vmatmul.mubr.f32.gmra.mrb[0].mxu0 %v480
        %v916 = vpop.f32.mrb[0].mxu0
        %v917 = vadd.f32 %v681, %v916
        %v918 = vpop.f32.mrb[0].mxu0
        %v919 = vadd.f32 %v683, %v918
        %920 = vmatprep.mubr.f32.mxu0 0.0
        %921 = vmatmul.mubr.f32.gmra.mrb[0].mxu0 %v483
        %v922 = vpop.f32.mrb[0].mxu0
        %v923 = vadd.f32 %v687, %v922
        %v924 = vpop.f32.mrb[0].mxu0
        %v925 = vadd.f32 %v689, %v924
        %926 = vmatprep.mubr.f32.mxu0 0.0
        %927 = vmatmul.mubr.f32.gmra.mrb[0].mxu0 %v486
        %v928 = vpop.f32.mrb[0].mxu0
        %v929 = vadd.f32 %v693, %v928
        %v930 = vpop.f32.mrb[0].mxu0
        %v931 = vadd.f32 %v695, %v930
        %932 = vmatprep.mubr.f32.mxu0 0.0
        %933 = vmatmul.mubr.f32.gmra.mrb[0].mxu0 %v489
        %v934 = vpop.f32.mrb[0].mxu0
        %v935 = vadd.f32 %v699, %v934
        %v936 = vpop.f32.mrb[0].mxu0
        %v937 = vadd.f32 %v701, %v936
        %938 = vmatprep.mubr.f32.mxu0 0.0
        %939 = vmatmul.mubr.f32.gmra.mrb[0].mxu0 %v492
        %v940 = vpop.f32.mrb[0].mxu0
        %v941 = vadd.f32 %v705, %v940
        %v942 = vpop.f32.mrb[0].mxu0
        %v943 = vadd.f32 %v707, %v942
        %944 = vmatprep.mubr.f32.mxu0 0.0
        %945 = vmatmul.mubr.f32.gmra.mrb[0].mxu0 %v495
        %v946 = vpop.f32.mrb[0].mxu0
        %v947 = vadd.f32 %v711, %v946
        %v948 = vpop.f32.mrb[0].mxu0
        %v949 = vadd.f32 %v713, %v948
        %950 = vmatprep.mubr.f32.mxu0 0.0
        %951 = vmatmul.mubr.f32.gmra.mrb[0].mxu0 %v498
        %v952 = vpop.f32.mrb[0].mxu0
        %v953 = vadd.f32 %v717, %v952
        %v954 = vpop.f32.mrb[0].mxu0
        %v955 = vadd.f32 %v719, %v954
        %956 = vmatprep.mubr.f32.mxu0 0.0
        %957 = vmatmul.mubr.f32.gmra.mrb[0].mxu0 %v501
        %v958 = vpop.f32.mrb[0].mxu0
        %v959 = vadd.f32 %v723, %v958
        %v960 = vpop.f32.mrb[0].mxu0
        %v961 = vadd.f32 %v725, %v960
        %962 = vmatprep.mubr.f32.mxu0 0.0
        %963 = vmatmul.mubr.f32.gmra.mrb[0].mxu0 %v504
        %v964 = vpop.f32.mrb[0].mxu0
        %v965 = vadd.f32 %v729, %v964
        %v966 = vpop.f32.mrb[0].mxu0
        %v967 = vadd.f32 %v731, %v966
        %968 = vmatprep.mubr.f32.mxu0 0.0
        %969 = vmatmul.mubr.f32.gmra.mrb[0].mxu0 %v507
        %v970 = vpop.f32.mrb[0].mxu0
        %v971 = vadd.f32 %v735, %v970
        %v972 = vpop.f32.mrb[0].mxu0
        %v973 = vadd.f32 %v737, %v972
        %974 = vmatprep.mubr.f32.mxu0 0.0
        %975 = vmatmul.mubr.f32.gmra.mrb[0].mxu0 %v510
        %v976 = vpop.f32.mrb[0].mxu0
        %v977 = vadd.f32 %v741, %v976
        %v978 = vpop.f32.mrb[0].mxu0
        %v979 = vadd.f32 %v743, %v978
        %980 = vmatprep.mubr.f32.mxu0 0.0
        %981 = vmatmul.mubr.f32.gmra.mrb[0].mxu0 %v513
        %v982 = vpop.f32.mrb[0].mxu0
        %v983 = vadd.f32 %v747, %v982
        %v984 = vpop.f32.mrb[0].mxu0
        %v985 = vadd.f32 %v749, %v984
        %986 = vdwg.mxu0
        %v987 = vld [vmem:[%s385 + $0x10] sm:$0xff]
        %v988 = vld [vmem:[%s385 + $0x18] sm:$0xff]
        %v989 = vld [vmem:[%s385 + $0x20] sm:$0xff]
        %v990 = vld [vmem:[%s385 + $0x28] sm:$0xff]
        %v991 = vld [vmem:[%s385 + $0x30] sm:$0xff]
        %v992 = vld [vmem:[%s385 + $0x38] sm:$0xff]
        %v993 = vld [vmem:[%s385 + $0x40] sm:$0xff]
        %v994 = vld [vmem:[%s385 + $0x48] sm:$0xff]
        %v995 = vld [vmem:[%s385 + $0x50] sm:$0xff]
        %v996 = vld [vmem:[%s385 + $0x58] sm:$0xff]
        %v997 = vld [vmem:[%s385 + $0x60] sm:$0xff]
        %v998 = vld [vmem:[%s385 + $0x68] sm:$0xff]
        %v999 = vld [vmem:[%s385 + $0x70] sm:$0xff]
        %v1000 = vld [vmem:[%s385 + $0x78] sm:$0xff]
        %v1001 = vld [vmem:[%s385 + $0x80] sm:$0xff]
        %v1002 = vld [vmem:[%s385 + $0x88] sm:$0xff]
        %v1003 = vld [vmem:[%s385 + $0x90] sm:$0xff]
        %v1004 = vld [vmem:[%s385 + $0x98] sm:$0xff]
        %v1005 = vld [vmem:[%s385 + $0xa0] sm:$0xff]
        %v1006 = vld [vmem:[%s385 + $0xa8] sm:$0xff]
        %v1007 = vld [vmem:[%s385 + $0xb0] sm:$0xff]
        %v1008 = vld [vmem:[%s385 + $0xb8] sm:$0xff]
        %v1009 = vld [vmem:[%s385 + $0xc0] sm:$0xff]
        %v1010 = vld [vmem:[%s385 + $0xc8] sm:$0xff]
        %v1011 = vld [vmem:[%s385 + $0xd0] sm:$0xff]
        %v1012 = vld [vmem:[%s385 + $0xd8] sm:$0xff]
        %v1013 = vld [vmem:[%s385 + $0xe0] sm:$0xff]
        %v1014 = vld [vmem:[%s385 + $0xe8] sm:$0xff]
        %s1015 = scalar_lea.vmem %s1, 128
        %v1016 = vld [vmem:[%s1015] sm:$0xff]
        %v1017 = vld [vmem:[%s1015 + $0x8] sm:$0xff]
        %v1018 = vld [vmem:[%s1015 + $0x10] sm:$0xff]
        %v1019 = vld [vmem:[%s1015 + $0x18] sm:$0xff]
        %v1020 = vld [vmem:[%s1015 + $0x20] sm:$0xff]
        %v1021 = vld [vmem:[%s1015 + $0x28] sm:$0xff]
        %v1022 = vld [vmem:[%s1015 + $0x30] sm:$0xff]
        %v1023 = vld [vmem:[%s1015 + $0x38] sm:$0xff]
        %v1025 = vsel %vm433, %v987, 0
        %v1028 = vsel %vm433, %v988, 0
        %v1031 = vsel %vm433, %v989, 0
        %v1034 = vsel %vm433, %v990, 0
        %v1037 = vsel %vm433, %v991, 0
        %v1040 = vsel %vm433, %v992, 0
        %v1043 = vsel %vm433, %v993, 0
        %v1046 = vsel %vm433, %v994, 0
        %v1049 = vsel %vm433, %v995, 0
        %v1052 = vsel %vm433, %v996, 0
        %v1055 = vsel %vm433, %v997, 0
        %v1058 = vsel %vm433, %v998, 0
        %v1061 = vsel %vm433, %v999, 0
        %v1064 = vsel %vm433, %v1000, 0
        %v1067 = vsel %vm433, %v1001, 0
        %v1070 = vsel %vm433, %v1002, 0
        %v1073 = vsel %vm433, %v1003, 0
        %v1076 = vsel %vm433, %v1004, 0
        %v1079 = vsel %vm433, %v1005, 0
        %v1082 = vsel %vm433, %v1006, 0
        %v1085 = vsel %vm433, %v1007, 0
        %v1088 = vsel %vm433, %v1008, 0
        %v1091 = vsel %vm433, %v1009, 0
        %v1094 = vsel %vm433, %v1010, 0
        %v1097 = vsel %vm433, %v1011, 0
        %v1100 = vsel %vm433, %v1012, 0
        %v1103 = vsel %vm433, %v1013, 0
        %v1106 = vsel %vm433, %v1014, 0
        %1108 = vmatprep.subr.mxu0 %v1017
        %1109 = vmatpush1.msra.mxu0 %v1016
        %1110 = vmatprep.subr.mxu0 %v1019
        %1111 = vmatpush1.msra.mxu0 %v1018
        %1112 = vmatprep.subr.mxu0 %v1021
        %1113 = vmatpush1.msra.mxu0 %v1020
        %1114 = vmatprep.subr.mxu0 %v1023
        %1115 = vmatpush1.msra.mxu0 %v1022
        %1116 = vmatprep.subr.mxu0 0.0
        %1117 = vmatpush1.msra.mxu0 0.0
        %1118 = vmatprep.subr.mxu0 0.0
        %1119 = vmatpush1.msra.mxu0 0.0
        %1120 = vmatprep.subr.mxu0 0.0
        %1121 = vmatpush1.msra.mxu0 0.0
        %1122 = vmatprep.subr.mxu0 0.0
        %1123 = vmatpush1.msra.mxu0 0.0
        %1124 = vmatprep.subr.mxu0 0.0
        %1125 = vmatpush1.msra.mxu0 0.0
        %1126 = vmatprep.subr.mxu0 0.0
        %1127 = vmatpush1.msra.mxu0 0.0
        %1128 = vmatprep.subr.mxu0 0.0
        %1129 = vmatpush1.msra.mxu0 0.0
        %1130 = vmatprep.subr.mxu0 0.0
        %1131 = vmatpush1.msra.mxu0 0.0
        %1132 = vmatprep.subr.mxu0 0.0
        %1133 = vmatpush1.msra.mxu0 0.0
        %1134 = vmatprep.subr.mxu0 0.0
        %1135 = vmatpush1.msra.mxu0 0.0
        %1136 = vmatprep.subr.mxu0 0.0
        %1137 = vmatpush1.msra.mxu0 0.0
        %1138 = vmatprep.subr.mxu0 0.0
        %1139 = vmatpush1.msra.mxu0 0.0
        %1140 = vmatprep.subr.mxu0 0.0
        %1141 = vmatpush1.msra.mxu0 0.0
        %1142 = vmatprep.subr.mxu0 0.0
        %1143 = vmatpush1.msra.mxu0 0.0
        %1144 = vmatprep.subr.mxu0 0.0
        %1145 = vmatpush1.msra.mxu0 0.0
        %1146 = vmatprep.subr.mxu0 0.0
        %1147 = vmatpush1.msra.mxu0 0.0
        %1148 = vmatprep.subr.mxu0 0.0
        %1149 = vmatpush1.msra.mxu0 0.0
        %1150 = vmatprep.subr.mxu0 0.0
        %1151 = vmatpush1.msra.mxu0 0.0
        %1152 = vmatprep.subr.mxu0 0.0
        %1153 = vmatpush1.msra.mxu0 0.0
        %1154 = vmatprep.subr.mxu0 0.0
        %1155 = vmatpush1.msra.mxu0 0.0
        %1156 = vmatprep.subr.mxu0 0.0
        %1157 = vmatpush1.msra.mxu0 0.0
        %1158 = vmatprep.subr.mxu0 0.0
        %1159 = vmatpush1.msra.mxu0 0.0
        %1160 = vmatprep.subr.mxu0 0.0
        %1161 = vmatpush1.msra.mxu0 0.0
        %1162 = vmatprep.subr.mxu0 0.0
        %1163 = vmatpush1.msra.mxu0 0.0
        %1164 = vmatprep.subr.mxu0 0.0
        %1165 = vmatpush1.msra.mxu0 0.0
        %1166 = vmatprep.subr.mxu0 0.0
        %1167 = vmatpush1.msra.mxu0 0.0
        %1168 = vmatprep.subr.mxu0 0.0
        %1169 = vmatpush1.msra.mxu0 0.0
        %1170 = vmatprep.subr.mxu0 0.0
        %1171 = vmatpush1.msra.mxu0 0.0
        %1172 = vmatprep.mubr.f32.mxu0 0.0
        %1173 = vmatmul.mubr.f32.gmra.mrb[0].mxu0 %v1025
        %v1174 = vpop.f32.mrb[0].mxu0
        %v1175 = vadd.f32 0.0, %v1174
        %v1176 = vpop.f32.mrb[0].mxu0
        %v1177 = vadd.f32 0.0, %v1176
        %1178 = vmatprep.mubr.f32.mxu0 0.0
        %1179 = vmatmul.mubr.f32.gmra.mrb[0].mxu0 %v1028
        %v1180 = vpop.f32.mrb[0].mxu0
        %v1181 = vadd.f32 0.0, %v1180
        %v1182 = vpop.f32.mrb[0].mxu0
        %v1183 = vadd.f32 0.0, %v1182
        %1184 = vmatprep.mubr.f32.mxu0 0.0
        %1185 = vmatmul.mubr.f32.gmra.mrb[0].mxu0 %v1031
        %v1186 = vpop.f32.mrb[0].mxu0
        %v1187 = vadd.f32 0.0, %v1186
        %v1188 = vpop.f32.mrb[0].mxu0
        %v1189 = vadd.f32 0.0, %v1188
        %1190 = vmatprep.mubr.f32.mxu0 0.0
        %1191 = vmatmul.mubr.f32.gmra.mrb[0].mxu0 %v1034
        %v1192 = vpop.f32.mrb[0].mxu0
        %v1193 = vadd.f32 0.0, %v1192
        %v1194 = vpop.f32.mrb[0].mxu0
        %v1195 = vadd.f32 0.0, %v1194
        %1196 = vmatprep.mubr.f32.mxu0 0.0
        %1197 = vmatmul.mubr.f32.gmra.mrb[0].mxu0 %v1037
        %v1198 = vpop.f32.mrb[0].mxu0
        %v1199 = vadd.f32 0.0, %v1198
        %v1200 = vpop.f32.mrb[0].mxu0
        %v1201 = vadd.f32 0.0, %v1200
        %1202 = vmatprep.mubr.f32.mxu0 0.0
        %1203 = vmatmul.mubr.f32.gmra.mrb[0].mxu0 %v1040
        %v1204 = vpop.f32.mrb[0].mxu0
        %v1205 = vadd.f32 0.0, %v1204
        %v1206 = vpop.f32.mrb[0].mxu0
        %v1207 = vadd.f32 0.0, %v1206
        %1208 = vmatprep.mubr.f32.mxu0 0.0
        %1209 = vmatmul.mubr.f32.gmra.mrb[0].mxu0 %v1043
        %v1210 = vpop.f32.mrb[0].mxu0
        %v1211 = vadd.f32 0.0, %v1210
        %v1212 = vpop.f32.mrb[0].mxu0
        %v1213 = vadd.f32 0.0, %v1212
        %1214 = vmatprep.mubr.f32.mxu0 0.0
        %1215 = vmatmul.mubr.f32.gmra.mrb[0].mxu0 %v1046
        %v1216 = vpop.f32.mrb[0].mxu0
        %v1217 = vadd.f32 0.0, %v1216
        %v1218 = vpop.f32.mrb[0].mxu0
        %v1219 = vadd.f32 0.0, %v1218
        %1220 = vmatprep.mubr.f32.mxu0 0.0
        %1221 = vmatmul.mubr.f32.gmra.mrb[0].mxu0 %v1049
        %v1222 = vpop.f32.mrb[0].mxu0
        %v1223 = vadd.f32 0.0, %v1222
        %v1224 = vpop.f32.mrb[0].mxu0
        %v1225 = vadd.f32 0.0, %v1224
        %1226 = vmatprep.mubr.f32.mxu0 0.0
        %1227 = vmatmul.mubr.f32.gmra.mrb[0].mxu0 %v1052
        %v1228 = vpop.f32.mrb[0].mxu0
        %v1229 = vadd.f32 0.0, %v1228
        %v1230 = vpop.f32.mrb[0].mxu0
        %v1231 = vadd.f32 0.0, %v1230
        %1232 = vmatprep.mubr.f32.mxu0 0.0
        %1233 = vmatmul.mubr.f32.gmra.mrb[0].mxu0 %v1055
        %v1234 = vpop.f32.mrb[0].mxu0
        %v1235 = vadd.f32 0.0, %v1234
        %v1236 = vpop.f32.mrb[0].mxu0
        %v1237 = vadd.f32 0.0, %v1236
        %1238 = vmatprep.mubr.f32.mxu0 0.0
        %1239 = vmatmul.mubr.f32.gmra.mrb[0].mxu0 %v1058
        %v1240 = vpop.f32.mrb[0].mxu0
        %v1241 = vadd.f32 0.0, %v1240
        %v1242 = vpop.f32.mrb[0].mxu0
        %v1243 = vadd.f32 0.0, %v1242
        %1244 = vmatprep.mubr.f32.mxu0 0.0
        %1245 = vmatmul.mubr.f32.gmra.mrb[0].mxu0 %v1061
        %v1246 = vpop.f32.mrb[0].mxu0
        %v1247 = vadd.f32 0.0, %v1246
        %v1248 = vpop.f32.mrb[0].mxu0
        %v1249 = vadd.f32 0.0, %v1248
        %1250 = vmatprep.mubr.f32.mxu0 0.0
        %1251 = vmatmul.mubr.f32.gmra.mrb[0].mxu0 %v1064
        %v1252 = vpop.f32.mrb[0].mxu0
        %v1253 = vadd.f32 0.0, %v1252
        %v1254 = vpop.f32.mrb[0].mxu0
        %v1255 = vadd.f32 0.0, %v1254
        %1256 = vmatprep.mubr.f32.mxu0 0.0
        %1257 = vmatmul.mubr.f32.gmra.mrb[0].mxu0 %v1067
        %v1258 = vpop.f32.mrb[0].mxu0
        %v1259 = vadd.f32 0.0, %v1258
        %v1260 = vpop.f32.mrb[0].mxu0
        %v1261 = vadd.f32 0.0, %v1260
        %1262 = vmatprep.mubr.f32.mxu0 0.0
        %1263 = vmatmul.mubr.f32.gmra.mrb[0].mxu0 %v1070
        %v1264 = vpop.f32.mrb[0].mxu0
        %v1265 = vadd.f32 0.0, %v1264
        %v1266 = vpop.f32.mrb[0].mxu0
        %v1267 = vadd.f32 0.0, %v1266
        %1268 = vmatprep.mubr.f32.mxu0 0.0
        %1269 = vmatmul.mubr.f32.gmra.mrb[0].mxu0 %v1073
        %v1270 = vpop.f32.mrb[0].mxu0
        %v1271 = vadd.f32 0.0, %v1270
        %v1272 = vpop.f32.mrb[0].mxu0
        %v1273 = vadd.f32 0.0, %v1272
        %1274 = vmatprep.mubr.f32.mxu0 0.0
        %1275 = vmatmul.mubr.f32.gmra.mrb[0].mxu0 %v1076
        %v1276 = vpop.f32.mrb[0].mxu0
        %v1277 = vadd.f32 0.0, %v1276
        %v1278 = vpop.f32.mrb[0].mxu0
        %v1279 = vadd.f32 0.0, %v1278
        %1280 = vmatprep.mubr.f32.mxu0 0.0
        %1281 = vmatmul.mubr.f32.gmra.mrb[0].mxu0 %v1079
        %v1282 = vpop.f32.mrb[0].mxu0
        %v1283 = vadd.f32 0.0, %v1282
        %v1284 = vpop.f32.mrb[0].mxu0
        %v1285 = vadd.f32 0.0, %v1284
        %1286 = vmatprep.mubr.f32.mxu0 0.0
        %1287 = vmatmul.mubr.f32.gmra.mrb[0].mxu0 %v1082
        %v1288 = vpop.f32.mrb[0].mxu0
        %v1289 = vadd.f32 0.0, %v1288
        %v1290 = vpop.f32.mrb[0].mxu0
        %v1291 = vadd.f32 0.0, %v1290
        %1292 = vmatprep.mubr.f32.mxu0 0.0
        %1293 = vmatmul.mubr.f32.gmra.mrb[0].mxu0 %v1085
        %v1294 = vpop.f32.mrb[0].mxu0
        %v1295 = vadd.f32 0.0, %v1294
        %v1296 = vpop.f32.mrb[0].mxu0
        %v1297 = vadd.f32 0.0, %v1296
        %1298 = vmatprep.mubr.f32.mxu0 0.0
        %1299 = vmatmul.mubr.f32.gmra.mrb[0].mxu0 %v1088
        %v1300 = vpop.f32.mrb[0].mxu0
        %v1301 = vadd.f32 0.0, %v1300
        %v1302 = vpop.f32.mrb[0].mxu0
        %v1303 = vadd.f32 0.0, %v1302
        %1304 = vmatprep.mubr.f32.mxu0 0.0
        %1305 = vmatmul.mubr.f32.gmra.mrb[0].mxu0 %v1091
        %v1306 = vpop.f32.mrb[0].mxu0
        %v1307 = vadd.f32 0.0, %v1306
        %v1308 = vpop.f32.mrb[0].mxu0
        %v1309 = vadd.f32 0.0, %v1308
        %1310 = vmatprep.mubr.f32.mxu0 0.0
        %1311 = vmatmul.mubr.f32.gmra.mrb[0].mxu0 %v1094
        %v1312 = vpop.f32.mrb[0].mxu0
        %v1313 = vadd.f32 0.0, %v1312
        %v1314 = vpop.f32.mrb[0].mxu0
        %v1315 = vadd.f32 0.0, %v1314
        %1316 = vmatprep.mubr.f32.mxu0 0.0
        %1317 = vmatmul.mubr.f32.gmra.mrb[0].mxu0 %v1097
        %v1318 = vpop.f32.mrb[0].mxu0
        %v1319 = vadd.f32 0.0, %v1318
        %v1320 = vpop.f32.mrb[0].mxu0
        %v1321 = vadd.f32 0.0, %v1320
        %1322 = vmatprep.mubr.f32.mxu0 0.0
        %1323 = vmatmul.mubr.f32.gmra.mrb[0].mxu0 %v1100
        %v1324 = vpop.f32.mrb[0].mxu0
        %v1325 = vadd.f32 0.0, %v1324
        %v1326 = vpop.f32.mrb[0].mxu0
        %v1327 = vadd.f32 0.0, %v1326
        %1328 = vmatprep.mubr.f32.mxu0 0.0
        %1329 = vmatmul.mubr.f32.gmra.mrb[0].mxu0 %v1103
        %v1330 = vpop.f32.mrb[0].mxu0
        %v1331 = vadd.f32 0.0, %v1330
        %v1332 = vpop.f32.mrb[0].mxu0
        %v1333 = vadd.f32 0.0, %v1332
        %1334 = vmatprep.mubr.f32.mxu0 0.0
        %1335 = vmatmul.mubr.f32.gmra.mrb[0].mxu0 %v1106
        %v1336 = vpop.f32.mrb[0].mxu0
        %v1337 = vadd.f32 0.0, %v1336
        %v1338 = vpop.f32.mrb[0].mxu0
        %v1339 = vadd.f32 0.0, %v1338
        %1340 = vdwg.mxu0
        %v1341 = vadd.f32 %v821, %v1175
        %v1342 = vadd.f32 %v823, %v1177
        %v1343 = vadd.f32 %v827, %v1181
        %v1344 = vadd.f32 %v829, %v1183
        %v1345 = vadd.f32 %v833, %v1187
        %v1346 = vadd.f32 %v835, %v1189
        %v1347 = vadd.f32 %v839, %v1193
        %v1348 = vadd.f32 %v841, %v1195
        %v1349 = vadd.f32 %v845, %v1199
        %v1350 = vadd.f32 %v847, %v1201
        %v1351 = vadd.f32 %v851, %v1205
        %v1352 = vadd.f32 %v853, %v1207
        %v1353 = vadd.f32 %v857, %v1211
        %v1354 = vadd.f32 %v859, %v1213
        %v1355 = vadd.f32 %v863, %v1217
        %v1356 = vadd.f32 %v865, %v1219
        %v1357 = vadd.f32 %v869, %v1223
        %v1358 = vadd.f32 %v871, %v1225
        %v1359 = vadd.f32 %v875, %v1229
        %v1360 = vadd.f32 %v877, %v1231
        %v1361 = vadd.f32 %v881, %v1235
        %v1362 = vadd.f32 %v883, %v1237
        %v1363 = vadd.f32 %v887, %v1241
        %v1364 = vadd.f32 %v889, %v1243
        %v1365 = vadd.f32 %v893, %v1247
        %v1366 = vadd.f32 %v895, %v1249
        %v1367 = vadd.f32 %v899, %v1253
        %v1368 = vadd.f32 %v901, %v1255
        %v1369 = vadd.f32 %v905, %v1259
        %v1370 = vadd.f32 %v907, %v1261
        %v1371 = vadd.f32 %v911, %v1265
        %v1372 = vadd.f32 %v913, %v1267
        %v1373 = vadd.f32 %v917, %v1271
        %v1374 = vadd.f32 %v919, %v1273
        %v1375 = vadd.f32 %v923, %v1277
        %v1376 = vadd.f32 %v925, %v1279
        %v1377 = vadd.f32 %v929, %v1283
        %v1378 = vadd.f32 %v931, %v1285
        %v1379 = vadd.f32 %v935, %v1289
        %v1380 = vadd.f32 %v937, %v1291
        %v1381 = vadd.f32 %v941, %v1295
        %v1382 = vadd.f32 %v943, %v1297
        %v1383 = vadd.f32 %v947, %v1301
        %v1384 = vadd.f32 %v949, %v1303
        %v1385 = vadd.f32 %v953, %v1307
        %v1386 = vadd.f32 %v955, %v1309
        %v1387 = vadd.f32 %v959, %v1313
        %v1388 = vadd.f32 %v961, %v1315
        %v1389 = vadd.f32 %v965, %v1319
        %v1390 = vadd.f32 %v967, %v1321
        %v1391 = vadd.f32 %v971, %v1325
        %v1392 = vadd.f32 %v973, %v1327
        %v1393 = vadd.f32 %v977, %v1331
        %v1394 = vadd.f32 %v979, %v1333
        %v1395 = vadd.f32 %v983, %v1337
        %v1396 = vadd.f32 %v985, %v1339
        %v1397 = vld [vmem:[%s385 + $0x18] sm:$0xff]
        %v1398 = vld [vmem:[%s385 + $0x20] sm:$0xff]
        %v1399 = vld [vmem:[%s385 + $0x28] sm:$0xff]
        %v1400 = vld [vmem:[%s385 + $0x30] sm:$0xff]
        %v1401 = vld [vmem:[%s385 + $0x38] sm:$0xff]
        %v1402 = vld [vmem:[%s385 + $0x40] sm:$0xff]
        %v1403 = vld [vmem:[%s385 + $0x48] sm:$0xff]
        %v1404 = vld [vmem:[%s385 + $0x50] sm:$0xff]
        %v1405 = vld [vmem:[%s385 + $0x58] sm:$0xff]
        %v1406 = vld [vmem:[%s385 + $0x60] sm:$0xff]
        %v1407 = vld [vmem:[%s385 + $0x68] sm:$0xff]
        %v1408 = vld [vmem:[%s385 + $0x70] sm:$0xff]
        %v1409 = vld [vmem:[%s385 + $0x78] sm:$0xff]
        %v1410 = vld [vmem:[%s385 + $0x80] sm:$0xff]
        %v1411 = vld [vmem:[%s385 + $0x88] sm:$0xff]
        %v1412 = vld [vmem:[%s385 + $0x90] sm:$0xff]
        %v1413 = vld [vmem:[%s385 + $0x98] sm:$0xff]
        %v1414 = vld [vmem:[%s385 + $0xa0] sm:$0xff]
        %v1415 = vld [vmem:[%s385 + $0xa8] sm:$0xff]
        %v1416 = vld [vmem:[%s385 + $0xb0] sm:$0xff]
        %v1417 = vld [vmem:[%s385 + $0xb8] sm:$0xff]
        %v1418 = vld [vmem:[%s385 + $0xc0] sm:$0xff]
        %v1419 = vld [vmem:[%s385 + $0xc8] sm:$0xff]
        %v1420 = vld [vmem:[%s385 + $0xd0] sm:$0xff]
        %v1421 = vld [vmem:[%s385 + $0xd8] sm:$0xff]
        %v1422 = vld [vmem:[%s385 + $0xe0] sm:$0xff]
        %v1423 = vld [vmem:[%s385 + $0xe8] sm:$0xff]
        %v1424 = vld [vmem:[%s385 + $0xf0] sm:$0xff]
        %s1425 = scalar_lea.vmem %s1, 192
        %v1426 = vld [vmem:[%s1425] sm:$0xff]
        %v1427 = vld [vmem:[%s1425 + $0x8] sm:$0xff]
        %v1428 = vld [vmem:[%s1425 + $0x10] sm:$0xff]
        %v1429 = vld [vmem:[%s1425 + $0x18] sm:$0xff]
        %v1430 = vld [vmem:[%s1425 + $0x20] sm:$0xff]
        %v1431 = vld [vmem:[%s1425 + $0x28] sm:$0xff]
        %v1432 = vld [vmem:[%s1425 + $0x30] sm:$0xff]
        %v1433 = vld [vmem:[%s1425 + $0x38] sm:$0xff]
        %v1435 = vsel %vm433, %v1397, 0
        %v1438 = vsel %vm433, %v1398, 0
        %v1441 = vsel %vm433, %v1399, 0
        %v1444 = vsel %vm433, %v1400, 0
        %v1447 = vsel %vm433, %v1401, 0
        %v1450 = vsel %vm433, %v1402, 0
        %v1453 = vsel %vm433, %v1403, 0
        %v1456 = vsel %vm433, %v1404, 0
        %v1459 = vsel %vm433, %v1405, 0
        %v1462 = vsel %vm433, %v1406, 0
        %v1465 = vsel %vm433, %v1407, 0
        %v1468 = vsel %vm433, %v1408, 0
        %v1471 = vsel %vm433, %v1409, 0
        %v1474 = vsel %vm433, %v1410, 0
        %v1477 = vsel %vm433, %v1411, 0
        %v1480 = vsel %vm433, %v1412, 0
        %v1483 = vsel %vm433, %v1413, 0
        %v1486 = vsel %vm433, %v1414, 0
        %v1489 = vsel %vm433, %v1415, 0
        %v1492 = vsel %vm433, %v1416, 0
        %v1495 = vsel %vm433, %v1417, 0
        %v1498 = vsel %vm433, %v1418, 0
        %v1501 = vsel %vm433, %v1419, 0
        %v1504 = vsel %vm433, %v1420, 0
        %v1507 = vsel %vm433, %v1421, 0
        %v1510 = vsel %vm433, %v1422, 0
        %v1513 = vsel %vm433, %v1423, 0
        %v1516 = vsel %vm433, %v1424, 0
        %1518 = vmatprep.subr.mxu0 %v1427
        %1519 = vmatpush1.msra.mxu0 %v1426
        %1520 = vmatprep.subr.mxu0 %v1429
        %1521 = vmatpush1.msra.mxu0 %v1428
        %1522 = vmatprep.subr.mxu0 %v1431
        %1523 = vmatpush1.msra.mxu0 %v1430
        %1524 = vmatprep.subr.mxu0 %v1433
        %1525 = vmatpush1.msra.mxu0 %v1432
        %1526 = vmatprep.subr.mxu0 0.0
        %1527 = vmatpush1.msra.mxu0 0.0
        %1528 = vmatprep.subr.mxu0 0.0
        %1529 = vmatpush1.msra.mxu0 0.0
        %1530 = vmatprep.subr.mxu0 0.0
        %1531 = vmatpush1.msra.mxu0 0.0
        %1532 = vmatprep.subr.mxu0 0.0
        %1533 = vmatpush1.msra.mxu0 0.0
        %1534 = vmatprep.subr.mxu0 0.0
        %1535 = vmatpush1.msra.mxu0 0.0
        %1536 = vmatprep.subr.mxu0 0.0
        %1537 = vmatpush1.msra.mxu0 0.0
        %1538 = vmatprep.subr.mxu0 0.0
        %1539 = vmatpush1.msra.mxu0 0.0
        %1540 = vmatprep.subr.mxu0 0.0
        %1541 = vmatpush1.msra.mxu0 0.0
        %1542 = vmatprep.subr.mxu0 0.0
        %1543 = vmatpush1.msra.mxu0 0.0
        %1544 = vmatprep.subr.mxu0 0.0
        %1545 = vmatpush1.msra.mxu0 0.0
        %1546 = vmatprep.subr.mxu0 0.0
        %1547 = vmatpush1.msra.mxu0 0.0
        %1548 = vmatprep.subr.mxu0 0.0
        %1549 = vmatpush1.msra.mxu0 0.0
        %1550 = vmatprep.subr.mxu0 0.0
        %1551 = vmatpush1.msra.mxu0 0.0
        %1552 = vmatprep.subr.mxu0 0.0
        %1553 = vmatpush1.msra.mxu0 0.0
        %1554 = vmatprep.subr.mxu0 0.0
        %1555 = vmatpush1.msra.mxu0 0.0
        %1556 = vmatprep.subr.mxu0 0.0
        %1557 = vmatpush1.msra.mxu0 0.0
        %1558 = vmatprep.subr.mxu0 0.0
        %1559 = vmatpush1.msra.mxu0 0.0
        %1560 = vmatprep.subr.mxu0 0.0
        %1561 = vmatpush1.msra.mxu0 0.0
        %1562 = vmatprep.subr.mxu0 0.0
        %1563 = vmatpush1.msra.mxu0 0.0
        %1564 = vmatprep.subr.mxu0 0.0
        %1565 = vmatpush1.msra.mxu0 0.0
        %1566 = vmatprep.subr.mxu0 0.0
        %1567 = vmatpush1.msra.mxu0 0.0
        %1568 = vmatprep.subr.mxu0 0.0
        %1569 = vmatpush1.msra.mxu0 0.0
        %1570 = vmatprep.subr.mxu0 0.0
        %1571 = vmatpush1.msra.mxu0 0.0
        %1572 = vmatprep.subr.mxu0 0.0
        %1573 = vmatpush1.msra.mxu0 0.0
        %1574 = vmatprep.subr.mxu0 0.0
        %1575 = vmatpush1.msra.mxu0 0.0
        %1576 = vmatprep.subr.mxu0 0.0
        %1577 = vmatpush1.msra.mxu0 0.0
        %1578 = vmatprep.subr.mxu0 0.0
        %1579 = vmatpush1.msra.mxu0 0.0
        %1580 = vmatprep.subr.mxu0 0.0
        %1581 = vmatpush1.msra.mxu0 0.0
        %1582 = vmatprep.mubr.f32.mxu0 0.0
        %1583 = vmatmul.mubr.f32.gmra.mrb[0].mxu0 %v1435
        %v1584 = vpop.f32.mrb[0].mxu0
        %v1585 = vadd.f32 0.0, %v1584
        %v1586 = vpop.f32.mrb[0].mxu0
        %v1587 = vadd.f32 0.0, %v1586
        %1588 = vmatprep.mubr.f32.mxu0 0.0
        %1589 = vmatmul.mubr.f32.gmra.mrb[0].mxu0 %v1438
        %v1590 = vpop.f32.mrb[0].mxu0
        %v1591 = vadd.f32 0.0, %v1590
        %v1592 = vpop.f32.mrb[0].mxu0
        %v1593 = vadd.f32 0.0, %v1592
        %1594 = vmatprep.mubr.f32.mxu0 0.0
        %1595 = vmatmul.mubr.f32.gmra.mrb[0].mxu0 %v1441
        %v1596 = vpop.f32.mrb[0].mxu0
        %v1597 = vadd.f32 0.0, %v1596
        %v1598 = vpop.f32.mrb[0].mxu0
        %v1599 = vadd.f32 0.0, %v1598
        %1600 = vmatprep.mubr.f32.mxu0 0.0
        %1601 = vmatmul.mubr.f32.gmra.mrb[0].mxu0 %v1444
        %v1602 = vpop.f32.mrb[0].mxu0
        %v1603 = vadd.f32 0.0, %v1602
        %v1604 = vpop.f32.mrb[0].mxu0
        %v1605 = vadd.f32 0.0, %v1604
        %1606 = vmatprep.mubr.f32.mxu0 0.0
        %1607 = vmatmul.mubr.f32.gmra.mrb[0].mxu0 %v1447
        %v1608 = vpop.f32.mrb[0].mxu0
        %v1609 = vadd.f32 0.0, %v1608
        %v1610 = vpop.f32.mrb[0].mxu0
        %v1611 = vadd.f32 0.0, %v1610
        %1612 = vmatprep.mubr.f32.mxu0 0.0
        %1613 = vmatmul.mubr.f32.gmra.mrb[0].mxu0 %v1450
        %v1614 = vpop.f32.mrb[0].mxu0
        %v1615 = vadd.f32 0.0, %v1614
        %v1616 = vpop.f32.mrb[0].mxu0
        %v1617 = vadd.f32 0.0, %v1616
        %1618 = vmatprep.mubr.f32.mxu0 0.0
        %1619 = vmatmul.mubr.f32.gmra.mrb[0].mxu0 %v1453
        %v1620 = vpop.f32.mrb[0].mxu0
        %v1621 = vadd.f32 0.0, %v1620
        %v1622 = vpop.f32.mrb[0].mxu0
        %v1623 = vadd.f32 0.0, %v1622
        %1624 = vmatprep.mubr.f32.mxu0 0.0
        %1625 = vmatmul.mubr.f32.gmra.mrb[0].mxu0 %v1456
        %v1626 = vpop.f32.mrb[0].mxu0
        %v1627 = vadd.f32 0.0, %v1626
        %v1628 = vpop.f32.mrb[0].mxu0
        %v1629 = vadd.f32 0.0, %v1628
        %1630 = vmatprep.mubr.f32.mxu0 0.0
        %1631 = vmatmul.mubr.f32.gmra.mrb[0].mxu0 %v1459
        %v1632 = vpop.f32.mrb[0].mxu0
        %v1633 = vadd.f32 0.0, %v1632
        %v1634 = vpop.f32.mrb[0].mxu0
        %v1635 = vadd.f32 0.0, %v1634
        %1636 = vmatprep.mubr.f32.mxu0 0.0
        %1637 = vmatmul.mubr.f32.gmra.mrb[0].mxu0 %v1462
        %v1638 = vpop.f32.mrb[0].mxu0
        %v1639 = vadd.f32 0.0, %v1638
        %v1640 = vpop.f32.mrb[0].mxu0
        %v1641 = vadd.f32 0.0, %v1640
        %1642 = vmatprep.mubr.f32.mxu0 0.0
        %1643 = vmatmul.mubr.f32.gmra.mrb[0].mxu0 %v1465
        %v1644 = vpop.f32.mrb[0].mxu0
        %v1645 = vadd.f32 0.0, %v1644
        %v1646 = vpop.f32.mrb[0].mxu0
        %v1647 = vadd.f32 0.0, %v1646
        %1648 = vmatprep.mubr.f32.mxu0 0.0
        %1649 = vmatmul.mubr.f32.gmra.mrb[0].mxu0 %v1468
        %v1650 = vpop.f32.mrb[0].mxu0
        %v1651 = vadd.f32 0.0, %v1650
        %v1652 = vpop.f32.mrb[0].mxu0
        %v1653 = vadd.f32 0.0, %v1652
        %1654 = vmatprep.mubr.f32.mxu0 0.0
        %1655 = vmatmul.mubr.f32.gmra.mrb[0].mxu0 %v1471
        %v1656 = vpop.f32.mrb[0].mxu0
        %v1657 = vadd.f32 0.0, %v1656
        %v1658 = vpop.f32.mrb[0].mxu0
        %v1659 = vadd.f32 0.0, %v1658
        %1660 = vmatprep.mubr.f32.mxu0 0.0
        %1661 = vmatmul.mubr.f32.gmra.mrb[0].mxu0 %v1474
        %v1662 = vpop.f32.mrb[0].mxu0
        %v1663 = vadd.f32 0.0, %v1662
        %v1664 = vpop.f32.mrb[0].mxu0
        %v1665 = vadd.f32 0.0, %v1664
        %1666 = vmatprep.mubr.f32.mxu0 0.0
        %1667 = vmatmul.mubr.f32.gmra.mrb[0].mxu0 %v1477
        %v1668 = vpop.f32.mrb[0].mxu0
        %v1669 = vadd.f32 0.0, %v1668
        %v1670 = vpop.f32.mrb[0].mxu0
        %v1671 = vadd.f32 0.0, %v1670
        %1672 = vmatprep.mubr.f32.mxu0 0.0
        %1673 = vmatmul.mubr.f32.gmra.mrb[0].mxu0 %v1480
        %v1674 = vpop.f32.mrb[0].mxu0
        %v1675 = vadd.f32 0.0, %v1674
        %v1676 = vpop.f32.mrb[0].mxu0
        %v1677 = vadd.f32 0.0, %v1676
        %1678 = vmatprep.mubr.f32.mxu0 0.0
        %1679 = vmatmul.mubr.f32.gmra.mrb[0].mxu0 %v1483
        %v1680 = vpop.f32.mrb[0].mxu0
        %v1681 = vadd.f32 0.0, %v1680
        %v1682 = vpop.f32.mrb[0].mxu0
        %v1683 = vadd.f32 0.0, %v1682
        %1684 = vmatprep.mubr.f32.mxu0 0.0
        %1685 = vmatmul.mubr.f32.gmra.mrb[0].mxu0 %v1486
        %v1686 = vpop.f32.mrb[0].mxu0
        %v1687 = vadd.f32 0.0, %v1686
        %v1688 = vpop.f32.mrb[0].mxu0
        %v1689 = vadd.f32 0.0, %v1688
        %1690 = vmatprep.mubr.f32.mxu0 0.0
        %1691 = vmatmul.mubr.f32.gmra.mrb[0].mxu0 %v1489
        %v1692 = vpop.f32.mrb[0].mxu0
        %v1693 = vadd.f32 0.0, %v1692
        %v1694 = vpop.f32.mrb[0].mxu0
        %v1695 = vadd.f32 0.0, %v1694
        %1696 = vmatprep.mubr.f32.mxu0 0.0
        %1697 = vmatmul.mubr.f32.gmra.mrb[0].mxu0 %v1492
        %v1698 = vpop.f32.mrb[0].mxu0
        %v1699 = vadd.f32 0.0, %v1698
        %v1700 = vpop.f32.mrb[0].mxu0
        %v1701 = vadd.f32 0.0, %v1700
        %1702 = vmatprep.mubr.f32.mxu0 0.0
        %1703 = vmatmul.mubr.f32.gmra.mrb[0].mxu0 %v1495
        %v1704 = vpop.f32.mrb[0].mxu0
        %v1705 = vadd.f32 0.0, %v1704
        %v1706 = vpop.f32.mrb[0].mxu0
        %v1707 = vadd.f32 0.0, %v1706
        %1708 = vmatprep.mubr.f32.mxu0 0.0
        %1709 = vmatmul.mubr.f32.gmra.mrb[0].mxu0 %v1498
        %v1710 = vpop.f32.mrb[0].mxu0
        %v1711 = vadd.f32 0.0, %v1710
        %v1712 = vpop.f32.mrb[0].mxu0
        %v1713 = vadd.f32 0.0, %v1712
        %1714 = vmatprep.mubr.f32.mxu0 0.0
        %1715 = vmatmul.mubr.f32.gmra.mrb[0].mxu0 %v1501
        %v1716 = vpop.f32.mrb[0].mxu0
        %v1717 = vadd.f32 0.0, %v1716
        %v1718 = vpop.f32.mrb[0].mxu0
        %v1719 = vadd.f32 0.0, %v1718
        %1720 = vmatprep.mubr.f32.mxu0 0.0
        %1721 = vmatmul.mubr.f32.gmra.mrb[0].mxu0 %v1504
        %v1722 = vpop.f32.mrb[0].mxu0
        %v1723 = vadd.f32 0.0, %v1722
        %v1724 = vpop.f32.mrb[0].mxu0
        %v1725 = vadd.f32 0.0, %v1724
        %1726 = vmatprep.mubr.f32.mxu0 0.0
        %1727 = vmatmul.mubr.f32.gmra.mrb[0].mxu0 %v1507
        %v1728 = vpop.f32.mrb[0].mxu0
        %v1729 = vadd.f32 0.0, %v1728
        %v1730 = vpop.f32.mrb[0].mxu0
        %v1731 = vadd.f32 0.0, %v1730
        %1732 = vmatprep.mubr.f32.mxu0 0.0
        %1733 = vmatmul.mubr.f32.gmra.mrb[0].mxu0 %v1510
        %v1734 = vpop.f32.mrb[0].mxu0
        %v1735 = vadd.f32 0.0, %v1734
        %v1736 = vpop.f32.mrb[0].mxu0
        %v1737 = vadd.f32 0.0, %v1736
        %1738 = vmatprep.mubr.f32.mxu0 0.0
        %1739 = vmatmul.mubr.f32.gmra.mrb[0].mxu0 %v1513
        %v1740 = vpop.f32.mrb[0].mxu0
        %v1741 = vadd.f32 0.0, %v1740
        %v1742 = vpop.f32.mrb[0].mxu0
        %v1743 = vadd.f32 0.0, %v1742
        %1744 = vmatprep.mubr.f32.mxu0 0.0
        %1745 = vmatmul.mubr.f32.gmra.mrb[0].mxu0 %v1516
        %v1746 = vpop.f32.mrb[0].mxu0
        %v1747 = vadd.f32 0.0, %v1746
        %v1748 = vpop.f32.mrb[0].mxu0
        %v1749 = vadd.f32 0.0, %v1748
        %1750 = vdwg.mxu0
        %v1751 = vadd.f32 %v1341, %v1585
        %v1752 = vadd.f32 %v1342, %v1587
        %v1753 = vadd.f32 %v1343, %v1591
        %v1754 = vadd.f32 %v1344, %v1593
        %v1755 = vadd.f32 %v1345, %v1597
        %v1756 = vadd.f32 %v1346, %v1599
        %v1757 = vadd.f32 %v1347, %v1603
        %v1758 = vadd.f32 %v1348, %v1605
        %v1759 = vadd.f32 %v1349, %v1609
        %v1760 = vadd.f32 %v1350, %v1611
        %v1761 = vadd.f32 %v1351, %v1615
        %v1762 = vadd.f32 %v1352, %v1617
        %v1763 = vadd.f32 %v1353, %v1621
        %v1764 = vadd.f32 %v1354, %v1623
        %v1765 = vadd.f32 %v1355, %v1627
        %v1766 = vadd.f32 %v1356, %v1629
        %v1767 = vadd.f32 %v1357, %v1633
        %v1768 = vadd.f32 %v1358, %v1635
        %v1769 = vadd.f32 %v1359, %v1639
        %v1770 = vadd.f32 %v1360, %v1641
        %v1771 = vadd.f32 %v1361, %v1645
        %v1772 = vadd.f32 %v1362, %v1647
        %v1773 = vadd.f32 %v1363, %v1651
        %v1774 = vadd.f32 %v1364, %v1653
        %v1775 = vadd.f32 %v1365, %v1657
        %v1776 = vadd.f32 %v1366, %v1659
        %v1777 = vadd.f32 %v1367, %v1663
        %v1778 = vadd.f32 %v1368, %v1665
        %v1779 = vadd.f32 %v1369, %v1669
        %v1780 = vadd.f32 %v1370, %v1671
        %v1781 = vadd.f32 %v1371, %v1675
        %v1782 = vadd.f32 %v1372, %v1677
        %v1783 = vadd.f32 %v1373, %v1681
        %v1784 = vadd.f32 %v1374, %v1683
        %v1785 = vadd.f32 %v1375, %v1687
        %v1786 = vadd.f32 %v1376, %v1689
        %v1787 = vadd.f32 %v1377, %v1693
        %v1788 = vadd.f32 %v1378, %v1695
        %v1789 = vadd.f32 %v1379, %v1699
        %v1790 = vadd.f32 %v1380, %v1701
        %v1791 = vadd.f32 %v1381, %v1705
        %v1792 = vadd.f32 %v1382, %v1707
        %v1793 = vadd.f32 %v1383, %v1711
        %v1794 = vadd.f32 %v1384, %v1713
        %v1795 = vadd.f32 %v1385, %v1717
        %v1796 = vadd.f32 %v1386, %v1719
        %v1797 = vadd.f32 %v1387, %v1723
        %v1798 = vadd.f32 %v1388, %v1725
        %v1799 = vadd.f32 %v1389, %v1729
        %v1800 = vadd.f32 %v1390, %v1731
        %v1801 = vadd.f32 %v1391, %v1735
        %v1802 = vadd.f32 %v1392, %v1737
        %v1803 = vadd.f32 %v1393, %v1741
        %v1804 = vadd.f32 %v1394, %v1743
        %v1805 = vadd.f32 %v1395, %v1747
        %v1806 = vadd.f32 %v1396, %v1749
        %v1807 = vld [vmem:[%s385 + $0x20] sm:$0xff]
        %v1808 = vld [vmem:[%s385 + $0x28] sm:$0xff]
        %v1809 = vld [vmem:[%s385 + $0x30] sm:$0xff]
        %v1810 = vld [vmem:[%s385 + $0x38] sm:$0xff]
        %v1811 = vld [vmem:[%s385 + $0x40] sm:$0xff]
        %v1812 = vld [vmem:[%s385 + $0x48] sm:$0xff]
        %v1813 = vld [vmem:[%s385 + $0x50] sm:$0xff]
        %v1814 = vld [vmem:[%s385 + $0x58] sm:$0xff]
        %v1815 = vld [vmem:[%s385 + $0x60] sm:$0xff]
        %v1816 = vld [vmem:[%s385 + $0x68] sm:$0xff]
        %v1817 = vld [vmem:[%s385 + $0x70] sm:$0xff]
        %v1818 = vld [vmem:[%s385 + $0x78] sm:$0xff]
        %v1819 = vld [vmem:[%s385 + $0x80] sm:$0xff]
        %v1820 = vld [vmem:[%s385 + $0x88] sm:$0xff]
        %v1821 = vld [vmem:[%s385 + $0x90] sm:$0xff]
        %v1822 = vld [vmem:[%s385 + $0x98] sm:$0xff]
        %v1823 = vld [vmem:[%s385 + $0xa0] sm:$0xff]
        %v1824 = vld [vmem:[%s385 + $0xa8] sm:$0xff]
        %v1825 = vld [vmem:[%s385 + $0xb0] sm:$0xff]
        %v1826 = vld [vmem:[%s385 + $0xb8] sm:$0xff]
        %v1827 = vld [vmem:[%s385 + $0xc0] sm:$0xff]
        %v1828 = vld [vmem:[%s385 + $0xc8] sm:$0xff]
        %v1829 = vld [vmem:[%s385 + $0xd0] sm:$0xff]
        %v1830 = vld [vmem:[%s385 + $0xd8] sm:$0xff]
        %v1831 = vld [vmem:[%s385 + $0xe0] sm:$0xff]
        %v1832 = vld [vmem:[%s385 + $0xe8] sm:$0xff]
        %v1833 = vld [vmem:[%s385 + $0xf0] sm:$0xff]
        %v1834 = vld [vmem:[%s385 + $0xf8] sm:$0xff]
        %s1835 = scalar_lea.vmem %s1, 256
        %v1836 = vld [vmem:[%s1835] sm:$0xff]
        %v1837 = vld [vmem:[%s1835 + $0x8] sm:$0xff]
        %v1838 = vld [vmem:[%s1835 + $0x10] sm:$0xff]
        %v1839 = vld [vmem:[%s1835 + $0x18] sm:$0xff]
        %v1840 = vld [vmem:[%s1835 + $0x20] sm:$0xff]
        %v1841 = vld [vmem:[%s1835 + $0x28] sm:$0xff]
        %v1842 = vld [vmem:[%s1835 + $0x30] sm:$0xff]
        %v1843 = vld [vmem:[%s1835 + $0x38] sm:$0xff]
        %v1845 = vsel %vm433, %v1807, 0
        %v1848 = vsel %vm433, %v1808, 0
        %v1851 = vsel %vm433, %v1809, 0
        %v1854 = vsel %vm433, %v1810, 0
        %v1857 = vsel %vm433, %v1811, 0
        %v1860 = vsel %vm433, %v1812, 0
        %v1863 = vsel %vm433, %v1813, 0
        %v1866 = vsel %vm433, %v1814, 0
        %v1869 = vsel %vm433, %v1815, 0
        %v1872 = vsel %vm433, %v1816, 0
        %v1875 = vsel %vm433, %v1817, 0
        %v1878 = vsel %vm433, %v1818, 0
        %v1881 = vsel %vm433, %v1819, 0
        %v1884 = vsel %vm433, %v1820, 0
        %v1887 = vsel %vm433, %v1821, 0
        %v1890 = vsel %vm433, %v1822, 0
        %v1893 = vsel %vm433, %v1823, 0
        %v1896 = vsel %vm433, %v1824, 0
        %v1899 = vsel %vm433, %v1825, 0
        %v1902 = vsel %vm433, %v1826, 0
        %v1905 = vsel %vm433, %v1827, 0
        %v1908 = vsel %vm433, %v1828, 0
        %v1911 = vsel %vm433, %v1829, 0
        %v1914 = vsel %vm433, %v1830, 0
        %v1917 = vsel %vm433, %v1831, 0
        %v1920 = vsel %vm433, %v1832, 0
        %v1923 = vsel %vm433, %v1833, 0
        %v1926 = vsel %vm433, %v1834, 0
        %1928 = vmatprep.subr.mxu0 %v1837
        %1929 = vmatpush1.msra.mxu0 %v1836
        %1930 = vmatprep.subr.mxu0 %v1839
        %1931 = vmatpush1.msra.mxu0 %v1838
        %1932 = vmatprep.subr.mxu0 %v1841
        %1933 = vmatpush1.msra.mxu0 %v1840
        %1934 = vmatprep.subr.mxu0 %v1843
        %1935 = vmatpush1.msra.mxu0 %v1842
        %1936 = vmatprep.subr.mxu0 0.0
        %1937 = vmatpush1.msra.mxu0 0.0
        %1938 = vmatprep.subr.mxu0 0.0
        %1939 = vmatpush1.msra.mxu0 0.0
        %1940 = vmatprep.subr.mxu0 0.0
        %1941 = vmatpush1.msra.mxu0 0.0
        %1942 = vmatprep.subr.mxu0 0.0
        %1943 = vmatpush1.msra.mxu0 0.0
        %1944 = vmatprep.subr.mxu0 0.0
        %1945 = vmatpush1.msra.mxu0 0.0
        %1946 = vmatprep.subr.mxu0 0.0
        %1947 = vmatpush1.msra.mxu0 0.0
        %1948 = vmatprep.subr.mxu0 0.0
        %1949 = vmatpush1.msra.mxu0 0.0
        %1950 = vmatprep.subr.mxu0 0.0
        %1951 = vmatpush1.msra.mxu0 0.0
        %1952 = vmatprep.subr.mxu0 0.0
        %1953 = vmatpush1.msra.mxu0 0.0
        %1954 = vmatprep.subr.mxu0 0.0
        %1955 = vmatpush1.msra.mxu0 0.0
        %1956 = vmatprep.subr.mxu0 0.0
        %1957 = vmatpush1.msra.mxu0 0.0
        %1958 = vmatprep.subr.mxu0 0.0
        %1959 = vmatpush1.msra.mxu0 0.0
        %1960 = vmatprep.subr.mxu0 0.0
        %1961 = vmatpush1.msra.mxu0 0.0
        %1962 = vmatprep.subr.mxu0 0.0
        %1963 = vmatpush1.msra.mxu0 0.0
        %1964 = vmatprep.subr.mxu0 0.0
        %1965 = vmatpush1.msra.mxu0 0.0
        %1966 = vmatprep.subr.mxu0 0.0
        %1967 = vmatpush1.msra.mxu0 0.0
        %1968 = vmatprep.subr.mxu0 0.0
        %1969 = vmatpush1.msra.mxu0 0.0
        %1970 = vmatprep.subr.mxu0 0.0
        %1971 = vmatpush1.msra.mxu0 0.0
        %1972 = vmatprep.subr.mxu0 0.0
        %1973 = vmatpush1.msra.mxu0 0.0
        %1974 = vmatprep.subr.mxu0 0.0
        %1975 = vmatpush1.msra.mxu0 0.0
        %1976 = vmatprep.subr.mxu0 0.0
        %1977 = vmatpush1.msra.mxu0 0.0
        %1978 = vmatprep.subr.mxu0 0.0
        %1979 = vmatpush1.msra.mxu0 0.0
        %1980 = vmatprep.subr.mxu0 0.0
        %1981 = vmatpush1.msra.mxu0 0.0
        %1982 = vmatprep.subr.mxu0 0.0
        %1983 = vmatpush1.msra.mxu0 0.0
        %1984 = vmatprep.subr.mxu0 0.0
        %1985 = vmatpush1.msra.mxu0 0.0
        %1986 = vmatprep.subr.mxu0 0.0
        %1987 = vmatpush1.msra.mxu0 0.0
        %1988 = vmatprep.subr.mxu0 0.0
        %1989 = vmatpush1.msra.mxu0 0.0
        %1990 = vmatprep.subr.mxu0 0.0
        %1991 = vmatpush1.msra.mxu0 0.0
        %1992 = vmatprep.mubr.f32.mxu0 0.0
        %1993 = vmatmul.mubr.f32.gmra.mrb[0].mxu0 %v1845
        %v1994 = vpop.f32.mrb[0].mxu0
        %v1995 = vadd.f32 0.0, %v1994
        %v1996 = vpop.f32.mrb[0].mxu0
        %v1997 = vadd.f32 0.0, %v1996
        %1998 = vmatprep.mubr.f32.mxu0 0.0
        %1999 = vmatmul.mubr.f32.gmra.mrb[0].mxu0 %v1848
        %v2000 = vpop.f32.mrb[0].mxu0
        %v2001 = vadd.f32 0.0, %v2000
        %v2002 = vpop.f32.mrb[0].mxu0
        %v2003 = vadd.f32 0.0, %v2002
        %2004 = vmatprep.mubr.f32.mxu0 0.0
        %2005 = vmatmul.mubr.f32.gmra.mrb[0].mxu0 %v1851
        %v2006 = vpop.f32.mrb[0].mxu0
        %v2007 = vadd.f32 0.0, %v2006
        %v2008 = vpop.f32.mrb[0].mxu0
        %v2009 = vadd.f32 0.0, %v2008
        %2010 = vmatprep.mubr.f32.mxu0 0.0
        %2011 = vmatmul.mubr.f32.gmra.mrb[0].mxu0 %v1854
        %v2012 = vpop.f32.mrb[0].mxu0
        %v2013 = vadd.f32 0.0, %v2012
        %v2014 = vpop.f32.mrb[0].mxu0
        %v2015 = vadd.f32 0.0, %v2014
        %2016 = vmatprep.mubr.f32.mxu0 0.0
        %2017 = vmatmul.mubr.f32.gmra.mrb[0].mxu0 %v1857
        %v2018 = vpop.f32.mrb[0].mxu0
        %v2019 = vadd.f32 0.0, %v2018
        %v2020 = vpop.f32.mrb[0].mxu0
        %v2021 = vadd.f32 0.0, %v2020
        %2022 = vmatprep.mubr.f32.mxu0 0.0
        %2023 = vmatmul.mubr.f32.gmra.mrb[0].mxu0 %v1860
        %v2024 = vpop.f32.mrb[0].mxu0
        %v2025 = vadd.f32 0.0, %v2024
        %v2026 = vpop.f32.mrb[0].mxu0
        %v2027 = vadd.f32 0.0, %v2026
        %2028 = vmatprep.mubr.f32.mxu0 0.0
        %2029 = vmatmul.mubr.f32.gmra.mrb[0].mxu0 %v1863
        %v2030 = vpop.f32.mrb[0].mxu0
        %v2031 = vadd.f32 0.0, %v2030
        %v2032 = vpop.f32.mrb[0].mxu0
        %v2033 = vadd.f32 0.0, %v2032
        %2034 = vmatprep.mubr.f32.mxu0 0.0
        %2035 = vmatmul.mubr.f32.gmra.mrb[0].mxu0 %v1866
        %v2036 = vpop.f32.mrb[0].mxu0
        %v2037 = vadd.f32 0.0, %v2036
        %v2038 = vpop.f32.mrb[0].mxu0
        %v2039 = vadd.f32 0.0, %v2038
        %2040 = vmatprep.mubr.f32.mxu0 0.0
        %2041 = vmatmul.mubr.f32.gmra.mrb[0].mxu0 %v1869
        %v2042 = vpop.f32.mrb[0].mxu0
        %v2043 = vadd.f32 0.0, %v2042
        %v2044 = vpop.f32.mrb[0].mxu0
        %v2045 = vadd.f32 0.0, %v2044
        %2046 = vmatprep.mubr.f32.mxu0 0.0
        %2047 = vmatmul.mubr.f32.gmra.mrb[0].mxu0 %v1872
        %v2048 = vpop.f32.mrb[0].mxu0
        %v2049 = vadd.f32 0.0, %v2048
        %v2050 = vpop.f32.mrb[0].mxu0
        %v2051 = vadd.f32 0.0, %v2050
        %2052 = vmatprep.mubr.f32.mxu0 0.0
        %2053 = vmatmul.mubr.f32.gmra.mrb[0].mxu0 %v1875
        %v2054 = vpop.f32.mrb[0].mxu0
        %v2055 = vadd.f32 0.0, %v2054
        %v2056 = vpop.f32.mrb[0].mxu0
        %v2057 = vadd.f32 0.0, %v2056
        %2058 = vmatprep.mubr.f32.mxu0 0.0
        %2059 = vmatmul.mubr.f32.gmra.mrb[0].mxu0 %v1878
        %v2060 = vpop.f32.mrb[0].mxu0
        %v2061 = vadd.f32 0.0, %v2060
        %v2062 = vpop.f32.mrb[0].mxu0
        %v2063 = vadd.f32 0.0, %v2062
        %2064 = vmatprep.mubr.f32.mxu0 0.0
        %2065 = vmatmul.mubr.f32.gmra.mrb[0].mxu0 %v1881
        %v2066 = vpop.f32.mrb[0].mxu0
        %v2067 = vadd.f32 0.0, %v2066
        %v2068 = vpop.f32.mrb[0].mxu0
        %v2069 = vadd.f32 0.0, %v2068
        %2070 = vmatprep.mubr.f32.mxu0 0.0
        %2071 = vmatmul.mubr.f32.gmra.mrb[0].mxu0 %v1884
        %v2072 = vpop.f32.mrb[0].mxu0
        %v2073 = vadd.f32 0.0, %v2072
        %v2074 = vpop.f32.mrb[0].mxu0
        %v2075 = vadd.f32 0.0, %v2074
        %2076 = vmatprep.mubr.f32.mxu0 0.0
        %2077 = vmatmul.mubr.f32.gmra.mrb[0].mxu0 %v1887
        %v2078 = vpop.f32.mrb[0].mxu0
        %v2079 = vadd.f32 0.0, %v2078
        %v2080 = vpop.f32.mrb[0].mxu0
        %v2081 = vadd.f32 0.0, %v2080
        %2082 = vmatprep.mubr.f32.mxu0 0.0
        %2083 = vmatmul.mubr.f32.gmra.mrb[0].mxu0 %v1890
        %v2084 = vpop.f32.mrb[0].mxu0
        %v2085 = vadd.f32 0.0, %v2084
        %v2086 = vpop.f32.mrb[0].mxu0
        %v2087 = vadd.f32 0.0, %v2086
        %2088 = vmatprep.mubr.f32.mxu0 0.0
        %2089 = vmatmul.mubr.f32.gmra.mrb[0].mxu0 %v1893
        %v2090 = vpop.f32.mrb[0].mxu0
        %v2091 = vadd.f32 0.0, %v2090
        %v2092 = vpop.f32.mrb[0].mxu0
        %v2093 = vadd.f32 0.0, %v2092
        %2094 = vmatprep.mubr.f32.mxu0 0.0
        %2095 = vmatmul.mubr.f32.gmra.mrb[0].mxu0 %v1896
        %v2096 = vpop.f32.mrb[0].mxu0
        %v2097 = vadd.f32 0.0, %v2096
        %v2098 = vpop.f32.mrb[0].mxu0
        %v2099 = vadd.f32 0.0, %v2098
        %2100 = vmatprep.mubr.f32.mxu0 0.0
        %2101 = vmatmul.mubr.f32.gmra.mrb[0].mxu0 %v1899
        %v2102 = vpop.f32.mrb[0].mxu0
        %v2103 = vadd.f32 0.0, %v2102
        %v2104 = vpop.f32.mrb[0].mxu0
        %v2105 = vadd.f32 0.0, %v2104
        %2106 = vmatprep.mubr.f32.mxu0 0.0
        %2107 = vmatmul.mubr.f32.gmra.mrb[0].mxu0 %v1902
        %v2108 = vpop.f32.mrb[0].mxu0
        %v2109 = vadd.f32 0.0, %v2108
        %v2110 = vpop.f32.mrb[0].mxu0
        %v2111 = vadd.f32 0.0, %v2110
        %2112 = vmatprep.mubr.f32.mxu0 0.0
        %2113 = vmatmul.mubr.f32.gmra.mrb[0].mxu0 %v1905
        %v2114 = vpop.f32.mrb[0].mxu0
        %v2115 = vadd.f32 0.0, %v2114
        %v2116 = vpop.f32.mrb[0].mxu0
        %v2117 = vadd.f32 0.0, %v2116
        %2118 = vmatprep.mubr.f32.mxu0 0.0
        %2119 = vmatmul.mubr.f32.gmra.mrb[0].mxu0 %v1908
        %v2120 = vpop.f32.mrb[0].mxu0
        %v2121 = vadd.f32 0.0, %v2120
        %v2122 = vpop.f32.mrb[0].mxu0
        %v2123 = vadd.f32 0.0, %v2122
        %2124 = vmatprep.mubr.f32.mxu0 0.0
        %2125 = vmatmul.mubr.f32.gmra.mrb[0].mxu0 %v1911
        %v2126 = vpop.f32.mrb[0].mxu0
        %v2127 = vadd.f32 0.0, %v2126
        %v2128 = vpop.f32.mrb[0].mxu0
        %v2129 = vadd.f32 0.0, %v2128
        %2130 = vmatprep.mubr.f32.mxu0 0.0
        %2131 = vmatmul.mubr.f32.gmra.mrb[0].mxu0 %v1914
        %v2132 = vpop.f32.mrb[0].mxu0
        %v2133 = vadd.f32 0.0, %v2132
        %v2134 = vpop.f32.mrb[0].mxu0
        %v2135 = vadd.f32 0.0, %v2134
        %2136 = vmatprep.mubr.f32.mxu0 0.0
        %2137 = vmatmul.mubr.f32.gmra.mrb[0].mxu0 %v1917
        %v2138 = vpop.f32.mrb[0].mxu0
        %v2139 = vadd.f32 0.0, %v2138
        %v2140 = vpop.f32.mrb[0].mxu0
        %v2141 = vadd.f32 0.0, %v2140
        %2142 = vmatprep.mubr.f32.mxu0 0.0
        %2143 = vmatmul.mubr.f32.gmra.mrb[0].mxu0 %v1920
        %v2144 = vpop.f32.mrb[0].mxu0
        %v2145 = vadd.f32 0.0, %v2144
        %v2146 = vpop.f32.mrb[0].mxu0
        %v2147 = vadd.f32 0.0, %v2146
        %2148 = vmatprep.mubr.f32.mxu0 0.0
        %2149 = vmatmul.mubr.f32.gmra.mrb[0].mxu0 %v1923
        %v2150 = vpop.f32.mrb[0].mxu0
        %v2151 = vadd.f32 0.0, %v2150
        %v2152 = vpop.f32.mrb[0].mxu0
        %v2153 = vadd.f32 0.0, %v2152
        %2154 = vmatprep.mubr.f32.mxu0 0.0
        %2155 = vmatmul.mubr.f32.gmra.mrb[0].mxu0 %v1926
        %v2156 = vpop.f32.mrb[0].mxu0
        %v2157 = vadd.f32 0.0, %v2156
        %v2158 = vpop.f32.mrb[0].mxu0
        %v2159 = vadd.f32 0.0, %v2158
        %2160 = vdwg.mxu0
        %v2161 = vadd.f32 %v1751, %v1995
        %v2162 = vadd.f32 %v1752, %v1997
        %v2163 = vadd.f32 %v1753, %v2001
        %v2164 = vadd.f32 %v1754, %v2003
        %v2165 = vadd.f32 %v1755, %v2007
        %v2166 = vadd.f32 %v1756, %v2009
        %v2167 = vadd.f32 %v1757, %v2013
        %v2168 = vadd.f32 %v1758, %v2015
        %v2169 = vadd.f32 %v1759, %v2019
        %v2170 = vadd.f32 %v1760, %v2021
        %v2171 = vadd.f32 %v1761, %v2025
        %v2172 = vadd.f32 %v1762, %v2027
        %v2173 = vadd.f32 %v1763, %v2031
        %v2174 = vadd.f32 %v1764, %v2033
        %v2175 = vadd.f32 %v1765, %v2037
        %v2176 = vadd.f32 %v1766, %v2039
        %v2177 = vadd.f32 %v1767, %v2043
        %v2178 = vadd.f32 %v1768, %v2045
        %v2179 = vadd.f32 %v1769, %v2049
        %v2180 = vadd.f32 %v1770, %v2051
        %v2181 = vadd.f32 %v1771, %v2055
        %v2182 = vadd.f32 %v1772, %v2057
        %v2183 = vadd.f32 %v1773, %v2061
        %v2184 = vadd.f32 %v1774, %v2063
        %v2185 = vadd.f32 %v1775, %v2067
        %v2186 = vadd.f32 %v1776, %v2069
        %v2187 = vadd.f32 %v1777, %v2073
        %v2188 = vadd.f32 %v1778, %v2075
        %v2189 = vadd.f32 %v1779, %v2079
        %v2190 = vadd.f32 %v1780, %v2081
        %v2191 = vadd.f32 %v1781, %v2085
        %v2192 = vadd.f32 %v1782, %v2087
        %v2193 = vadd.f32 %v1783, %v2091
        %v2194 = vadd.f32 %v1784, %v2093
        %v2195 = vadd.f32 %v1785, %v2097
        %v2196 = vadd.f32 %v1786, %v2099
        %v2197 = vadd.f32 %v1787, %v2103
        %v2198 = vadd.f32 %v1788, %v2105
        %v2199 = vadd.f32 %v1789, %v2109
        %v2200 = vadd.f32 %v1790, %v2111
        %v2201 = vadd.f32 %v1791, %v2115
        %v2202 = vadd.f32 %v1792, %v2117
        %v2203 = vadd.f32 %v1793, %v2121
        %v2204 = vadd.f32 %v1794, %v2123
        %v2205 = vadd.f32 %v1795, %v2127
        %v2206 = vadd.f32 %v1796, %v2129
        %v2207 = vadd.f32 %v1797, %v2133
        %v2208 = vadd.f32 %v1798, %v2135
        %v2209 = vadd.f32 %v1799, %v2139
        %v2210 = vadd.f32 %v1800, %v2141
        %v2211 = vadd.f32 %v1801, %v2145
        %v2212 = vadd.f32 %v1802, %v2147
        %v2213 = vadd.f32 %v1803, %v2151
        %v2214 = vadd.f32 %v1804, %v2153
        %v2215 = vadd.f32 %v1805, %v2157
        %v2216 = vadd.f32 %v1806, %v2159
        %v2217 = vld [vmem:[%s2] sm:$0x3]
        %v2219 = vlaneseq
        %v2220 = vshrl.u32 %v2219, 7
        %v2221 = vsub.s32 0, %v2220
        %v2222 = vrot.slane %v2217, %v2221
        %v2223 = vlaneseq
        %v2224 = vshrl.u32 %v2223, 7
        %v2225 = vsub.s32 1, %v2224
        %v2226 = vrot.slane %v2217, %v2225
        %v2229 = vadd.f32 %v2161, %v2222
        %v2230 = vadd.f32 %v2162, %v2226
        %v2231 = vadd.f32 %v2163, %v2222
        %v2232 = vadd.f32 %v2164, %v2226
        %v2233 = vadd.f32 %v2165, %v2222
        %v2234 = vadd.f32 %v2166, %v2226
        %v2235 = vadd.f32 %v2167, %v2222
        %v2236 = vadd.f32 %v2168, %v2226
        %v2237 = vadd.f32 %v2169, %v2222
        %v2238 = vadd.f32 %v2170, %v2226
        %v2239 = vadd.f32 %v2171, %v2222
        %v2240 = vadd.f32 %v2172, %v2226
        %v2241 = vadd.f32 %v2173, %v2222
        %v2242 = vadd.f32 %v2174, %v2226
        %v2243 = vadd.f32 %v2175, %v2222
        %v2244 = vadd.f32 %v2176, %v2226
        %v2245 = vadd.f32 %v2177, %v2222
        %v2246 = vadd.f32 %v2178, %v2226
        %v2247 = vadd.f32 %v2179, %v2222
        %v2248 = vadd.f32 %v2180, %v2226
        %v2249 = vadd.f32 %v2181, %v2222
        %v2250 = vadd.f32 %v2182, %v2226
        %v2251 = vadd.f32 %v2183, %v2222
        %v2252 = vadd.f32 %v2184, %v2226
        %v2253 = vadd.f32 %v2185, %v2222
        %v2254 = vadd.f32 %v2186, %v2226
        %v2255 = vadd.f32 %v2187, %v2222
        %v2256 = vadd.f32 %v2188, %v2226
        %v2257 = vadd.f32 %v2189, %v2222
        %v2258 = vadd.f32 %v2190, %v2226
        %v2259 = vadd.f32 %v2191, %v2222
        %v2260 = vadd.f32 %v2192, %v2226
        %v2261 = vadd.f32 %v2193, %v2222
        %v2262 = vadd.f32 %v2194, %v2226
        %v2263 = vadd.f32 %v2195, %v2222
        %v2264 = vadd.f32 %v2196, %v2226
        %v2265 = vadd.f32 %v2197, %v2222
        %v2266 = vadd.f32 %v2198, %v2226
        %v2267 = vadd.f32 %v2199, %v2222
        %v2268 = vadd.f32 %v2200, %v2226
        %v2269 = vadd.f32 %v2201, %v2222
        %v2270 = vadd.f32 %v2202, %v2226
        %v2271 = vadd.f32 %v2203, %v2222
        %v2272 = vadd.f32 %v2204, %v2226
        %v2273 = vadd.f32 %v2205, %v2222
        %v2274 = vadd.f32 %v2206, %v2226
        %v2275 = vadd.f32 %v2207, %v2222
        %v2276 = vadd.f32 %v2208, %v2226
        %v2277 = vadd.f32 %v2209, %v2222
        %v2278 = vadd.f32 %v2210, %v2226
        %v2279 = vadd.f32 %v2211, %v2222
        %v2280 = vadd.f32 %v2212, %v2226
        %v2281 = vadd.f32 %v2213, %v2222
        %v2282 = vadd.f32 %v2214, %v2226
        %v2283 = vadd.f32 %v2215, %v2222
        %v2284 = vadd.f32 %v2216, %v2226
        %v2285 = vtanh.pop %v2229
        %v2286 = vtanh.pop %v2230
        %v2287 = vtanh.pop %v2231
        %v2288 = vtanh.pop %v2232
        %v2289 = vtanh.pop %v2233
        %v2290 = vtanh.pop %v2234
        %v2291 = vtanh.pop %v2235
        %v2292 = vtanh.pop %v2236
        %v2293 = vtanh.pop %v2237
        %v2294 = vtanh.pop %v2238
        %v2295 = vtanh.pop %v2239
        %v2296 = vtanh.pop %v2240
        %v2297 = vtanh.pop %v2241
        %v2298 = vtanh.pop %v2242
        %v2299 = vtanh.pop %v2243
        %v2300 = vtanh.pop %v2244
        %v2301 = vtanh.pop %v2245
        %v2302 = vtanh.pop %v2246
        %v2303 = vtanh.pop %v2247
        %v2304 = vtanh.pop %v2248
        %v2305 = vtanh.pop %v2249
        %v2306 = vtanh.pop %v2250
        %v2307 = vtanh.pop %v2251
        %v2308 = vtanh.pop %v2252
        %v2309 = vtanh.pop %v2253
        %v2310 = vtanh.pop %v2254
        %v2311 = vtanh.pop %v2255
        %v2312 = vtanh.pop %v2256
        %v2313 = vtanh.pop %v2257
        %v2314 = vtanh.pop %v2258
        %v2315 = vtanh.pop %v2259
        %v2316 = vtanh.pop %v2260
        %v2317 = vtanh.pop %v2261
        %v2318 = vtanh.pop %v2262
        %v2319 = vtanh.pop %v2263
        %v2320 = vtanh.pop %v2264
        %v2321 = vtanh.pop %v2265
        %v2322 = vtanh.pop %v2266
        %v2323 = vtanh.pop %v2267
        %v2324 = vtanh.pop %v2268
        %v2325 = vtanh.pop %v2269
        %v2326 = vtanh.pop %v2270
        %v2327 = vtanh.pop %v2271
        %v2328 = vtanh.pop %v2272
        %v2329 = vtanh.pop %v2273
        %v2330 = vtanh.pop %v2274
        %v2331 = vtanh.pop %v2275
        %v2332 = vtanh.pop %v2276
        %v2333 = vtanh.pop %v2277
        %v2334 = vtanh.pop %v2278
        %v2335 = vtanh.pop %v2279
        %v2336 = vtanh.pop %v2280
        %v2337 = vtanh.pop %v2281
        %v2338 = vtanh.pop %v2282
        %v2339 = vtanh.pop %v2283
        %v2340 = vtanh.pop %v2284
        %2341 = vst [vmem:[#allocation2] sm:$0xff] %v2285
        %vm2342 = vcmask 326656
        %2343 = vst.msk [vmem:[#allocation2 + $0x8] sm:$0xff] %vm2342, %v2286
        %2344 = vst [vmem:[#allocation2 + $0x10] sm:$0xff] %v2287
        %2345 = vst.msk [vmem:[#allocation2 + $0x18] sm:$0xff] %vm2342, %v2288
        %2346 = vst [vmem:[#allocation2 + $0x20] sm:$0xff] %v2289
        %2347 = vst.msk [vmem:[#allocation2 + $0x28] sm:$0xff] %vm2342, %v2290
        %2348 = vst [vmem:[#allocation2 + $0x30] sm:$0xff] %v2291
        %2349 = vst.msk [vmem:[#allocation2 + $0x38] sm:$0xff] %vm2342, %v2292
        %2350 = vst [vmem:[#allocation2 + $0x40] sm:$0xff] %v2293
        %2351 = vst.msk [vmem:[#allocation2 + $0x48] sm:$0xff] %vm2342, %v2294
        %2352 = vst [vmem:[#allocation2 + $0x50] sm:$0xff] %v2295
        %2353 = vst.msk [vmem:[#allocation2 + $0x58] sm:$0xff] %vm2342, %v2296
        %2354 = vst [vmem:[#allocation2 + $0x60] sm:$0xff] %v2297
        %2355 = vst.msk [vmem:[#allocation2 + $0x68] sm:$0xff] %vm2342, %v2298
        %2356 = vst [vmem:[#allocation2 + $0x70] sm:$0xff] %v2299
        %2357 = vst.msk [vmem:[#allocation2 + $0x78] sm:$0xff] %vm2342, %v2300
        %2358 = vst [vmem:[#allocation2 + $0x80] sm:$0xff] %v2301
        %2359 = vst.msk [vmem:[#allocation2 + $0x88] sm:$0xff] %vm2342, %v2302
        %2360 = vst [vmem:[#allocation2 + $0x90] sm:$0xff] %v2303
        %2361 = vst.msk [vmem:[#allocation2 + $0x98] sm:$0xff] %vm2342, %v2304
        %2362 = vst [vmem:[#allocation2 + $0xa0] sm:$0xff] %v2305
        %2363 = vst.msk [vmem:[#allocation2 + $0xa8] sm:$0xff] %vm2342, %v2306
        %2364 = vst [vmem:[#allocation2 + $0xb0] sm:$0xff] %v2307
        %2365 = vst.msk [vmem:[#allocation2 + $0xb8] sm:$0xff] %vm2342, %v2308
        %2366 = vst [vmem:[#allocation2 + $0xc0] sm:$0xff] %v2309
        %2367 = vst.msk [vmem:[#allocation2 + $0xc8] sm:$0xff] %vm2342, %v2310
        %2368 = vst [vmem:[#allocation2 + $0xd0] sm:$0xff] %v2311
        %2369 = vst.msk [vmem:[#allocation2 + $0xd8] sm:$0xff] %vm2342, %v2312
        %2370 = vst [vmem:[#allocation2 + $0xe0] sm:$0xff] %v2313
        %2371 = vst.msk [vmem:[#allocation2 + $0xe8] sm:$0xff] %vm2342, %v2314
        %2372 = vst [vmem:[#allocation2 + $0xf0] sm:$0xff] %v2315
        %2373 = vst.msk [vmem:[#allocation2 + $0xf8] sm:$0xff] %vm2342, %v2316
        %2374 = vst [vmem:[#allocation2 + $0x100] sm:$0xff] %v2317
        %2375 = vst.msk [vmem:[#allocation2 + $0x108] sm:$0xff] %vm2342, %v2318
        %2376 = vst [vmem:[#allocation2 + $0x110] sm:$0xff] %v2319
        %2377 = vst.msk [vmem:[#allocation2 + $0x118] sm:$0xff] %vm2342, %v2320
        %2378 = vst [vmem:[#allocation2 + $0x120] sm:$0xff] %v2321
        %2379 = vst.msk [vmem:[#allocation2 + $0x128] sm:$0xff] %vm2342, %v2322
        %2380 = vst [vmem:[#allocation2 + $0x130] sm:$0xff] %v2323
        %2381 = vst.msk [vmem:[#allocation2 + $0x138] sm:$0xff] %vm2342, %v2324
        %2382 = vst [vmem:[#allocation2 + $0x140] sm:$0xff] %v2325
        %2383 = vst.msk [vmem:[#allocation2 + $0x148] sm:$0xff] %vm2342, %v2326
        %2384 = vst [vmem:[#allocation2 + $0x150] sm:$0xff] %v2327
        %2385 = vst.msk [vmem:[#allocation2 + $0x158] sm:$0xff] %vm2342, %v2328
        %2386 = vst [vmem:[#allocation2 + $0x160] sm:$0xff] %v2329
        %2387 = vst.msk [vmem:[#allocation2 + $0x168] sm:$0xff] %vm2342, %v2330
        %2388 = vst [vmem:[#allocation2 + $0x170] sm:$0xff] %v2331
        %2389 = vst.msk [vmem:[#allocation2 + $0x178] sm:$0xff] %vm2342, %v2332
        %2390 = vst [vmem:[#allocation2 + $0x180] sm:$0xff] %v2333
        %2391 = vst.msk [vmem:[#allocation2 + $0x188] sm:$0xff] %vm2342, %v2334
        %2392 = vst [vmem:[#allocation2 + $0x190] sm:$0xff] %v2335
        %2393 = vst.msk [vmem:[#allocation2 + $0x198] sm:$0xff] %vm2342, %v2336
        %2394 = vst [vmem:[#allocation2 + $0x1a0] sm:$0xff] %v2337
        %2395 = vst.msk [vmem:[#allocation2 + $0x1a8] sm:$0xff] %vm2342, %v2338
        %2396 = vst [vmem:[#allocation2 + $0x1b0] sm:$0xff] %v2339
        %2397 = vst.msk [vmem:[#allocation2 + $0x1b8] sm:$0xff] %vm2342, %v2340
        %v2398 = vld [vmem:[#allocation2] sm:$0xff]
        %v2399 = vld [vmem:[#allocation2 + $0x8] sm:$0xff]
        %v2400 = vld [vmem:[#allocation2 + $0x10] sm:$0xff]
        %v2401 = vld [vmem:[#allocation2 + $0x18] sm:$0xff]
        %v2402 = vld [vmem:[#allocation2 + $0x20] sm:$0xff]
        %v2403 = vld [vmem:[#allocation2 + $0x28] sm:$0xff]
        %v2404 = vld [vmem:[#allocation2 + $0x30] sm:$0xff]
        %v2405 = vld [vmem:[#allocation2 + $0x38] sm:$0xff]
        %v2406 = vld [vmem:[#allocation2 + $0x40] sm:$0xff]
        %v2407 = vld [vmem:[#allocation2 + $0x48] sm:$0xff]
        %v2408 = vld [vmem:[#allocation2 + $0x50] sm:$0xff]
        %v2409 = vld [vmem:[#allocation2 + $0x58] sm:$0xff]
        %v2410 = vld [vmem:[#allocation2 + $0x60] sm:$0xff]
        %v2411 = vld [vmem:[#allocation2 + $0x68] sm:$0xff]
        %v2412 = vld [vmem:[#allocation2 + $0x70] sm:$0xff]
        %v2413 = vld [vmem:[#allocation2 + $0x78] sm:$0xff]
        %v2414 = vld [vmem:[#allocation2 + $0x80] sm:$0xff]
        %v2415 = vld [vmem:[#allocation2 + $0x88] sm:$0xff]
        %v2416 = vld [vmem:[#allocation2 + $0x90] sm:$0xff]
        %v2417 = vld [vmem:[#allocation2 + $0x98] sm:$0xff]
        %v2418 = vld [vmem:[#allocation2 + $0xa0] sm:$0xff]
        %v2419 = vld [vmem:[#allocation2 + $0xa8] sm:$0xff]
        %v2420 = vld [vmem:[#allocation2 + $0xb0] sm:$0xff]
        %v2421 = vld [vmem:[#allocation2 + $0xb8] sm:$0xff]
        %v2422 = vld [vmem:[#allocation2 + $0xc0] sm:$0xff]
        %v2423 = vld [vmem:[#allocation2 + $0xc8] sm:$0xff]
        %v2424 = vld [vmem:[#allocation2 + $0xd0] sm:$0xff]
        %v2425 = vld [vmem:[#allocation2 + $0xd8] sm:$0xff]
        %v2426 = vld [vmem:[#allocation2 + $0xe0] sm:$0xff]
        %v2427 = vld [vmem:[#allocation2 + $0xe8] sm:$0xff]
        %v2428 = vld [vmem:[#allocation2 + $0xf0] sm:$0xff]
        %v2429 = vld [vmem:[#allocation2 + $0xf8] sm:$0xff]
        %v2430 = vld [vmem:[#allocation2 + $0x100] sm:$0xff]
        %v2431 = vld [vmem:[#allocation2 + $0x108] sm:$0xff]
        %v2432 = vld [vmem:[#allocation2 + $0x110] sm:$0xff]
        %v2433 = vld [vmem:[#allocation2 + $0x118] sm:$0xff]
        %v2434 = vld [vmem:[#allocation2 + $0x120] sm:$0xff]
        %v2435 = vld [vmem:[#allocation2 + $0x128] sm:$0xff]
        %v2436 = vld [vmem:[%s3] sm:$0xff]
        %v2437 = vld [vmem:[%s3 + $0x8] sm:$0xff]
        %v2438 = vld [vmem:[%s3 + $0x10] sm:$0xff]
        %v2439 = vld [vmem:[%s3 + $0x18] sm:$0xff]
        %v2440 = vld [vmem:[%s3 + $0x20] sm:$0xff]
        %v2441 = vld [vmem:[%s3 + $0x28] sm:$0xff]
        %v2442 = vld [vmem:[%s3 + $0x30] sm:$0xff]
        %v2443 = vld [vmem:[%s3 + $0x38] sm:$0xff]
        %v2444 = vld [vmem:[%s3 + $0x40] sm:$0xff]
        %v2445 = vld [vmem:[%s3 + $0x48] sm:$0xff]
        %v2446 = vld [vmem:[%s3 + $0x50] sm:$0xff]
        %v2447 = vld [vmem:[%s3 + $0x58] sm:$0xff]
        %v2448 = vld [vmem:[%s3 + $0x60] sm:$0xff]
        %v2449 = vld [vmem:[%s3 + $0x68] sm:$0xff]
        %v2450 = vld [vmem:[%s3 + $0x70] sm:$0xff]
        %v2451 = vld [vmem:[%s3 + $0x78] sm:$0xff]
        %v2452 = vld [vmem:[%s3 + $0x80] sm:$0xff]
        %v2453 = vld [vmem:[%s3 + $0x88] sm:$0xff]
        %v2454 = vld [vmem:[%s3 + $0x90] sm:$0xff]
        %v2455 = vld [vmem:[%s3 + $0x98] sm:$0xff]
        %v2456 = vld [vmem:[%s3 + $0xa0] sm:$0xff]
        %v2457 = vld [vmem:[%s3 + $0xa8] sm:$0xff]
        %v2458 = vld [vmem:[%s3 + $0xb0] sm:$0xff]
        %v2459 = vld [vmem:[%s3 + $0xb8] sm:$0xff]
        %v2460 = vld [vmem:[%s3 + $0xc0] sm:$0xff]
        %v2461 = vld [vmem:[%s3 + $0xc8] sm:$0xff]
        %v2462 = vld [vmem:[%s3 + $0xd0] sm:$0xff]
        %v2463 = vld [vmem:[%s3 + $0xd8] sm:$0xff]
        %v2464 = vld [vmem:[%s3 + $0xe0] sm:$0xff]
        %v2465 = vld [vmem:[%s3 + $0xe8] sm:$0xff]
        %v2466 = vld [vmem:[%s3 + $0xf0] sm:$0xff]
        %v2467 = vld [vmem:[%s3 + $0xf8] sm:$0xff]
        %v2468 = vld [vmem:[%s3 + $0x100] sm:$0xff]
        %v2469 = vld [vmem:[%s3 + $0x108] sm:$0xff]
        %v2470 = vld [vmem:[%s3 + $0x110] sm:$0xff]
        %v2471 = vld [vmem:[%s3 + $0x118] sm:$0xff]
        %v2472 = vld [vmem:[%s3 + $0x120] sm:$0xff]
        %v2473 = vld [vmem:[%s3 + $0x128] sm:$0xff]
        %v2474 = vld [vmem:[%s3 + $0x130] sm:$0xff]
        %v2475 = vld [vmem:[%s3 + $0x138] sm:$0xff]
        %v2476 = vld [vmem:[%s3 + $0x140] sm:$0xff]
        %v2477 = vld [vmem:[%s3 + $0x148] sm:$0xff]
        %v2478 = vld [vmem:[#allocation2 + $0x130] sm:$0xff]
        %v2479 = vld [vmem:[#allocation2 + $0x138] sm:$0xff]
        %s2480 = scalar_lea.vmem %s3, 336
        %v2481 = vld [vmem:[%s2480] sm:$0xff]
        %v2482 = vld [vmem:[%s2480 + $0x8] sm:$0xff]
        %v2483 = vld [vmem:[%s2480 + $0x10] sm:$0xff]
        %v2484 = vld [vmem:[%s2480 + $0x18] sm:$0xff]
        %v2485 = vld [vmem:[%s2480 + $0x20] sm:$0xff]
        %v2486 = vld [vmem:[%s2480 + $0x28] sm:$0xff]
        %v2487 = vld [vmem:[%s2480 + $0x30] sm:$0xff]
        %v2488 = vld [vmem:[%s2480 + $0x38] sm:$0xff]
        %v2489 = vld [vmem:[%s2480 + $0x40] sm:$0xff]
        %v2490 = vld [vmem:[%s2480 + $0x48] sm:$0xff]
        %v2491 = vld [vmem:[%s2480 + $0x50] sm:$0xff]
        %v2492 = vld [vmem:[%s2480 + $0x58] sm:$0xff]
        %v2493 = vld [vmem:[%s2480 + $0x60] sm:$0xff]
        %v2494 = vld [vmem:[%s2480 + $0x68] sm:$0xff]
        %v2495 = vld [vmem:[%s2480 + $0x70] sm:$0xff]
        %v2496 = vld [vmem:[%s2480 + $0x78] sm:$0xff]
        %v2497 = vld [vmem:[%s2480 + $0x80] sm:$0xff]
        %v2498 = vld [vmem:[%s2480 + $0x88] sm:$0xff]
        %v2499 = vld [vmem:[%s2480 + $0x90] sm:$0xff]
        %v2500 = vld [vmem:[%s2480 + $0x98] sm:$0xff]
        %v2501 = vld [vmem:[%s2480 + $0xa0] sm:$0xff]
        %v2502 = vld [vmem:[%s2480 + $0xa8] sm:$0xff]
        %v2503 = vld [vmem:[%s2480 + $0xb0] sm:$0xff]
        %v2504 = vld [vmem:[%s2480 + $0xb8] sm:$0xff]
        %v2505 = vld [vmem:[%s2480 + $0xc0] sm:$0xff]
        %v2506 = vld [vmem:[%s2480 + $0xc8] sm:$0xff]
        %v2507 = vld [vmem:[%s2480 + $0xd0] sm:$0xff]
        %v2508 = vld [vmem:[%s2480 + $0xd8] sm:$0xff]
        %v2509 = vld [vmem:[%s2480 + $0xe0] sm:$0xff]
        %v2510 = vld [vmem:[%s2480 + $0xe8] sm:$0xff]
        %v2511 = vld [vmem:[%s2480 + $0xf0] sm:$0xff]
        %v2512 = vld [vmem:[%s2480 + $0xf8] sm:$0xff]
        %v2513 = vld [vmem:[%s2480 + $0x100] sm:$0xff]
        %v2514 = vld [vmem:[%s2480 + $0x108] sm:$0xff]
        %v2515 = vld [vmem:[%s2480 + $0x110] sm:$0xff]
        %v2516 = vld [vmem:[%s2480 + $0x118] sm:$0xff]
        %v2517 = vld [vmem:[%s2480 + $0x120] sm:$0xff]
        %v2518 = vld [vmem:[%s2480 + $0x128] sm:$0xff]
        %v2519 = vld [vmem:[%s2480 + $0x130] sm:$0xff]
        %v2520 = vld [vmem:[%s2480 + $0x138] sm:$0xff]
        %v2521 = vld [vmem:[%s2480 + $0x140] sm:$0xff]
        %v2522 = vld [vmem:[%s2480 + $0x148] sm:$0xff]
        %v2524 = vsel %vm2342, %v2401, 0
        %v2527 = vsel %vm2342, %v2403, 0
        %v2530 = vsel %vm2342, %v2405, 0
        %v2533 = vsel %vm2342, %v2407, 0
        %v2536 = vsel %vm2342, %v2409, 0
        %v2539 = vsel %vm2342, %v2411, 0
        %v2542 = vsel %vm2342, %v2413, 0
        %v2545 = vsel %vm2342, %v2415, 0
        %v2548 = vsel %vm2342, %v2417, 0
        %v2551 = vsel %vm2342, %v2419, 0
        %v2554 = vsel %vm2342, %v2421, 0
        %v2557 = vsel %vm2342, %v2423, 0
        %v2560 = vsel %vm2342, %v2425, 0
        %v2563 = vsel %vm2342, %v2427, 0
        %v2566 = vsel %vm2342, %v2429, 0
        %v2569 = vsel %vm2342, %v2431, 0
        %v2572 = vsel %vm2342, %v2433, 0
        %v2575 = vsel %vm2342, %v2435, 0
        %v2578 = vsel %vm2342, %v2479, 0
        %2580 = vmatprep.subr.mxu0 %v2482
        %2581 = vmatpush1.msra.mxu0 %v2481
        %2582 = vmatprep.subr.mxu0 %v2484
        %2583 = vmatpush1.msra.mxu0 %v2483
        %2584 = vmatprep.subr.mxu0 %v2486
        %2585 = vmatpush1.msra.mxu0 %v2485
        %2586 = vmatprep.subr.mxu0 %v2488
        %2587 = vmatpush1.msra.mxu0 %v2487
        %2588 = vmatprep.subr.mxu0 %v2490
        %2589 = vmatpush1.msra.mxu0 %v2489
        %2590 = vmatprep.subr.mxu0 %v2492
        %2591 = vmatpush1.msra.mxu0 %v2491
        %2592 = vmatprep.subr.mxu0 %v2494
        %2593 = vmatpush1.msra.mxu0 %v2493
        %2594 = vmatprep.subr.mxu0 %v2496
        %2595 = vmatpush1.msra.mxu0 %v2495
        %2596 = vmatprep.subr.mxu0 %v2498
        %2597 = vmatpush1.msra.mxu0 %v2497
        %2598 = vmatprep.subr.mxu0 %v2500
        %2599 = vmatpush1.msra.mxu0 %v2499
        %2600 = vmatprep.subr.mxu0 %v2502
        %2601 = vmatpush1.msra.mxu0 %v2501
        %2602 = vmatprep.subr.mxu0 %v2504
        %2603 = vmatpush1.msra.mxu0 %v2503
        %2604 = vmatprep.subr.mxu0 %v2506
        %2605 = vmatpush1.msra.mxu0 %v2505
        %2606 = vmatprep.subr.mxu0 %v2508
        %2607 = vmatpush1.msra.mxu0 %v2507
        %2608 = vmatprep.subr.mxu0 %v2510
        %2609 = vmatpush1.msra.mxu0 %v2509
        %2610 = vmatprep.subr.mxu0 %v2512
        %2611 = vmatpush1.msra.mxu0 %v2511
        %2612 = vmatprep.subr.mxu0 %v2514
        %2613 = vmatpush1.msra.mxu0 %v2513
        %2614 = vmatprep.subr.mxu0 %v2516
        %2615 = vmatpush1.msra.mxu0 %v2515
        %2616 = vmatprep.subr.mxu0 %v2518
        %2617 = vmatpush1.msra.mxu0 %v2517
        %2618 = vmatprep.subr.mxu0 %v2520
        %2619 = vmatpush1.msra.mxu0 %v2519
        %2620 = vmatprep.subr.mxu0 %v2522
        %2621 = vmatpush1.msra.mxu0 %v2521
        %2622 = vmatprep.subr.mxu0 0.0
        %2623 = vmatpush1.msra.mxu0 0.0
        %2624 = vmatprep.subr.mxu0 0.0
        %2625 = vmatpush1.msra.mxu0 0.0
        %2626 = vmatprep.subr.mxu0 0.0
        %2627 = vmatpush1.msra.mxu0 0.0
        %2628 = vmatprep.subr.mxu0 0.0
        %2629 = vmatpush1.msra.mxu0 0.0
        %2630 = vmatprep.subr.mxu0 0.0
        %2631 = vmatpush1.msra.mxu0 0.0
        %2632 = vmatprep.subr.mxu0 0.0
        %2633 = vmatpush1.msra.mxu0 0.0
        %2634 = vmatprep.subr.mxu0 0.0
        %2635 = vmatpush1.msra.mxu0 0.0
        %2636 = vmatprep.subr.mxu0 0.0
        %2637 = vmatpush1.msra.mxu0 0.0
        %2638 = vmatprep.subr.mxu0 0.0
        %2639 = vmatpush1.msra.mxu0 0.0
        %2640 = vmatprep.subr.mxu0 0.0
        %2641 = vmatpush1.msra.mxu0 0.0
        %2642 = vmatprep.subr.mxu0 0.0
        %2643 = vmatpush1.msra.mxu0 0.0
        %2644 = vmatprep.mubr.f32.mxu0 %v2524
        %2645 = vmatmul.mubr.f32.gmra.mrb[0].mxu0 %v2400
        %v2646 = vpop.f32.mrb[0].mxu0
        %v2647 = vadd.f32 0.0, %v2646
        %v2648 = vpop.f32.mrb[0].mxu0
        %v2649 = vadd.f32 0.0, %v2648
        %2650 = vmatprep.mubr.f32.mxu0 %v2527
        %2651 = vmatmul.mubr.f32.gmra.mrb[0].mxu0 %v2402
        %v2652 = vpop.f32.mrb[0].mxu0
        %v2653 = vpop.f32.mrb[0].mxu0
        %2654 = vmatprep.mubr.f32.mxu0 %v2530
        %2655 = vmatmul.mubr.f32.gmra.mrb[0].mxu0 %v2404
        %v2656 = vpop.f32.mrb[0].mxu0
        %v2657 = vadd.f32 0.0, %v2656
        %v2658 = vpop.f32.mrb[0].mxu0
        %v2659 = vadd.f32 0.0, %v2658
        %2660 = vmatprep.mubr.f32.mxu0 %v2533
        %2661 = vmatmul.mubr.f32.gmra.mrb[0].mxu0 %v2406
        %v2662 = vpop.f32.mrb[0].mxu0
        %v2663 = vpop.f32.mrb[0].mxu0
        %2664 = vmatprep.mubr.f32.mxu0 %v2536
        %2665 = vmatmul.mubr.f32.gmra.mrb[0].mxu0 %v2408
        %v2666 = vpop.f32.mrb[0].mxu0
        %v2667 = vadd.f32 0.0, %v2666
        %v2668 = vpop.f32.mrb[0].mxu0
        %v2669 = vadd.f32 0.0, %v2668
        %2670 = vmatprep.mubr.f32.mxu0 %v2539
        %2671 = vmatmul.mubr.f32.gmra.mrb[0].mxu0 %v2410
        %v2672 = vpop.f32.mrb[0].mxu0
        %v2673 = vpop.f32.mrb[0].mxu0
        %2674 = vmatprep.mubr.f32.mxu0 %v2542
        %2675 = vmatmul.mubr.f32.gmra.mrb[0].mxu0 %v2412
        %v2676 = vpop.f32.mrb[0].mxu0
        %v2677 = vadd.f32 0.0, %v2676
        %v2678 = vpop.f32.mrb[0].mxu0
        %v2679 = vadd.f32 0.0, %v2678
        %2680 = vmatprep.mubr.f32.mxu0 %v2545
        %2681 = vmatmul.mubr.f32.gmra.mrb[0].mxu0 %v2414
        %v2682 = vpop.f32.mrb[0].mxu0
        %v2683 = vpop.f32.mrb[0].mxu0
        %2684 = vmatprep.mubr.f32.mxu0 %v2548
        %2685 = vmatmul.mubr.f32.gmra.mrb[0].mxu0 %v2416
        %v2686 = vpop.f32.mrb[0].mxu0
        %v2687 = vadd.f32 0.0, %v2686
        %v2688 = vpop.f32.mrb[0].mxu0
        %v2689 = vadd.f32 0.0, %v2688
        %2690 = vmatprep.mubr.f32.mxu0 %v2551
        %2691 = vmatmul.mubr.f32.gmra.mrb[0].mxu0 %v2418
        %v2692 = vpop.f32.mrb[0].mxu0
        %v2693 = vpop.f32.mrb[0].mxu0
        %2694 = vmatprep.mubr.f32.mxu0 %v2554
        %2695 = vmatmul.mubr.f32.gmra.mrb[0].mxu0 %v2420
        %v2696 = vpop.f32.mrb[0].mxu0
        %v2697 = vadd.f32 0.0, %v2696
        %v2698 = vpop.f32.mrb[0].mxu0
        %v2699 = vadd.f32 0.0, %v2698
        %2700 = vmatprep.mubr.f32.mxu0 %v2557
        %2701 = vmatmul.mubr.f32.gmra.mrb[0].mxu0 %v2422
        %v2702 = vpop.f32.mrb[0].mxu0
        %v2703 = vpop.f32.mrb[0].mxu0
        %2704 = vmatprep.mubr.f32.mxu0 %v2560
        %2705 = vmatmul.mubr.f32.gmra.mrb[0].mxu0 %v2424
        %v2706 = vpop.f32.mrb[0].mxu0
        %v2707 = vadd.f32 0.0, %v2706
        %v2708 = vpop.f32.mrb[0].mxu0
        %v2709 = vadd.f32 0.0, %v2708
        %2710 = vmatprep.mubr.f32.mxu0 %v2563
        %2711 = vmatmul.mubr.f32.gmra.mrb[0].mxu0 %v2426
        %v2712 = vpop.f32.mrb[0].mxu0
        %v2713 = vpop.f32.mrb[0].mxu0
        %2714 = vmatprep.mubr.f32.mxu0 %v2566
        %2715 = vmatmul.mubr.f32.gmra.mrb[0].mxu0 %v2428
        %v2716 = vpop.f32.mrb[0].mxu0
        %v2717 = vadd.f32 0.0, %v2716
        %v2718 = vpop.f32.mrb[0].mxu0
        %v2719 = vadd.f32 0.0, %v2718
        %2720 = vmatprep.mubr.f32.mxu0 %v2569
        %2721 = vmatmul.mubr.f32.gmra.mrb[0].mxu0 %v2430
        %v2722 = vpop.f32.mrb[0].mxu0
        %v2723 = vpop.f32.mrb[0].mxu0
        %2724 = vmatprep.mubr.f32.mxu0 %v2572
        %2725 = vmatmul.mubr.f32.gmra.mrb[0].mxu0 %v2432
        %v2726 = vpop.f32.mrb[0].mxu0
        %v2727 = vadd.f32 0.0, %v2726
        %v2728 = vpop.f32.mrb[0].mxu0
        %v2729 = vadd.f32 0.0, %v2728
        %2730 = vmatprep.mubr.f32.mxu0 %v2575
        %2731 = vmatmul.mubr.f32.gmra.mrb[0].mxu0 %v2434
        %v2732 = vpop.f32.mrb[0].mxu0
        %v2733 = vpop.f32.mrb[0].mxu0
        %2734 = vmatprep.mubr.f32.mxu0 %v2578
        %2735 = vmatmul.mubr.f32.gmra.mrb[0].mxu0 %v2478
        %v2736 = vpop.f32.mrb[0].mxu0
        %v2737 = vadd.f32 0.0, %v2736
        %v2738 = vpop.f32.mrb[0].mxu0
        %v2739 = vadd.f32 0.0, %v2738
        %2740 = vdwg.mxu0
        %v2742 = vsel %vm2342, %v2399, 0
        %2744 = vmatprep.subr.mxu0 %v2437
        %2745 = vmatpush1.msra.mxu0 %v2436
        %2746 = vmatprep.subr.mxu0 %v2439
        %2747 = vmatpush1.msra.mxu0 %v2438
        %2748 = vmatprep.subr.mxu0 %v2441
        %2749 = vmatpush1.msra.mxu0 %v2440
        %2750 = vmatprep.subr.mxu0 %v2443
        %2751 = vmatpush1.msra.mxu0 %v2442
        %2752 = vmatprep.subr.mxu0 %v2445
        %2753 = vmatpush1.msra.mxu0 %v2444
        %2754 = vmatprep.subr.mxu0 %v2447
        %2755 = vmatpush1.msra.mxu0 %v2446
        %2756 = vmatprep.subr.mxu0 %v2449
        %2757 = vmatpush1.msra.mxu0 %v2448
        %2758 = vmatprep.subr.mxu0 %v2451
        %2759 = vmatpush1.msra.mxu0 %v2450
        %2760 = vmatprep.subr.mxu0 %v2453
        %2761 = vmatpush1.msra.mxu0 %v2452
        %2762 = vmatprep.subr.mxu0 %v2455
        %2763 = vmatpush1.msra.mxu0 %v2454
        %2764 = vmatprep.subr.mxu0 %v2457
        %2765 = vmatpush1.msra.mxu0 %v2456
        %2766 = vmatprep.subr.mxu0 %v2459
        %2767 = vmatpush1.msra.mxu0 %v2458
        %2768 = vmatprep.subr.mxu0 %v2461
        %2769 = vmatpush1.msra.mxu0 %v2460
        %2770 = vmatprep.subr.mxu0 %v2463
        %2771 = vmatpush1.msra.mxu0 %v2462
        %2772 = vmatprep.subr.mxu0 %v2465
        %2773 = vmatpush1.msra.mxu0 %v2464
        %2774 = vmatprep.subr.mxu0 %v2467
        %2775 = vmatpush1.msra.mxu0 %v2466
        %2776 = vmatprep.subr.mxu0 %v2469
        %2777 = vmatpush1.msra.mxu0 %v2468
        %2778 = vmatprep.subr.mxu0 %v2471
        %2779 = vmatpush1.msra.mxu0 %v2470
        %2780 = vmatprep.subr.mxu0 %v2473
        %2781 = vmatpush1.msra.mxu0 %v2472
        %2782 = vmatprep.subr.mxu0 %v2475
        %2783 = vmatpush1.msra.mxu0 %v2474
        %2784 = vmatprep.subr.mxu0 %v2477
        %2785 = vmatpush1.msra.mxu0 %v2476
        %2786 = vmatprep.subr.mxu0 0.0
        %2787 = vmatpush1.msra.mxu0 0.0
        %2788 = vmatprep.subr.mxu0 0.0
        %2789 = vmatpush1.msra.mxu0 0.0
        %2790 = vmatprep.subr.mxu0 0.0
        %2791 = vmatpush1.msra.mxu0 0.0
        %2792 = vmatprep.subr.mxu0 0.0
        %2793 = vmatpush1.msra.mxu0 0.0
        %2794 = vmatprep.subr.mxu0 0.0
        %2795 = vmatpush1.msra.mxu0 0.0
        %2796 = vmatprep.subr.mxu0 0.0
        %2797 = vmatpush1.msra.mxu0 0.0
        %2798 = vmatprep.subr.mxu0 0.0
        %2799 = vmatpush1.msra.mxu0 0.0
        %2800 = vmatprep.subr.mxu0 0.0
        %2801 = vmatpush1.msra.mxu0 0.0
        %2802 = vmatprep.subr.mxu0 0.0
        %2803 = vmatpush1.msra.mxu0 0.0
        %2804 = vmatprep.subr.mxu0 0.0
        %2805 = vmatpush1.msra.mxu0 0.0
        %2806 = vmatprep.subr.mxu0 0.0
        %2807 = vmatpush1.msra.mxu0 0.0
        %2808 = vmatprep.mubr.f32.mxu0 %v2742
        %2809 = vmatmul.mubr.f32.gmra.mrb[0].mxu0 %v2398
        %v2810 = vpop.f32.mrb[0].mxu0
        %v2811 = vadd.f32 %v2647, %v2810
        %v2812 = vpop.f32.mrb[0].mxu0
        %v2813 = vadd.f32 %v2649, %v2812
        %2814 = vmatprep.mubr.f32.mxu0 %v2524
        %2815 = vmatmul.mubr.f32.gmra.mrb[0].mxu0 %v2400
        %v2816 = vpop.f32.mrb[0].mxu0
        %v2817 = vpop.f32.mrb[0].mxu0
        %2818 = vmatprep.mubr.f32.mxu0 %v2527
        %2819 = vmatmul.mubr.f32.gmra.mrb[0].mxu0 %v2402
        %v2820 = vpop.f32.mrb[0].mxu0
        %v2821 = vadd.f32 %v2657, %v2820
        %v2822 = vpop.f32.mrb[0].mxu0
        %v2823 = vadd.f32 %v2659, %v2822
        %2824 = vmatprep.mubr.f32.mxu0 %v2530
        %2825 = vmatmul.mubr.f32.gmra.mrb[0].mxu0 %v2404
        %v2826 = vpop.f32.mrb[0].mxu0
        %v2827 = vpop.f32.mrb[0].mxu0
        %2828 = vmatprep.mubr.f32.mxu0 %v2533
        %2829 = vmatmul.mubr.f32.gmra.mrb[0].mxu0 %v2406
        %v2830 = vpop.f32.mrb[0].mxu0
        %v2831 = vadd.f32 %v2667, %v2830
        %v2832 = vpop.f32.mrb[0].mxu0
        %v2833 = vadd.f32 %v2669, %v2832
        %2834 = vmatprep.mubr.f32.mxu0 %v2536
        %2835 = vmatmul.mubr.f32.gmra.mrb[0].mxu0 %v2408
        %v2836 = vpop.f32.mrb[0].mxu0
        %v2837 = vpop.f32.mrb[0].mxu0
        %2838 = vmatprep.mubr.f32.mxu0 %v2539
        %2839 = vmatmul.mubr.f32.gmra.mrb[0].mxu0 %v2410
        %v2840 = vpop.f32.mrb[0].mxu0
        %v2841 = vadd.f32 %v2677, %v2840
        %v2842 = vpop.f32.mrb[0].mxu0
        %v2843 = vadd.f32 %v2679, %v2842
        %2844 = vmatprep.mubr.f32.mxu0 %v2542
        %2845 = vmatmul.mubr.f32.gmra.mrb[0].mxu0 %v2412
        %v2846 = vpop.f32.mrb[0].mxu0
        %v2847 = vpop.f32.mrb[0].mxu0
        %2848 = vmatprep.mubr.f32.mxu0 %v2545
        %2849 = vmatmul.mubr.f32.gmra.mrb[0].mxu0 %v2414
        %v2850 = vpop.f32.mrb[0].mxu0
        %v2851 = vadd.f32 %v2687, %v2850
        %v2852 = vpop.f32.mrb[0].mxu0
        %v2853 = vadd.f32 %v2689, %v2852
        %2854 = vmatprep.mubr.f32.mxu0 %v2548
        %2855 = vmatmul.mubr.f32.gmra.mrb[0].mxu0 %v2416
        %v2856 = vpop.f32.mrb[0].mxu0
        %v2857 = vpop.f32.mrb[0].mxu0
        %2858 = vmatprep.mubr.f32.mxu0 %v2551
        %2859 = vmatmul.mubr.f32.gmra.mrb[0].mxu0 %v2418
        %v2860 = vpop.f32.mrb[0].mxu0
        %v2861 = vadd.f32 %v2697, %v2860
        %v2862 = vpop.f32.mrb[0].mxu0
        %v2863 = vadd.f32 %v2699, %v2862
        %2864 = vmatprep.mubr.f32.mxu0 %v2554
        %2865 = vmatmul.mubr.f32.gmra.mrb[0].mxu0 %v2420
        %v2866 = vpop.f32.mrb[0].mxu0
        %v2867 = vpop.f32.mrb[0].mxu0
        %2868 = vmatprep.mubr.f32.mxu0 %v2557
        %2869 = vmatmul.mubr.f32.gmra.mrb[0].mxu0 %v2422
        %v2870 = vpop.f32.mrb[0].mxu0
        %v2871 = vadd.f32 %v2707, %v2870
        %v2872 = vpop.f32.mrb[0].mxu0
        %v2873 = vadd.f32 %v2709, %v2872
        %2874 = vmatprep.mubr.f32.mxu0 %v2560
        %2875 = vmatmul.mubr.f32.gmra.mrb[0].mxu0 %v2424
        %v2876 = vpop.f32.mrb[0].mxu0
        %v2877 = vpop.f32.mrb[0].mxu0
        %2878 = vmatprep.mubr.f32.mxu0 %v2563
        %2879 = vmatmul.mubr.f32.gmra.mrb[0].mxu0 %v2426
        %v2880 = vpop.f32.mrb[0].mxu0
        %v2881 = vadd.f32 %v2717, %v2880
        %v2882 = vpop.f32.mrb[0].mxu0
        %v2883 = vadd.f32 %v2719, %v2882
        %2884 = vmatprep.mubr.f32.mxu0 %v2566
        %2885 = vmatmul.mubr.f32.gmra.mrb[0].mxu0 %v2428
        %v2886 = vpop.f32.mrb[0].mxu0
        %v2887 = vpop.f32.mrb[0].mxu0
        %2888 = vmatprep.mubr.f32.mxu0 %v2569
        %2889 = vmatmul.mubr.f32.gmra.mrb[0].mxu0 %v2430
        %v2890 = vpop.f32.mrb[0].mxu0
        %v2891 = vadd.f32 %v2727, %v2890
        %v2892 = vpop.f32.mrb[0].mxu0
        %v2893 = vadd.f32 %v2729, %v2892
        %2894 = vmatprep.mubr.f32.mxu0 %v2572
        %2895 = vmatmul.mubr.f32.gmra.mrb[0].mxu0 %v2432
        %v2896 = vpop.f32.mrb[0].mxu0
        %v2897 = vpop.f32.mrb[0].mxu0
        %2898 = vmatprep.mubr.f32.mxu0 %v2575
        %2899 = vmatmul.mubr.f32.gmra.mrb[0].mxu0 %v2434
        %v2900 = vpop.f32.mrb[0].mxu0
        %v2901 = vadd.f32 %v2737, %v2900
        %v2902 = vpop.f32.mrb[0].mxu0
        %v2903 = vadd.f32 %v2739, %v2902
        %2904 = vdwg.mxu0
        %v2905 = vld [vmem:[#allocation2 + $0x20] sm:$0xff]
        %v2906 = vld [vmem:[#allocation2 + $0x28] sm:$0xff]
        %v2907 = vld [vmem:[#allocation2 + $0x30] sm:$0xff]
        %v2908 = vld [vmem:[#allocation2 + $0x38] sm:$0xff]
        %v2909 = vld [vmem:[#allocation2 + $0x40] sm:$0xff]
        %v2910 = vld [vmem:[#allocation2 + $0x48] sm:$0xff]
        %v2911 = vld [vmem:[#allocation2 + $0x50] sm:$0xff]
        %v2912 = vld [vmem:[#allocation2 + $0x58] sm:$0xff]
        %v2913 = vld [vmem:[#allocation2 + $0x60] sm:$0xff]
        %v2914 = vld [vmem:[#allocation2 + $0x68] sm:$0xff]
        %v2915 = vld [vmem:[#allocation2 + $0x70] sm:$0xff]
        %v2916 = vld [vmem:[#allocation2 + $0x78] sm:$0xff]
        %v2917 = vld [vmem:[#allocation2 + $0x80] sm:$0xff]
        %v2918 = vld [vmem:[#allocation2 + $0x88] sm:$0xff]
        %v2919 = vld [vmem:[#allocation2 + $0x90] sm:$0xff]
        %v2920 = vld [vmem:[#allocation2 + $0x98] sm:$0xff]
        %v2921 = vld [vmem:[#allocation2 + $0xa0] sm:$0xff]
        %v2922 = vld [vmem:[#allocation2 + $0xa8] sm:$0xff]
        %v2923 = vld [vmem:[#allocation2 + $0xb0] sm:$0xff]
        %v2924 = vld [vmem:[#allocation2 + $0xb8] sm:$0xff]
        %v2925 = vld [vmem:[#allocation2 + $0xc0] sm:$0xff]
        %v2926 = vld [vmem:[#allocation2 + $0xc8] sm:$0xff]
        %v2927 = vld [vmem:[#allocation2 + $0xd0] sm:$0xff]
        %v2928 = vld [vmem:[#allocation2 + $0xd8] sm:$0xff]
        %v2929 = vld [vmem:[#allocation2 + $0xe0] sm:$0xff]
        %v2930 = vld [vmem:[#allocation2 + $0xe8] sm:$0xff]
        %v2931 = vld [vmem:[#allocation2 + $0xf0] sm:$0xff]
        %v2932 = vld [vmem:[#allocation2 + $0xf8] sm:$0xff]
        %v2933 = vld [vmem:[#allocation2 + $0x100] sm:$0xff]
        %v2934 = vld [vmem:[#allocation2 + $0x108] sm:$0xff]
        %v2935 = vld [vmem:[#allocation2 + $0x110] sm:$0xff]
        %v2936 = vld [vmem:[#allocation2 + $0x118] sm:$0xff]
        %v2937 = vld [vmem:[#allocation2 + $0x120] sm:$0xff]
        %v2938 = vld [vmem:[#allocation2 + $0x128] sm:$0xff]
        %v2939 = vld [vmem:[#allocation2 + $0x130] sm:$0xff]
        %v2940 = vld [vmem:[#allocation2 + $0x138] sm:$0xff]
        %v2941 = vld [vmem:[#allocation2 + $0x140] sm:$0xff]
        %v2942 = vld [vmem:[#allocation2 + $0x148] sm:$0xff]
        %s2943 = scalar_lea.vmem %s3, 672
        %v2944 = vld [vmem:[%s2943] sm:$0xff]
        %v2945 = vld [vmem:[%s2943 + $0x8] sm:$0xff]
        %v2946 = vld [vmem:[%s2943 + $0x10] sm:$0xff]
        %v2947 = vld [vmem:[%s2943 + $0x18] sm:$0xff]
        %v2948 = vld [vmem:[%s2943 + $0x20] sm:$0xff]
        %v2949 = vld [vmem:[%s2943 + $0x28] sm:$0xff]
        %v2950 = vld [vmem:[%s2943 + $0x30] sm:$0xff]
        %v2951 = vld [vmem:[%s2943 + $0x38] sm:$0xff]
        %v2952 = vld [vmem:[%s2943 + $0x40] sm:$0xff]
        %v2953 = vld [vmem:[%s2943 + $0x48] sm:$0xff]
        %v2954 = vld [vmem:[%s2943 + $0x50] sm:$0xff]
        %v2955 = vld [vmem:[%s2943 + $0x58] sm:$0xff]
        %v2956 = vld [vmem:[%s2943 + $0x60] sm:$0xff]
        %v2957 = vld [vmem:[%s2943 + $0x68] sm:$0xff]
        %v2958 = vld [vmem:[%s2943 + $0x70] sm:$0xff]
        %v2959 = vld [vmem:[%s2943 + $0x78] sm:$0xff]
        %v2960 = vld [vmem:[%s2943 + $0x80] sm:$0xff]
        %v2961 = vld [vmem:[%s2943 + $0x88] sm:$0xff]
        %v2962 = vld [vmem:[%s2943 + $0x90] sm:$0xff]
        %v2963 = vld [vmem:[%s2943 + $0x98] sm:$0xff]
        %v2964 = vld [vmem:[%s2943 + $0xa0] sm:$0xff]
        %v2965 = vld [vmem:[%s2943 + $0xa8] sm:$0xff]
        %v2966 = vld [vmem:[%s2943 + $0xb0] sm:$0xff]
        %v2967 = vld [vmem:[%s2943 + $0xb8] sm:$0xff]
        %v2968 = vld [vmem:[%s2943 + $0xc0] sm:$0xff]
        %v2969 = vld [vmem:[%s2943 + $0xc8] sm:$0xff]
        %v2970 = vld [vmem:[%s2943 + $0xd0] sm:$0xff]
        %v2971 = vld [vmem:[%s2943 + $0xd8] sm:$0xff]
        %v2972 = vld [vmem:[%s2943 + $0xe0] sm:$0xff]
        %v2973 = vld [vmem:[%s2943 + $0xe8] sm:$0xff]
        %v2974 = vld [vmem:[%s2943 + $0xf0] sm:$0xff]
        %v2975 = vld [vmem:[%s2943 + $0xf8] sm:$0xff]
        %v2976 = vld [vmem:[%s2943 + $0x100] sm:$0xff]
        %v2977 = vld [vmem:[%s2943 + $0x108] sm:$0xff]
        %v2978 = vld [vmem:[%s2943 + $0x110] sm:$0xff]
        %v2979 = vld [vmem:[%s2943 + $0x118] sm:$0xff]
        %v2980 = vld [vmem:[%s2943 + $0x120] sm:$0xff]
        %v2981 = vld [vmem:[%s2943 + $0x128] sm:$0xff]
        %v2982 = vld [vmem:[%s2943 + $0x130] sm:$0xff]
        %v2983 = vld [vmem:[%s2943 + $0x138] sm:$0xff]
        %v2984 = vld [vmem:[%s2943 + $0x140] sm:$0xff]
        %v2985 = vld [vmem:[%s2943 + $0x148] sm:$0xff]
        %v2987 = vsel %vm2342, %v2906, 0
        %v2990 = vsel %vm2342, %v2908, 0
        %v2993 = vsel %vm2342, %v2910, 0
        %v2996 = vsel %vm2342, %v2912, 0
        %v2999 = vsel %vm2342, %v2914, 0
        %v3002 = vsel %vm2342, %v2916, 0
        %v3005 = vsel %vm2342, %v2918, 0
        %v3008 = vsel %vm2342, %v2920, 0
        %v3011 = vsel %vm2342, %v2922, 0
        %v3014 = vsel %vm2342, %v2924, 0
        %v3017 = vsel %vm2342, %v2926, 0
        %v3020 = vsel %vm2342, %v2928, 0
        %v3023 = vsel %vm2342, %v2930, 0
        %v3026 = vsel %vm2342, %v2932, 0
        %v3029 = vsel %vm2342, %v2934, 0
        %v3032 = vsel %vm2342, %v2936, 0
        %v3035 = vsel %vm2342, %v2938, 0
        %v3038 = vsel %vm2342, %v2940, 0
        %v3041 = vsel %vm2342, %v2942, 0
        %3043 = vmatprep.subr.mxu0 %v2945
        %3044 = vmatpush1.msra.mxu0 %v2944
        %3045 = vmatprep.subr.mxu0 %v2947
        %3046 = vmatpush1.msra.mxu0 %v2946
        %3047 = vmatprep.subr.mxu0 %v2949
        %3048 = vmatpush1.msra.mxu0 %v2948
        %3049 = vmatprep.subr.mxu0 %v2951
        %3050 = vmatpush1.msra.mxu0 %v2950
        %3051 = vmatprep.subr.mxu0 %v2953
        %3052 = vmatpush1.msra.mxu0 %v2952
        %3053 = vmatprep.subr.mxu0 %v2955
        %3054 = vmatpush1.msra.mxu0 %v2954
        %3055 = vmatprep.subr.mxu0 %v2957
        %3056 = vmatpush1.msra.mxu0 %v2956
        %3057 = vmatprep.subr.mxu0 %v2959
        %3058 = vmatpush1.msra.mxu0 %v2958
        %3059 = vmatprep.subr.mxu0 %v2961
        %3060 = vmatpush1.msra.mxu0 %v2960
        %3061 = vmatprep.subr.mxu0 %v2963
        %3062 = vmatpush1.msra.mxu0 %v2962
        %3063 = vmatprep.subr.mxu0 %v2965
        %3064 = vmatpush1.msra.mxu0 %v2964
        %3065 = vmatprep.subr.mxu0 %v2967
        %3066 = vmatpush1.msra.mxu0 %v2966
        %3067 = vmatprep.subr.mxu0 %v2969
        %3068 = vmatpush1.msra.mxu0 %v2968
        %3069 = vmatprep.subr.mxu0 %v2971
        %3070 = vmatpush1.msra.mxu0 %v2970
        %3071 = vmatprep.subr.mxu0 %v2973
        %3072 = vmatpush1.msra.mxu0 %v2972
        %3073 = vmatprep.subr.mxu0 %v2975
        %3074 = vmatpush1.msra.mxu0 %v2974
        %3075 = vmatprep.subr.mxu0 %v2977
        %3076 = vmatpush1.msra.mxu0 %v2976
        %3077 = vmatprep.subr.mxu0 %v2979
        %3078 = vmatpush1.msra.mxu0 %v2978
        %3079 = vmatprep.subr.mxu0 %v2981
        %3080 = vmatpush1.msra.mxu0 %v2980
        %3081 = vmatprep.subr.mxu0 %v2983
        %3082 = vmatpush1.msra.mxu0 %v2982
        %3083 = vmatprep.subr.mxu0 %v2985
        %3084 = vmatpush1.msra.mxu0 %v2984
        %3085 = vmatprep.subr.mxu0 0.0
        %3086 = vmatpush1.msra.mxu0 0.0
        %3087 = vmatprep.subr.mxu0 0.0
        %3088 = vmatpush1.msra.mxu0 0.0
        %3089 = vmatprep.subr.mxu0 0.0
        %3090 = vmatpush1.msra.mxu0 0.0
        %3091 = vmatprep.subr.mxu0 0.0
        %3092 = vmatpush1.msra.mxu0 0.0
        %3093 = vmatprep.subr.mxu0 0.0
        %3094 = vmatpush1.msra.mxu0 0.0
        %3095 = vmatprep.subr.mxu0 0.0
        %3096 = vmatpush1.msra.mxu0 0.0
        %3097 = vmatprep.subr.mxu0 0.0
        %3098 = vmatpush1.msra.mxu0 0.0
        %3099 = vmatprep.subr.mxu0 0.0
        %3100 = vmatpush1.msra.mxu0 0.0
        %3101 = vmatprep.subr.mxu0 0.0
        %3102 = vmatpush1.msra.mxu0 0.0
        %3103 = vmatprep.subr.mxu0 0.0
        %3104 = vmatpush1.msra.mxu0 0.0
        %3105 = vmatprep.subr.mxu0 0.0
        %3106 = vmatpush1.msra.mxu0 0.0
        %3107 = vmatprep.mubr.f32.mxu0 %v2987
        %3108 = vmatmul.mubr.f32.gmra.mrb[0].mxu0 %v2905
        %v3109 = vpop.f32.mrb[0].mxu0
        %v3110 = vadd.f32 0.0, %v3109
        %v3111 = vpop.f32.mrb[0].mxu0
        %v3112 = vadd.f32 0.0, %v3111
        %3113 = vmatprep.mubr.f32.mxu0 %v2990
        %3114 = vmatmul.mubr.f32.gmra.mrb[0].mxu0 %v2907
        %v3115 = vpop.f32.mrb[0].mxu0
        %v3116 = vpop.f32.mrb[0].mxu0
        %3117 = vmatprep.mubr.f32.mxu0 %v2993
        %3118 = vmatmul.mubr.f32.gmra.mrb[0].mxu0 %v2909
        %v3119 = vpop.f32.mrb[0].mxu0
        %v3120 = vadd.f32 0.0, %v3119
        %v3121 = vpop.f32.mrb[0].mxu0
        %v3122 = vadd.f32 0.0, %v3121
        %3123 = vmatprep.mubr.f32.mxu0 %v2996
        %3124 = vmatmul.mubr.f32.gmra.mrb[0].mxu0 %v2911
        %v3125 = vpop.f32.mrb[0].mxu0
        %v3126 = vpop.f32.mrb[0].mxu0
        %3127 = vmatprep.mubr.f32.mxu0 %v2999
        %3128 = vmatmul.mubr.f32.gmra.mrb[0].mxu0 %v2913
        %v3129 = vpop.f32.mrb[0].mxu0
        %v3130 = vadd.f32 0.0, %v3129
        %v3131 = vpop.f32.mrb[0].mxu0
        %v3132 = vadd.f32 0.0, %v3131
        %3133 = vmatprep.mubr.f32.mxu0 %v3002
        %3134 = vmatmul.mubr.f32.gmra.mrb[0].mxu0 %v2915
        %v3135 = vpop.f32.mrb[0].mxu0
        %v3136 = vpop.f32.mrb[0].mxu0
        %3137 = vmatprep.mubr.f32.mxu0 %v3005
        %3138 = vmatmul.mubr.f32.gmra.mrb[0].mxu0 %v2917
        %v3139 = vpop.f32.mrb[0].mxu0
        %v3140 = vadd.f32 0.0, %v3139
        %v3141 = vpop.f32.mrb[0].mxu0
        %v3142 = vadd.f32 0.0, %v3141
        %3143 = vmatprep.mubr.f32.mxu0 %v3008
        %3144 = vmatmul.mubr.f32.gmra.mrb[0].mxu0 %v2919
        %v3145 = vpop.f32.mrb[0].mxu0
        %v3146 = vpop.f32.mrb[0].mxu0
        %3147 = vmatprep.mubr.f32.mxu0 %v3011
        %3148 = vmatmul.mubr.f32.gmra.mrb[0].mxu0 %v2921
        %v3149 = vpop.f32.mrb[0].mxu0
        %v3150 = vadd.f32 0.0, %v3149
        %v3151 = vpop.f32.mrb[0].mxu0
        %v3152 = vadd.f32 0.0, %v3151
        %3153 = vmatprep.mubr.f32.mxu0 %v3014
        %3154 = vmatmul.mubr.f32.gmra.mrb[0].mxu0 %v2923
        %v3155 = vpop.f32.mrb[0].mxu0
        %v3156 = vpop.f32.mrb[0].mxu0
        %3157 = vmatprep.mubr.f32.mxu0 %v3017
        %3158 = vmatmul.mubr.f32.gmra.mrb[0].mxu0 %v2925
        %v3159 = vpop.f32.mrb[0].mxu0
        %v3160 = vadd.f32 0.0, %v3159
        %v3161 = vpop.f32.mrb[0].mxu0
        %v3162 = vadd.f32 0.0, %v3161
        %3163 = vmatprep.mubr.f32.mxu0 %v3020
        %3164 = vmatmul.mubr.f32.gmra.mrb[0].mxu0 %v2927
        %v3165 = vpop.f32.mrb[0].mxu0
        %v3166 = vpop.f32.mrb[0].mxu0
        %3167 = vmatprep.mubr.f32.mxu0 %v3023
        %3168 = vmatmul.mubr.f32.gmra.mrb[0].mxu0 %v2929
        %v3169 = vpop.f32.mrb[0].mxu0
        %v3170 = vadd.f32 0.0, %v3169
        %v3171 = vpop.f32.mrb[0].mxu0
        %v3172 = vadd.f32 0.0, %v3171
        %3173 = vmatprep.mubr.f32.mxu0 %v3026
        %3174 = vmatmul.mubr.f32.gmra.mrb[0].mxu0 %v2931
        %v3175 = vpop.f32.mrb[0].mxu0
        %v3176 = vpop.f32.mrb[0].mxu0
        %3177 = vmatprep.mubr.f32.mxu0 %v3029
        %3178 = vmatmul.mubr.f32.gmra.mrb[0].mxu0 %v2933
        %v3179 = vpop.f32.mrb[0].mxu0
        %v3180 = vadd.f32 0.0, %v3179
        %v3181 = vpop.f32.mrb[0].mxu0
        %v3182 = vadd.f32 0.0, %v3181
        %3183 = vmatprep.mubr.f32.mxu0 %v3032
        %3184 = vmatmul.mubr.f32.gmra.mrb[0].mxu0 %v2935
        %v3185 = vpop.f32.mrb[0].mxu0
        %v3186 = vpop.f32.mrb[0].mxu0
        %3187 = vmatprep.mubr.f32.mxu0 %v3035
        %3188 = vmatmul.mubr.f32.gmra.mrb[0].mxu0 %v2937
        %v3189 = vpop.f32.mrb[0].mxu0
        %v3190 = vadd.f32 0.0, %v3189
        %v3191 = vpop.f32.mrb[0].mxu0
        %v3192 = vadd.f32 0.0, %v3191
        %3193 = vmatprep.mubr.f32.mxu0 %v3038
        %3194 = vmatmul.mubr.f32.gmra.mrb[0].mxu0 %v2939
        %v3195 = vpop.f32.mrb[0].mxu0
        %v3196 = vpop.f32.mrb[0].mxu0
        %3197 = vmatprep.mubr.f32.mxu0 %v3041
        %3198 = vmatmul.mubr.f32.gmra.mrb[0].mxu0 %v2941
        %v3199 = vpop.f32.mrb[0].mxu0
        %v3200 = vadd.f32 0.0, %v3199
        %v3201 = vpop.f32.mrb[0].mxu0
        %v3202 = vadd.f32 0.0, %v3201
        %3203 = vdwg.mxu0
        %v3204 = vadd.f32 %v2811, %v3110
        %v3205 = vadd.f32 %v2813, %v3112
        %v3206 = vadd.f32 %v2821, %v3120
        %v3207 = vadd.f32 %v2823, %v3122
        %v3208 = vadd.f32 %v2831, %v3130
        %v3209 = vadd.f32 %v2833, %v3132
        %v3210 = vadd.f32 %v2841, %v3140
        %v3211 = vadd.f32 %v2843, %v3142
        %v3212 = vadd.f32 %v2851, %v3150
        %v3213 = vadd.f32 %v2853, %v3152
        %v3214 = vadd.f32 %v2861, %v3160
        %v3215 = vadd.f32 %v2863, %v3162
        %v3216 = vadd.f32 %v2871, %v3170
        %v3217 = vadd.f32 %v2873, %v3172
        %v3218 = vadd.f32 %v2881, %v3180
        %v3219 = vadd.f32 %v2883, %v3182
        %v3220 = vadd.f32 %v2891, %v3190
        %v3221 = vadd.f32 %v2893, %v3192
        %v3222 = vadd.f32 %v2901, %v3200
        %v3223 = vadd.f32 %v2903, %v3202
        %v3224 = vld [vmem:[#allocation2 + $0x30] sm:$0xff]
        %v3225 = vld [vmem:[#allocation2 + $0x38] sm:$0xff]
        %v3226 = vld [vmem:[#allocation2 + $0x40] sm:$0xff]
        %v3227 = vld [vmem:[#allocation2 + $0x48] sm:$0xff]
        %v3228 = vld [vmem:[#allocation2 + $0x50] sm:$0xff]
        %v3229 = vld [vmem:[#allocation2 + $0x58] sm:$0xff]
        %v3230 = vld [vmem:[#allocation2 + $0x60] sm:$0xff]
        %v3231 = vld [vmem:[#allocation2 + $0x68] sm:$0xff]
        %v3232 = vld [vmem:[#allocation2 + $0x70] sm:$0xff]
        %v3233 = vld [vmem:[#allocation2 + $0x78] sm:$0xff]
        %v3234 = vld [vmem:[#allocation2 + $0x80] sm:$0xff]
        %v3235 = vld [vmem:[#allocation2 + $0x88] sm:$0xff]
        %v3236 = vld [vmem:[#allocation2 + $0x90] sm:$0xff]
        %v3237 = vld [vmem:[#allocation2 + $0x98] sm:$0xff]
        %v3238 = vld [vmem:[#allocation2 + $0xa0] sm:$0xff]
        %v3239 = vld [vmem:[#allocation2 + $0xa8] sm:$0xff]
        %v3240 = vld [vmem:[#allocation2 + $0xb0] sm:$0xff]
        %v3241 = vld [vmem:[#allocation2 + $0xb8] sm:$0xff]
        %v3242 = vld [vmem:[#allocation2 + $0xc0] sm:$0xff]
        %v3243 = vld [vmem:[#allocation2 + $0xc8] sm:$0xff]
        %v3244 = vld [vmem:[#allocation2 + $0xd0] sm:$0xff]
        %v3245 = vld [vmem:[#allocation2 + $0xd8] sm:$0xff]
        %v3246 = vld [vmem:[#allocation2 + $0xe0] sm:$0xff]
        %v3247 = vld [vmem:[#allocation2 + $0xe8] sm:$0xff]
        %v3248 = vld [vmem:[#allocation2 + $0xf0] sm:$0xff]
        %v3249 = vld [vmem:[#allocation2 + $0xf8] sm:$0xff]
        %v3250 = vld [vmem:[#allocation2 + $0x100] sm:$0xff]
        %v3251 = vld [vmem:[#allocation2 + $0x108] sm:$0xff]
        %v3252 = vld [vmem:[#allocation2 + $0x110] sm:$0xff]
        %v3253 = vld [vmem:[#allocation2 + $0x118] sm:$0xff]
        %v3254 = vld [vmem:[#allocation2 + $0x120] sm:$0xff]
        %v3255 = vld [vmem:[#allocation2 + $0x128] sm:$0xff]
        %v3256 = vld [vmem:[#allocation2 + $0x130] sm:$0xff]
        %v3257 = vld [vmem:[#allocation2 + $0x138] sm:$0xff]
        %v3258 = vld [vmem:[#allocation2 + $0x140] sm:$0xff]
        %v3259 = vld [vmem:[#allocation2 + $0x148] sm:$0xff]
        %v3260 = vld [vmem:[#allocation2 + $0x150] sm:$0xff]
        %v3261 = vld [vmem:[#allocation2 + $0x158] sm:$0xff]
        %s3262 = scalar_lea.vmem %s3, 1008
        %v3263 = vld [vmem:[%s3262] sm:$0xff]
        %v3264 = vld [vmem:[%s3262 + $0x8] sm:$0xff]
        %v3265 = vld [vmem:[%s3262 + $0x10] sm:$0xff]
        %v3266 = vld [vmem:[%s3262 + $0x18] sm:$0xff]
        %v3267 = vld [vmem:[%s3262 + $0x20] sm:$0xff]
        %v3268 = vld [vmem:[%s3262 + $0x28] sm:$0xff]
        %v3269 = vld [vmem:[%s3262 + $0x30] sm:$0xff]
        %v3270 = vld [vmem:[%s3262 + $0x38] sm:$0xff]
        %v3271 = vld [vmem:[%s3262 + $0x40] sm:$0xff]
        %v3272 = vld [vmem:[%s3262 + $0x48] sm:$0xff]
        %v3273 = vld [vmem:[%s3262 + $0x50] sm:$0xff]
        %v3274 = vld [vmem:[%s3262 + $0x58] sm:$0xff]
        %v3275 = vld [vmem:[%s3262 + $0x60] sm:$0xff]
        %v3276 = vld [vmem:[%s3262 + $0x68] sm:$0xff]
        %v3277 = vld [vmem:[%s3262 + $0x70] sm:$0xff]
        %v3278 = vld [vmem:[%s3262 + $0x78] sm:$0xff]
        %v3279 = vld [vmem:[%s3262 + $0x80] sm:$0xff]
        %v3280 = vld [vmem:[%s3262 + $0x88] sm:$0xff]
        %v3281 = vld [vmem:[%s3262 + $0x90] sm:$0xff]
        %v3282 = vld [vmem:[%s3262 + $0x98] sm:$0xff]
        %v3283 = vld [vmem:[%s3262 + $0xa0] sm:$0xff]
        %v3284 = vld [vmem:[%s3262 + $0xa8] sm:$0xff]
        %v3285 = vld [vmem:[%s3262 + $0xb0] sm:$0xff]
        %v3286 = vld [vmem:[%s3262 + $0xb8] sm:$0xff]
        %v3287 = vld [vmem:[%s3262 + $0xc0] sm:$0xff]
        %v3288 = vld [vmem:[%s3262 + $0xc8] sm:$0xff]
        %v3289 = vld [vmem:[%s3262 + $0xd0] sm:$0xff]
        %v3290 = vld [vmem:[%s3262 + $0xd8] sm:$0xff]
        %v3291 = vld [vmem:[%s3262 + $0xe0] sm:$0xff]
        %v3292 = vld [vmem:[%s3262 + $0xe8] sm:$0xff]
        %v3293 = vld [vmem:[%s3262 + $0xf0] sm:$0xff]
        %v3294 = vld [vmem:[%s3262 + $0xf8] sm:$0xff]
        %v3295 = vld [vmem:[%s3262 + $0x100] sm:$0xff]
        %v3296 = vld [vmem:[%s3262 + $0x108] sm:$0xff]
        %v3297 = vld [vmem:[%s3262 + $0x110] sm:$0xff]
        %v3298 = vld [vmem:[%s3262 + $0x118] sm:$0xff]
        %v3299 = vld [vmem:[%s3262 + $0x120] sm:$0xff]
        %v3300 = vld [vmem:[%s3262 + $0x128] sm:$0xff]
        %v3301 = vld [vmem:[%s3262 + $0x130] sm:$0xff]
        %v3302 = vld [vmem:[%s3262 + $0x138] sm:$0xff]
        %v3303 = vld [vmem:[%s3262 + $0x140] sm:$0xff]
        %v3304 = vld [vmem:[%s3262 + $0x148] sm:$0xff]
        %v3306 = vsel %vm2342, %v3225, 0
        %v3309 = vsel %vm2342, %v3227, 0
        %v3312 = vsel %vm2342, %v3229, 0
        %v3315 = vsel %vm2342, %v3231, 0
        %v3318 = vsel %vm2342, %v3233, 0
        %v3321 = vsel %vm2342, %v3235, 0
        %v3324 = vsel %vm2342, %v3237, 0
        %v3327 = vsel %vm2342, %v3239, 0
        %v3330 = vsel %vm2342, %v3241, 0
        %v3333 = vsel %vm2342, %v3243, 0
        %v3336 = vsel %vm2342, %v3245, 0
        %v3339 = vsel %vm2342, %v3247, 0
        %v3342 = vsel %vm2342, %v3249, 0
        %v3345 = vsel %vm2342, %v3251, 0
        %v3348 = vsel %vm2342, %v3253, 0
        %v3351 = vsel %vm2342, %v3255, 0
        %v3354 = vsel %vm2342, %v3257, 0
        %v3357 = vsel %vm2342, %v3259, 0
        %v3360 = vsel %vm2342, %v3261, 0
        %3362 = vmatprep.subr.mxu0 %v3264
        %3363 = vmatpush1.msra.mxu0 %v3263
        %3364 = vmatprep.subr.mxu0 %v3266
        %3365 = vmatpush1.msra.mxu0 %v3265
        %3366 = vmatprep.subr.mxu0 %v3268
        %3367 = vmatpush1.msra.mxu0 %v3267
        %3368 = vmatprep.subr.mxu0 %v3270
        %3369 = vmatpush1.msra.mxu0 %v3269
        %3370 = vmatprep.subr.mxu0 %v3272
        %3371 = vmatpush1.msra.mxu0 %v3271
        %3372 = vmatprep.subr.mxu0 %v3274
        %3373 = vmatpush1.msra.mxu0 %v3273
        %3374 = vmatprep.subr.mxu0 %v3276
        %3375 = vmatpush1.msra.mxu0 %v3275
        %3376 = vmatprep.subr.mxu0 %v3278
        %3377 = vmatpush1.msra.mxu0 %v3277
        %3378 = vmatprep.subr.mxu0 %v3280
        %3379 = vmatpush1.msra.mxu0 %v3279
        %3380 = vmatprep.subr.mxu0 %v3282
        %3381 = vmatpush1.msra.mxu0 %v3281
        %3382 = vmatprep.subr.mxu0 %v3284
        %3383 = vmatpush1.msra.mxu0 %v3283
        %3384 = vmatprep.subr.mxu0 %v3286
        %3385 = vmatpush1.msra.mxu0 %v3285
        %3386 = vmatprep.subr.mxu0 %v3288
        %3387 = vmatpush1.msra.mxu0 %v3287
        %3388 = vmatprep.subr.mxu0 %v3290
        %3389 = vmatpush1.msra.mxu0 %v3289
        %3390 = vmatprep.subr.mxu0 %v3292
        %3391 = vmatpush1.msra.mxu0 %v3291
        %3392 = vmatprep.subr.mxu0 %v3294
        %3393 = vmatpush1.msra.mxu0 %v3293
        %3394 = vmatprep.subr.mxu0 %v3296
        %3395 = vmatpush1.msra.mxu0 %v3295
        %3396 = vmatprep.subr.mxu0 %v3298
        %3397 = vmatpush1.msra.mxu0 %v3297
        %3398 = vmatprep.subr.mxu0 %v3300
        %3399 = vmatpush1.msra.mxu0 %v3299
        %3400 = vmatprep.subr.mxu0 %v3302
        %3401 = vmatpush1.msra.mxu0 %v3301
        %3402 = vmatprep.subr.mxu0 %v3304
        %3403 = vmatpush1.msra.mxu0 %v3303
        %3404 = vmatprep.subr.mxu0 0.0
        %3405 = vmatpush1.msra.mxu0 0.0
        %3406 = vmatprep.subr.mxu0 0.0
        %3407 = vmatpush1.msra.mxu0 0.0
        %3408 = vmatprep.subr.mxu0 0.0
        %3409 = vmatpush1.msra.mxu0 0.0
        %3410 = vmatprep.subr.mxu0 0.0
        %3411 = vmatpush1.msra.mxu0 0.0
        %3412 = vmatprep.subr.mxu0 0.0
        %3413 = vmatpush1.msra.mxu0 0.0
        %3414 = vmatprep.subr.mxu0 0.0
        %3415 = vmatpush1.msra.mxu0 0.0
        %3416 = vmatprep.subr.mxu0 0.0
        %3417 = vmatpush1.msra.mxu0 0.0
        %3418 = vmatprep.subr.mxu0 0.0
        %3419 = vmatpush1.msra.mxu0 0.0
        %3420 = vmatprep.subr.mxu0 0.0
        %3421 = vmatpush1.msra.mxu0 0.0
        %3422 = vmatprep.subr.mxu0 0.0
        %3423 = vmatpush1.msra.mxu0 0.0
        %3424 = vmatprep.subr.mxu0 0.0
        %3425 = vmatpush1.msra.mxu0 0.0
        %3426 = vmatprep.mubr.f32.mxu0 %v3306
        %3427 = vmatmul.mubr.f32.gmra.mrb[0].mxu0 %v3224
        %v3428 = vpop.f32.mrb[0].mxu0
        %v3429 = vadd.f32 0.0, %v3428
        %v3430 = vpop.f32.mrb[0].mxu0
        %v3431 = vadd.f32 0.0, %v3430
        %3432 = vmatprep.mubr.f32.mxu0 %v3309
        %3433 = vmatmul.mubr.f32.gmra.mrb[0].mxu0 %v3226
        %v3434 = vpop.f32.mrb[0].mxu0
        %v3435 = vpop.f32.mrb[0].mxu0
        %3436 = vmatprep.mubr.f32.mxu0 %v3312
        %3437 = vmatmul.mubr.f32.gmra.mrb[0].mxu0 %v3228
        %v3438 = vpop.f32.mrb[0].mxu0
        %v3439 = vadd.f32 0.0, %v3438
        %v3440 = vpop.f32.mrb[0].mxu0
        %v3441 = vadd.f32 0.0, %v3440
        %3442 = vmatprep.mubr.f32.mxu0 %v3315
        %3443 = vmatmul.mubr.f32.gmra.mrb[0].mxu0 %v3230
        %v3444 = vpop.f32.mrb[0].mxu0
        %v3445 = vpop.f32.mrb[0].mxu0
        %3446 = vmatprep.mubr.f32.mxu0 %v3318
        %3447 = vmatmul.mubr.f32.gmra.mrb[0].mxu0 %v3232
        %v3448 = vpop.f32.mrb[0].mxu0
        %v3449 = vadd.f32 0.0, %v3448
        %v3450 = vpop.f32.mrb[0].mxu0
        %v3451 = vadd.f32 0.0, %v3450
        %3452 = vmatprep.mubr.f32.mxu0 %v3321
        %3453 = vmatmul.mubr.f32.gmra.mrb[0].mxu0 %v3234
        %v3454 = vpop.f32.mrb[0].mxu0
        %v3455 = vpop.f32.mrb[0].mxu0
        %3456 = vmatprep.mubr.f32.mxu0 %v3324
        %3457 = vmatmul.mubr.f32.gmra.mrb[0].mxu0 %v3236
        %v3458 = vpop.f32.mrb[0].mxu0
        %v3459 = vadd.f32 0.0, %v3458
        %v3460 = vpop.f32.mrb[0].mxu0
        %v3461 = vadd.f32 0.0, %v3460
        %3462 = vmatprep.mubr.f32.mxu0 %v3327
        %3463 = vmatmul.mubr.f32.gmra.mrb[0].mxu0 %v3238
        %v3464 = vpop.f32.mrb[0].mxu0
        %v3465 = vpop.f32.mrb[0].mxu0
        %3466 = vmatprep.mubr.f32.mxu0 %v3330
        %3467 = vmatmul.mubr.f32.gmra.mrb[0].mxu0 %v3240
        %v3468 = vpop.f32.mrb[0].mxu0
        %v3469 = vadd.f32 0.0, %v3468
        %v3470 = vpop.f32.mrb[0].mxu0
        %v3471 = vadd.f32 0.0, %v3470
        %3472 = vmatprep.mubr.f32.mxu0 %v3333
        %3473 = vmatmul.mubr.f32.gmra.mrb[0].mxu0 %v3242
        %v3474 = vpop.f32.mrb[0].mxu0
        %v3475 = vpop.f32.mrb[0].mxu0
        %3476 = vmatprep.mubr.f32.mxu0 %v3336
        %3477 = vmatmul.mubr.f32.gmra.mrb[0].mxu0 %v3244
        %v3478 = vpop.f32.mrb[0].mxu0
        %v3479 = vadd.f32 0.0, %v3478
        %v3480 = vpop.f32.mrb[0].mxu0
        %v3481 = vadd.f32 0.0, %v3480
        %3482 = vmatprep.mubr.f32.mxu0 %v3339
        %3483 = vmatmul.mubr.f32.gmra.mrb[0].mxu0 %v3246
        %v3484 = vpop.f32.mrb[0].mxu0
        %v3485 = vpop.f32.mrb[0].mxu0
        %3486 = vmatprep.mubr.f32.mxu0 %v3342
        %3487 = vmatmul.mubr.f32.gmra.mrb[0].mxu0 %v3248
        %v3488 = vpop.f32.mrb[0].mxu0
        %v3489 = vadd.f32 0.0, %v3488
        %v3490 = vpop.f32.mrb[0].mxu0
        %v3491 = vadd.f32 0.0, %v3490
        %3492 = vmatprep.mubr.f32.mxu0 %v3345
        %3493 = vmatmul.mubr.f32.gmra.mrb[0].mxu0 %v3250
        %v3494 = vpop.f32.mrb[0].mxu0
        %v3495 = vpop.f32.mrb[0].mxu0
        %3496 = vmatprep.mubr.f32.mxu0 %v3348
        %3497 = vmatmul.mubr.f32.gmra.mrb[0].mxu0 %v3252
        %v3498 = vpop.f32.mrb[0].mxu0
        %v3499 = vadd.f32 0.0, %v3498
        %v3500 = vpop.f32.mrb[0].mxu0
        %v3501 = vadd.f32 0.0, %v3500
        %3502 = vmatprep.mubr.f32.mxu0 %v3351
        %3503 = vmatmul.mubr.f32.gmra.mrb[0].mxu0 %v3254
        %v3504 = vpop.f32.mrb[0].mxu0
        %v3505 = vpop.f32.mrb[0].mxu0
        %3506 = vmatprep.mubr.f32.mxu0 %v3354
        %3507 = vmatmul.mubr.f32.gmra.mrb[0].mxu0 %v3256
        %v3508 = vpop.f32.mrb[0].mxu0
        %v3509 = vadd.f32 0.0, %v3508
        %v3510 = vpop.f32.mrb[0].mxu0
        %v3511 = vadd.f32 0.0, %v3510
        %3512 = vmatprep.mubr.f32.mxu0 %v3357
        %3513 = vmatmul.mubr.f32.gmra.mrb[0].mxu0 %v3258
        %v3514 = vpop.f32.mrb[0].mxu0
        %v3515 = vpop.f32.mrb[0].mxu0
        %3516 = vmatprep.mubr.f32.mxu0 %v3360
        %3517 = vmatmul.mubr.f32.gmra.mrb[0].mxu0 %v3260
        %v3518 = vpop.f32.mrb[0].mxu0
        %v3519 = vadd.f32 0.0, %v3518
        %v3520 = vpop.f32.mrb[0].mxu0
        %v3521 = vadd.f32 0.0, %v3520
        %3522 = vdwg.mxu0
        %v3523 = vadd.f32 %v3204, %v3429
        %v3524 = vadd.f32 %v3205, %v3431
        %v3525 = vadd.f32 %v3206, %v3439
        %v3526 = vadd.f32 %v3207, %v3441
        %v3527 = vadd.f32 %v3208, %v3449
        %v3528 = vadd.f32 %v3209, %v3451
        %v3529 = vadd.f32 %v3210, %v3459
        %v3530 = vadd.f32 %v3211, %v3461
        %v3531 = vadd.f32 %v3212, %v3469
        %v3532 = vadd.f32 %v3213, %v3471
        %v3533 = vadd.f32 %v3214, %v3479
        %v3534 = vadd.f32 %v3215, %v3481
        %v3535 = vadd.f32 %v3216, %v3489
        %v3536 = vadd.f32 %v3217, %v3491
        %v3537 = vadd.f32 %v3218, %v3499
        %v3538 = vadd.f32 %v3219, %v3501
        %v3539 = vadd.f32 %v3220, %v3509
        %v3540 = vadd.f32 %v3221, %v3511
        %v3541 = vadd.f32 %v3222, %v3519
        %v3542 = vadd.f32 %v3223, %v3521
        %v3543 = vld [vmem:[#allocation2 + $0x40] sm:$0xff]
        %v3544 = vld [vmem:[#allocation2 + $0x48] sm:$0xff]
        %v3545 = vld [vmem:[#allocation2 + $0x50] sm:$0xff]
        %v3546 = vld [vmem:[#allocation2 + $0x58] sm:$0xff]
        %v3547 = vld [vmem:[#allocation2 + $0x60] sm:$0xff]
        %v3548 = vld [vmem:[#allocation2 + $0x68] sm:$0xff]
        %v3549 = vld [vmem:[#allocation2 + $0x70] sm:$0xff]
        %v3550 = vld [vmem:[#allocation2 + $0x78] sm:$0xff]
        %v3551 = vld [vmem:[#allocation2 + $0x80] sm:$0xff]
        %v3552 = vld [vmem:[#allocation2 + $0x88] sm:$0xff]
        %v3553 = vld [vmem:[#allocation2 + $0x90] sm:$0xff]
        %v3554 = vld [vmem:[#allocation2 + $0x98] sm:$0xff]
        %v3555 = vld [vmem:[#allocation2 + $0xa0] sm:$0xff]
        %v3556 = vld [vmem:[#allocation2 + $0xa8] sm:$0xff]
        %v3557 = vld [vmem:[#allocation2 + $0xb0] sm:$0xff]
        %v3558 = vld [vmem:[#allocation2 + $0xb8] sm:$0xff]
        %v3559 = vld [vmem:[#allocation2 + $0xc0] sm:$0xff]
        %v3560 = vld [vmem:[#allocation2 + $0xc8] sm:$0xff]
        %v3561 = vld [vmem:[#allocation2 + $0xd0] sm:$0xff]
        %v3562 = vld [vmem:[#allocation2 + $0xd8] sm:$0xff]
        %v3563 = vld [vmem:[#allocation2 + $0xe0] sm:$0xff]
        %v3564 = vld [vmem:[#allocation2 + $0xe8] sm:$0xff]
        %v3565 = vld [vmem:[#allocation2 + $0xf0] sm:$0xff]
        %v3566 = vld [vmem:[#allocation2 + $0xf8] sm:$0xff]
        %v3567 = vld [vmem:[#allocation2 + $0x100] sm:$0xff]
        %v3568 = vld [vmem:[#allocation2 + $0x108] sm:$0xff]
        %v3569 = vld [vmem:[#allocation2 + $0x110] sm:$0xff]
        %v3570 = vld [vmem:[#allocation2 + $0x118] sm:$0xff]
        %v3571 = vld [vmem:[#allocation2 + $0x120] sm:$0xff]
        %v3572 = vld [vmem:[#allocation2 + $0x128] sm:$0xff]
        %v3573 = vld [vmem:[#allocation2 + $0x130] sm:$0xff]
        %v3574 = vld [vmem:[#allocation2 + $0x138] sm:$0xff]
        %v3575 = vld [vmem:[#allocation2 + $0x140] sm:$0xff]
        %v3576 = vld [vmem:[#allocation2 + $0x148] sm:$0xff]
        %v3577 = vld [vmem:[#allocation2 + $0x150] sm:$0xff]
        %v3578 = vld [vmem:[#allocation2 + $0x158] sm:$0xff]
        %v3579 = vld [vmem:[#allocation2 + $0x160] sm:$0xff]
        %v3580 = vld [vmem:[#allocation2 + $0x168] sm:$0xff]
        %s3581 = scalar_lea.vmem %s3, 1344
        %v3582 = vld [vmem:[%s3581] sm:$0xff]
        %v3583 = vld [vmem:[%s3581 + $0x8] sm:$0xff]
        %v3584 = vld [vmem:[%s3581 + $0x10] sm:$0xff]
        %v3585 = vld [vmem:[%s3581 + $0x18] sm:$0xff]
        %v3586 = vld [vmem:[%s3581 + $0x20] sm:$0xff]
        %v3587 = vld [vmem:[%s3581 + $0x28] sm:$0xff]
        %v3588 = vld [vmem:[%s3581 + $0x30] sm:$0xff]
        %v3589 = vld [vmem:[%s3581 + $0x38] sm:$0xff]
        %v3590 = vld [vmem:[%s3581 + $0x40] sm:$0xff]
        %v3591 = vld [vmem:[%s3581 + $0x48] sm:$0xff]
        %v3592 = vld [vmem:[%s3581 + $0x50] sm:$0xff]
        %v3593 = vld [vmem:[%s3581 + $0x58] sm:$0xff]
        %v3594 = vld [vmem:[%s3581 + $0x60] sm:$0xff]
        %v3595 = vld [vmem:[%s3581 + $0x68] sm:$0xff]
        %v3596 = vld [vmem:[%s3581 + $0x70] sm:$0xff]
        %v3597 = vld [vmem:[%s3581 + $0x78] sm:$0xff]
        %v3598 = vld [vmem:[%s3581 + $0x80] sm:$0xff]
        %v3599 = vld [vmem:[%s3581 + $0x88] sm:$0xff]
        %v3600 = vld [vmem:[%s3581 + $0x90] sm:$0xff]
        %v3601 = vld [vmem:[%s3581 + $0x98] sm:$0xff]
        %v3602 = vld [vmem:[%s3581 + $0xa0] sm:$0xff]
        %v3603 = vld [vmem:[%s3581 + $0xa8] sm:$0xff]
        %v3604 = vld [vmem:[%s3581 + $0xb0] sm:$0xff]
        %v3605 = vld [vmem:[%s3581 + $0xb8] sm:$0xff]
        %v3606 = vld [vmem:[%s3581 + $0xc0] sm:$0xff]
        %v3607 = vld [vmem:[%s3581 + $0xc8] sm:$0xff]
        %v3608 = vld [vmem:[%s3581 + $0xd0] sm:$0xff]
        %v3609 = vld [vmem:[%s3581 + $0xd8] sm:$0xff]
        %v3610 = vld [vmem:[%s3581 + $0xe0] sm:$0xff]
        %v3611 = vld [vmem:[%s3581 + $0xe8] sm:$0xff]
        %v3612 = vld [vmem:[%s3581 + $0xf0] sm:$0xff]
        %v3613 = vld [vmem:[%s3581 + $0xf8] sm:$0xff]
        %v3614 = vld [vmem:[%s3581 + $0x100] sm:$0xff]
        %v3615 = vld [vmem:[%s3581 + $0x108] sm:$0xff]
        %v3616 = vld [vmem:[%s3581 + $0x110] sm:$0xff]
        %v3617 = vld [vmem:[%s3581 + $0x118] sm:$0xff]
        %v3618 = vld [vmem:[%s3581 + $0x120] sm:$0xff]
        %v3619 = vld [vmem:[%s3581 + $0x128] sm:$0xff]
        %v3620 = vld [vmem:[%s3581 + $0x130] sm:$0xff]
        %v3621 = vld [vmem:[%s3581 + $0x138] sm:$0xff]
        %v3622 = vld [vmem:[%s3581 + $0x140] sm:$0xff]
        %v3623 = vld [vmem:[%s3581 + $0x148] sm:$0xff]
        %v3625 = vsel %vm2342, %v3544, 0
        %v3628 = vsel %vm2342, %v3546, 0
        %v3631 = vsel %vm2342, %v3548, 0
        %v3634 = vsel %vm2342, %v3550, 0
        %v3637 = vsel %vm2342, %v3552, 0
        %v3640 = vsel %vm2342, %v3554, 0
        %v3643 = vsel %vm2342, %v3556, 0
        %v3646 = vsel %vm2342, %v3558, 0
        %v3649 = vsel %vm2342, %v3560, 0
        %v3652 = vsel %vm2342, %v3562, 0
        %v3655 = vsel %vm2342, %v3564, 0
        %v3658 = vsel %vm2342, %v3566, 0
        %v3661 = vsel %vm2342, %v3568, 0
        %v3664 = vsel %vm2342, %v3570, 0
        %v3667 = vsel %vm2342, %v3572, 0
        %v3670 = vsel %vm2342, %v3574, 0
        %v3673 = vsel %vm2342, %v3576, 0
        %v3676 = vsel %vm2342, %v3578, 0
        %v3679 = vsel %vm2342, %v3580, 0
        %3681 = vmatprep.subr.mxu0 %v3583
        %3682 = vmatpush1.msra.mxu0 %v3582
        %3683 = vmatprep.subr.mxu0 %v3585
        %3684 = vmatpush1.msra.mxu0 %v3584
        %3685 = vmatprep.subr.mxu0 %v3587
        %3686 = vmatpush1.msra.mxu0 %v3586
        %3687 = vmatprep.subr.mxu0 %v3589
        %3688 = vmatpush1.msra.mxu0 %v3588
        %3689 = vmatprep.subr.mxu0 %v3591
        %3690 = vmatpush1.msra.mxu0 %v3590
        %3691 = vmatprep.subr.mxu0 %v3593
        %3692 = vmatpush1.msra.mxu0 %v3592
        %3693 = vmatprep.subr.mxu0 %v3595
        %3694 = vmatpush1.msra.mxu0 %v3594
        %3695 = vmatprep.subr.mxu0 %v3597
        %3696 = vmatpush1.msra.mxu0 %v3596
        %3697 = vmatprep.subr.mxu0 %v3599
        %3698 = vmatpush1.msra.mxu0 %v3598
        %3699 = vmatprep.subr.mxu0 %v3601
        %3700 = vmatpush1.msra.mxu0 %v3600
        %3701 = vmatprep.subr.mxu0 %v3603
        %3702 = vmatpush1.msra.mxu0 %v3602
        %3703 = vmatprep.subr.mxu0 %v3605
        %3704 = vmatpush1.msra.mxu0 %v3604
        %3705 = vmatprep.subr.mxu0 %v3607
        %3706 = vmatpush1.msra.mxu0 %v3606
        %3707 = vmatprep.subr.mxu0 %v3609
        %3708 = vmatpush1.msra.mxu0 %v3608
        %3709 = vmatprep.subr.mxu0 %v3611
        %3710 = vmatpush1.msra.mxu0 %v3610
        %3711 = vmatprep.subr.mxu0 %v3613
        %3712 = vmatpush1.msra.mxu0 %v3612
        %3713 = vmatprep.subr.mxu0 %v3615
        %3714 = vmatpush1.msra.mxu0 %v3614
        %3715 = vmatprep.subr.mxu0 %v3617
        %3716 = vmatpush1.msra.mxu0 %v3616
        %3717 = vmatprep.subr.mxu0 %v3619
        %3718 = vmatpush1.msra.mxu0 %v3618
        %3719 = vmatprep.subr.mxu0 %v3621
        %3720 = vmatpush1.msra.mxu0 %v3620
        %3721 = vmatprep.subr.mxu0 %v3623
        %3722 = vmatpush1.msra.mxu0 %v3622
        %3723 = vmatprep.subr.mxu0 0.0
        %3724 = vmatpush1.msra.mxu0 0.0
        %3725 = vmatprep.subr.mxu0 0.0
        %3726 = vmatpush1.msra.mxu0 0.0
        %3727 = vmatprep.subr.mxu0 0.0
        %3728 = vmatpush1.msra.mxu0 0.0
        %3729 = vmatprep.subr.mxu0 0.0
        %3730 = vmatpush1.msra.mxu0 0.0
        %3731 = vmatprep.subr.mxu0 0.0
        %3732 = vmatpush1.msra.mxu0 0.0
        %3733 = vmatprep.subr.mxu0 0.0
        %3734 = vmatpush1.msra.mxu0 0.0
        %3735 = vmatprep.subr.mxu0 0.0
        %3736 = vmatpush1.msra.mxu0 0.0
        %3737 = vmatprep.subr.mxu0 0.0
        %3738 = vmatpush1.msra.mxu0 0.0
        %3739 = vmatprep.subr.mxu0 0.0
        %3740 = vmatpush1.msra.mxu0 0.0
        %3741 = vmatprep.subr.mxu0 0.0
        %3742 = vmatpush1.msra.mxu0 0.0
        %3743 = vmatprep.subr.mxu0 0.0
        %3744 = vmatpush1.msra.mxu0 0.0
        %3745 = vmatprep.mubr.f32.mxu0 %v3625
        %3746 = vmatmul.mubr.f32.gmra.mrb[0].mxu0 %v3543
        %v3747 = vpop.f32.mrb[0].mxu0
        %v3748 = vadd.f32 0.0, %v3747
        %v3749 = vpop.f32.mrb[0].mxu0
        %v3750 = vadd.f32 0.0, %v3749
        %3751 = vmatprep.mubr.f32.mxu0 %v3628
        %3752 = vmatmul.mubr.f32.gmra.mrb[0].mxu0 %v3545
        %v3753 = vpop.f32.mrb[0].mxu0
        %v3754 = vpop.f32.mrb[0].mxu0
        %3755 = vmatprep.mubr.f32.mxu0 %v3631
        %3756 = vmatmul.mubr.f32.gmra.mrb[0].mxu0 %v3547
        %v3757 = vpop.f32.mrb[0].mxu0
        %v3758 = vadd.f32 0.0, %v3757
        %v3759 = vpop.f32.mrb[0].mxu0
        %v3760 = vadd.f32 0.0, %v3759
        %3761 = vmatprep.mubr.f32.mxu0 %v3634
        %3762 = vmatmul.mubr.f32.gmra.mrb[0].mxu0 %v3549
        %v3763 = vpop.f32.mrb[0].mxu0
        %v3764 = vpop.f32.mrb[0].mxu0
        %3765 = vmatprep.mubr.f32.mxu0 %v3637
        %3766 = vmatmul.mubr.f32.gmra.mrb[0].mxu0 %v3551
        %v3767 = vpop.f32.mrb[0].mxu0
        %v3768 = vadd.f32 0.0, %v3767
        %v3769 = vpop.f32.mrb[0].mxu0
        %v3770 = vadd.f32 0.0, %v3769
        %3771 = vmatprep.mubr.f32.mxu0 %v3640
        %3772 = vmatmul.mubr.f32.gmra.mrb[0].mxu0 %v3553
        %v3773 = vpop.f32.mrb[0].mxu0
        %v3774 = vpop.f32.mrb[0].mxu0
        %3775 = vmatprep.mubr.f32.mxu0 %v3643
        %3776 = vmatmul.mubr.f32.gmra.mrb[0].mxu0 %v3555
        %v3777 = vpop.f32.mrb[0].mxu0
        %v3778 = vadd.f32 0.0, %v3777
        %v3779 = vpop.f32.mrb[0].mxu0
        %v3780 = vadd.f32 0.0, %v3779
        %3781 = vmatprep.mubr.f32.mxu0 %v3646
        %3782 = vmatmul.mubr.f32.gmra.mrb[0].mxu0 %v3557
        %v3783 = vpop.f32.mrb[0].mxu0
        %v3784 = vpop.f32.mrb[0].mxu0
        %3785 = vmatprep.mubr.f32.mxu0 %v3649
        %3786 = vmatmul.mubr.f32.gmra.mrb[0].mxu0 %v3559
        %v3787 = vpop.f32.mrb[0].mxu0
        %v3788 = vadd.f32 0.0, %v3787
        %v3789 = vpop.f32.mrb[0].mxu0
        %v3790 = vadd.f32 0.0, %v3789
        %3791 = vmatprep.mubr.f32.mxu0 %v3652
        %3792 = vmatmul.mubr.f32.gmra.mrb[0].mxu0 %v3561
        %v3793 = vpop.f32.mrb[0].mxu0
        %v3794 = vpop.f32.mrb[0].mxu0
        %3795 = vmatprep.mubr.f32.mxu0 %v3655
        %3796 = vmatmul.mubr.f32.gmra.mrb[0].mxu0 %v3563
        %v3797 = vpop.f32.mrb[0].mxu0
        %v3798 = vadd.f32 0.0, %v3797
        %v3799 = vpop.f32.mrb[0].mxu0
        %v3800 = vadd.f32 0.0, %v3799
        %3801 = vmatprep.mubr.f32.mxu0 %v3658
        %3802 = vmatmul.mubr.f32.gmra.mrb[0].mxu0 %v3565
        %v3803 = vpop.f32.mrb[0].mxu0
        %v3804 = vpop.f32.mrb[0].mxu0
        %3805 = vmatprep.mubr.f32.mxu0 %v3661
        %3806 = vmatmul.mubr.f32.gmra.mrb[0].mxu0 %v3567
        %v3807 = vpop.f32.mrb[0].mxu0
        %v3808 = vadd.f32 0.0, %v3807
        %v3809 = vpop.f32.mrb[0].mxu0
        %v3810 = vadd.f32 0.0, %v3809
        %3811 = vmatprep.mubr.f32.mxu0 %v3664
        %3812 = vmatmul.mubr.f32.gmra.mrb[0].mxu0 %v3569
        %v3813 = vpop.f32.mrb[0].mxu0
        %v3814 = vpop.f32.mrb[0].mxu0
        %3815 = vmatprep.mubr.f32.mxu0 %v3667
        %3816 = vmatmul.mubr.f32.gmra.mrb[0].mxu0 %v3571
        %v3817 = vpop.f32.mrb[0].mxu0
        %v3818 = vadd.f32 0.0, %v3817
        %v3819 = vpop.f32.mrb[0].mxu0
        %v3820 = vadd.f32 0.0, %v3819
        %3821 = vmatprep.mubr.f32.mxu0 %v3670
        %3822 = vmatmul.mubr.f32.gmra.mrb[0].mxu0 %v3573
        %v3823 = vpop.f32.mrb[0].mxu0
        %v3824 = vpop.f32.mrb[0].mxu0
        %3825 = vmatprep.mubr.f32.mxu0 %v3673
        %3826 = vmatmul.mubr.f32.gmra.mrb[0].mxu0 %v3575
        %v3827 = vpop.f32.mrb[0].mxu0
        %v3828 = vadd.f32 0.0, %v3827
        %v3829 = vpop.f32.mrb[0].mxu0
        %v3830 = vadd.f32 0.0, %v3829
        %3831 = vmatprep.mubr.f32.mxu0 %v3676
        %3832 = vmatmul.mubr.f32.gmra.mrb[0].mxu0 %v3577
        %v3833 = vpop.f32.mrb[0].mxu0
        %v3834 = vpop.f32.mrb[0].mxu0
        %3835 = vmatprep.mubr.f32.mxu0 %v3679
        %3836 = vmatmul.mubr.f32.gmra.mrb[0].mxu0 %v3579
        %v3837 = vpop.f32.mrb[0].mxu0
        %v3838 = vadd.f32 0.0, %v3837
        %v3839 = vpop.f32.mrb[0].mxu0
        %v3840 = vadd.f32 0.0, %v3839
        %3841 = vdwg.mxu0
        %v3842 = vadd.f32 %v3523, %v3748
        %v3843 = vadd.f32 %v3524, %v3750
        %v3844 = vadd.f32 %v3525, %v3758
        %v3845 = vadd.f32 %v3526, %v3760
        %v3846 = vadd.f32 %v3527, %v3768
        %v3847 = vadd.f32 %v3528, %v3770
        %v3848 = vadd.f32 %v3529, %v3778
        %v3849 = vadd.f32 %v3530, %v3780
        %v3850 = vadd.f32 %v3531, %v3788
        %v3851 = vadd.f32 %v3532, %v3790
        %v3852 = vadd.f32 %v3533, %v3798
        %v3853 = vadd.f32 %v3534, %v3800
        %v3854 = vadd.f32 %v3535, %v3808
        %v3855 = vadd.f32 %v3536, %v3810
        %v3856 = vadd.f32 %v3537, %v3818
        %v3857 = vadd.f32 %v3538, %v3820
        %v3858 = vadd.f32 %v3539, %v3828
        %v3859 = vadd.f32 %v3540, %v3830
        %v3860 = vadd.f32 %v3541, %v3838
        %v3861 = vadd.f32 %v3542, %v3840
        %v3862 = vld [vmem:[#allocation2 + $0x50] sm:$0xff]
        %v3863 = vld [vmem:[#allocation2 + $0x58] sm:$0xff]
        %v3864 = vld [vmem:[#allocation2 + $0x60] sm:$0xff]
        %v3865 = vld [vmem:[#allocation2 + $0x68] sm:$0xff]
        %v3866 = vld [vmem:[#allocation2 + $0x70] sm:$0xff]
        %v3867 = vld [vmem:[#allocation2 + $0x78] sm:$0xff]
        %v3868 = vld [vmem:[#allocation2 + $0x80] sm:$0xff]
        %v3869 = vld [vmem:[#allocation2 + $0x88] sm:$0xff]
        %v3870 = vld [vmem:[#allocation2 + $0x90] sm:$0xff]
        %v3871 = vld [vmem:[#allocation2 + $0x98] sm:$0xff]
        %v3872 = vld [vmem:[#allocation2 + $0xa0] sm:$0xff]
        %v3873 = vld [vmem:[#allocation2 + $0xa8] sm:$0xff]
        %v3874 = vld [vmem:[#allocation2 + $0xb0] sm:$0xff]
        %v3875 = vld [vmem:[#allocation2 + $0xb8] sm:$0xff]
        %v3876 = vld [vmem:[#allocation2 + $0xc0] sm:$0xff]
        %v3877 = vld [vmem:[#allocation2 + $0xc8] sm:$0xff]
        %v3878 = vld [vmem:[#allocation2 + $0xd0] sm:$0xff]
        %v3879 = vld [vmem:[#allocation2 + $0xd8] sm:$0xff]
        %v3880 = vld [vmem:[#allocation2 + $0xe0] sm:$0xff]
        %v3881 = vld [vmem:[#allocation2 + $0xe8] sm:$0xff]
        %v3882 = vld [vmem:[#allocation2 + $0xf0] sm:$0xff]
        %v3883 = vld [vmem:[#allocation2 + $0xf8] sm:$0xff]
        %v3884 = vld [vmem:[#allocation2 + $0x100] sm:$0xff]
        %v3885 = vld [vmem:[#allocation2 + $0x108] sm:$0xff]
        %v3886 = vld [vmem:[#allocation2 + $0x110] sm:$0xff]
        %v3887 = vld [vmem:[#allocation2 + $0x118] sm:$0xff]
        %v3888 = vld [vmem:[#allocation2 + $0x120] sm:$0xff]
        %v3889 = vld [vmem:[#allocation2 + $0x128] sm:$0xff]
        %v3890 = vld [vmem:[#allocation2 + $0x130] sm:$0xff]
        %v3891 = vld [vmem:[#allocation2 + $0x138] sm:$0xff]
        %v3892 = vld [vmem:[#allocation2 + $0x140] sm:$0xff]
        %v3893 = vld [vmem:[#allocation2 + $0x148] sm:$0xff]
        %v3894 = vld [vmem:[#allocation2 + $0x150] sm:$0xff]
        %v3895 = vld [vmem:[#allocation2 + $0x158] sm:$0xff]
        %v3896 = vld [vmem:[#allocation2 + $0x160] sm:$0xff]
        %v3897 = vld [vmem:[#allocation2 + $0x168] sm:$0xff]
        %v3898 = vld [vmem:[#allocation2 + $0x170] sm:$0xff]
        %v3899 = vld [vmem:[#allocation2 + $0x178] sm:$0xff]
        %s3900 = scalar_lea.vmem %s3, 1680
        %v3901 = vld [vmem:[%s3900] sm:$0xff]
        %v3902 = vld [vmem:[%s3900 + $0x8] sm:$0xff]
        %v3903 = vld [vmem:[%s3900 + $0x10] sm:$0xff]
        %v3904 = vld [vmem:[%s3900 + $0x18] sm:$0xff]
        %v3905 = vld [vmem:[%s3900 + $0x20] sm:$0xff]
        %v3906 = vld [vmem:[%s3900 + $0x28] sm:$0xff]
        %v3907 = vld [vmem:[%s3900 + $0x30] sm:$0xff]
        %v3908 = vld [vmem:[%s3900 + $0x38] sm:$0xff]
        %v3909 = vld [vmem:[%s3900 + $0x40] sm:$0xff]
        %v3910 = vld [vmem:[%s3900 + $0x48] sm:$0xff]
        %v3911 = vld [vmem:[%s3900 + $0x50] sm:$0xff]
        %v3912 = vld [vmem:[%s3900 + $0x58] sm:$0xff]
        %v3913 = vld [vmem:[%s3900 + $0x60] sm:$0xff]
        %v3914 = vld [vmem:[%s3900 + $0x68] sm:$0xff]
        %v3915 = vld [vmem:[%s3900 + $0x70] sm:$0xff]
        %v3916 = vld [vmem:[%s3900 + $0x78] sm:$0xff]
        %v3917 = vld [vmem:[%s3900 + $0x80] sm:$0xff]
        %v3918 = vld [vmem:[%s3900 + $0x88] sm:$0xff]
        %v3919 = vld [vmem:[%s3900 + $0x90] sm:$0xff]
        %v3920 = vld [vmem:[%s3900 + $0x98] sm:$0xff]
        %v3921 = vld [vmem:[%s3900 + $0xa0] sm:$0xff]
        %v3922 = vld [vmem:[%s3900 + $0xa8] sm:$0xff]
        %v3923 = vld [vmem:[%s3900 + $0xb0] sm:$0xff]
        %v3924 = vld [vmem:[%s3900 + $0xb8] sm:$0xff]
        %v3925 = vld [vmem:[%s3900 + $0xc0] sm:$0xff]
        %v3926 = vld [vmem:[%s3900 + $0xc8] sm:$0xff]
        %v3927 = vld [vmem:[%s3900 + $0xd0] sm:$0xff]
        %v3928 = vld [vmem:[%s3900 + $0xd8] sm:$0xff]
        %v3929 = vld [vmem:[%s3900 + $0xe0] sm:$0xff]
        %v3930 = vld [vmem:[%s3900 + $0xe8] sm:$0xff]
        %v3931 = vld [vmem:[%s3900 + $0xf0] sm:$0xff]
        %v3932 = vld [vmem:[%s3900 + $0xf8] sm:$0xff]
        %v3933 = vld [vmem:[%s3900 + $0x100] sm:$0xff]
        %v3934 = vld [vmem:[%s3900 + $0x108] sm:$0xff]
        %v3935 = vld [vmem:[%s3900 + $0x110] sm:$0xff]
        %v3936 = vld [vmem:[%s3900 + $0x118] sm:$0xff]
        %v3937 = vld [vmem:[%s3900 + $0x120] sm:$0xff]
        %v3938 = vld [vmem:[%s3900 + $0x128] sm:$0xff]
        %v3939 = vld [vmem:[%s3900 + $0x130] sm:$0xff]
        %v3940 = vld [vmem:[%s3900 + $0x138] sm:$0xff]
        %v3941 = vld [vmem:[%s3900 + $0x140] sm:$0xff]
        %v3942 = vld [vmem:[%s3900 + $0x148] sm:$0xff]
        %v3944 = vsel %vm2342, %v3863, 0
        %v3947 = vsel %vm2342, %v3865, 0
        %v3950 = vsel %vm2342, %v3867, 0
        %v3953 = vsel %vm2342, %v3869, 0
        %v3956 = vsel %vm2342, %v3871, 0
        %v3959 = vsel %vm2342, %v3873, 0
        %v3962 = vsel %vm2342, %v3875, 0
        %v3965 = vsel %vm2342, %v3877, 0
        %v3968 = vsel %vm2342, %v3879, 0
        %v3971 = vsel %vm2342, %v3881, 0
        %v3974 = vsel %vm2342, %v3883, 0
        %v3977 = vsel %vm2342, %v3885, 0
        %v3980 = vsel %vm2342, %v3887, 0
        %v3983 = vsel %vm2342, %v3889, 0
        %v3986 = vsel %vm2342, %v3891, 0
        %v3989 = vsel %vm2342, %v3893, 0
        %v3992 = vsel %vm2342, %v3895, 0
        %v3995 = vsel %vm2342, %v3897, 0
        %v3998 = vsel %vm2342, %v3899, 0
        %4000 = vmatprep.subr.mxu0 %v3902
        %4001 = vmatpush1.msra.mxu0 %v3901
        %4002 = vmatprep.subr.mxu0 %v3904
        %4003 = vmatpush1.msra.mxu0 %v3903
        %4004 = vmatprep.subr.mxu0 %v3906
        %4005 = vmatpush1.msra.mxu0 %v3905
        %4006 = vmatprep.subr.mxu0 %v3908
        %4007 = vmatpush1.msra.mxu0 %v3907
        %4008 = vmatprep.subr.mxu0 %v3910
        %4009 = vmatpush1.msra.mxu0 %v3909
        %4010 = vmatprep.subr.mxu0 %v3912
        %4011 = vmatpush1.msra.mxu0 %v3911
        %4012 = vmatprep.subr.mxu0 %v3914
        %4013 = vmatpush1.msra.mxu0 %v3913
        %4014 = vmatprep.subr.mxu0 %v3916
        %4015 = vmatpush1.msra.mxu0 %v3915
        %4016 = vmatprep.subr.mxu0 %v3918
        %4017 = vmatpush1.msra.mxu0 %v3917
        %4018 = vmatprep.subr.mxu0 %v3920
        %4019 = vmatpush1.msra.mxu0 %v3919
        %4020 = vmatprep.subr.mxu0 %v3922
        %4021 = vmatpush1.msra.mxu0 %v3921
        %4022 = vmatprep.subr.mxu0 %v3924
        %4023 = vmatpush1.msra.mxu0 %v3923
        %4024 = vmatprep.subr.mxu0 %v3926
        %4025 = vmatpush1.msra.mxu0 %v3925
        %4026 = vmatprep.subr.mxu0 %v3928
        %4027 = vmatpush1.msra.mxu0 %v3927
        %4028 = vmatprep.subr.mxu0 %v3930
        %4029 = vmatpush1.msra.mxu0 %v3929
        %4030 = vmatprep.subr.mxu0 %v3932
        %4031 = vmatpush1.msra.mxu0 %v3931
        %4032 = vmatprep.subr.mxu0 %v3934
        %4033 = vmatpush1.msra.mxu0 %v3933
        %4034 = vmatprep.subr.mxu0 %v3936
        %4035 = vmatpush1.msra.mxu0 %v3935
        %4036 = vmatprep.subr.mxu0 %v3938
        %4037 = vmatpush1.msra.mxu0 %v3937
        %4038 = vmatprep.subr.mxu0 %v3940
        %4039 = vmatpush1.msra.mxu0 %v3939
        %4040 = vmatprep.subr.mxu0 %v3942
        %4041 = vmatpush1.msra.mxu0 %v3941
        %4042 = vmatprep.subr.mxu0 0.0
        %4043 = vmatpush1.msra.mxu0 0.0
        %4044 = vmatprep.subr.mxu0 0.0
        %4045 = vmatpush1.msra.mxu0 0.0
        %4046 = vmatprep.subr.mxu0 0.0
        %4047 = vmatpush1.msra.mxu0 0.0
        %4048 = vmatprep.subr.mxu0 0.0
        %4049 = vmatpush1.msra.mxu0 0.0
        %4050 = vmatprep.subr.mxu0 0.0
        %4051 = vmatpush1.msra.mxu0 0.0
        %4052 = vmatprep.subr.mxu0 0.0
        %4053 = vmatpush1.msra.mxu0 0.0
        %4054 = vmatprep.subr.mxu0 0.0
        %4055 = vmatpush1.msra.mxu0 0.0
        %4056 = vmatprep.subr.mxu0 0.0
        %4057 = vmatpush1.msra.mxu0 0.0
        %4058 = vmatprep.subr.mxu0 0.0
        %4059 = vmatpush1.msra.mxu0 0.0
        %4060 = vmatprep.subr.mxu0 0.0
        %4061 = vmatpush1.msra.mxu0 0.0
        %4062 = vmatprep.subr.mxu0 0.0
        %4063 = vmatpush1.msra.mxu0 0.0
        %4064 = vmatprep.mubr.f32.mxu0 %v3944
        %4065 = vmatmul.mubr.f32.gmra.mrb[0].mxu0 %v3862
        %v4066 = vpop.f32.mrb[0].mxu0
        %v4067 = vadd.f32 0.0, %v4066
        %v4068 = vpop.f32.mrb[0].mxu0
        %v4069 = vadd.f32 0.0, %v4068
        %4070 = vmatprep.mubr.f32.mxu0 %v3947
        %4071 = vmatmul.mubr.f32.gmra.mrb[0].mxu0 %v3864
        %v4072 = vpop.f32.mrb[0].mxu0
        %v4073 = vpop.f32.mrb[0].mxu0
        %4074 = vmatprep.mubr.f32.mxu0 %v3950
        %4075 = vmatmul.mubr.f32.gmra.mrb[0].mxu0 %v3866
        %v4076 = vpop.f32.mrb[0].mxu0
        %v4077 = vadd.f32 0.0, %v4076
        %v4078 = vpop.f32.mrb[0].mxu0
        %v4079 = vadd.f32 0.0, %v4078
        %4080 = vmatprep.mubr.f32.mxu0 %v3953
        %4081 = vmatmul.mubr.f32.gmra.mrb[0].mxu0 %v3868
        %v4082 = vpop.f32.mrb[0].mxu0
        %v4083 = vpop.f32.mrb[0].mxu0
        %4084 = vmatprep.mubr.f32.mxu0 %v3956
        %4085 = vmatmul.mubr.f32.gmra.mrb[0].mxu0 %v3870
        %v4086 = vpop.f32.mrb[0].mxu0
        %v4087 = vadd.f32 0.0, %v4086
        %v4088 = vpop.f32.mrb[0].mxu0
        %v4089 = vadd.f32 0.0, %v4088
        %4090 = vmatprep.mubr.f32.mxu0 %v3959
        %4091 = vmatmul.mubr.f32.gmra.mrb[0].mxu0 %v3872
        %v4092 = vpop.f32.mrb[0].mxu0
        %v4093 = vpop.f32.mrb[0].mxu0
        %4094 = vmatprep.mubr.f32.mxu0 %v3962
        %4095 = vmatmul.mubr.f32.gmra.mrb[0].mxu0 %v3874
        %v4096 = vpop.f32.mrb[0].mxu0
        %v4097 = vadd.f32 0.0, %v4096
        %v4098 = vpop.f32.mrb[0].mxu0
        %v4099 = vadd.f32 0.0, %v4098
        %4100 = vmatprep.mubr.f32.mxu0 %v3965
        %4101 = vmatmul.mubr.f32.gmra.mrb[0].mxu0 %v3876
        %v4102 = vpop.f32.mrb[0].mxu0
        %v4103 = vpop.f32.mrb[0].mxu0
        %4104 = vmatprep.mubr.f32.mxu0 %v3968
        %4105 = vmatmul.mubr.f32.gmra.mrb[0].mxu0 %v3878
        %v4106 = vpop.f32.mrb[0].mxu0
        %v4107 = vadd.f32 0.0, %v4106
        %v4108 = vpop.f32.mrb[0].mxu0
        %v4109 = vadd.f32 0.0, %v4108
        %4110 = vmatprep.mubr.f32.mxu0 %v3971
        %4111 = vmatmul.mubr.f32.gmra.mrb[0].mxu0 %v3880
        %v4112 = vpop.f32.mrb[0].mxu0
        %v4113 = vpop.f32.mrb[0].mxu0
        %4114 = vmatprep.mubr.f32.mxu0 %v3974
        %4115 = vmatmul.mubr.f32.gmra.mrb[0].mxu0 %v3882
        %v4116 = vpop.f32.mrb[0].mxu0
        %v4117 = vadd.f32 0.0, %v4116
        %v4118 = vpop.f32.mrb[0].mxu0
        %v4119 = vadd.f32 0.0, %v4118
        %4120 = vmatprep.mubr.f32.mxu0 %v3977
        %4121 = vmatmul.mubr.f32.gmra.mrb[0].mxu0 %v3884
        %v4122 = vpop.f32.mrb[0].mxu0
        %v4123 = vpop.f32.mrb[0].mxu0
        %4124 = vmatprep.mubr.f32.mxu0 %v3980
        %4125 = vmatmul.mubr.f32.gmra.mrb[0].mxu0 %v3886
        %v4126 = vpop.f32.mrb[0].mxu0
        %v4127 = vadd.f32 0.0, %v4126
        %v4128 = vpop.f32.mrb[0].mxu0
        %v4129 = vadd.f32 0.0, %v4128
        %4130 = vmatprep.mubr.f32.mxu0 %v3983
        %4131 = vmatmul.mubr.f32.gmra.mrb[0].mxu0 %v3888
        %v4132 = vpop.f32.mrb[0].mxu0
        %v4133 = vpop.f32.mrb[0].mxu0
        %4134 = vmatprep.mubr.f32.mxu0 %v3986
        %4135 = vmatmul.mubr.f32.gmra.mrb[0].mxu0 %v3890
        %v4136 = vpop.f32.mrb[0].mxu0
        %v4137 = vadd.f32 0.0, %v4136
        %v4138 = vpop.f32.mrb[0].mxu0
        %v4139 = vadd.f32 0.0, %v4138
        %4140 = vmatprep.mubr.f32.mxu0 %v3989
        %4141 = vmatmul.mubr.f32.gmra.mrb[0].mxu0 %v3892
        %v4142 = vpop.f32.mrb[0].mxu0
        %v4143 = vpop.f32.mrb[0].mxu0
        %4144 = vmatprep.mubr.f32.mxu0 %v3992
        %4145 = vmatmul.mubr.f32.gmra.mrb[0].mxu0 %v3894
        %v4146 = vpop.f32.mrb[0].mxu0
        %v4147 = vadd.f32 0.0, %v4146
        %v4148 = vpop.f32.mrb[0].mxu0
        %v4149 = vadd.f32 0.0, %v4148
        %4150 = vmatprep.mubr.f32.mxu0 %v3995
        %4151 = vmatmul.mubr.f32.gmra.mrb[0].mxu0 %v3896
        %v4152 = vpop.f32.mrb[0].mxu0
        %v4153 = vpop.f32.mrb[0].mxu0
        %4154 = vmatprep.mubr.f32.mxu0 %v3998
        %4155 = vmatmul.mubr.f32.gmra.mrb[0].mxu0 %v3898
        %v4156 = vpop.f32.mrb[0].mxu0
        %v4157 = vadd.f32 0.0, %v4156
        %v4158 = vpop.f32.mrb[0].mxu0
        %v4159 = vadd.f32 0.0, %v4158
        %4160 = vdwg.mxu0
        %v4161 = vadd.f32 %v3842, %v4067
        %v4162 = vadd.f32 %v3843, %v4069
        %v4163 = vadd.f32 %v3844, %v4077
        %v4164 = vadd.f32 %v3845, %v4079
        %v4165 = vadd.f32 %v3846, %v4087
        %v4166 = vadd.f32 %v3847, %v4089
        %v4167 = vadd.f32 %v3848, %v4097
        %v4168 = vadd.f32 %v3849, %v4099
        %v4169 = vadd.f32 %v3850, %v4107
        %v4170 = vadd.f32 %v3851, %v4109
        %v4171 = vadd.f32 %v3852, %v4117
        %v4172 = vadd.f32 %v3853, %v4119
        %v4173 = vadd.f32 %v3854, %v4127
        %v4174 = vadd.f32 %v3855, %v4129
        %v4175 = vadd.f32 %v3856, %v4137
        %v4176 = vadd.f32 %v3857, %v4139
        %v4177 = vadd.f32 %v3858, %v4147
        %v4178 = vadd.f32 %v3859, %v4149
        %v4179 = vadd.f32 %v3860, %v4157
        %v4180 = vadd.f32 %v3861, %v4159
        %v4181 = vld [vmem:[#allocation2 + $0x60] sm:$0xff]
        %v4182 = vld [vmem:[#allocation2 + $0x68] sm:$0xff]
        %v4183 = vld [vmem:[#allocation2 + $0x70] sm:$0xff]
        %v4184 = vld [vmem:[#allocation2 + $0x78] sm:$0xff]
        %v4185 = vld [vmem:[#allocation2 + $0x80] sm:$0xff]
        %v4186 = vld [vmem:[#allocation2 + $0x88] sm:$0xff]
        %v4187 = vld [vmem:[#allocation2 + $0x90] sm:$0xff]
        %v4188 = vld [vmem:[#allocation2 + $0x98] sm:$0xff]
        %v4189 = vld [vmem:[#allocation2 + $0xa0] sm:$0xff]
        %v4190 = vld [vmem:[#allocation2 + $0xa8] sm:$0xff]
        %v4191 = vld [vmem:[#allocation2 + $0xb0] sm:$0xff]
        %v4192 = vld [vmem:[#allocation2 + $0xb8] sm:$0xff]
        %v4193 = vld [vmem:[#allocation2 + $0xc0] sm:$0xff]
        %v4194 = vld [vmem:[#allocation2 + $0xc8] sm:$0xff]
        %v4195 = vld [vmem:[#allocation2 + $0xd0] sm:$0xff]
        %v4196 = vld [vmem:[#allocation2 + $0xd8] sm:$0xff]
        %v4197 = vld [vmem:[#allocation2 + $0xe0] sm:$0xff]
        %v4198 = vld [vmem:[#allocation2 + $0xe8] sm:$0xff]
        %v4199 = vld [vmem:[#allocation2 + $0xf0] sm:$0xff]
        %v4200 = vld [vmem:[#allocation2 + $0xf8] sm:$0xff]
        %v4201 = vld [vmem:[#allocation2 + $0x100] sm:$0xff]
        %v4202 = vld [vmem:[#allocation2 + $0x108] sm:$0xff]
        %v4203 = vld [vmem:[#allocation2 + $0x110] sm:$0xff]
        %v4204 = vld [vmem:[#allocation2 + $0x118] sm:$0xff]
        %v4205 = vld [vmem:[#allocation2 + $0x120] sm:$0xff]
        %v4206 = vld [vmem:[#allocation2 + $0x128] sm:$0xff]
        %v4207 = vld [vmem:[#allocation2 + $0x130] sm:$0xff]
        %v4208 = vld [vmem:[#allocation2 + $0x138] sm:$0xff]
        %v4209 = vld [vmem:[#allocation2 + $0x140] sm:$0xff]
        %v4210 = vld [vmem:[#allocation2 + $0x148] sm:$0xff]
        %v4211 = vld [vmem:[#allocation2 + $0x150] sm:$0xff]
        %v4212 = vld [vmem:[#allocation2 + $0x158] sm:$0xff]
        %v4213 = vld [vmem:[#allocation2 + $0x160] sm:$0xff]
        %v4214 = vld [vmem:[#allocation2 + $0x168] sm:$0xff]
        %v4215 = vld [vmem:[#allocation2 + $0x170] sm:$0xff]
        %v4216 = vld [vmem:[#allocation2 + $0x178] sm:$0xff]
        %v4217 = vld [vmem:[#allocation2 + $0x180] sm:$0xff]
        %v4218 = vld [vmem:[#allocation2 + $0x188] sm:$0xff]
        %s4219 = scalar_lea.vmem %s3, 2016
        %v4220 = vld [vmem:[%s4219] sm:$0xff]
        %v4221 = vld [vmem:[%s4219 + $0x8] sm:$0xff]
        %v4222 = vld [vmem:[%s4219 + $0x10] sm:$0xff]
        %v4223 = vld [vmem:[%s4219 + $0x18] sm:$0xff]
        %v4224 = vld [vmem:[%s4219 + $0x20] sm:$0xff]
        %v4225 = vld [vmem:[%s4219 + $0x28] sm:$0xff]
        %v4226 = vld [vmem:[%s4219 + $0x30] sm:$0xff]
        %v4227 = vld [vmem:[%s4219 + $0x38] sm:$0xff]
        %v4228 = vld [vmem:[%s4219 + $0x40] sm:$0xff]
        %v4229 = vld [vmem:[%s4219 + $0x48] sm:$0xff]
        %v4230 = vld [vmem:[%s4219 + $0x50] sm:$0xff]
        %v4231 = vld [vmem:[%s4219 + $0x58] sm:$0xff]
        %v4232 = vld [vmem:[%s4219 + $0x60] sm:$0xff]
        %v4233 = vld [vmem:[%s4219 + $0x68] sm:$0xff]
        %v4234 = vld [vmem:[%s4219 + $0x70] sm:$0xff]
        %v4235 = vld [vmem:[%s4219 + $0x78] sm:$0xff]
        %v4236 = vld [vmem:[%s4219 + $0x80] sm:$0xff]
        %v4237 = vld [vmem:[%s4219 + $0x88] sm:$0xff]
        %v4238 = vld [vmem:[%s4219 + $0x90] sm:$0xff]
        %v4239 = vld [vmem:[%s4219 + $0x98] sm:$0xff]
        %v4240 = vld [vmem:[%s4219 + $0xa0] sm:$0xff]
        %v4241 = vld [vmem:[%s4219 + $0xa8] sm:$0xff]
        %v4242 = vld [vmem:[%s4219 + $0xb0] sm:$0xff]
        %v4243 = vld [vmem:[%s4219 + $0xb8] sm:$0xff]
        %v4244 = vld [vmem:[%s4219 + $0xc0] sm:$0xff]
        %v4245 = vld [vmem:[%s4219 + $0xc8] sm:$0xff]
        %v4246 = vld [vmem:[%s4219 + $0xd0] sm:$0xff]
        %v4247 = vld [vmem:[%s4219 + $0xd8] sm:$0xff]
        %v4248 = vld [vmem:[%s4219 + $0xe0] sm:$0xff]
        %v4249 = vld [vmem:[%s4219 + $0xe8] sm:$0xff]
        %v4250 = vld [vmem:[%s4219 + $0xf0] sm:$0xff]
        %v4251 = vld [vmem:[%s4219 + $0xf8] sm:$0xff]
        %v4252 = vld [vmem:[%s4219 + $0x100] sm:$0xff]
        %v4253 = vld [vmem:[%s4219 + $0x108] sm:$0xff]
        %v4254 = vld [vmem:[%s4219 + $0x110] sm:$0xff]
        %v4255 = vld [vmem:[%s4219 + $0x118] sm:$0xff]
        %v4256 = vld [vmem:[%s4219 + $0x120] sm:$0xff]
        %v4257 = vld [vmem:[%s4219 + $0x128] sm:$0xff]
        %v4258 = vld [vmem:[%s4219 + $0x130] sm:$0xff]
        %v4259 = vld [vmem:[%s4219 + $0x138] sm:$0xff]
        %v4260 = vld [vmem:[%s4219 + $0x140] sm:$0xff]
        %v4261 = vld [vmem:[%s4219 + $0x148] sm:$0xff]
        %v4263 = vsel %vm2342, %v4182, 0
        %v4266 = vsel %vm2342, %v4184, 0
        %v4269 = vsel %vm2342, %v4186, 0
        %v4272 = vsel %vm2342, %v4188, 0
        %v4275 = vsel %vm2342, %v4190, 0
        %v4278 = vsel %vm2342, %v4192, 0
        %v4281 = vsel %vm2342, %v4194, 0
        %v4284 = vsel %vm2342, %v4196, 0
        %v4287 = vsel %vm2342, %v4198, 0
        %v4290 = vsel %vm2342, %v4200, 0
        %v4293 = vsel %vm2342, %v4202, 0
        %v4296 = vsel %vm2342, %v4204, 0
        %v4299 = vsel %vm2342, %v4206, 0
        %v4302 = vsel %vm2342, %v4208, 0
        %v4305 = vsel %vm2342, %v4210, 0
        %v4308 = vsel %vm2342, %v4212, 0
        %v4311 = vsel %vm2342, %v4214, 0
        %v4314 = vsel %vm2342, %v4216, 0
        %v4317 = vsel %vm2342, %v4218, 0
        %4319 = vmatprep.subr.mxu0 %v4221
        %4320 = vmatpush1.msra.mxu0 %v4220
        %4321 = vmatprep.subr.mxu0 %v4223
        %4322 = vmatpush1.msra.mxu0 %v4222
        %4323 = vmatprep.subr.mxu0 %v4225
        %4324 = vmatpush1.msra.mxu0 %v4224
        %4325 = vmatprep.subr.mxu0 %v4227
        %4326 = vmatpush1.msra.mxu0 %v4226
        %4327 = vmatprep.subr.mxu0 %v4229
        %4328 = vmatpush1.msra.mxu0 %v4228
        %4329 = vmatprep.subr.mxu0 %v4231
        %4330 = vmatpush1.msra.mxu0 %v4230
        %4331 = vmatprep.subr.mxu0 %v4233
        %4332 = vmatpush1.msra.mxu0 %v4232
        %4333 = vmatprep.subr.mxu0 %v4235
        %4334 = vmatpush1.msra.mxu0 %v4234
        %4335 = vmatprep.subr.mxu0 %v4237
        %4336 = vmatpush1.msra.mxu0 %v4236
        %4337 = vmatprep.subr.mxu0 %v4239
        %4338 = vmatpush1.msra.mxu0 %v4238
        %4339 = vmatprep.subr.mxu0 %v4241
        %4340 = vmatpush1.msra.mxu0 %v4240
        %4341 = vmatprep.subr.mxu0 %v4243
        %4342 = vmatpush1.msra.mxu0 %v4242
        %4343 = vmatprep.subr.mxu0 %v4245
        %4344 = vmatpush1.msra.mxu0 %v4244
        %4345 = vmatprep.subr.mxu0 %v4247
        %4346 = vmatpush1.msra.mxu0 %v4246
        %4347 = vmatprep.subr.mxu0 %v4249
        %4348 = vmatpush1.msra.mxu0 %v4248
        %4349 = vmatprep.subr.mxu0 %v4251
        %4350 = vmatpush1.msra.mxu0 %v4250
        %4351 = vmatprep.subr.mxu0 %v4253
        %4352 = vmatpush1.msra.mxu0 %v4252
        %4353 = vmatprep.subr.mxu0 %v4255
        %4354 = vmatpush1.msra.mxu0 %v4254
        %4355 = vmatprep.subr.mxu0 %v4257
        %4356 = vmatpush1.msra.mxu0 %v4256
        %4357 = vmatprep.subr.mxu0 %v4259
        %4358 = vmatpush1.msra.mxu0 %v4258
        %4359 = vmatprep.subr.mxu0 %v4261
        %4360 = vmatpush1.msra.mxu0 %v4260
        %4361 = vmatprep.subr.mxu0 0.0
        %4362 = vmatpush1.msra.mxu0 0.0
        %4363 = vmatprep.subr.mxu0 0.0
        %4364 = vmatpush1.msra.mxu0 0.0
        %4365 = vmatprep.subr.mxu0 0.0
        %4366 = vmatpush1.msra.mxu0 0.0
        %4367 = vmatprep.subr.mxu0 0.0
        %4368 = vmatpush1.msra.mxu0 0.0
        %4369 = vmatprep.subr.mxu0 0.0
        %4370 = vmatpush1.msra.mxu0 0.0
        %4371 = vmatprep.subr.mxu0 0.0
        %4372 = vmatpush1.msra.mxu0 0.0
        %4373 = vmatprep.subr.mxu0 0.0
        %4374 = vmatpush1.msra.mxu0 0.0
        %4375 = vmatprep.subr.mxu0 0.0
        %4376 = vmatpush1.msra.mxu0 0.0
        %4377 = vmatprep.subr.mxu0 0.0
        %4378 = vmatpush1.msra.mxu0 0.0
        %4379 = vmatprep.subr.mxu0 0.0
        %4380 = vmatpush1.msra.mxu0 0.0
        %4381 = vmatprep.subr.mxu0 0.0
        %4382 = vmatpush1.msra.mxu0 0.0
        %4383 = vmatprep.mubr.f32.mxu0 %v4263
        %4384 = vmatmul.mubr.f32.gmra.mrb[0].mxu0 %v4181
        %v4385 = vpop.f32.mrb[0].mxu0
        %v4386 = vadd.f32 0.0, %v4385
        %v4387 = vpop.f32.mrb[0].mxu0
        %v4388 = vadd.f32 0.0, %v4387
        %4389 = vmatprep.mubr.f32.mxu0 %v4266
        %4390 = vmatmul.mubr.f32.gmra.mrb[0].mxu0 %v4183
        %v4391 = vpop.f32.mrb[0].mxu0
        %v4392 = vpop.f32.mrb[0].mxu0
        %4393 = vmatprep.mubr.f32.mxu0 %v4269
        %4394 = vmatmul.mubr.f32.gmra.mrb[0].mxu0 %v4185
        %v4395 = vpop.f32.mrb[0].mxu0
        %v4396 = vadd.f32 0.0, %v4395
        %v4397 = vpop.f32.mrb[0].mxu0
        %v4398 = vadd.f32 0.0, %v4397
        %4399 = vmatprep.mubr.f32.mxu0 %v4272
        %4400 = vmatmul.mubr.f32.gmra.mrb[0].mxu0 %v4187
        %v4401 = vpop.f32.mrb[0].mxu0
        %v4402 = vpop.f32.mrb[0].mxu0
        %4403 = vmatprep.mubr.f32.mxu0 %v4275
        %4404 = vmatmul.mubr.f32.gmra.mrb[0].mxu0 %v4189
        %v4405 = vpop.f32.mrb[0].mxu0
        %v4406 = vadd.f32 0.0, %v4405
        %v4407 = vpop.f32.mrb[0].mxu0
        %v4408 = vadd.f32 0.0, %v4407
        %4409 = vmatprep.mubr.f32.mxu0 %v4278
        %4410 = vmatmul.mubr.f32.gmra.mrb[0].mxu0 %v4191
        %v4411 = vpop.f32.mrb[0].mxu0
        %v4412 = vpop.f32.mrb[0].mxu0
        %4413 = vmatprep.mubr.f32.mxu0 %v4281
        %4414 = vmatmul.mubr.f32.gmra.mrb[0].mxu0 %v4193
        %v4415 = vpop.f32.mrb[0].mxu0
        %v4416 = vadd.f32 0.0, %v4415
        %v4417 = vpop.f32.mrb[0].mxu0
        %v4418 = vadd.f32 0.0, %v4417
        %4419 = vmatprep.mubr.f32.mxu0 %v4284
        %4420 = vmatmul.mubr.f32.gmra.mrb[0].mxu0 %v4195
        %v4421 = vpop.f32.mrb[0].mxu0
        %v4422 = vpop.f32.mrb[0].mxu0
        %4423 = vmatprep.mubr.f32.mxu0 %v4287
        %4424 = vmatmul.mubr.f32.gmra.mrb[0].mxu0 %v4197
        %v4425 = vpop.f32.mrb[0].mxu0
        %v4426 = vadd.f32 0.0, %v4425
        %v4427 = vpop.f32.mrb[0].mxu0
        %v4428 = vadd.f32 0.0, %v4427
        %4429 = vmatprep.mubr.f32.mxu0 %v4290
        %4430 = vmatmul.mubr.f32.gmra.mrb[0].mxu0 %v4199
        %v4431 = vpop.f32.mrb[0].mxu0
        %v4432 = vpop.f32.mrb[0].mxu0
        %4433 = vmatprep.mubr.f32.mxu0 %v4293
        %4434 = vmatmul.mubr.f32.gmra.mrb[0].mxu0 %v4201
        %v4435 = vpop.f32.mrb[0].mxu0
        %v4436 = vadd.f32 0.0, %v4435
        %v4437 = vpop.f32.mrb[0].mxu0
        %v4438 = vadd.f32 0.0, %v4437
        %4439 = vmatprep.mubr.f32.mxu0 %v4296
        %4440 = vmatmul.mubr.f32.gmra.mrb[0].mxu0 %v4203
        %v4441 = vpop.f32.mrb[0].mxu0
        %v4442 = vpop.f32.mrb[0].mxu0
        %4443 = vmatprep.mubr.f32.mxu0 %v4299
        %4444 = vmatmul.mubr.f32.gmra.mrb[0].mxu0 %v4205
        %v4445 = vpop.f32.mrb[0].mxu0
        %v4446 = vadd.f32 0.0, %v4445
        %v4447 = vpop.f32.mrb[0].mxu0
        %v4448 = vadd.f32 0.0, %v4447
        %4449 = vmatprep.mubr.f32.mxu0 %v4302
        %4450 = vmatmul.mubr.f32.gmra.mrb[0].mxu0 %v4207
        %v4451 = vpop.f32.mrb[0].mxu0
        %v4452 = vpop.f32.mrb[0].mxu0
        %4453 = vmatprep.mubr.f32.mxu0 %v4305
        %4454 = vmatmul.mubr.f32.gmra.mrb[0].mxu0 %v4209
        %v4455 = vpop.f32.mrb[0].mxu0
        %v4456 = vadd.f32 0.0, %v4455
        %v4457 = vpop.f32.mrb[0].mxu0
        %v4458 = vadd.f32 0.0, %v4457
        %4459 = vmatprep.mubr.f32.mxu0 %v4308
        %4460 = vmatmul.mubr.f32.gmra.mrb[0].mxu0 %v4211
        %v4461 = vpop.f32.mrb[0].mxu0
        %v4462 = vpop.f32.mrb[0].mxu0
        %4463 = vmatprep.mubr.f32.mxu0 %v4311
        %4464 = vmatmul.mubr.f32.gmra.mrb[0].mxu0 %v4213
        %v4465 = vpop.f32.mrb[0].mxu0
        %v4466 = vadd.f32 0.0, %v4465
        %v4467 = vpop.f32.mrb[0].mxu0
        %v4468 = vadd.f32 0.0, %v4467
        %4469 = vmatprep.mubr.f32.mxu0 %v4314
        %4470 = vmatmul.mubr.f32.gmra.mrb[0].mxu0 %v4215
        %v4471 = vpop.f32.mrb[0].mxu0
        %v4472 = vpop.f32.mrb[0].mxu0
        %4473 = vmatprep.mubr.f32.mxu0 %v4317
        %4474 = vmatmul.mubr.f32.gmra.mrb[0].mxu0 %v4217
        %v4475 = vpop.f32.mrb[0].mxu0
        %v4476 = vadd.f32 0.0, %v4475
        %v4477 = vpop.f32.mrb[0].mxu0
        %v4478 = vadd.f32 0.0, %v4477
        %4479 = vdwg.mxu0
        %v4480 = vadd.f32 %v4161, %v4386
        %v4481 = vadd.f32 %v4162, %v4388
        %v4482 = vadd.f32 %v4163, %v4396
        %v4483 = vadd.f32 %v4164, %v4398
        %v4484 = vadd.f32 %v4165, %v4406
        %v4485 = vadd.f32 %v4166, %v4408
        %v4486 = vadd.f32 %v4167, %v4416
        %v4487 = vadd.f32 %v4168, %v4418
        %v4488 = vadd.f32 %v4169, %v4426
        %v4489 = vadd.f32 %v4170, %v4428
        %v4490 = vadd.f32 %v4171, %v4436
        %v4491 = vadd.f32 %v4172, %v4438
        %v4492 = vadd.f32 %v4173, %v4446
        %v4493 = vadd.f32 %v4174, %v4448
        %v4494 = vadd.f32 %v4175, %v4456
        %v4495 = vadd.f32 %v4176, %v4458
        %v4496 = vadd.f32 %v4177, %v4466
        %v4497 = vadd.f32 %v4178, %v4468
        %v4498 = vadd.f32 %v4179, %v4476
        %v4499 = vadd.f32 %v4180, %v4478
        %v4500 = vld [vmem:[#allocation2 + $0x70] sm:$0xff]
        %v4501 = vld [vmem:[#allocation2 + $0x78] sm:$0xff]
        %v4502 = vld [vmem:[#allocation2 + $0x80] sm:$0xff]
        %v4503 = vld [vmem:[#allocation2 + $0x88] sm:$0xff]
        %v4504 = vld [vmem:[#allocation2 + $0x90] sm:$0xff]
        %v4505 = vld [vmem:[#allocation2 + $0x98] sm:$0xff]
        %v4506 = vld [vmem:[#allocation2 + $0xa0] sm:$0xff]
        %v4507 = vld [vmem:[#allocation2 + $0xa8] sm:$0xff]
        %v4508 = vld [vmem:[#allocation2 + $0xb0] sm:$0xff]
        %v4509 = vld [vmem:[#allocation2 + $0xb8] sm:$0xff]
        %v4510 = vld [vmem:[#allocation2 + $0xc0] sm:$0xff]
        %v4511 = vld [vmem:[#allocation2 + $0xc8] sm:$0xff]
        %v4512 = vld [vmem:[#allocation2 + $0xd0] sm:$0xff]
        %v4513 = vld [vmem:[#allocation2 + $0xd8] sm:$0xff]
        %v4514 = vld [vmem:[#allocation2 + $0xe0] sm:$0xff]
        %v4515 = vld [vmem:[#allocation2 + $0xe8] sm:$0xff]
        %v4516 = vld [vmem:[#allocation2 + $0xf0] sm:$0xff]
        %v4517 = vld [vmem:[#allocation2 + $0xf8] sm:$0xff]
        %v4518 = vld [vmem:[#allocation2 + $0x100] sm:$0xff]
        %v4519 = vld [vmem:[#allocation2 + $0x108] sm:$0xff]
        %v4520 = vld [vmem:[#allocation2 + $0x110] sm:$0xff]
        %v4521 = vld [vmem:[#allocation2 + $0x118] sm:$0xff]
        %v4522 = vld [vmem:[#allocation2 + $0x120] sm:$0xff]
        %v4523 = vld [vmem:[#allocation2 + $0x128] sm:$0xff]
        %v4524 = vld [vmem:[#allocation2 + $0x130] sm:$0xff]
        %v4525 = vld [vmem:[#allocation2 + $0x138] sm:$0xff]
        %v4526 = vld [vmem:[#allocation2 + $0x140] sm:$0xff]
        %v4527 = vld [vmem:[#allocation2 + $0x148] sm:$0xff]
        %v4528 = vld [vmem:[#allocation2 + $0x150] sm:$0xff]
        %v4529 = vld [vmem:[#allocation2 + $0x158] sm:$0xff]
        %v4530 = vld [vmem:[#allocation2 + $0x160] sm:$0xff]
        %v4531 = vld [vmem:[#allocation2 + $0x168] sm:$0xff]
        %v4532 = vld [vmem:[#allocation2 + $0x170] sm:$0xff]
        %v4533 = vld [vmem:[#allocation2 + $0x178] sm:$0xff]
        %v4534 = vld [vmem:[#allocation2 + $0x180] sm:$0xff]
        %v4535 = vld [vmem:[#allocation2 + $0x188] sm:$0xff]
        %v4536 = vld [vmem:[#allocation2 + $0x190] sm:$0xff]
        %v4537 = vld [vmem:[#allocation2 + $0x198] sm:$0xff]
        %s4538 = scalar_lea.vmem %s3, 2352
        %v4539 = vld [vmem:[%s4538] sm:$0xff]
        %v4540 = vld [vmem:[%s4538 + $0x8] sm:$0xff]
        %v4541 = vld [vmem:[%s4538 + $0x10] sm:$0xff]
        %v4542 = vld [vmem:[%s4538 + $0x18] sm:$0xff]
        %v4543 = vld [vmem:[%s4538 + $0x20] sm:$0xff]
        %v4544 = vld [vmem:[%s4538 + $0x28] sm:$0xff]
        %v4545 = vld [vmem:[%s4538 + $0x30] sm:$0xff]
        %v4546 = vld [vmem:[%s4538 + $0x38] sm:$0xff]
        %v4547 = vld [vmem:[%s4538 + $0x40] sm:$0xff]
        %v4548 = vld [vmem:[%s4538 + $0x48] sm:$0xff]
        %v4549 = vld [vmem:[%s4538 + $0x50] sm:$0xff]
        %v4550 = vld [vmem:[%s4538 + $0x58] sm:$0xff]
        %v4551 = vld [vmem:[%s4538 + $0x60] sm:$0xff]
        %v4552 = vld [vmem:[%s4538 + $0x68] sm:$0xff]
        %v4553 = vld [vmem:[%s4538 + $0x70] sm:$0xff]
        %v4554 = vld [vmem:[%s4538 + $0x78] sm:$0xff]
        %v4555 = vld [vmem:[%s4538 + $0x80] sm:$0xff]
        %v4556 = vld [vmem:[%s4538 + $0x88] sm:$0xff]
        %v4557 = vld [vmem:[%s4538 + $0x90] sm:$0xff]
        %v4558 = vld [vmem:[%s4538 + $0x98] sm:$0xff]
        %v4559 = vld [vmem:[%s4538 + $0xa0] sm:$0xff]
        %v4560 = vld [vmem:[%s4538 + $0xa8] sm:$0xff]
        %v4561 = vld [vmem:[%s4538 + $0xb0] sm:$0xff]
        %v4562 = vld [vmem:[%s4538 + $0xb8] sm:$0xff]
        %v4563 = vld [vmem:[%s4538 + $0xc0] sm:$0xff]
        %v4564 = vld [vmem:[%s4538 + $0xc8] sm:$0xff]
        %v4565 = vld [vmem:[%s4538 + $0xd0] sm:$0xff]
        %v4566 = vld [vmem:[%s4538 + $0xd8] sm:$0xff]
        %v4567 = vld [vmem:[%s4538 + $0xe0] sm:$0xff]
        %v4568 = vld [vmem:[%s4538 + $0xe8] sm:$0xff]
        %v4569 = vld [vmem:[%s4538 + $0xf0] sm:$0xff]
        %v4570 = vld [vmem:[%s4538 + $0xf8] sm:$0xff]
        %v4571 = vld [vmem:[%s4538 + $0x100] sm:$0xff]
        %v4572 = vld [vmem:[%s4538 + $0x108] sm:$0xff]
        %v4573 = vld [vmem:[%s4538 + $0x110] sm:$0xff]
        %v4574 = vld [vmem:[%s4538 + $0x118] sm:$0xff]
        %v4575 = vld [vmem:[%s4538 + $0x120] sm:$0xff]
        %v4576 = vld [vmem:[%s4538 + $0x128] sm:$0xff]
        %v4577 = vld [vmem:[%s4538 + $0x130] sm:$0xff]
        %v4578 = vld [vmem:[%s4538 + $0x138] sm:$0xff]
        %v4579 = vld [vmem:[%s4538 + $0x140] sm:$0xff]
        %v4580 = vld [vmem:[%s4538 + $0x148] sm:$0xff]
        %v4582 = vsel %vm2342, %v4501, 0
        %v4585 = vsel %vm2342, %v4503, 0
        %v4588 = vsel %vm2342, %v4505, 0
        %v4591 = vsel %vm2342, %v4507, 0
        %v4594 = vsel %vm2342, %v4509, 0
        %v4597 = vsel %vm2342, %v4511, 0
        %v4600 = vsel %vm2342, %v4513, 0
        %v4603 = vsel %vm2342, %v4515, 0
        %v4606 = vsel %vm2342, %v4517, 0
        %v4609 = vsel %vm2342, %v4519, 0
        %v4612 = vsel %vm2342, %v4521, 0
        %v4615 = vsel %vm2342, %v4523, 0
        %v4618 = vsel %vm2342, %v4525, 0
        %v4621 = vsel %vm2342, %v4527, 0
        %v4624 = vsel %vm2342, %v4529, 0
        %v4627 = vsel %vm2342, %v4531, 0
        %v4630 = vsel %vm2342, %v4533, 0
        %v4633 = vsel %vm2342, %v4535, 0
        %v4636 = vsel %vm2342, %v4537, 0
        %4638 = vmatprep.subr.mxu0 %v4540
        %4639 = vmatpush1.msra.mxu0 %v4539
        %4640 = vmatprep.subr.mxu0 %v4542
        %4641 = vmatpush1.msra.mxu0 %v4541
        %4642 = vmatprep.subr.mxu0 %v4544
        %4643 = vmatpush1.msra.mxu0 %v4543
        %4644 = vmatprep.subr.mxu0 %v4546
        %4645 = vmatpush1.msra.mxu0 %v4545
        %4646 = vmatprep.subr.mxu0 %v4548
        %4647 = vmatpush1.msra.mxu0 %v4547
        %4648 = vmatprep.subr.mxu0 %v4550
        %4649 = vmatpush1.msra.mxu0 %v4549
        %4650 = vmatprep.subr.mxu0 %v4552
        %4651 = vmatpush1.msra.mxu0 %v4551
        %4652 = vmatprep.subr.mxu0 %v4554
        %4653 = vmatpush1.msra.mxu0 %v4553
        %4654 = vmatprep.subr.mxu0 %v4556
        %4655 = vmatpush1.msra.mxu0 %v4555
        %4656 = vmatprep.subr.mxu0 %v4558
        %4657 = vmatpush1.msra.mxu0 %v4557
        %4658 = vmatprep.subr.mxu0 %v4560
        %4659 = vmatpush1.msra.mxu0 %v4559
        %4660 = vmatprep.subr.mxu0 %v4562
        %4661 = vmatpush1.msra.mxu0 %v4561
        %4662 = vmatprep.subr.mxu0 %v4564
        %4663 = vmatpush1.msra.mxu0 %v4563
        %4664 = vmatprep.subr.mxu0 %v4566
        %4665 = vmatpush1.msra.mxu0 %v4565
        %4666 = vmatprep.subr.mxu0 %v4568
        %4667 = vmatpush1.msra.mxu0 %v4567
        %4668 = vmatprep.subr.mxu0 %v4570
        %4669 = vmatpush1.msra.mxu0 %v4569
        %4670 = vmatprep.subr.mxu0 %v4572
        %4671 = vmatpush1.msra.mxu0 %v4571
        %4672 = vmatprep.subr.mxu0 %v4574
        %4673 = vmatpush1.msra.mxu0 %v4573
        %4674 = vmatprep.subr.mxu0 %v4576
        %4675 = vmatpush1.msra.mxu0 %v4575
        %4676 = vmatprep.subr.mxu0 %v4578
        %4677 = vmatpush1.msra.mxu0 %v4577
        %4678 = vmatprep.subr.mxu0 %v4580
        %4679 = vmatpush1.msra.mxu0 %v4579
        %4680 = vmatprep.subr.mxu0 0.0
        %4681 = vmatpush1.msra.mxu0 0.0
        %4682 = vmatprep.subr.mxu0 0.0
        %4683 = vmatpush1.msra.mxu0 0.0
        %4684 = vmatprep.subr.mxu0 0.0
        %4685 = vmatpush1.msra.mxu0 0.0
        %4686 = vmatprep.subr.mxu0 0.0
        %4687 = vmatpush1.msra.mxu0 0.0
        %4688 = vmatprep.subr.mxu0 0.0
        %4689 = vmatpush1.msra.mxu0 0.0
        %4690 = vmatprep.subr.mxu0 0.0
        %4691 = vmatpush1.msra.mxu0 0.0
        %4692 = vmatprep.subr.mxu0 0.0
        %4693 = vmatpush1.msra.mxu0 0.0
        %4694 = vmatprep.subr.mxu0 0.0
        %4695 = vmatpush1.msra.mxu0 0.0
        %4696 = vmatprep.subr.mxu0 0.0
        %4697 = vmatpush1.msra.mxu0 0.0
        %4698 = vmatprep.subr.mxu0 0.0
        %4699 = vmatpush1.msra.mxu0 0.0
        %4700 = vmatprep.subr.mxu0 0.0
        %4701 = vmatpush1.msra.mxu0 0.0
        %4702 = vmatprep.mubr.f32.mxu0 %v4582
        %4703 = vmatmul.mubr.f32.gmra.mrb[0].mxu0 %v4500
        %v4704 = vpop.f32.mrb[0].mxu0
        %v4705 = vadd.f32 0.0, %v4704
        %v4706 = vpop.f32.mrb[0].mxu0
        %v4707 = vadd.f32 0.0, %v4706
        %4708 = vmatprep.mubr.f32.mxu0 %v4585
        %4709 = vmatmul.mubr.f32.gmra.mrb[0].mxu0 %v4502
        %v4710 = vpop.f32.mrb[0].mxu0
        %v4711 = vpop.f32.mrb[0].mxu0
        %4712 = vmatprep.mubr.f32.mxu0 %v4588
        %4713 = vmatmul.mubr.f32.gmra.mrb[0].mxu0 %v4504
        %v4714 = vpop.f32.mrb[0].mxu0
        %v4715 = vadd.f32 0.0, %v4714
        %v4716 = vpop.f32.mrb[0].mxu0
        %v4717 = vadd.f32 0.0, %v4716
        %4718 = vmatprep.mubr.f32.mxu0 %v4591
        %4719 = vmatmul.mubr.f32.gmra.mrb[0].mxu0 %v4506
        %v4720 = vpop.f32.mrb[0].mxu0
        %v4721 = vpop.f32.mrb[0].mxu0
        %4722 = vmatprep.mubr.f32.mxu0 %v4594
        %4723 = vmatmul.mubr.f32.gmra.mrb[0].mxu0 %v4508
        %v4724 = vpop.f32.mrb[0].mxu0
        %v4725 = vadd.f32 0.0, %v4724
        %v4726 = vpop.f32.mrb[0].mxu0
        %v4727 = vadd.f32 0.0, %v4726
        %4728 = vmatprep.mubr.f32.mxu0 %v4597
        %4729 = vmatmul.mubr.f32.gmra.mrb[0].mxu0 %v4510
        %v4730 = vpop.f32.mrb[0].mxu0
        %v4731 = vpop.f32.mrb[0].mxu0
        %4732 = vmatprep.mubr.f32.mxu0 %v4600
        %4733 = vmatmul.mubr.f32.gmra.mrb[0].mxu0 %v4512
        %v4734 = vpop.f32.mrb[0].mxu0
        %v4735 = vadd.f32 0.0, %v4734
        %v4736 = vpop.f32.mrb[0].mxu0
        %v4737 = vadd.f32 0.0, %v4736
        %4738 = vmatprep.mubr.f32.mxu0 %v4603
        %4739 = vmatmul.mubr.f32.gmra.mrb[0].mxu0 %v4514
        %v4740 = vpop.f32.mrb[0].mxu0
        %v4741 = vpop.f32.mrb[0].mxu0
        %4742 = vmatprep.mubr.f32.mxu0 %v4606
        %4743 = vmatmul.mubr.f32.gmra.mrb[0].mxu0 %v4516
        %v4744 = vpop.f32.mrb[0].mxu0
        %v4745 = vadd.f32 0.0, %v4744
        %v4746 = vpop.f32.mrb[0].mxu0
        %v4747 = vadd.f32 0.0, %v4746
        %4748 = vmatprep.mubr.f32.mxu0 %v4609
        %4749 = vmatmul.mubr.f32.gmra.mrb[0].mxu0 %v4518
        %v4750 = vpop.f32.mrb[0].mxu0
        %v4751 = vpop.f32.mrb[0].mxu0
        %4752 = vmatprep.mubr.f32.mxu0 %v4612
        %4753 = vmatmul.mubr.f32.gmra.mrb[0].mxu0 %v4520
        %v4754 = vpop.f32.mrb[0].mxu0
        %v4755 = vadd.f32 0.0, %v4754
        %v4756 = vpop.f32.mrb[0].mxu0
        %v4757 = vadd.f32 0.0, %v4756
        %4758 = vmatprep.mubr.f32.mxu0 %v4615
        %4759 = vmatmul.mubr.f32.gmra.mrb[0].mxu0 %v4522
        %v4760 = vpop.f32.mrb[0].mxu0
        %v4761 = vpop.f32.mrb[0].mxu0
        %4762 = vmatprep.mubr.f32.mxu0 %v4618
        %4763 = vmatmul.mubr.f32.gmra.mrb[0].mxu0 %v4524
        %v4764 = vpop.f32.mrb[0].mxu0
        %v4765 = vadd.f32 0.0, %v4764
        %v4766 = vpop.f32.mrb[0].mxu0
        %v4767 = vadd.f32 0.0, %v4766
        %4768 = vmatprep.mubr.f32.mxu0 %v4621
        %4769 = vmatmul.mubr.f32.gmra.mrb[0].mxu0 %v4526
        %v4770 = vpop.f32.mrb[0].mxu0
        %v4771 = vpop.f32.mrb[0].mxu0
        %4772 = vmatprep.mubr.f32.mxu0 %v4624
        %4773 = vmatmul.mubr.f32.gmra.mrb[0].mxu0 %v4528
        %v4774 = vpop.f32.mrb[0].mxu0
        %v4775 = vadd.f32 0.0, %v4774
        %v4776 = vpop.f32.mrb[0].mxu0
        %v4777 = vadd.f32 0.0, %v4776
        %4778 = vmatprep.mubr.f32.mxu0 %v4627
        %4779 = vmatmul.mubr.f32.gmra.mrb[0].mxu0 %v4530
        %v4780 = vpop.f32.mrb[0].mxu0
        %v4781 = vpop.f32.mrb[0].mxu0
        %4782 = vmatprep.mubr.f32.mxu0 %v4630
        %4783 = vmatmul.mubr.f32.gmra.mrb[0].mxu0 %v4532
        %v4784 = vpop.f32.mrb[0].mxu0
        %v4785 = vadd.f32 0.0, %v4784
        %v4786 = vpop.f32.mrb[0].mxu0
        %v4787 = vadd.f32 0.0, %v4786
        %4788 = vmatprep.mubr.f32.mxu0 %v4633
        %4789 = vmatmul.mubr.f32.gmra.mrb[0].mxu0 %v4534
        %v4790 = vpop.f32.mrb[0].mxu0
        %v4791 = vpop.f32.mrb[0].mxu0
        %4792 = vmatprep.mubr.f32.mxu0 %v4636
        %4793 = vmatmul.mubr.f32.gmra.mrb[0].mxu0 %v4536
        %v4794 = vpop.f32.mrb[0].mxu0
        %v4795 = vadd.f32 0.0, %v4794
        %v4796 = vpop.f32.mrb[0].mxu0
        %v4797 = vadd.f32 0.0, %v4796
        %4798 = vdwg.mxu0
        %v4799 = vadd.f32 %v4480, %v4705
        %v4800 = vadd.f32 %v4481, %v4707
        %v4801 = vadd.f32 %v4482, %v4715
        %v4802 = vadd.f32 %v4483, %v4717
        %v4803 = vadd.f32 %v4484, %v4725
        %v4804 = vadd.f32 %v4485, %v4727
        %v4805 = vadd.f32 %v4486, %v4735
        %v4806 = vadd.f32 %v4487, %v4737
        %v4807 = vadd.f32 %v4488, %v4745
        %v4808 = vadd.f32 %v4489, %v4747
        %v4809 = vadd.f32 %v4490, %v4755
        %v4810 = vadd.f32 %v4491, %v4757
        %v4811 = vadd.f32 %v4492, %v4765
        %v4812 = vadd.f32 %v4493, %v4767
        %v4813 = vadd.f32 %v4494, %v4775
        %v4814 = vadd.f32 %v4495, %v4777
        %v4815 = vadd.f32 %v4496, %v4785
        %v4816 = vadd.f32 %v4497, %v4787
        %v4817 = vadd.f32 %v4498, %v4795
        %v4818 = vadd.f32 %v4499, %v4797
        %v4819 = vld [vmem:[#allocation2 + $0x80] sm:$0xff]
        %v4820 = vld [vmem:[#allocation2 + $0x88] sm:$0xff]
        %v4821 = vld [vmem:[#allocation2 + $0x90] sm:$0xff]
        %v4822 = vld [vmem:[#allocation2 + $0x98] sm:$0xff]
        %v4823 = vld [vmem:[#allocation2 + $0xa0] sm:$0xff]
        %v4824 = vld [vmem:[#allocation2 + $0xa8] sm:$0xff]
        %v4825 = vld [vmem:[#allocation2 + $0xb0] sm:$0xff]
        %v4826 = vld [vmem:[#allocation2 + $0xb8] sm:$0xff]
        %v4827 = vld [vmem:[#allocation2 + $0xc0] sm:$0xff]
        %v4828 = vld [vmem:[#allocation2 + $0xc8] sm:$0xff]
        %v4829 = vld [vmem:[#allocation2 + $0xd0] sm:$0xff]
        %v4830 = vld [vmem:[#allocation2 + $0xd8] sm:$0xff]
        %v4831 = vld [vmem:[#allocation2 + $0xe0] sm:$0xff]
        %v4832 = vld [vmem:[#allocation2 + $0xe8] sm:$0xff]
        %v4833 = vld [vmem:[#allocation2 + $0xf0] sm:$0xff]
        %v4834 = vld [vmem:[#allocation2 + $0xf8] sm:$0xff]
        %v4835 = vld [vmem:[#allocation2 + $0x100] sm:$0xff]
        %v4836 = vld [vmem:[#allocation2 + $0x108] sm:$0xff]
        %v4837 = vld [vmem:[#allocation2 + $0x110] sm:$0xff]
        %v4838 = vld [vmem:[#allocation2 + $0x118] sm:$0xff]
        %v4839 = vld [vmem:[#allocation2 + $0x120] sm:$0xff]
        %v4840 = vld [vmem:[#allocation2 + $0x128] sm:$0xff]
        %v4841 = vld [vmem:[#allocation2 + $0x130] sm:$0xff]
        %v4842 = vld [vmem:[#allocation2 + $0x138] sm:$0xff]
        %v4843 = vld [vmem:[#allocation2 + $0x140] sm:$0xff]
        %v4844 = vld [vmem:[#allocation2 + $0x148] sm:$0xff]
        %v4845 = vld [vmem:[#allocation2 + $0x150] sm:$0xff]
        %v4846 = vld [vmem:[#allocation2 + $0x158] sm:$0xff]
        %v4847 = vld [vmem:[#allocation2 + $0x160] sm:$0xff]
        %v4848 = vld [vmem:[#allocation2 + $0x168] sm:$0xff]
        %v4849 = vld [vmem:[#allocation2 + $0x170] sm:$0xff]
        %v4850 = vld [vmem:[#allocation2 + $0x178] sm:$0xff]
        %v4851 = vld [vmem:[#allocation2 + $0x180] sm:$0xff]
        %v4852 = vld [vmem:[#allocation2 + $0x188] sm:$0xff]
        %v4853 = vld [vmem:[#allocation2 + $0x190] sm:$0xff]
        %v4854 = vld [vmem:[#allocation2 + $0x198] sm:$0xff]
        %v4855 = vld [vmem:[#allocation2 + $0x1a0] sm:$0xff]
        %v4856 = vld [vmem:[#allocation2 + $0x1a8] sm:$0xff]
        %s4857 = scalar_lea.vmem %s3, 2688
        %v4858 = vld [vmem:[%s4857] sm:$0xff]
        %v4859 = vld [vmem:[%s4857 + $0x8] sm:$0xff]
        %v4860 = vld [vmem:[%s4857 + $0x10] sm:$0xff]
        %v4861 = vld [vmem:[%s4857 + $0x18] sm:$0xff]
        %v4862 = vld [vmem:[%s4857 + $0x20] sm:$0xff]
        %v4863 = vld [vmem:[%s4857 + $0x28] sm:$0xff]
        %v4864 = vld [vmem:[%s4857 + $0x30] sm:$0xff]
        %v4865 = vld [vmem:[%s4857 + $0x38] sm:$0xff]
        %v4866 = vld [vmem:[%s4857 + $0x40] sm:$0xff]
        %v4867 = vld [vmem:[%s4857 + $0x48] sm:$0xff]
        %v4868 = vld [vmem:[%s4857 + $0x50] sm:$0xff]
        %v4869 = vld [vmem:[%s4857 + $0x58] sm:$0xff]
        %v4870 = vld [vmem:[%s4857 + $0x60] sm:$0xff]
        %v4871 = vld [vmem:[%s4857 + $0x68] sm:$0xff]
        %v4872 = vld [vmem:[%s4857 + $0x70] sm:$0xff]
        %v4873 = vld [vmem:[%s4857 + $0x78] sm:$0xff]
        %v4874 = vld [vmem:[%s4857 + $0x80] sm:$0xff]
        %v4875 = vld [vmem:[%s4857 + $0x88] sm:$0xff]
        %v4876 = vld [vmem:[%s4857 + $0x90] sm:$0xff]
        %v4877 = vld [vmem:[%s4857 + $0x98] sm:$0xff]
        %v4878 = vld [vmem:[%s4857 + $0xa0] sm:$0xff]
        %v4879 = vld [vmem:[%s4857 + $0xa8] sm:$0xff]
        %v4880 = vld [vmem:[%s4857 + $0xb0] sm:$0xff]
        %v4881 = vld [vmem:[%s4857 + $0xb8] sm:$0xff]
        %v4882 = vld [vmem:[%s4857 + $0xc0] sm:$0xff]
        %v4883 = vld [vmem:[%s4857 + $0xc8] sm:$0xff]
        %v4884 = vld [vmem:[%s4857 + $0xd0] sm:$0xff]
        %v4885 = vld [vmem:[%s4857 + $0xd8] sm:$0xff]
        %v4886 = vld [vmem:[%s4857 + $0xe0] sm:$0xff]
        %v4887 = vld [vmem:[%s4857 + $0xe8] sm:$0xff]
        %v4888 = vld [vmem:[%s4857 + $0xf0] sm:$0xff]
        %v4889 = vld [vmem:[%s4857 + $0xf8] sm:$0xff]
        %v4890 = vld [vmem:[%s4857 + $0x100] sm:$0xff]
        %v4891 = vld [vmem:[%s4857 + $0x108] sm:$0xff]
        %v4892 = vld [vmem:[%s4857 + $0x110] sm:$0xff]
        %v4893 = vld [vmem:[%s4857 + $0x118] sm:$0xff]
        %v4894 = vld [vmem:[%s4857 + $0x120] sm:$0xff]
        %v4895 = vld [vmem:[%s4857 + $0x128] sm:$0xff]
        %v4896 = vld [vmem:[%s4857 + $0x130] sm:$0xff]
        %v4897 = vld [vmem:[%s4857 + $0x138] sm:$0xff]
        %v4898 = vld [vmem:[%s4857 + $0x140] sm:$0xff]
        %v4899 = vld [vmem:[%s4857 + $0x148] sm:$0xff]
        %v4901 = vsel %vm2342, %v4820, 0
        %v4904 = vsel %vm2342, %v4822, 0
        %v4907 = vsel %vm2342, %v4824, 0
        %v4910 = vsel %vm2342, %v4826, 0
        %v4913 = vsel %vm2342, %v4828, 0
        %v4916 = vsel %vm2342, %v4830, 0
        %v4919 = vsel %vm2342, %v4832, 0
        %v4922 = vsel %vm2342, %v4834, 0
        %v4925 = vsel %vm2342, %v4836, 0
        %v4928 = vsel %vm2342, %v4838, 0
        %v4931 = vsel %vm2342, %v4840, 0
        %v4934 = vsel %vm2342, %v4842, 0
        %v4937 = vsel %vm2342, %v4844, 0
        %v4940 = vsel %vm2342, %v4846, 0
        %v4943 = vsel %vm2342, %v4848, 0
        %v4946 = vsel %vm2342, %v4850, 0
        %v4949 = vsel %vm2342, %v4852, 0
        %v4952 = vsel %vm2342, %v4854, 0
        %v4955 = vsel %vm2342, %v4856, 0
        %4957 = vmatprep.subr.mxu0 %v4859
        %4958 = vmatpush1.msra.mxu0 %v4858
        %4959 = vmatprep.subr.mxu0 %v4861
        %4960 = vmatpush1.msra.mxu0 %v4860
        %4961 = vmatprep.subr.mxu0 %v4863
        %4962 = vmatpush1.msra.mxu0 %v4862
        %4963 = vmatprep.subr.mxu0 %v4865
        %4964 = vmatpush1.msra.mxu0 %v4864
        %4965 = vmatprep.subr.mxu0 %v4867
        %4966 = vmatpush1.msra.mxu0 %v4866
        %4967 = vmatprep.subr.mxu0 %v4869
        %4968 = vmatpush1.msra.mxu0 %v4868
        %4969 = vmatprep.subr.mxu0 %v4871
        %4970 = vmatpush1.msra.mxu0 %v4870
        %4971 = vmatprep.subr.mxu0 %v4873
        %4972 = vmatpush1.msra.mxu0 %v4872
        %4973 = vmatprep.subr.mxu0 %v4875
        %4974 = vmatpush1.msra.mxu0 %v4874
        %4975 = vmatprep.subr.mxu0 %v4877
        %4976 = vmatpush1.msra.mxu0 %v4876
        %4977 = vmatprep.subr.mxu0 %v4879
        %4978 = vmatpush1.msra.mxu0 %v4878
        %4979 = vmatprep.subr.mxu0 %v4881
        %4980 = vmatpush1.msra.mxu0 %v4880
        %4981 = vmatprep.subr.mxu0 %v4883
        %4982 = vmatpush1.msra.mxu0 %v4882
        %4983 = vmatprep.subr.mxu0 %v4885
        %4984 = vmatpush1.msra.mxu0 %v4884
        %4985 = vmatprep.subr.mxu0 %v4887
        %4986 = vmatpush1.msra.mxu0 %v4886
        %4987 = vmatprep.subr.mxu0 %v4889
        %4988 = vmatpush1.msra.mxu0 %v4888
        %4989 = vmatprep.subr.mxu0 %v4891
        %4990 = vmatpush1.msra.mxu0 %v4890
        %4991 = vmatprep.subr.mxu0 %v4893
        %4992 = vmatpush1.msra.mxu0 %v4892
        %4993 = vmatprep.subr.mxu0 %v4895
        %4994 = vmatpush1.msra.mxu0 %v4894
        %4995 = vmatprep.subr.mxu0 %v4897
        %4996 = vmatpush1.msra.mxu0 %v4896
        %4997 = vmatprep.subr.mxu0 %v4899
        %4998 = vmatpush1.msra.mxu0 %v4898
        %4999 = vmatprep.subr.mxu0 0.0
        %5000 = vmatpush1.msra.mxu0 0.0
        %5001 = vmatprep.subr.mxu0 0.0
        %5002 = vmatpush1.msra.mxu0 0.0
        %5003 = vmatprep.subr.mxu0 0.0
        %5004 = vmatpush1.msra.mxu0 0.0
        %5005 = vmatprep.subr.mxu0 0.0
        %5006 = vmatpush1.msra.mxu0 0.0
        %5007 = vmatprep.subr.mxu0 0.0
        %5008 = vmatpush1.msra.mxu0 0.0
        %5009 = vmatprep.subr.mxu0 0.0
        %5010 = vmatpush1.msra.mxu0 0.0
        %5011 = vmatprep.subr.mxu0 0.0
        %5012 = vmatpush1.msra.mxu0 0.0
        %5013 = vmatprep.subr.mxu0 0.0
        %5014 = vmatpush1.msra.mxu0 0.0
        %5015 = vmatprep.subr.mxu0 0.0
        %5016 = vmatpush1.msra.mxu0 0.0
        %5017 = vmatprep.subr.mxu0 0.0
        %5018 = vmatpush1.msra.mxu0 0.0
        %5019 = vmatprep.subr.mxu0 0.0
        %5020 = vmatpush1.msra.mxu0 0.0
        %5021 = vmatprep.mubr.f32.mxu0 %v4901
        %5022 = vmatmul.mubr.f32.gmra.mrb[0].mxu0 %v4819
        %v5023 = vpop.f32.mrb[0].mxu0
        %v5024 = vadd.f32 0.0, %v5023
        %v5025 = vpop.f32.mrb[0].mxu0
        %v5026 = vadd.f32 0.0, %v5025
        %5027 = vmatprep.mubr.f32.mxu0 %v4904
        %5028 = vmatmul.mubr.f32.gmra.mrb[0].mxu0 %v4821
        %v5029 = vpop.f32.mrb[0].mxu0
        %v5030 = vpop.f32.mrb[0].mxu0
        %5031 = vmatprep.mubr.f32.mxu0 %v4907
        %5032 = vmatmul.mubr.f32.gmra.mrb[0].mxu0 %v4823
        %v5033 = vpop.f32.mrb[0].mxu0
        %v5034 = vadd.f32 0.0, %v5033
        %v5035 = vpop.f32.mrb[0].mxu0
        %v5036 = vadd.f32 0.0, %v5035
        %5037 = vmatprep.mubr.f32.mxu0 %v4910
        %5038 = vmatmul.mubr.f32.gmra.mrb[0].mxu0 %v4825
        %v5039 = vpop.f32.mrb[0].mxu0
        %v5040 = vpop.f32.mrb[0].mxu0
        %5041 = vmatprep.mubr.f32.mxu0 %v4913
        %5042 = vmatmul.mubr.f32.gmra.mrb[0].mxu0 %v4827
        %v5043 = vpop.f32.mrb[0].mxu0
        %v5044 = vadd.f32 0.0, %v5043
        %v5045 = vpop.f32.mrb[0].mxu0
        %v5046 = vadd.f32 0.0, %v5045
        %5047 = vmatprep.mubr.f32.mxu0 %v4916
        %5048 = vmatmul.mubr.f32.gmra.mrb[0].mxu0 %v4829
        %v5049 = vpop.f32.mrb[0].mxu0
        %v5050 = vpop.f32.mrb[0].mxu0
        %5051 = vmatprep.mubr.f32.mxu0 %v4919
        %5052 = vmatmul.mubr.f32.gmra.mrb[0].mxu0 %v4831
        %v5053 = vpop.f32.mrb[0].mxu0
        %v5054 = vadd.f32 0.0, %v5053
        %v5055 = vpop.f32.mrb[0].mxu0
        %v5056 = vadd.f32 0.0, %v5055
        %5057 = vmatprep.mubr.f32.mxu0 %v4922
        %5058 = vmatmul.mubr.f32.gmra.mrb[0].mxu0 %v4833
        %v5059 = vpop.f32.mrb[0].mxu0
        %v5060 = vpop.f32.mrb[0].mxu0
        %5061 = vmatprep.mubr.f32.mxu0 %v4925
        %5062 = vmatmul.mubr.f32.gmra.mrb[0].mxu0 %v4835
        %v5063 = vpop.f32.mrb[0].mxu0
        %v5064 = vadd.f32 0.0, %v5063
        %v5065 = vpop.f32.mrb[0].mxu0
        %v5066 = vadd.f32 0.0, %v5065
        %5067 = vmatprep.mubr.f32.mxu0 %v4928
        %5068 = vmatmul.mubr.f32.gmra.mrb[0].mxu0 %v4837
        %v5069 = vpop.f32.mrb[0].mxu0
        %v5070 = vpop.f32.mrb[0].mxu0
        %5071 = vmatprep.mubr.f32.mxu0 %v4931
        %5072 = vmatmul.mubr.f32.gmra.mrb[0].mxu0 %v4839
        %v5073 = vpop.f32.mrb[0].mxu0
        %v5074 = vadd.f32 0.0, %v5073
        %v5075 = vpop.f32.mrb[0].mxu0
        %v5076 = vadd.f32 0.0, %v5075
        %5077 = vmatprep.mubr.f32.mxu0 %v4934
        %5078 = vmatmul.mubr.f32.gmra.mrb[0].mxu0 %v4841
        %v5079 = vpop.f32.mrb[0].mxu0
        %v5080 = vpop.f32.mrb[0].mxu0
        %5081 = vmatprep.mubr.f32.mxu0 %v4937
        %5082 = vmatmul.mubr.f32.gmra.mrb[0].mxu0 %v4843
        %v5083 = vpop.f32.mrb[0].mxu0
        %v5084 = vadd.f32 0.0, %v5083
        %v5085 = vpop.f32.mrb[0].mxu0
        %v5086 = vadd.f32 0.0, %v5085
        %5087 = vmatprep.mubr.f32.mxu0 %v4940
        %5088 = vmatmul.mubr.f32.gmra.mrb[0].mxu0 %v4845
        %v5089 = vpop.f32.mrb[0].mxu0
        %v5090 = vpop.f32.mrb[0].mxu0
        %5091 = vmatprep.mubr.f32.mxu0 %v4943
        %5092 = vmatmul.mubr.f32.gmra.mrb[0].mxu0 %v4847
        %v5093 = vpop.f32.mrb[0].mxu0
        %v5094 = vadd.f32 0.0, %v5093
        %v5095 = vpop.f32.mrb[0].mxu0
        %v5096 = vadd.f32 0.0, %v5095
        %5097 = vmatprep.mubr.f32.mxu0 %v4946
        %5098 = vmatmul.mubr.f32.gmra.mrb[0].mxu0 %v4849
        %v5099 = vpop.f32.mrb[0].mxu0
        %v5100 = vpop.f32.mrb[0].mxu0
        %5101 = vmatprep.mubr.f32.mxu0 %v4949
        %5102 = vmatmul.mubr.f32.gmra.mrb[0].mxu0 %v4851
        %v5103 = vpop.f32.mrb[0].mxu0
        %v5104 = vadd.f32 0.0, %v5103
        %v5105 = vpop.f32.mrb[0].mxu0
        %v5106 = vadd.f32 0.0, %v5105
        %5107 = vmatprep.mubr.f32.mxu0 %v4952
        %5108 = vmatmul.mubr.f32.gmra.mrb[0].mxu0 %v4853
        %v5109 = vpop.f32.mrb[0].mxu0
        %v5110 = vpop.f32.mrb[0].mxu0
        %5111 = vmatprep.mubr.f32.mxu0 %v4955
        %5112 = vmatmul.mubr.f32.gmra.mrb[0].mxu0 %v4855
        %v5113 = vpop.f32.mrb[0].mxu0
        %v5114 = vadd.f32 0.0, %v5113
        %v5115 = vpop.f32.mrb[0].mxu0
        %v5116 = vadd.f32 0.0, %v5115
        %5117 = vdwg.mxu0
        %v5118 = vadd.f32 %v4799, %v5024
        %v5119 = vadd.f32 %v4800, %v5026
        %v5120 = vadd.f32 %v4801, %v5034
        %v5121 = vadd.f32 %v4802, %v5036
        %v5122 = vadd.f32 %v4803, %v5044
        %v5123 = vadd.f32 %v4804, %v5046
        %v5124 = vadd.f32 %v4805, %v5054
        %v5125 = vadd.f32 %v4806, %v5056
        %v5126 = vadd.f32 %v4807, %v5064
        %v5127 = vadd.f32 %v4808, %v5066
        %v5128 = vadd.f32 %v4809, %v5074
        %v5129 = vadd.f32 %v4810, %v5076
        %v5130 = vadd.f32 %v4811, %v5084
        %v5131 = vadd.f32 %v4812, %v5086
        %v5132 = vadd.f32 %v4813, %v5094
        %v5133 = vadd.f32 %v4814, %v5096
        %v5134 = vadd.f32 %v4815, %v5104
        %v5135 = vadd.f32 %v4816, %v5106
        %v5136 = vadd.f32 %v4817, %v5114
        %v5137 = vadd.f32 %v4818, %v5116
        %v5138 = vld [vmem:[#allocation2 + $0x90] sm:$0xff]
        %v5139 = vld [vmem:[#allocation2 + $0x98] sm:$0xff]
        %v5140 = vld [vmem:[#allocation2 + $0xa0] sm:$0xff]
        %v5141 = vld [vmem:[#allocation2 + $0xa8] sm:$0xff]
        %v5142 = vld [vmem:[#allocation2 + $0xb0] sm:$0xff]
        %v5143 = vld [vmem:[#allocation2 + $0xb8] sm:$0xff]
        %v5144 = vld [vmem:[#allocation2 + $0xc0] sm:$0xff]
        %v5145 = vld [vmem:[#allocation2 + $0xc8] sm:$0xff]
        %v5146 = vld [vmem:[#allocation2 + $0xd0] sm:$0xff]
        %v5147 = vld [vmem:[#allocation2 + $0xd8] sm:$0xff]
        %v5148 = vld [vmem:[#allocation2 + $0xe0] sm:$0xff]
        %v5149 = vld [vmem:[#allocation2 + $0xe8] sm:$0xff]
        %v5150 = vld [vmem:[#allocation2 + $0xf0] sm:$0xff]
        %v5151 = vld [vmem:[#allocation2 + $0xf8] sm:$0xff]
        %v5152 = vld [vmem:[#allocation2 + $0x100] sm:$0xff]
        %v5153 = vld [vmem:[#allocation2 + $0x108] sm:$0xff]
        %v5154 = vld [vmem:[#allocation2 + $0x110] sm:$0xff]
        %v5155 = vld [vmem:[#allocation2 + $0x118] sm:$0xff]
        %v5156 = vld [vmem:[#allocation2 + $0x120] sm:$0xff]
        %v5157 = vld [vmem:[#allocation2 + $0x128] sm:$0xff]
        %v5158 = vld [vmem:[#allocation2 + $0x130] sm:$0xff]
        %v5159 = vld [vmem:[#allocation2 + $0x138] sm:$0xff]
        %v5160 = vld [vmem:[#allocation2 + $0x140] sm:$0xff]
        %v5161 = vld [vmem:[#allocation2 + $0x148] sm:$0xff]
        %v5162 = vld [vmem:[#allocation2 + $0x150] sm:$0xff]
        %v5163 = vld [vmem:[#allocation2 + $0x158] sm:$0xff]
        %v5164 = vld [vmem:[#allocation2 + $0x160] sm:$0xff]
        %v5165 = vld [vmem:[#allocation2 + $0x168] sm:$0xff]
        %v5166 = vld [vmem:[#allocation2 + $0x170] sm:$0xff]
        %v5167 = vld [vmem:[#allocation2 + $0x178] sm:$0xff]
        %v5168 = vld [vmem:[#allocation2 + $0x180] sm:$0xff]
        %v5169 = vld [vmem:[#allocation2 + $0x188] sm:$0xff]
        %v5170 = vld [vmem:[#allocation2 + $0x190] sm:$0xff]
        %v5171 = vld [vmem:[#allocation2 + $0x198] sm:$0xff]
        %v5172 = vld [vmem:[#allocation2 + $0x1a0] sm:$0xff]
        %v5173 = vld [vmem:[#allocation2 + $0x1a8] sm:$0xff]
        %v5174 = vld [vmem:[#allocation2 + $0x1b0] sm:$0xff]
        %v5175 = vld [vmem:[#allocation2 + $0x1b8] sm:$0xff]
        %s5176 = scalar_lea.vmem %s3, 3024
        %v5177 = vld [vmem:[%s5176] sm:$0xff]
        %v5178 = vld [vmem:[%s5176 + $0x8] sm:$0xff]
        %v5179 = vld [vmem:[%s5176 + $0x10] sm:$0xff]
        %v5180 = vld [vmem:[%s5176 + $0x18] sm:$0xff]
        %v5181 = vld [vmem:[%s5176 + $0x20] sm:$0xff]
        %v5182 = vld [vmem:[%s5176 + $0x28] sm:$0xff]
        %v5183 = vld [vmem:[%s5176 + $0x30] sm:$0xff]
        %v5184 = vld [vmem:[%s5176 + $0x38] sm:$0xff]
        %v5185 = vld [vmem:[%s5176 + $0x40] sm:$0xff]
        %v5186 = vld [vmem:[%s5176 + $0x48] sm:$0xff]
        %v5187 = vld [vmem:[%s5176 + $0x50] sm:$0xff]
        %v5188 = vld [vmem:[%s5176 + $0x58] sm:$0xff]
        %v5189 = vld [vmem:[%s5176 + $0x60] sm:$0xff]
        %v5190 = vld [vmem:[%s5176 + $0x68] sm:$0xff]
        %v5191 = vld [vmem:[%s5176 + $0x70] sm:$0xff]
        %v5192 = vld [vmem:[%s5176 + $0x78] sm:$0xff]
        %v5193 = vld [vmem:[%s5176 + $0x80] sm:$0xff]
        %v5194 = vld [vmem:[%s5176 + $0x88] sm:$0xff]
        %v5195 = vld [vmem:[%s5176 + $0x90] sm:$0xff]
        %v5196 = vld [vmem:[%s5176 + $0x98] sm:$0xff]
        %v5197 = vld [vmem:[%s5176 + $0xa0] sm:$0xff]
        %v5198 = vld [vmem:[%s5176 + $0xa8] sm:$0xff]
        %v5199 = vld [vmem:[%s5176 + $0xb0] sm:$0xff]
        %v5200 = vld [vmem:[%s5176 + $0xb8] sm:$0xff]
        %v5201 = vld [vmem:[%s5176 + $0xc0] sm:$0xff]
        %v5202 = vld [vmem:[%s5176 + $0xc8] sm:$0xff]
        %v5203 = vld [vmem:[%s5176 + $0xd0] sm:$0xff]
        %v5204 = vld [vmem:[%s5176 + $0xd8] sm:$0xff]
        %v5205 = vld [vmem:[%s5176 + $0xe0] sm:$0xff]
        %v5206 = vld [vmem:[%s5176 + $0xe8] sm:$0xff]
        %v5207 = vld [vmem:[%s5176 + $0xf0] sm:$0xff]
        %v5208 = vld [vmem:[%s5176 + $0xf8] sm:$0xff]
        %v5209 = vld [vmem:[%s5176 + $0x100] sm:$0xff]
        %v5210 = vld [vmem:[%s5176 + $0x108] sm:$0xff]
        %v5211 = vld [vmem:[%s5176 + $0x110] sm:$0xff]
        %v5212 = vld [vmem:[%s5176 + $0x118] sm:$0xff]
        %v5213 = vld [vmem:[%s5176 + $0x120] sm:$0xff]
        %v5214 = vld [vmem:[%s5176 + $0x128] sm:$0xff]
        %v5215 = vld [vmem:[%s5176 + $0x130] sm:$0xff]
        %v5216 = vld [vmem:[%s5176 + $0x138] sm:$0xff]
        %v5217 = vld [vmem:[%s5176 + $0x140] sm:$0xff]
        %v5218 = vld [vmem:[%s5176 + $0x148] sm:$0xff]
        %v5220 = vsel %vm2342, %v5139, 0
        %v5223 = vsel %vm2342, %v5141, 0
        %v5226 = vsel %vm2342, %v5143, 0
        %v5229 = vsel %vm2342, %v5145, 0
        %v5232 = vsel %vm2342, %v5147, 0
        %v5235 = vsel %vm2342, %v5149, 0
        %v5238 = vsel %vm2342, %v5151, 0
        %v5241 = vsel %vm2342, %v5153, 0
        %v5244 = vsel %vm2342, %v5155, 0
        %v5247 = vsel %vm2342, %v5157, 0
        %v5250 = vsel %vm2342, %v5159, 0
        %v5253 = vsel %vm2342, %v5161, 0
        %v5256 = vsel %vm2342, %v5163, 0
        %v5259 = vsel %vm2342, %v5165, 0
        %v5262 = vsel %vm2342, %v5167, 0
        %v5265 = vsel %vm2342, %v5169, 0
        %v5268 = vsel %vm2342, %v5171, 0
        %v5271 = vsel %vm2342, %v5173, 0
        %v5274 = vsel %vm2342, %v5175, 0
        %5276 = vmatprep.subr.mxu0 %v5178
        %5277 = vmatpush1.msra.mxu0 %v5177
        %5278 = vmatprep.subr.mxu0 %v5180
        %5279 = vmatpush1.msra.mxu0 %v5179
        %5280 = vmatprep.subr.mxu0 %v5182
        %5281 = vmatpush1.msra.mxu0 %v5181
        %5282 = vmatprep.subr.mxu0 %v5184
        %5283 = vmatpush1.msra.mxu0 %v5183
        %5284 = vmatprep.subr.mxu0 %v5186
        %5285 = vmatpush1.msra.mxu0 %v5185
        %5286 = vmatprep.subr.mxu0 %v5188
        %5287 = vmatpush1.msra.mxu0 %v5187
        %5288 = vmatprep.subr.mxu0 %v5190
        %5289 = vmatpush1.msra.mxu0 %v5189
        %5290 = vmatprep.subr.mxu0 %v5192
        %5291 = vmatpush1.msra.mxu0 %v5191
        %5292 = vmatprep.subr.mxu0 %v5194
        %5293 = vmatpush1.msra.mxu0 %v5193
        %5294 = vmatprep.subr.mxu0 %v5196
        %5295 = vmatpush1.msra.mxu0 %v5195
        %5296 = vmatprep.subr.mxu0 %v5198
        %5297 = vmatpush1.msra.mxu0 %v5197
        %5298 = vmatprep.subr.mxu0 %v5200
        %5299 = vmatpush1.msra.mxu0 %v5199
        %5300 = vmatprep.subr.mxu0 %v5202
        %5301 = vmatpush1.msra.mxu0 %v5201
        %5302 = vmatprep.subr.mxu0 %v5204
        %5303 = vmatpush1.msra.mxu0 %v5203
        %5304 = vmatprep.subr.mxu0 %v5206
        %5305 = vmatpush1.msra.mxu0 %v5205
        %5306 = vmatprep.subr.mxu0 %v5208
        %5307 = vmatpush1.msra.mxu0 %v5207
        %5308 = vmatprep.subr.mxu0 %v5210
        %5309 = vmatpush1.msra.mxu0 %v5209
        %5310 = vmatprep.subr.mxu0 %v5212
        %5311 = vmatpush1.msra.mxu0 %v5211
        %5312 = vmatprep.subr.mxu0 %v5214
        %5313 = vmatpush1.msra.mxu0 %v5213
        %5314 = vmatprep.subr.mxu0 %v5216
        %5315 = vmatpush1.msra.mxu0 %v5215
        %5316 = vmatprep.subr.mxu0 %v5218
        %5317 = vmatpush1.msra.mxu0 %v5217
        %5318 = vmatprep.subr.mxu0 0.0
        %5319 = vmatpush1.msra.mxu0 0.0
        %5320 = vmatprep.subr.mxu0 0.0
        %5321 = vmatpush1.msra.mxu0 0.0
        %5322 = vmatprep.subr.mxu0 0.0
        %5323 = vmatpush1.msra.mxu0 0.0
        %5324 = vmatprep.subr.mxu0 0.0
        %5325 = vmatpush1.msra.mxu0 0.0
        %5326 = vmatprep.subr.mxu0 0.0
        %5327 = vmatpush1.msra.mxu0 0.0
        %5328 = vmatprep.subr.mxu0 0.0
        %5329 = vmatpush1.msra.mxu0 0.0
        %5330 = vmatprep.subr.mxu0 0.0
        %5331 = vmatpush1.msra.mxu0 0.0
        %5332 = vmatprep.subr.mxu0 0.0
        %5333 = vmatpush1.msra.mxu0 0.0
        %5334 = vmatprep.subr.mxu0 0.0
        %5335 = vmatpush1.msra.mxu0 0.0
        %5336 = vmatprep.subr.mxu0 0.0
        %5337 = vmatpush1.msra.mxu0 0.0
        %5338 = vmatprep.subr.mxu0 0.0
        %5339 = vmatpush1.msra.mxu0 0.0
        %5340 = vmatprep.mubr.f32.mxu0 %v5220
        %5341 = vmatmul.mubr.f32.gmra.mrb[0].mxu0 %v5138
        %v5342 = vpop.f32.mrb[0].mxu0
        %v5343 = vadd.f32 0.0, %v5342
        %v5344 = vpop.f32.mrb[0].mxu0
        %v5345 = vadd.f32 0.0, %v5344
        %5346 = vmatprep.mubr.f32.mxu0 %v5223
        %5347 = vmatmul.mubr.f32.gmra.mrb[0].mxu0 %v5140
        %v5348 = vpop.f32.mrb[0].mxu0
        %v5349 = vpop.f32.mrb[0].mxu0
        %5350 = vmatprep.mubr.f32.mxu0 %v5226
        %5351 = vmatmul.mubr.f32.gmra.mrb[0].mxu0 %v5142
        %v5352 = vpop.f32.mrb[0].mxu0
        %v5353 = vadd.f32 0.0, %v5352
        %v5354 = vpop.f32.mrb[0].mxu0
        %v5355 = vadd.f32 0.0, %v5354
        %5356 = vmatprep.mubr.f32.mxu0 %v5229
        %5357 = vmatmul.mubr.f32.gmra.mrb[0].mxu0 %v5144
        %v5358 = vpop.f32.mrb[0].mxu0
        %v5359 = vpop.f32.mrb[0].mxu0
        %5360 = vmatprep.mubr.f32.mxu0 %v5232
        %5361 = vmatmul.mubr.f32.gmra.mrb[0].mxu0 %v5146
        %v5362 = vpop.f32.mrb[0].mxu0
        %v5363 = vadd.f32 0.0, %v5362
        %v5364 = vpop.f32.mrb[0].mxu0
        %v5365 = vadd.f32 0.0, %v5364
        %5366 = vmatprep.mubr.f32.mxu0 %v5235
        %5367 = vmatmul.mubr.f32.gmra.mrb[0].mxu0 %v5148
        %v5368 = vpop.f32.mrb[0].mxu0
        %v5369 = vpop.f32.mrb[0].mxu0
        %5370 = vmatprep.mubr.f32.mxu0 %v5238
        %5371 = vmatmul.mubr.f32.gmra.mrb[0].mxu0 %v5150
        %v5372 = vpop.f32.mrb[0].mxu0
        %v5373 = vadd.f32 0.0, %v5372
        %v5374 = vpop.f32.mrb[0].mxu0
        %v5375 = vadd.f32 0.0, %v5374
        %5376 = vmatprep.mubr.f32.mxu0 %v5241
        %5377 = vmatmul.mubr.f32.gmra.mrb[0].mxu0 %v5152
        %v5378 = vpop.f32.mrb[0].mxu0
        %v5379 = vpop.f32.mrb[0].mxu0
        %5380 = vmatprep.mubr.f32.mxu0 %v5244
        %5381 = vmatmul.mubr.f32.gmra.mrb[0].mxu0 %v5154
        %v5382 = vpop.f32.mrb[0].mxu0
        %v5383 = vadd.f32 0.0, %v5382
        %v5384 = vpop.f32.mrb[0].mxu0
        %v5385 = vadd.f32 0.0, %v5384
        %5386 = vmatprep.mubr.f32.mxu0 %v5247
        %5387 = vmatmul.mubr.f32.gmra.mrb[0].mxu0 %v5156
        %v5388 = vpop.f32.mrb[0].mxu0
        %v5389 = vpop.f32.mrb[0].mxu0
        %5390 = vmatprep.mubr.f32.mxu0 %v5250
        %5391 = vmatmul.mubr.f32.gmra.mrb[0].mxu0 %v5158
        %v5392 = vpop.f32.mrb[0].mxu0
        %v5393 = vadd.f32 0.0, %v5392
        %v5394 = vpop.f32.mrb[0].mxu0
        %v5395 = vadd.f32 0.0, %v5394
        %5396 = vmatprep.mubr.f32.mxu0 %v5253
        %5397 = vmatmul.mubr.f32.gmra.mrb[0].mxu0 %v5160
        %v5398 = vpop.f32.mrb[0].mxu0
        %v5399 = vpop.f32.mrb[0].mxu0
        %5400 = vmatprep.mubr.f32.mxu0 %v5256
        %5401 = vmatmul.mubr.f32.gmra.mrb[0].mxu0 %v5162
        %v5402 = vpop.f32.mrb[0].mxu0
        %v5403 = vadd.f32 0.0, %v5402
        %v5404 = vpop.f32.mrb[0].mxu0
        %v5405 = vadd.f32 0.0, %v5404
        %5406 = vmatprep.mubr.f32.mxu0 %v5259
        %5407 = vmatmul.mubr.f32.gmra.mrb[0].mxu0 %v5164
        %v5408 = vpop.f32.mrb[0].mxu0
        %v5409 = vpop.f32.mrb[0].mxu0
        %5410 = vmatprep.mubr.f32.mxu0 %v5262
        %5411 = vmatmul.mubr.f32.gmra.mrb[0].mxu0 %v5166
        %v5412 = vpop.f32.mrb[0].mxu0
        %v5413 = vadd.f32 0.0, %v5412
        %v5414 = vpop.f32.mrb[0].mxu0
        %v5415 = vadd.f32 0.0, %v5414
        %5416 = vmatprep.mubr.f32.mxu0 %v5265
        %5417 = vmatmul.mubr.f32.gmra.mrb[0].mxu0 %v5168
        %v5418 = vpop.f32.mrb[0].mxu0
        %v5419 = vpop.f32.mrb[0].mxu0
        %5420 = vmatprep.mubr.f32.mxu0 %v5268
        %5421 = vmatmul.mubr.f32.gmra.mrb[0].mxu0 %v5170
        %v5422 = vpop.f32.mrb[0].mxu0
        %v5423 = vadd.f32 0.0, %v5422
        %v5424 = vpop.f32.mrb[0].mxu0
        %v5425 = vadd.f32 0.0, %v5424
        %5426 = vmatprep.mubr.f32.mxu0 %v5271
        %5427 = vmatmul.mubr.f32.gmra.mrb[0].mxu0 %v5172
        %v5428 = vpop.f32.mrb[0].mxu0
        %v5429 = vpop.f32.mrb[0].mxu0
        %5430 = vmatprep.mubr.f32.mxu0 %v5274
        %5431 = vmatmul.mubr.f32.gmra.mrb[0].mxu0 %v5174
        %v5432 = vpop.f32.mrb[0].mxu0
        %v5433 = vadd.f32 0.0, %v5432
        %v5434 = vpop.f32.mrb[0].mxu0
        %v5435 = vadd.f32 0.0, %v5434
        %5436 = vdwg.mxu0
        %v5437 = vadd.f32 %v5118, %v5343
        %v5438 = vadd.f32 %v5119, %v5345
        %v5439 = vadd.f32 %v5120, %v5353
        %v5440 = vadd.f32 %v5121, %v5355
        %v5441 = vadd.f32 %v5122, %v5363
        %v5442 = vadd.f32 %v5123, %v5365
        %v5443 = vadd.f32 %v5124, %v5373
        %v5444 = vadd.f32 %v5125, %v5375
        %v5445 = vadd.f32 %v5126, %v5383
        %v5446 = vadd.f32 %v5127, %v5385
        %v5447 = vadd.f32 %v5128, %v5393
        %v5448 = vadd.f32 %v5129, %v5395
        %v5449 = vadd.f32 %v5130, %v5403
        %v5450 = vadd.f32 %v5131, %v5405
        %v5451 = vadd.f32 %v5132, %v5413
        %v5452 = vadd.f32 %v5133, %v5415
        %v5453 = vadd.f32 %v5134, %v5423
        %v5454 = vadd.f32 %v5135, %v5425
        %v5455 = vadd.f32 %v5136, %v5433
        %v5456 = vadd.f32 %v5137, %v5435
        %v5457 = vld [vmem:[%s4] sm:$0x3]
        %v5459 = vlaneseq
        %v5460 = vshrl.u32 %v5459, 7
        %v5461 = vsub.s32 0, %v5460
        %v5462 = vrot.slane %v5457, %v5461
        %v5463 = vlaneseq
        %v5464 = vshrl.u32 %v5463, 7
        %v5465 = vsub.s32 1, %v5464
        %v5466 = vrot.slane %v5457, %v5465
        %v5469 = vadd.f32 %v5437, %v5462
        %v5470 = vadd.f32 %v5438, %v5466
        %v5471 = vtanh.pop %v5469
        %v5472 = vtanh.pop %v5470
        %v5473 = vld [vmem:[%s5] sm:$0xff]
        %v5474 = vld [vmem:[%s5 + $0x8] sm:$0xff]
        %v5475 = vld [vmem:[%s5 + $0x10] sm:$0xff]
        %v5476 = vld [vmem:[%s5 + $0x18] sm:$0xff]
        %v5477 = vld [vmem:[%s5 + $0x20] sm:$0xff]
        %v5478 = vld [vmem:[%s5 + $0x28] sm:$0xff]
        %v5479 = vld [vmem:[%s5 + $0x30] sm:$0xff]
        %v5480 = vld [vmem:[%s5 + $0x38] sm:$0xff]
        %v5481 = vld [vmem:[%s5 + $0x40] sm:$0xff]
        %v5482 = vld [vmem:[%s5 + $0x48] sm:$0xff]
        %v5483 = vld [vmem:[%s5 + $0x50] sm:$0xff]
        %v5484 = vld [vmem:[%s5 + $0x58] sm:$0xff]
        %v5485 = vld [vmem:[%s5 + $0x60] sm:$0xff]
        %v5486 = vld [vmem:[%s5 + $0x68] sm:$0xff]
        %v5487 = vld [vmem:[%s5 + $0x70] sm:$0xff]
        %v5488 = vld [vmem:[%s5 + $0x78] sm:$0xff]
        %v5489 = vld [vmem:[%s5 + $0x80] sm:$0xff]
        %v5490 = vld [vmem:[%s5 + $0x88] sm:$0xff]
        %v5491 = vld [vmem:[%s5 + $0x90] sm:$0xff]
        %v5492 = vld [vmem:[%s5 + $0x98] sm:$0xff]
        %v5493 = vadd.f32 %v5439, %v5462
        %v5494 = vadd.f32 %v5440, %v5466
        %v5495 = vtanh.pop %v5493
        %v5496 = vtanh.pop %v5494
        %s5497 = scalar_lea.vmem %s5, 160
        %v5498 = vld [vmem:[%s5497] sm:$0xff]
        %v5499 = vld [vmem:[%s5497 + $0x8] sm:$0xff]
        %v5500 = vld [vmem:[%s5497 + $0x10] sm:$0xff]
        %v5501 = vld [vmem:[%s5497 + $0x18] sm:$0xff]
        %v5502 = vld [vmem:[%s5497 + $0x20] sm:$0xff]
        %v5503 = vld [vmem:[%s5497 + $0x28] sm:$0xff]
        %v5504 = vld [vmem:[%s5497 + $0x30] sm:$0xff]
        %v5505 = vld [vmem:[%s5497 + $0x38] sm:$0xff]
        %v5506 = vld [vmem:[%s5497 + $0x40] sm:$0xff]
        %v5507 = vld [vmem:[%s5497 + $0x48] sm:$0xff]
        %v5508 = vld [vmem:[%s5497 + $0x50] sm:$0xff]
        %v5509 = vld [vmem:[%s5497 + $0x58] sm:$0xff]
        %v5510 = vld [vmem:[%s5497 + $0x60] sm:$0xff]
        %v5511 = vld [vmem:[%s5497 + $0x68] sm:$0xff]
        %v5512 = vld [vmem:[%s5497 + $0x70] sm:$0xff]
        %v5513 = vld [vmem:[%s5497 + $0x78] sm:$0xff]
        %v5514 = vld [vmem:[%s5497 + $0x80] sm:$0xff]
        %v5515 = vld [vmem:[%s5497 + $0x88] sm:$0xff]
        %v5516 = vld [vmem:[%s5497 + $0x90] sm:$0xff]
        %v5517 = vld [vmem:[%s5497 + $0x98] sm:$0xff]
        %v5519 = vsel %vm433, %v5496, 0
        %5521 = vmatprep.subr.mxu0 0.0
        %5522 = vmatpush1.msra.mxu0 %v5498
        %5523 = vmatprep.subr.mxu0 0.0
        %5524 = vmatpush1.msra.mxu0 %v5499
        %5525 = vmatprep.subr.mxu0 0.0
        %5526 = vmatpush1.msra.mxu0 %v5500
        %5527 = vmatprep.subr.mxu0 0.0
        %5528 = vmatpush1.msra.mxu0 %v5501
        %5529 = vmatprep.subr.mxu0 0.0
        %5530 = vmatpush1.msra.mxu0 %v5502
        %5531 = vmatprep.subr.mxu0 0.0
        %5532 = vmatpush1.msra.mxu0 %v5503
        %5533 = vmatprep.subr.mxu0 0.0
        %5534 = vmatpush1.msra.mxu0 %v5504
        %5535 = vmatprep.subr.mxu0 0.0
        %5536 = vmatpush1.msra.mxu0 %v5505
        %5537 = vmatprep.subr.mxu0 0.0
        %5538 = vmatpush1.msra.mxu0 %v5506
        %5539 = vmatprep.subr.mxu0 0.0
        %5540 = vmatpush1.msra.mxu0 %v5507
        %5541 = vmatprep.subr.mxu0 0.0
        %5542 = vmatpush1.msra.mxu0 %v5508
        %5543 = vmatprep.subr.mxu0 0.0
        %5544 = vmatpush1.msra.mxu0 %v5509
        %5545 = vmatprep.subr.mxu0 0.0
        %5546 = vmatpush1.msra.mxu0 %v5510
        %5547 = vmatprep.subr.mxu0 0.0
        %5548 = vmatpush1.msra.mxu0 %v5511
        %5549 = vmatprep.subr.mxu0 0.0
        %5550 = vmatpush1.msra.mxu0 %v5512
        %5551 = vmatprep.subr.mxu0 0.0
        %5552 = vmatpush1.msra.mxu0 %v5513
        %5553 = vmatprep.subr.mxu0 0.0
        %5554 = vmatpush1.msra.mxu0 %v5514
        %5555 = vmatprep.subr.mxu0 0.0
        %5556 = vmatpush1.msra.mxu0 %v5515
        %5557 = vmatprep.subr.mxu0 0.0
        %5558 = vmatpush1.msra.mxu0 %v5516
        %5559 = vmatprep.subr.mxu0 0.0
        %5560 = vmatpush1.msra.mxu0 %v5517
        %5561 = vmatprep.subr.mxu0 0.0
        %5562 = vmatpush1.msra.mxu0 0.0
        %5563 = vmatprep.subr.mxu0 0.0
        %5564 = vmatpush1.msra.mxu0 0.0
        %5565 = vmatprep.subr.mxu0 0.0
        %5566 = vmatpush1.msra.mxu0 0.0
        %5567 = vmatprep.subr.mxu0 0.0
        %5568 = vmatpush1.msra.mxu0 0.0
        %5569 = vmatprep.subr.mxu0 0.0
        %5570 = vmatpush1.msra.mxu0 0.0
        %5571 = vmatprep.subr.mxu0 0.0
        %5572 = vmatpush1.msra.mxu0 0.0
        %5573 = vmatprep.subr.mxu0 0.0
        %5574 = vmatpush1.msra.mxu0 0.0
        %5575 = vmatprep.subr.mxu0 0.0
        %5576 = vmatpush1.msra.mxu0 0.0
        %5577 = vmatprep.subr.mxu0 0.0
        %5578 = vmatpush1.msra.mxu0 0.0
        %5579 = vmatprep.subr.mxu0 0.0
        %5580 = vmatpush1.msra.mxu0 0.0
        %5581 = vmatprep.subr.mxu0 0.0
        %5582 = vmatpush1.msra.mxu0 0.0
        %5583 = vmatprep.subr.mxu0 0.0
        %5584 = vmatpush1.msra.mxu0 0.0
        %5585 = vmatprep.mubr.f32.mxu0 %v5519
        %5586 = vmatmul.mubr.f32.gmra.mrb[0].mxu0 %v5495
        %v5587 = vpop.f32.mrb[0].mxu0
        %v5588 = vadd.f32 0.0, %v5587
        %v5589 = vpop.f32.mrb[0].mxu0
        %5590 = vdwg.mxu0
        %v5592 = vsel %vm433, %v5472, 0
        %5594 = vmatprep.subr.mxu0 0.0
        %5595 = vmatpush1.msra.mxu0 %v5473
        %5596 = vmatprep.subr.mxu0 0.0
        %5597 = vmatpush1.msra.mxu0 %v5474
        %5598 = vmatprep.subr.mxu0 0.0
        %5599 = vmatpush1.msra.mxu0 %v5475
        %5600 = vmatprep.subr.mxu0 0.0
        %5601 = vmatpush1.msra.mxu0 %v5476
        %5602 = vmatprep.subr.mxu0 0.0
        %5603 = vmatpush1.msra.mxu0 %v5477
        %5604 = vmatprep.subr.mxu0 0.0
        %5605 = vmatpush1.msra.mxu0 %v5478
        %5606 = vmatprep.subr.mxu0 0.0
        %5607 = vmatpush1.msra.mxu0 %v5479
        %5608 = vmatprep.subr.mxu0 0.0
        %5609 = vmatpush1.msra.mxu0 %v5480
        %5610 = vmatprep.subr.mxu0 0.0
        %5611 = vmatpush1.msra.mxu0 %v5481
        %5612 = vmatprep.subr.mxu0 0.0
        %5613 = vmatpush1.msra.mxu0 %v5482
        %5614 = vmatprep.subr.mxu0 0.0
        %5615 = vmatpush1.msra.mxu0 %v5483
        %5616 = vmatprep.subr.mxu0 0.0
        %5617 = vmatpush1.msra.mxu0 %v5484
        %5618 = vmatprep.subr.mxu0 0.0
        %5619 = vmatpush1.msra.mxu0 %v5485
        %5620 = vmatprep.subr.mxu0 0.0
        %5621 = vmatpush1.msra.mxu0 %v5486
        %5622 = vmatprep.subr.mxu0 0.0
        %5623 = vmatpush1.msra.mxu0 %v5487
        %5624 = vmatprep.subr.mxu0 0.0
        %5625 = vmatpush1.msra.mxu0 %v5488
        %5626 = vmatprep.subr.mxu0 0.0
        %5627 = vmatpush1.msra.mxu0 %v5489
        %5628 = vmatprep.subr.mxu0 0.0
        %5629 = vmatpush1.msra.mxu0 %v5490
        %5630 = vmatprep.subr.mxu0 0.0
        %5631 = vmatpush1.msra.mxu0 %v5491
        %5632 = vmatprep.subr.mxu0 0.0
        %5633 = vmatpush1.msra.mxu0 %v5492
        %5634 = vmatprep.subr.mxu0 0.0
        %5635 = vmatpush1.msra.mxu0 0.0
        %5636 = vmatprep.subr.mxu0 0.0
        %5637 = vmatpush1.msra.mxu0 0.0
        %5638 = vmatprep.subr.mxu0 0.0
        %5639 = vmatpush1.msra.mxu0 0.0
        %5640 = vmatprep.subr.mxu0 0.0
        %5641 = vmatpush1.msra.mxu0 0.0
        %5642 = vmatprep.subr.mxu0 0.0
        %5643 = vmatpush1.msra.mxu0 0.0
        %5644 = vmatprep.subr.mxu0 0.0
        %5645 = vmatpush1.msra.mxu0 0.0
        %5646 = vmatprep.subr.mxu0 0.0
        %5647 = vmatpush1.msra.mxu0 0.0
        %5648 = vmatprep.subr.mxu0 0.0
        %5649 = vmatpush1.msra.mxu0 0.0
        %5650 = vmatprep.subr.mxu0 0.0
        %5651 = vmatpush1.msra.mxu0 0.0
        %5652 = vmatprep.subr.mxu0 0.0
        %5653 = vmatpush1.msra.mxu0 0.0
        %5654 = vmatprep.subr.mxu0 0.0
        %5655 = vmatpush1.msra.mxu0 0.0
        %5656 = vmatprep.subr.mxu0 0.0
        %5657 = vmatpush1.msra.mxu0 0.0
        %5658 = vmatprep.mubr.f32.mxu0 %v5592
        %5659 = vmatmul.mubr.f32.gmra.mrb[0].mxu0 %v5471
        %v5660 = vpop.f32.mrb[0].mxu0
        %v5661 = vadd.f32 %v5588, %v5660
        %v5662 = vpop.f32.mrb[0].mxu0
        %5663 = vdwg.mxu0
        %v5664 = vadd.f32 %v5441, %v5462
        %v5665 = vadd.f32 %v5442, %v5466
        %v5666 = vtanh.pop %v5664
        %v5667 = vtanh.pop %v5665
        %s5668 = scalar_lea.vmem %s5, 320
        %v5669 = vld [vmem:[%s5668] sm:$0xff]
        %v5670 = vld [vmem:[%s5668 + $0x8] sm:$0xff]
        %v5671 = vld [vmem:[%s5668 + $0x10] sm:$0xff]
        %v5672 = vld [vmem:[%s5668 + $0x18] sm:$0xff]
        %v5673 = vld [vmem:[%s5668 + $0x20] sm:$0xff]
        %v5674 = vld [vmem:[%s5668 + $0x28] sm:$0xff]
        %v5675 = vld [vmem:[%s5668 + $0x30] sm:$0xff]
        %v5676 = vld [vmem:[%s5668 + $0x38] sm:$0xff]
        %v5677 = vld [vmem:[%s5668 + $0x40] sm:$0xff]
        %v5678 = vld [vmem:[%s5668 + $0x48] sm:$0xff]
        %v5679 = vld [vmem:[%s5668 + $0x50] sm:$0xff]
        %v5680 = vld [vmem:[%s5668 + $0x58] sm:$0xff]
        %v5681 = vld [vmem:[%s5668 + $0x60] sm:$0xff]
        %v5682 = vld [vmem:[%s5668 + $0x68] sm:$0xff]
        %v5683 = vld [vmem:[%s5668 + $0x70] sm:$0xff]
        %v5684 = vld [vmem:[%s5668 + $0x78] sm:$0xff]
        %v5685 = vld [vmem:[%s5668 + $0x80] sm:$0xff]
        %v5686 = vld [vmem:[%s5668 + $0x88] sm:$0xff]
        %v5687 = vld [vmem:[%s5668 + $0x90] sm:$0xff]
        %v5688 = vld [vmem:[%s5668 + $0x98] sm:$0xff]
        %v5690 = vsel %vm433, %v5667, 0
        %5692 = vmatprep.subr.mxu0 0.0
        %5693 = vmatpush1.msra.mxu0 %v5669
        %5694 = vmatprep.subr.mxu0 0.0
        %5695 = vmatpush1.msra.mxu0 %v5670
        %5696 = vmatprep.subr.mxu0 0.0
        %5697 = vmatpush1.msra.mxu0 %v5671
        %5698 = vmatprep.subr.mxu0 0.0
        %5699 = vmatpush1.msra.mxu0 %v5672
        %5700 = vmatprep.subr.mxu0 0.0
        %5701 = vmatpush1.msra.mxu0 %v5673
        %5702 = vmatprep.subr.mxu0 0.0
        %5703 = vmatpush1.msra.mxu0 %v5674
        %5704 = vmatprep.subr.mxu0 0.0
        %5705 = vmatpush1.msra.mxu0 %v5675
        %5706 = vmatprep.subr.mxu0 0.0
        %5707 = vmatpush1.msra.mxu0 %v5676
        %5708 = vmatprep.subr.mxu0 0.0
        %5709 = vmatpush1.msra.mxu0 %v5677
        %5710 = vmatprep.subr.mxu0 0.0
        %5711 = vmatpush1.msra.mxu0 %v5678
        %5712 = vmatprep.subr.mxu0 0.0
        %5713 = vmatpush1.msra.mxu0 %v5679
        %5714 = vmatprep.subr.mxu0 0.0
        %5715 = vmatpush1.msra.mxu0 %v5680
        %5716 = vmatprep.subr.mxu0 0.0
        %5717 = vmatpush1.msra.mxu0 %v5681
        %5718 = vmatprep.subr.mxu0 0.0
        %5719 = vmatpush1.msra.mxu0 %v5682
        %5720 = vmatprep.subr.mxu0 0.0
        %5721 = vmatpush1.msra.mxu0 %v5683
        %5722 = vmatprep.subr.mxu0 0.0
        %5723 = vmatpush1.msra.mxu0 %v5684
        %5724 = vmatprep.subr.mxu0 0.0
        %5725 = vmatpush1.msra.mxu0 %v5685
        %5726 = vmatprep.subr.mxu0 0.0
        %5727 = vmatpush1.msra.mxu0 %v5686
        %5728 = vmatprep.subr.mxu0 0.0
        %5729 = vmatpush1.msra.mxu0 %v5687
        %5730 = vmatprep.subr.mxu0 0.0
        %5731 = vmatpush1.msra.mxu0 %v5688
        %5732 = vmatprep.subr.mxu0 0.0
        %5733 = vmatpush1.msra.mxu0 0.0
        %5734 = vmatprep.subr.mxu0 0.0
        %5735 = vmatpush1.msra.mxu0 0.0
        %5736 = vmatprep.subr.mxu0 0.0
        %5737 = vmatpush1.msra.mxu0 0.0
        %5738 = vmatprep.subr.mxu0 0.0
        %5739 = vmatpush1.msra.mxu0 0.0
        %5740 = vmatprep.subr.mxu0 0.0
        %5741 = vmatpush1.msra.mxu0 0.0
        %5742 = vmatprep.subr.mxu0 0.0
        %5743 = vmatpush1.msra.mxu0 0.0
        %5744 = vmatprep.subr.mxu0 0.0
        %5745 = vmatpush1.msra.mxu0 0.0
        %5746 = vmatprep.subr.mxu0 0.0
        %5747 = vmatpush1.msra.mxu0 0.0
        %5748 = vmatprep.subr.mxu0 0.0
        %5749 = vmatpush1.msra.mxu0 0.0
        %5750 = vmatprep.subr.mxu0 0.0
        %5751 = vmatpush1.msra.mxu0 0.0
        %5752 = vmatprep.subr.mxu0 0.0
        %5753 = vmatpush1.msra.mxu0 0.0
        %5754 = vmatprep.subr.mxu0 0.0
        %5755 = vmatpush1.msra.mxu0 0.0
        %5756 = vmatprep.mubr.f32.mxu0 %v5690
        %5757 = vmatmul.mubr.f32.gmra.mrb[0].mxu0 %v5666
        %v5758 = vpop.f32.mrb[0].mxu0
        %v5759 = vadd.f32 0.0, %v5758
        %v5760 = vpop.f32.mrb[0].mxu0
        %5761 = vdwg.mxu0
        %v5762 = vadd.f32 %v5661, %v5759
        %v5763 = vadd.f32 %v5443, %v5462
        %v5764 = vadd.f32 %v5444, %v5466
        %v5765 = vtanh.pop %v5763
        %v5766 = vtanh.pop %v5764
        %s5767 = scalar_lea.vmem %s5, 480
        %v5768 = vld [vmem:[%s5767] sm:$0xff]
        %v5769 = vld [vmem:[%s5767 + $0x8] sm:$0xff]
        %v5770 = vld [vmem:[%s5767 + $0x10] sm:$0xff]
        %v5771 = vld [vmem:[%s5767 + $0x18] sm:$0xff]
        %v5772 = vld [vmem:[%s5767 + $0x20] sm:$0xff]
        %v5773 = vld [vmem:[%s5767 + $0x28] sm:$0xff]
        %v5774 = vld [vmem:[%s5767 + $0x30] sm:$0xff]
        %v5775 = vld [vmem:[%s5767 + $0x38] sm:$0xff]
        %v5776 = vld [vmem:[%s5767 + $0x40] sm:$0xff]
        %v5777 = vld [vmem:[%s5767 + $0x48] sm:$0xff]
        %v5778 = vld [vmem:[%s5767 + $0x50] sm:$0xff]
        %v5779 = vld [vmem:[%s5767 + $0x58] sm:$0xff]
        %v5780 = vld [vmem:[%s5767 + $0x60] sm:$0xff]
        %v5781 = vld [vmem:[%s5767 + $0x68] sm:$0xff]
        %v5782 = vld [vmem:[%s5767 + $0x70] sm:$0xff]
        %v5783 = vld [vmem:[%s5767 + $0x78] sm:$0xff]
        %v5784 = vld [vmem:[%s5767 + $0x80] sm:$0xff]
        %v5785 = vld [vmem:[%s5767 + $0x88] sm:$0xff]
        %v5786 = vld [vmem:[%s5767 + $0x90] sm:$0xff]
        %v5787 = vld [vmem:[%s5767 + $0x98] sm:$0xff]
        %v5789 = vsel %vm433, %v5766, 0
        %5791 = vmatprep.subr.mxu0 0.0
        %5792 = vmatpush1.msra.mxu0 %v5768
        %5793 = vmatprep.subr.mxu0 0.0
        %5794 = vmatpush1.msra.mxu0 %v5769
        %5795 = vmatprep.subr.mxu0 0.0
        %5796 = vmatpush1.msra.mxu0 %v5770
        %5797 = vmatprep.subr.mxu0 0.0
        %5798 = vmatpush1.msra.mxu0 %v5771
        %5799 = vmatprep.subr.mxu0 0.0
        %5800 = vmatpush1.msra.mxu0 %v5772
        %5801 = vmatprep.subr.mxu0 0.0
        %5802 = vmatpush1.msra.mxu0 %v5773
        %5803 = vmatprep.subr.mxu0 0.0
        %5804 = vmatpush1.msra.mxu0 %v5774
        %5805 = vmatprep.subr.mxu0 0.0
        %5806 = vmatpush1.msra.mxu0 %v5775
        %5807 = vmatprep.subr.mxu0 0.0
        %5808 = vmatpush1.msra.mxu0 %v5776
        %5809 = vmatprep.subr.mxu0 0.0
        %5810 = vmatpush1.msra.mxu0 %v5777
        %5811 = vmatprep.subr.mxu0 0.0
        %5812 = vmatpush1.msra.mxu0 %v5778
        %5813 = vmatprep.subr.mxu0 0.0
        %5814 = vmatpush1.msra.mxu0 %v5779
        %5815 = vmatprep.subr.mxu0 0.0
        %5816 = vmatpush1.msra.mxu0 %v5780
        %5817 = vmatprep.subr.mxu0 0.0
        %5818 = vmatpush1.msra.mxu0 %v5781
        %5819 = vmatprep.subr.mxu0 0.0
        %5820 = vmatpush1.msra.mxu0 %v5782
        %5821 = vmatprep.subr.mxu0 0.0
        %5822 = vmatpush1.msra.mxu0 %v5783
        %5823 = vmatprep.subr.mxu0 0.0
        %5824 = vmatpush1.msra.mxu0 %v5784
        %5825 = vmatprep.subr.mxu0 0.0
        %5826 = vmatpush1.msra.mxu0 %v5785
        %5827 = vmatprep.subr.mxu0 0.0
        %5828 = vmatpush1.msra.mxu0 %v5786
        %5829 = vmatprep.subr.mxu0 0.0
        %5830 = vmatpush1.msra.mxu0 %v5787
        %5831 = vmatprep.subr.mxu0 0.0
        %5832 = vmatpush1.msra.mxu0 0.0
        %5833 = vmatprep.subr.mxu0 0.0
        %5834 = vmatpush1.msra.mxu0 0.0
        %5835 = vmatprep.subr.mxu0 0.0
        %5836 = vmatpush1.msra.mxu0 0.0
        %5837 = vmatprep.subr.mxu0 0.0
        %5838 = vmatpush1.msra.mxu0 0.0
        %5839 = vmatprep.subr.mxu0 0.0
        %5840 = vmatpush1.msra.mxu0 0.0
        %5841 = vmatprep.subr.mxu0 0.0
        %5842 = vmatpush1.msra.mxu0 0.0
        %5843 = vmatprep.subr.mxu0 0.0
        %5844 = vmatpush1.msra.mxu0 0.0
        %5845 = vmatprep.subr.mxu0 0.0
        %5846 = vmatpush1.msra.mxu0 0.0
        %5847 = vmatprep.subr.mxu0 0.0
        %5848 = vmatpush1.msra.mxu0 0.0
        %5849 = vmatprep.subr.mxu0 0.0
        %5850 = vmatpush1.msra.mxu0 0.0
        %5851 = vmatprep.subr.mxu0 0.0
        %5852 = vmatpush1.msra.mxu0 0.0
        %5853 = vmatprep.subr.mxu0 0.0
        %5854 = vmatpush1.msra.mxu0 0.0
        %5855 = vmatprep.mubr.f32.mxu0 %v5789
        %5856 = vmatmul.mubr.f32.gmra.mrb[0].mxu0 %v5765
        %v5857 = vpop.f32.mrb[0].mxu0
        %v5858 = vadd.f32 0.0, %v5857
        %v5859 = vpop.f32.mrb[0].mxu0
        %5860 = vdwg.mxu0
        %v5861 = vadd.f32 %v5762, %v5858
        %v5862 = vadd.f32 %v5445, %v5462
        %v5863 = vadd.f32 %v5446, %v5466
        %v5864 = vtanh.pop %v5862
        %v5865 = vtanh.pop %v5863
        %s5866 = scalar_lea.vmem %s5, 640
        %v5867 = vld [vmem:[%s5866] sm:$0xff]
        %v5868 = vld [vmem:[%s5866 + $0x8] sm:$0xff]
        %v5869 = vld [vmem:[%s5866 + $0x10] sm:$0xff]
        %v5870 = vld [vmem:[%s5866 + $0x18] sm:$0xff]
        %v5871 = vld [vmem:[%s5866 + $0x20] sm:$0xff]
        %v5872 = vld [vmem:[%s5866 + $0x28] sm:$0xff]
        %v5873 = vld [vmem:[%s5866 + $0x30] sm:$0xff]
        %v5874 = vld [vmem:[%s5866 + $0x38] sm:$0xff]
        %v5875 = vld [vmem:[%s5866 + $0x40] sm:$0xff]
        %v5876 = vld [vmem:[%s5866 + $0x48] sm:$0xff]
        %v5877 = vld [vmem:[%s5866 + $0x50] sm:$0xff]
        %v5878 = vld [vmem:[%s5866 + $0x58] sm:$0xff]
        %v5879 = vld [vmem:[%s5866 + $0x60] sm:$0xff]
        %v5880 = vld [vmem:[%s5866 + $0x68] sm:$0xff]
        %v5881 = vld [vmem:[%s5866 + $0x70] sm:$0xff]
        %v5882 = vld [vmem:[%s5866 + $0x78] sm:$0xff]
        %v5883 = vld [vmem:[%s5866 + $0x80] sm:$0xff]
        %v5884 = vld [vmem:[%s5866 + $0x88] sm:$0xff]
        %v5885 = vld [vmem:[%s5866 + $0x90] sm:$0xff]
        %v5886 = vld [vmem:[%s5866 + $0x98] sm:$0xff]
        %v5888 = vsel %vm433, %v5865, 0
        %5890 = vmatprep.subr.mxu0 0.0
        %5891 = vmatpush1.msra.mxu0 %v5867
        %5892 = vmatprep.subr.mxu0 0.0
        %5893 = vmatpush1.msra.mxu0 %v5868
        %5894 = vmatprep.subr.mxu0 0.0
        %5895 = vmatpush1.msra.mxu0 %v5869
        %5896 = vmatprep.subr.mxu0 0.0
        %5897 = vmatpush1.msra.mxu0 %v5870
        %5898 = vmatprep.subr.mxu0 0.0
        %5899 = vmatpush1.msra.mxu0 %v5871
        %5900 = vmatprep.subr.mxu0 0.0
        %5901 = vmatpush1.msra.mxu0 %v5872
        %5902 = vmatprep.subr.mxu0 0.0
        %5903 = vmatpush1.msra.mxu0 %v5873
        %5904 = vmatprep.subr.mxu0 0.0
        %5905 = vmatpush1.msra.mxu0 %v5874
        %5906 = vmatprep.subr.mxu0 0.0
        %5907 = vmatpush1.msra.mxu0 %v5875
        %5908 = vmatprep.subr.mxu0 0.0
        %5909 = vmatpush1.msra.mxu0 %v5876
        %5910 = vmatprep.subr.mxu0 0.0
        %5911 = vmatpush1.msra.mxu0 %v5877
        %5912 = vmatprep.subr.mxu0 0.0
        %5913 = vmatpush1.msra.mxu0 %v5878
        %5914 = vmatprep.subr.mxu0 0.0
        %5915 = vmatpush1.msra.mxu0 %v5879
        %5916 = vmatprep.subr.mxu0 0.0
        %5917 = vmatpush1.msra.mxu0 %v5880
        %5918 = vmatprep.subr.mxu0 0.0
        %5919 = vmatpush1.msra.mxu0 %v5881
        %5920 = vmatprep.subr.mxu0 0.0
        %5921 = vmatpush1.msra.mxu0 %v5882
        %5922 = vmatprep.subr.mxu0 0.0
        %5923 = vmatpush1.msra.mxu0 %v5883
        %5924 = vmatprep.subr.mxu0 0.0
        %5925 = vmatpush1.msra.mxu0 %v5884
        %5926 = vmatprep.subr.mxu0 0.0
        %5927 = vmatpush1.msra.mxu0 %v5885
        %5928 = vmatprep.subr.mxu0 0.0
        %5929 = vmatpush1.msra.mxu0 %v5886
        %5930 = vmatprep.subr.mxu0 0.0
        %5931 = vmatpush1.msra.mxu0 0.0
        %5932 = vmatprep.subr.mxu0 0.0
        %5933 = vmatpush1.msra.mxu0 0.0
        %5934 = vmatprep.subr.mxu0 0.0
        %5935 = vmatpush1.msra.mxu0 0.0
        %5936 = vmatprep.subr.mxu0 0.0
        %5937 = vmatpush1.msra.mxu0 0.0
        %5938 = vmatprep.subr.mxu0 0.0
        %5939 = vmatpush1.msra.mxu0 0.0
        %5940 = vmatprep.subr.mxu0 0.0
        %5941 = vmatpush1.msra.mxu0 0.0
        %5942 = vmatprep.subr.mxu0 0.0
        %5943 = vmatpush1.msra.mxu0 0.0
        %5944 = vmatprep.subr.mxu0 0.0
        %5945 = vmatpush1.msra.mxu0 0.0
        %5946 = vmatprep.subr.mxu0 0.0
        %5947 = vmatpush1.msra.mxu0 0.0
        %5948 = vmatprep.subr.mxu0 0.0
        %5949 = vmatpush1.msra.mxu0 0.0
        %5950 = vmatprep.subr.mxu0 0.0
        %5951 = vmatpush1.msra.mxu0 0.0
        %5952 = vmatprep.subr.mxu0 0.0
        %5953 = vmatpush1.msra.mxu0 0.0
        %5954 = vmatprep.mubr.f32.mxu0 %v5888
        %5955 = vmatmul.mubr.f32.gmra.mrb[0].mxu0 %v5864
        %v5956 = vpop.f32.mrb[0].mxu0
        %v5957 = vadd.f32 0.0, %v5956
        %v5958 = vpop.f32.mrb[0].mxu0
        %5959 = vdwg.mxu0
        %v5960 = vadd.f32 %v5861, %v5957
        %v5961 = vadd.f32 %v5447, %v5462
        %v5962 = vadd.f32 %v5448, %v5466
        %v5963 = vtanh.pop %v5961
        %v5964 = vtanh.pop %v5962
        %s5965 = scalar_lea.vmem %s5, 800
        %v5966 = vld [vmem:[%s5965] sm:$0xff]
        %v5967 = vld [vmem:[%s5965 + $0x8] sm:$0xff]
        %v5968 = vld [vmem:[%s5965 + $0x10] sm:$0xff]
        %v5969 = vld [vmem:[%s5965 + $0x18] sm:$0xff]
        %v5970 = vld [vmem:[%s5965 + $0x20] sm:$0xff]
        %v5971 = vld [vmem:[%s5965 + $0x28] sm:$0xff]
        %v5972 = vld [vmem:[%s5965 + $0x30] sm:$0xff]
        %v5973 = vld [vmem:[%s5965 + $0x38] sm:$0xff]
        %v5974 = vld [vmem:[%s5965 + $0x40] sm:$0xff]
        %v5975 = vld [vmem:[%s5965 + $0x48] sm:$0xff]
        %v5976 = vld [vmem:[%s5965 + $0x50] sm:$0xff]
        %v5977 = vld [vmem:[%s5965 + $0x58] sm:$0xff]
        %v5978 = vld [vmem:[%s5965 + $0x60] sm:$0xff]
        %v5979 = vld [vmem:[%s5965 + $0x68] sm:$0xff]
        %v5980 = vld [vmem:[%s5965 + $0x70] sm:$0xff]
        %v5981 = vld [vmem:[%s5965 + $0x78] sm:$0xff]
        %v5982 = vld [vmem:[%s5965 + $0x80] sm:$0xff]
        %v5983 = vld [vmem:[%s5965 + $0x88] sm:$0xff]
        %v5984 = vld [vmem:[%s5965 + $0x90] sm:$0xff]
        %v5985 = vld [vmem:[%s5965 + $0x98] sm:$0xff]
        %v5987 = vsel %vm433, %v5964, 0
        %5989 = vmatprep.subr.mxu0 0.0
        %5990 = vmatpush1.msra.mxu0 %v5966
        %5991 = vmatprep.subr.mxu0 0.0
        %5992 = vmatpush1.msra.mxu0 %v5967
        %5993 = vmatprep.subr.mxu0 0.0
        %5994 = vmatpush1.msra.mxu0 %v5968
        %5995 = vmatprep.subr.mxu0 0.0
        %5996 = vmatpush1.msra.mxu0 %v5969
        %5997 = vmatprep.subr.mxu0 0.0
        %5998 = vmatpush1.msra.mxu0 %v5970
        %5999 = vmatprep.subr.mxu0 0.0
        %6000 = vmatpush1.msra.mxu0 %v5971
        %6001 = vmatprep.subr.mxu0 0.0
        %6002 = vmatpush1.msra.mxu0 %v5972
        %6003 = vmatprep.subr.mxu0 0.0
        %6004 = vmatpush1.msra.mxu0 %v5973
        %6005 = vmatprep.subr.mxu0 0.0
        %6006 = vmatpush1.msra.mxu0 %v5974
        %6007 = vmatprep.subr.mxu0 0.0
        %6008 = vmatpush1.msra.mxu0 %v5975
        %6009 = vmatprep.subr.mxu0 0.0
        %6010 = vmatpush1.msra.mxu0 %v5976
        %6011 = vmatprep.subr.mxu0 0.0
        %6012 = vmatpush1.msra.mxu0 %v5977
        %6013 = vmatprep.subr.mxu0 0.0
        %6014 = vmatpush1.msra.mxu0 %v5978
        %6015 = vmatprep.subr.mxu0 0.0
        %6016 = vmatpush1.msra.mxu0 %v5979
        %6017 = vmatprep.subr.mxu0 0.0
        %6018 = vmatpush1.msra.mxu0 %v5980
        %6019 = vmatprep.subr.mxu0 0.0
        %6020 = vmatpush1.msra.mxu0 %v5981
        %6021 = vmatprep.subr.mxu0 0.0
        %6022 = vmatpush1.msra.mxu0 %v5982
        %6023 = vmatprep.subr.mxu0 0.0
        %6024 = vmatpush1.msra.mxu0 %v5983
        %6025 = vmatprep.subr.mxu0 0.0
        %6026 = vmatpush1.msra.mxu0 %v5984
        %6027 = vmatprep.subr.mxu0 0.0
        %6028 = vmatpush1.msra.mxu0 %v5985
        %6029 = vmatprep.subr.mxu0 0.0
        %6030 = vmatpush1.msra.mxu0 0.0
        %6031 = vmatprep.subr.mxu0 0.0
        %6032 = vmatpush1.msra.mxu0 0.0
        %6033 = vmatprep.subr.mxu0 0.0
        %6034 = vmatpush1.msra.mxu0 0.0
        %6035 = vmatprep.subr.mxu0 0.0
        %6036 = vmatpush1.msra.mxu0 0.0
        %6037 = vmatprep.subr.mxu0 0.0
        %6038 = vmatpush1.msra.mxu0 0.0
        %6039 = vmatprep.subr.mxu0 0.0
        %6040 = vmatpush1.msra.mxu0 0.0
        %6041 = vmatprep.subr.mxu0 0.0
        %6042 = vmatpush1.msra.mxu0 0.0
        %6043 = vmatprep.subr.mxu0 0.0
        %6044 = vmatpush1.msra.mxu0 0.0
        %6045 = vmatprep.subr.mxu0 0.0
        %6046 = vmatpush1.msra.mxu0 0.0
        %6047 = vmatprep.subr.mxu0 0.0
        %6048 = vmatpush1.msra.mxu0 0.0
        %6049 = vmatprep.subr.mxu0 0.0
        %6050 = vmatpush1.msra.mxu0 0.0
        %6051 = vmatprep.subr.mxu0 0.0
        %6052 = vmatpush1.msra.mxu0 0.0
        %6053 = vmatprep.mubr.f32.mxu0 %v5987
        %6054 = vmatmul.mubr.f32.gmra.mrb[0].mxu0 %v5963
        %v6055 = vpop.f32.mrb[0].mxu0
        %v6056 = vadd.f32 0.0, %v6055
        %v6057 = vpop.f32.mrb[0].mxu0
        %6058 = vdwg.mxu0
        %v6059 = vadd.f32 %v5960, %v6056
        %v6060 = vadd.f32 %v5449, %v5462
        %v6061 = vadd.f32 %v5450, %v5466
        %v6062 = vtanh.pop %v6060
        %v6063 = vtanh.pop %v6061
        %s6064 = scalar_lea.vmem %s5, 960
        %v6065 = vld [vmem:[%s6064] sm:$0xff]
        %v6066 = vld [vmem:[%s6064 + $0x8] sm:$0xff]
        %v6067 = vld [vmem:[%s6064 + $0x10] sm:$0xff]
        %v6068 = vld [vmem:[%s6064 + $0x18] sm:$0xff]
        %v6069 = vld [vmem:[%s6064 + $0x20] sm:$0xff]
        %v6070 = vld [vmem:[%s6064 + $0x28] sm:$0xff]
        %v6071 = vld [vmem:[%s6064 + $0x30] sm:$0xff]
        %v6072 = vld [vmem:[%s6064 + $0x38] sm:$0xff]
        %v6073 = vld [vmem:[%s6064 + $0x40] sm:$0xff]
        %v6074 = vld [vmem:[%s6064 + $0x48] sm:$0xff]
        %v6075 = vld [vmem:[%s6064 + $0x50] sm:$0xff]
        %v6076 = vld [vmem:[%s6064 + $0x58] sm:$0xff]
        %v6077 = vld [vmem:[%s6064 + $0x60] sm:$0xff]
        %v6078 = vld [vmem:[%s6064 + $0x68] sm:$0xff]
        %v6079 = vld [vmem:[%s6064 + $0x70] sm:$0xff]
        %v6080 = vld [vmem:[%s6064 + $0x78] sm:$0xff]
        %v6081 = vld [vmem:[%s6064 + $0x80] sm:$0xff]
        %v6082 = vld [vmem:[%s6064 + $0x88] sm:$0xff]
        %v6083 = vld [vmem:[%s6064 + $0x90] sm:$0xff]
        %v6084 = vld [vmem:[%s6064 + $0x98] sm:$0xff]
        %v6086 = vsel %vm433, %v6063, 0
        %6088 = vmatprep.subr.mxu0 0.0
        %6089 = vmatpush1.msra.mxu0 %v6065
        %6090 = vmatprep.subr.mxu0 0.0
        %6091 = vmatpush1.msra.mxu0 %v6066
        %6092 = vmatprep.subr.mxu0 0.0
        %6093 = vmatpush1.msra.mxu0 %v6067
        %6094 = vmatprep.subr.mxu0 0.0
        %6095 = vmatpush1.msra.mxu0 %v6068
        %6096 = vmatprep.subr.mxu0 0.0
        %6097 = vmatpush1.msra.mxu0 %v6069
        %6098 = vmatprep.subr.mxu0 0.0
        %6099 = vmatpush1.msra.mxu0 %v6070
        %6100 = vmatprep.subr.mxu0 0.0
        %6101 = vmatpush1.msra.mxu0 %v6071
        %6102 = vmatprep.subr.mxu0 0.0
        %6103 = vmatpush1.msra.mxu0 %v6072
        %6104 = vmatprep.subr.mxu0 0.0
        %6105 = vmatpush1.msra.mxu0 %v6073
        %6106 = vmatprep.subr.mxu0 0.0
        %6107 = vmatpush1.msra.mxu0 %v6074
        %6108 = vmatprep.subr.mxu0 0.0
        %6109 = vmatpush1.msra.mxu0 %v6075
        %6110 = vmatprep.subr.mxu0 0.0
        %6111 = vmatpush1.msra.mxu0 %v6076
        %6112 = vmatprep.subr.mxu0 0.0
        %6113 = vmatpush1.msra.mxu0 %v6077
        %6114 = vmatprep.subr.mxu0 0.0
        %6115 = vmatpush1.msra.mxu0 %v6078
        %6116 = vmatprep.subr.mxu0 0.0
        %6117 = vmatpush1.msra.mxu0 %v6079
        %6118 = vmatprep.subr.mxu0 0.0
        %6119 = vmatpush1.msra.mxu0 %v6080
        %6120 = vmatprep.subr.mxu0 0.0
        %6121 = vmatpush1.msra.mxu0 %v6081
        %6122 = vmatprep.subr.mxu0 0.0
        %6123 = vmatpush1.msra.mxu0 %v6082
        %6124 = vmatprep.subr.mxu0 0.0
        %6125 = vmatpush1.msra.mxu0 %v6083
        %6126 = vmatprep.subr.mxu0 0.0
        %6127 = vmatpush1.msra.mxu0 %v6084
        %6128 = vmatprep.subr.mxu0 0.0
        %6129 = vmatpush1.msra.mxu0 0.0
        %6130 = vmatprep.subr.mxu0 0.0
        %6131 = vmatpush1.msra.mxu0 0.0
        %6132 = vmatprep.subr.mxu0 0.0
        %6133 = vmatpush1.msra.mxu0 0.0
        %6134 = vmatprep.subr.mxu0 0.0
        %6135 = vmatpush1.msra.mxu0 0.0
        %6136 = vmatprep.subr.mxu0 0.0
        %6137 = vmatpush1.msra.mxu0 0.0
        %6138 = vmatprep.subr.mxu0 0.0
        %6139 = vmatpush1.msra.mxu0 0.0
        %6140 = vmatprep.subr.mxu0 0.0
        %6141 = vmatpush1.msra.mxu0 0.0
        %6142 = vmatprep.subr.mxu0 0.0
        %6143 = vmatpush1.msra.mxu0 0.0
        %6144 = vmatprep.subr.mxu0 0.0
        %6145 = vmatpush1.msra.mxu0 0.0
        %6146 = vmatprep.subr.mxu0 0.0
        %6147 = vmatpush1.msra.mxu0 0.0
        %6148 = vmatprep.subr.mxu0 0.0
        %6149 = vmatpush1.msra.mxu0 0.0
        %6150 = vmatprep.subr.mxu0 0.0
        %6151 = vmatpush1.msra.mxu0 0.0
        %6152 = vmatprep.mubr.f32.mxu0 %v6086
        %6153 = vmatmul.mubr.f32.gmra.mrb[0].mxu0 %v6062
        %v6154 = vpop.f32.mrb[0].mxu0
        %v6155 = vadd.f32 0.0, %v6154
        %v6156 = vpop.f32.mrb[0].mxu0
        %6157 = vdwg.mxu0
        %v6158 = vadd.f32 %v6059, %v6155
        %v6159 = vadd.f32 %v5451, %v5462
        %v6160 = vadd.f32 %v5452, %v5466
        %v6161 = vtanh.pop %v6159
        %v6162 = vtanh.pop %v6160
        %s6163 = scalar_lea.vmem %s5, 1120
        %v6164 = vld [vmem:[%s6163] sm:$0xff]
        %v6165 = vld [vmem:[%s6163 + $0x8] sm:$0xff]
        %v6166 = vld [vmem:[%s6163 + $0x10] sm:$0xff]
        %v6167 = vld [vmem:[%s6163 + $0x18] sm:$0xff]
        %v6168 = vld [vmem:[%s6163 + $0x20] sm:$0xff]
        %v6169 = vld [vmem:[%s6163 + $0x28] sm:$0xff]
        %v6170 = vld [vmem:[%s6163 + $0x30] sm:$0xff]
        %v6171 = vld [vmem:[%s6163 + $0x38] sm:$0xff]
        %v6172 = vld [vmem:[%s6163 + $0x40] sm:$0xff]
        %v6173 = vld [vmem:[%s6163 + $0x48] sm:$0xff]
        %v6174 = vld [vmem:[%s6163 + $0x50] sm:$0xff]
        %v6175 = vld [vmem:[%s6163 + $0x58] sm:$0xff]
        %v6176 = vld [vmem:[%s6163 + $0x60] sm:$0xff]
        %v6177 = vld [vmem:[%s6163 + $0x68] sm:$0xff]
        %v6178 = vld [vmem:[%s6163 + $0x70] sm:$0xff]
        %v6179 = vld [vmem:[%s6163 + $0x78] sm:$0xff]
        %v6180 = vld [vmem:[%s6163 + $0x80] sm:$0xff]
        %v6181 = vld [vmem:[%s6163 + $0x88] sm:$0xff]
        %v6182 = vld [vmem:[%s6163 + $0x90] sm:$0xff]
        %v6183 = vld [vmem:[%s6163 + $0x98] sm:$0xff]
        %v6185 = vsel %vm433, %v6162, 0
        %6187 = vmatprep.subr.mxu0 0.0
        %6188 = vmatpush1.msra.mxu0 %v6164
        %6189 = vmatprep.subr.mxu0 0.0
        %6190 = vmatpush1.msra.mxu0 %v6165
        %6191 = vmatprep.subr.mxu0 0.0
        %6192 = vmatpush1.msra.mxu0 %v6166
        %6193 = vmatprep.subr.mxu0 0.0
        %6194 = vmatpush1.msra.mxu0 %v6167
        %6195 = vmatprep.subr.mxu0 0.0
        %6196 = vmatpush1.msra.mxu0 %v6168
        %6197 = vmatprep.subr.mxu0 0.0
        %6198 = vmatpush1.msra.mxu0 %v6169
        %6199 = vmatprep.subr.mxu0 0.0
        %6200 = vmatpush1.msra.mxu0 %v6170
        %6201 = vmatprep.subr.mxu0 0.0
        %6202 = vmatpush1.msra.mxu0 %v6171
        %6203 = vmatprep.subr.mxu0 0.0
        %6204 = vmatpush1.msra.mxu0 %v6172
        %6205 = vmatprep.subr.mxu0 0.0
        %6206 = vmatpush1.msra.mxu0 %v6173
        %6207 = vmatprep.subr.mxu0 0.0
        %6208 = vmatpush1.msra.mxu0 %v6174
        %6209 = vmatprep.subr.mxu0 0.0
        %6210 = vmatpush1.msra.mxu0 %v6175
        %6211 = vmatprep.subr.mxu0 0.0
        %6212 = vmatpush1.msra.mxu0 %v6176
        %6213 = vmatprep.subr.mxu0 0.0
        %6214 = vmatpush1.msra.mxu0 %v6177
        %6215 = vmatprep.subr.mxu0 0.0
        %6216 = vmatpush1.msra.mxu0 %v6178
        %6217 = vmatprep.subr.mxu0 0.0
        %6218 = vmatpush1.msra.mxu0 %v6179
        %6219 = vmatprep.subr.mxu0 0.0
        %6220 = vmatpush1.msra.mxu0 %v6180
        %6221 = vmatprep.subr.mxu0 0.0
        %6222 = vmatpush1.msra.mxu0 %v6181
        %6223 = vmatprep.subr.mxu0 0.0
        %6224 = vmatpush1.msra.mxu0 %v6182
        %6225 = vmatprep.subr.mxu0 0.0
        %6226 = vmatpush1.msra.mxu0 %v6183
        %6227 = vmatprep.subr.mxu0 0.0
        %6228 = vmatpush1.msra.mxu0 0.0
        %6229 = vmatprep.subr.mxu0 0.0
        %6230 = vmatpush1.msra.mxu0 0.0
        %6231 = vmatprep.subr.mxu0 0.0
        %6232 = vmatpush1.msra.mxu0 0.0
        %6233 = vmatprep.subr.mxu0 0.0
        %6234 = vmatpush1.msra.mxu0 0.0
        %6235 = vmatprep.subr.mxu0 0.0
        %6236 = vmatpush1.msra.mxu0 0.0
        %6237 = vmatprep.subr.mxu0 0.0
        %6238 = vmatpush1.msra.mxu0 0.0
        %6239 = vmatprep.subr.mxu0 0.0
        %6240 = vmatpush1.msra.mxu0 0.0
        %6241 = vmatprep.subr.mxu0 0.0
        %6242 = vmatpush1.msra.mxu0 0.0
        %6243 = vmatprep.subr.mxu0 0.0
        %6244 = vmatpush1.msra.mxu0 0.0
        %6245 = vmatprep.subr.mxu0 0.0
        %6246 = vmatpush1.msra.mxu0 0.0
        %6247 = vmatprep.subr.mxu0 0.0
        %6248 = vmatpush1.msra.mxu0 0.0
        %6249 = vmatprep.subr.mxu0 0.0
        %6250 = vmatpush1.msra.mxu0 0.0
        %6251 = vmatprep.mubr.f32.mxu0 %v6185
        %6252 = vmatmul.mubr.f32.gmra.mrb[0].mxu0 %v6161
        %v6253 = vpop.f32.mrb[0].mxu0
        %v6254 = vadd.f32 0.0, %v6253
        %v6255 = vpop.f32.mrb[0].mxu0
        %6256 = vdwg.mxu0
        %v6257 = vadd.f32 %v6158, %v6254
        %v6258 = vadd.f32 %v5453, %v5462
        %v6259 = vadd.f32 %v5454, %v5466
        %v6260 = vtanh.pop %v6258
        %v6261 = vtanh.pop %v6259
        %s6262 = scalar_lea.vmem %s5, 1280
        %v6263 = vld [vmem:[%s6262] sm:$0xff]
        %v6264 = vld [vmem:[%s6262 + $0x8] sm:$0xff]
        %v6265 = vld [vmem:[%s6262 + $0x10] sm:$0xff]
        %v6266 = vld [vmem:[%s6262 + $0x18] sm:$0xff]
        %v6267 = vld [vmem:[%s6262 + $0x20] sm:$0xff]
        %v6268 = vld [vmem:[%s6262 + $0x28] sm:$0xff]
        %v6269 = vld [vmem:[%s6262 + $0x30] sm:$0xff]
        %v6270 = vld [vmem:[%s6262 + $0x38] sm:$0xff]
        %v6271 = vld [vmem:[%s6262 + $0x40] sm:$0xff]
        %v6272 = vld [vmem:[%s6262 + $0x48] sm:$0xff]
        %v6273 = vld [vmem:[%s6262 + $0x50] sm:$0xff]
        %v6274 = vld [vmem:[%s6262 + $0x58] sm:$0xff]
        %v6275 = vld [vmem:[%s6262 + $0x60] sm:$0xff]
        %v6276 = vld [vmem:[%s6262 + $0x68] sm:$0xff]
        %v6277 = vld [vmem:[%s6262 + $0x70] sm:$0xff]
        %v6278 = vld [vmem:[%s6262 + $0x78] sm:$0xff]
        %v6279 = vld [vmem:[%s6262 + $0x80] sm:$0xff]
        %v6280 = vld [vmem:[%s6262 + $0x88] sm:$0xff]
        %v6281 = vld [vmem:[%s6262 + $0x90] sm:$0xff]
        %v6282 = vld [vmem:[%s6262 + $0x98] sm:$0xff]
        %v6284 = vsel %vm433, %v6261, 0
        %6286 = vmatprep.subr.mxu0 0.0
        %6287 = vmatpush1.msra.mxu0 %v6263
        %6288 = vmatprep.subr.mxu0 0.0
        %6289 = vmatpush1.msra.mxu0 %v6264
        %6290 = vmatprep.subr.mxu0 0.0
        %6291 = vmatpush1.msra.mxu0 %v6265
        %6292 = vmatprep.subr.mxu0 0.0
        %6293 = vmatpush1.msra.mxu0 %v6266
        %6294 = vmatprep.subr.mxu0 0.0
        %6295 = vmatpush1.msra.mxu0 %v6267
        %6296 = vmatprep.subr.mxu0 0.0
        %6297 = vmatpush1.msra.mxu0 %v6268
        %6298 = vmatprep.subr.mxu0 0.0
        %6299 = vmatpush1.msra.mxu0 %v6269
        %6300 = vmatprep.subr.mxu0 0.0
        %6301 = vmatpush1.msra.mxu0 %v6270
        %6302 = vmatprep.subr.mxu0 0.0
        %6303 = vmatpush1.msra.mxu0 %v6271
        %6304 = vmatprep.subr.mxu0 0.0
        %6305 = vmatpush1.msra.mxu0 %v6272
        %6306 = vmatprep.subr.mxu0 0.0
        %6307 = vmatpush1.msra.mxu0 %v6273
        %6308 = vmatprep.subr.mxu0 0.0
        %6309 = vmatpush1.msra.mxu0 %v6274
        %6310 = vmatprep.subr.mxu0 0.0
        %6311 = vmatpush1.msra.mxu0 %v6275
        %6312 = vmatprep.subr.mxu0 0.0
        %6313 = vmatpush1.msra.mxu0 %v6276
        %6314 = vmatprep.subr.mxu0 0.0
        %6315 = vmatpush1.msra.mxu0 %v6277
        %6316 = vmatprep.subr.mxu0 0.0
        %6317 = vmatpush1.msra.mxu0 %v6278
        %6318 = vmatprep.subr.mxu0 0.0
        %6319 = vmatpush1.msra.mxu0 %v6279
        %6320 = vmatprep.subr.mxu0 0.0
        %6321 = vmatpush1.msra.mxu0 %v6280
        %6322 = vmatprep.subr.mxu0 0.0
        %6323 = vmatpush1.msra.mxu0 %v6281
        %6324 = vmatprep.subr.mxu0 0.0
        %6325 = vmatpush1.msra.mxu0 %v6282
        %6326 = vmatprep.subr.mxu0 0.0
        %6327 = vmatpush1.msra.mxu0 0.0
        %6328 = vmatprep.subr.mxu0 0.0
        %6329 = vmatpush1.msra.mxu0 0.0
        %6330 = vmatprep.subr.mxu0 0.0
        %6331 = vmatpush1.msra.mxu0 0.0
        %6332 = vmatprep.subr.mxu0 0.0
        %6333 = vmatpush1.msra.mxu0 0.0
        %6334 = vmatprep.subr.mxu0 0.0
        %6335 = vmatpush1.msra.mxu0 0.0
        %6336 = vmatprep.subr.mxu0 0.0
        %6337 = vmatpush1.msra.mxu0 0.0
        %6338 = vmatprep.subr.mxu0 0.0
        %6339 = vmatpush1.msra.mxu0 0.0
        %6340 = vmatprep.subr.mxu0 0.0
        %6341 = vmatpush1.msra.mxu0 0.0
        %6342 = vmatprep.subr.mxu0 0.0
        %6343 = vmatpush1.msra.mxu0 0.0
        %6344 = vmatprep.subr.mxu0 0.0
        %6345 = vmatpush1.msra.mxu0 0.0
        %6346 = vmatprep.subr.mxu0 0.0
        %6347 = vmatpush1.msra.mxu0 0.0
        %6348 = vmatprep.subr.mxu0 0.0
        %6349 = vmatpush1.msra.mxu0 0.0
        %6350 = vmatprep.mubr.f32.mxu0 %v6284
        %6351 = vmatmul.mubr.f32.gmra.mrb[0].mxu0 %v6260
        %v6352 = vpop.f32.mrb[0].mxu0
        %v6353 = vadd.f32 0.0, %v6352
        %v6354 = vpop.f32.mrb[0].mxu0
        %6355 = vdwg.mxu0
        %v6356 = vadd.f32 %v6257, %v6353
        %v6357 = vadd.f32 %v5455, %v5462
        %v6358 = vadd.f32 %v5456, %v5466
        %v6359 = vtanh.pop %v6357
        %v6360 = vtanh.pop %v6358
        %s6361 = scalar_lea.vmem %s5, 1440
        %v6362 = vld [vmem:[%s6361] sm:$0xff]
        %v6363 = vld [vmem:[%s6361 + $0x8] sm:$0xff]
        %v6364 = vld [vmem:[%s6361 + $0x10] sm:$0xff]
        %v6365 = vld [vmem:[%s6361 + $0x18] sm:$0xff]
        %v6366 = vld [vmem:[%s6361 + $0x20] sm:$0xff]
        %v6367 = vld [vmem:[%s6361 + $0x28] sm:$0xff]
        %v6368 = vld [vmem:[%s6361 + $0x30] sm:$0xff]
        %v6369 = vld [vmem:[%s6361 + $0x38] sm:$0xff]
        %v6370 = vld [vmem:[%s6361 + $0x40] sm:$0xff]
        %v6371 = vld [vmem:[%s6361 + $0x48] sm:$0xff]
        %v6372 = vld [vmem:[%s6361 + $0x50] sm:$0xff]
        %v6373 = vld [vmem:[%s6361 + $0x58] sm:$0xff]
        %v6374 = vld [vmem:[%s6361 + $0x60] sm:$0xff]
        %v6375 = vld [vmem:[%s6361 + $0x68] sm:$0xff]
        %v6376 = vld [vmem:[%s6361 + $0x70] sm:$0xff]
        %v6377 = vld [vmem:[%s6361 + $0x78] sm:$0xff]
        %v6378 = vld [vmem:[%s6361 + $0x80] sm:$0xff]
        %v6379 = vld [vmem:[%s6361 + $0x88] sm:$0xff]
        %v6380 = vld [vmem:[%s6361 + $0x90] sm:$0xff]
        %v6381 = vld [vmem:[%s6361 + $0x98] sm:$0xff]
        %v6383 = vsel %vm433, %v6360, 0
        %6385 = vmatprep.subr.mxu0 0.0
        %6386 = vmatpush1.msra.mxu0 %v6362
        %6387 = vmatprep.subr.mxu0 0.0
        %6388 = vmatpush1.msra.mxu0 %v6363
        %6389 = vmatprep.subr.mxu0 0.0
        %6390 = vmatpush1.msra.mxu0 %v6364
        %6391 = vmatprep.subr.mxu0 0.0
        %6392 = vmatpush1.msra.mxu0 %v6365
        %6393 = vmatprep.subr.mxu0 0.0
        %6394 = vmatpush1.msra.mxu0 %v6366
        %6395 = vmatprep.subr.mxu0 0.0
        %6396 = vmatpush1.msra.mxu0 %v6367
        %6397 = vmatprep.subr.mxu0 0.0
        %6398 = vmatpush1.msra.mxu0 %v6368
        %6399 = vmatprep.subr.mxu0 0.0
        %6400 = vmatpush1.msra.mxu0 %v6369
        %6401 = vmatprep.subr.mxu0 0.0
        %6402 = vmatpush1.msra.mxu0 %v6370
        %6403 = vmatprep.subr.mxu0 0.0
        %6404 = vmatpush1.msra.mxu0 %v6371
        %6405 = vmatprep.subr.mxu0 0.0
        %6406 = vmatpush1.msra.mxu0 %v6372
        %6407 = vmatprep.subr.mxu0 0.0
        %6408 = vmatpush1.msra.mxu0 %v6373
        %6409 = vmatprep.subr.mxu0 0.0
        %6410 = vmatpush1.msra.mxu0 %v6374
        %6411 = vmatprep.subr.mxu0 0.0
        %6412 = vmatpush1.msra.mxu0 %v6375
        %6413 = vmatprep.subr.mxu0 0.0
        %6414 = vmatpush1.msra.mxu0 %v6376
        %6415 = vmatprep.subr.mxu0 0.0
        %6416 = vmatpush1.msra.mxu0 %v6377
        %6417 = vmatprep.subr.mxu0 0.0
        %6418 = vmatpush1.msra.mxu0 %v6378
        %6419 = vmatprep.subr.mxu0 0.0
        %6420 = vmatpush1.msra.mxu0 %v6379
        %6421 = vmatprep.subr.mxu0 0.0
        %6422 = vmatpush1.msra.mxu0 %v6380
        %6423 = vmatprep.subr.mxu0 0.0
        %6424 = vmatpush1.msra.mxu0 %v6381
        %6425 = vmatprep.subr.mxu0 0.0
        %6426 = vmatpush1.msra.mxu0 0.0
        %6427 = vmatprep.subr.mxu0 0.0
        %6428 = vmatpush1.msra.mxu0 0.0
        %6429 = vmatprep.subr.mxu0 0.0
        %6430 = vmatpush1.msra.mxu0 0.0
        %6431 = vmatprep.subr.mxu0 0.0
        %6432 = vmatpush1.msra.mxu0 0.0
        %6433 = vmatprep.subr.mxu0 0.0
        %6434 = vmatpush1.msra.mxu0 0.0
        %6435 = vmatprep.subr.mxu0 0.0
        %6436 = vmatpush1.msra.mxu0 0.0
        %6437 = vmatprep.subr.mxu0 0.0
        %6438 = vmatpush1.msra.mxu0 0.0
        %6439 = vmatprep.subr.mxu0 0.0
        %6440 = vmatpush1.msra.mxu0 0.0
        %6441 = vmatprep.subr.mxu0 0.0
        %6442 = vmatpush1.msra.mxu0 0.0
        %6443 = vmatprep.subr.mxu0 0.0
        %6444 = vmatpush1.msra.mxu0 0.0
        %6445 = vmatprep.subr.mxu0 0.0
        %6446 = vmatpush1.msra.mxu0 0.0
        %6447 = vmatprep.subr.mxu0 0.0
        %6448 = vmatpush1.msra.mxu0 0.0
        %6449 = vmatprep.mubr.f32.mxu0 %v6383
        %6450 = vmatmul.mubr.f32.gmra.mrb[0].mxu0 %v6359
        %v6451 = vpop.f32.mrb[0].mxu0
        %v6452 = vadd.f32 0.0, %v6451
        %v6453 = vpop.f32.mrb[0].mxu0
        %6454 = vdwg.mxu0
        %v6455 = vadd.f32 %v6356, %v6452
        %v6456 = vld [vmem:[%s6] sm:$0x1]
        %v6458 = vlaneseq
        %v6459 = vshrl.u32 %v6458, 7
        %v6460 = vsub.s32 0, %v6459
        %v6461 = vrot.slane %v6456, %v6460
        %v6463 = vadd.f32 %v6455, %v6461
        %v6464 = vtanh.pop %v6463
        %v6465 = vld [vmem:[%s7] sm:$0xff]
        %v6466 = vld [vmem:[%s7 + $0x8] sm:$0xff]
        %v6467 = vld [vmem:[%s7 + $0x10] sm:$0xff]
        %v6468 = vld [vmem:[%s7 + $0x18] sm:$0xff]
        %v6469 = vld [vmem:[%s7 + $0x20] sm:$0xff]
        %v6470 = vld [vmem:[%s7 + $0x28] sm:$0xff]
        %v6471 = vld [vmem:[%s7 + $0x30] sm:$0xff]
        %v6472 = vld [vmem:[%s7 + $0x38] sm:$0xff]
        %v6473 = vld [vmem:[%s7 + $0x40] sm:$0xff]
        %v6474 = vld [vmem:[%s7 + $0x48] sm:$0xff]
        %v6475 = vld [vmem:[%s7 + $0x50] sm:$0xff]
        %v6476 = vld [vmem:[%s7 + $0x58] sm:$0xff]
        %v6477 = vld [vmem:[%s7 + $0x60] sm:$0xff]
        %v6478 = vld [vmem:[%s7 + $0x68] sm:$0xff]
        %v6479 = vld [vmem:[%s7 + $0x70] sm:$0xff]
        %v6480 = vld [vmem:[%s7 + $0x78] sm:$0xff]
        %v6481 = vld [vmem:[%s8] sm:$0x1]
        %v6483 = vlaneseq
        %v6484 = vshrl.u32 %v6483, 7
        %v6485 = vsub.s32 0, %v6484
        %v6486 = vrot.slane %v6481, %v6485
        %6488 = vmatprep.subr.mxu0 0.0
        %6489 = vmatpush1.msra.mxu0 %v6465
        %6490 = vmatprep.subr.mxu0 0.0
        %6491 = vmatpush1.msra.mxu0 %v6466
        %6492 = vmatprep.subr.mxu0 0.0
        %6493 = vmatpush1.msra.mxu0 %v6467
        %6494 = vmatprep.subr.mxu0 0.0
        %6495 = vmatpush1.msra.mxu0 %v6468
        %6496 = vmatprep.subr.mxu0 0.0
        %6497 = vmatpush1.msra.mxu0 %v6469
        %6498 = vmatprep.subr.mxu0 0.0
        %6499 = vmatpush1.msra.mxu0 %v6470
        %6500 = vmatprep.subr.mxu0 0.0
        %6501 = vmatpush1.msra.mxu0 %v6471
        %6502 = vmatprep.subr.mxu0 0.0
        %6503 = vmatpush1.msra.mxu0 %v6472
        %6504 = vmatprep.subr.mxu0 0.0
        %6505 = vmatpush1.msra.mxu0 %v6473
        %6506 = vmatprep.subr.mxu0 0.0
        %6507 = vmatpush1.msra.mxu0 %v6474
        %6508 = vmatprep.subr.mxu0 0.0
        %6509 = vmatpush1.msra.mxu0 %v6475
        %6510 = vmatprep.subr.mxu0 0.0
        %6511 = vmatpush1.msra.mxu0 %v6476
        %6512 = vmatprep.subr.mxu0 0.0
        %6513 = vmatpush1.msra.mxu0 %v6477
        %6514 = vmatprep.subr.mxu0 0.0
        %6515 = vmatpush1.msra.mxu0 %v6478
        %6516 = vmatprep.subr.mxu0 0.0
        %6517 = vmatpush1.msra.mxu0 %v6479
        %6518 = vmatprep.subr.mxu0 0.0
        %6519 = vmatpush1.msra.mxu0 %v6480
        %6520 = vmatprep.subr.mxu0 0.0
        %6521 = vmatpush1.msra.mxu0 0.0
        %6522 = vmatprep.subr.mxu0 0.0
        %6523 = vmatpush1.msra.mxu0 0.0
        %6524 = vmatprep.subr.mxu0 0.0
        %6525 = vmatpush1.msra.mxu0 0.0
        %6526 = vmatprep.subr.mxu0 0.0
        %6527 = vmatpush1.msra.mxu0 0.0
        %6528 = vmatprep.subr.mxu0 0.0
        %6529 = vmatpush1.msra.mxu0 0.0
        %6530 = vmatprep.subr.mxu0 0.0
        %6531 = vmatpush1.msra.mxu0 0.0
        %6532 = vmatprep.subr.mxu0 0.0
        %6533 = vmatpush1.msra.mxu0 0.0
        %6534 = vmatprep.subr.mxu0 0.0
        %6535 = vmatpush1.msra.mxu0 0.0
        %6536 = vmatprep.subr.mxu0 0.0
        %6537 = vmatpush1.msra.mxu0 0.0
        %6538 = vmatprep.subr.mxu0 0.0
        %6539 = vmatpush1.msra.mxu0 0.0
        %6540 = vmatprep.subr.mxu0 0.0
        %6541 = vmatpush1.msra.mxu0 0.0
        %6542 = vmatprep.subr.mxu0 0.0
        %6543 = vmatpush1.msra.mxu0 0.0
        %6544 = vmatprep.subr.mxu0 0.0
        %6545 = vmatpush1.msra.mxu0 0.0
        %6546 = vmatprep.subr.mxu0 0.0
        %6547 = vmatpush1.msra.mxu0 0.0
        %6548 = vmatprep.subr.mxu0 0.0
        %6549 = vmatpush1.msra.mxu0 0.0
        %6550 = vmatprep.subr.mxu0 0.0
        %6551 = vmatpush1.msra.mxu0 0.0
        %6552 = vmatprep.mubr.f32.mxu0 0.0
        %6553 = vmatmul.mubr.f32.gmra.mrb[0].mxu0 %v6464
        %v6554 = vpop.f32.mrb[0].mxu0
        %v6555 = vadd.f32 %v6486, %v6554
        %v6556 = vpop.f32.mrb[0].mxu0
        %6557 = vdwg.mxu0
        %v6558 = vtanh.pop %v6555
        %v6559 = vld [vmem:[%s9] sm:$0xff]
        %v6560 = vld [vmem:[%s9 + $0x8] sm:$0xff]
        %v6561 = vld [vmem:[%s9 + $0x10] sm:$0xff]
        %v6562 = vld [vmem:[%s9 + $0x18] sm:$0xff]
        %v6563 = vld [vmem:[%s9 + $0x20] sm:$0xff]
        %v6564 = vld [vmem:[%s9 + $0x28] sm:$0xff]
        %v6565 = vld [vmem:[%s9 + $0x30] sm:$0xff]
        %v6566 = vld [vmem:[%s9 + $0x38] sm:$0xff]
        %v6567 = vld [vmem:[%s9 + $0x40] sm:$0xff]
        %v6568 = vld [vmem:[%s9 + $0x48] sm:$0xff]
        %v6569 = vld [vmem:[%s9 + $0x50] sm:$0xff]
        %v6570 = vld [vmem:[%s9 + $0x58] sm:$0xff]
        %v6571 = vld [vmem:[%s9 + $0x60] sm:$0xff]
        %v6572 = vld [vmem:[%s9 + $0x68] sm:$0xff]
        %v6573 = vld [vmem:[%s9 + $0x70] sm:$0xff]
        %v6574 = vld [vmem:[%s9 + $0x78] sm:$0xff]
        %v6575 = vld [vmem:[%s10] sm:$0x1]
        %v6577 = vlaneseq
        %v6578 = vshrl.u32 %v6577, 7
        %v6579 = vsub.s32 0, %v6578
        %v6580 = vrot.slane %v6575, %v6579
        %6582 = vmatprep.subr.mxu0 0.0
        %6583 = vmatpush1.msra.mxu0 %v6559
        %6584 = vmatprep.subr.mxu0 0.0
        %6585 = vmatpush1.msra.mxu0 %v6560
        %6586 = vmatprep.subr.mxu0 0.0
        %6587 = vmatpush1.msra.mxu0 %v6561
        %6588 = vmatprep.subr.mxu0 0.0
        %6589 = vmatpush1.msra.mxu0 %v6562
        %6590 = vmatprep.subr.mxu0 0.0
        %6591 = vmatpush1.msra.mxu0 %v6563
        %6592 = vmatprep.subr.mxu0 0.0
        %6593 = vmatpush1.msra.mxu0 %v6564
        %6594 = vmatprep.subr.mxu0 0.0
        %6595 = vmatpush1.msra.mxu0 %v6565
        %6596 = vmatprep.subr.mxu0 0.0
        %6597 = vmatpush1.msra.mxu0 %v6566
        %6598 = vmatprep.subr.mxu0 0.0
        %6599 = vmatpush1.msra.mxu0 %v6567
        %6600 = vmatprep.subr.mxu0 0.0
        %6601 = vmatpush1.msra.mxu0 %v6568
        %6602 = vmatprep.subr.mxu0 0.0
        %6603 = vmatpush1.msra.mxu0 %v6569
        %6604 = vmatprep.subr.mxu0 0.0
        %6605 = vmatpush1.msra.mxu0 %v6570
        %6606 = vmatprep.subr.mxu0 0.0
        %6607 = vmatpush1.msra.mxu0 %v6571
        %6608 = vmatprep.subr.mxu0 0.0
        %6609 = vmatpush1.msra.mxu0 %v6572
        %6610 = vmatprep.subr.mxu0 0.0
        %6611 = vmatpush1.msra.mxu0 %v6573
        %6612 = vmatprep.subr.mxu0 0.0
        %6613 = vmatpush1.msra.mxu0 %v6574
        %6614 = vmatprep.subr.mxu0 0.0
        %6615 = vmatpush1.msra.mxu0 0.0
        %6616 = vmatprep.subr.mxu0 0.0
        %6617 = vmatpush1.msra.mxu0 0.0
        %6618 = vmatprep.subr.mxu0 0.0
        %6619 = vmatpush1.msra.mxu0 0.0
        %6620 = vmatprep.subr.mxu0 0.0
        %6621 = vmatpush1.msra.mxu0 0.0
        %6622 = vmatprep.subr.mxu0 0.0
        %6623 = vmatpush1.msra.mxu0 0.0
        %6624 = vmatprep.subr.mxu0 0.0
        %6625 = vmatpush1.msra.mxu0 0.0
        %6626 = vmatprep.subr.mxu0 0.0
        %6627 = vmatpush1.msra.mxu0 0.0
        %6628 = vmatprep.subr.mxu0 0.0
        %6629 = vmatpush1.msra.mxu0 0.0
        %6630 = vmatprep.subr.mxu0 0.0
        %6631 = vmatpush1.msra.mxu0 0.0
        %6632 = vmatprep.subr.mxu0 0.0
        %6633 = vmatpush1.msra.mxu0 0.0
        %6634 = vmatprep.subr.mxu0 0.0
        %6635 = vmatpush1.msra.mxu0 0.0
        %6636 = vmatprep.subr.mxu0 0.0
        %6637 = vmatpush1.msra.mxu0 0.0
        %6638 = vmatprep.subr.mxu0 0.0
        %6639 = vmatpush1.msra.mxu0 0.0
        %6640 = vmatprep.subr.mxu0 0.0
        %6641 = vmatpush1.msra.mxu0 0.0
        %6642 = vmatprep.subr.mxu0 0.0
        %6643 = vmatpush1.msra.mxu0 0.0
        %6644 = vmatprep.subr.mxu0 0.0
        %6645 = vmatpush1.msra.mxu0 0.0
        %6646 = vmatprep.mubr.f32.mxu0 0.0
        %6647 = vmatmul.mubr.f32.gmra.mrb[0].mxu0 %v6558
        %v6648 = vpop.f32.mrb[0].mxu0
        %v6649 = vadd.f32 %v6580, %v6648
        %v6650 = vpop.f32.mrb[0].mxu0
        %6651 = vdwg.mxu0
        %6652 = vst [vmem:[%s380] sm:$0xff] %v6649
        %s6653 = sand.u32 %s269, 1
        %s6654 = scalar_lea.sflag [#allocation4], %s6653
        %s6655 = sand.u32 %s269, 1
        %s6656 = smul.addr %s6655, 8
        %s6657 = scalar_lea.vmem [#allocation3], %s6656
        // Predicated region
        $region65: #{lenet5_forward.1} parent=63 // pred_check
          %p6658 = pneg %p279
        $region66: #{lenet5_forward.1} parent=63 // pred_check_branch
          %6660 = sbr.rel (%p6658) target = $region68
        $region67: #{lenet5_forward.1} parent=63 // pred_region
          %s6662 = ssub.s32 128, 128
          %6663 = vsyncadd %s6654, %s6662
          %s6664 = smul.addr %s25, 128
          %s6665 = scalar_lea.hbm %s11, %s6664
          %s6667 = sshll.u32 %s6657, 4
          %s6668 = int_to_ptr.vmem [resolvable:$true] %s6667
          %6670 = dma.vmem_to_hbm [thread:$0]  %s6668, 128, %s6665, %s6654
        $region68: #{lenet5_forward.1} parent=63 // pred_fallthru
          _
      $region64: #{lenet5_forward.1} parent=5 // pred_fallthru
        _
      %p6671 = scmp.le.s32.totalorder 2, %s20
      // Predicated region
      $region69: #{lenet5_forward.1} parent=5 // pred_check
        %p6672 = pneg %p6671
      $region70: #{lenet5_forward.1} parent=5 // pred_check_branch
        %6674 = sbr.rel (%p6672) target = $region72
      $region71: #{lenet5_forward.1} parent=5 // pred_region
        %s6675 = ssub.s32 %s20, 2
        // Predicated region
        $region73: #{lenet5_forward.1} parent=71 // pred_check
          %p6676 = pneg %p285
        $region74: #{lenet5_forward.1} parent=71 // pred_check_branch
          %6678 = sbr.rel (%p6676) target = $region76
        $region75: #{lenet5_forward.1} parent=71 // pred_region
          %s6679 = sand.u32 %s270, 1
          %s6680 = scalar_lea.sflag [#allocation4], %s6679
          %s6681 = sand.u32 %s270, 1
          %s6682 = smul.addr %s6681, 8
          %s6683 = scalar_lea.vmem [#allocation3], %s6682
          %6684 = dma.done %s6680, 128
        $region76: #{lenet5_forward.1} parent=71 // pred_fallthru
          _
      $region72: #{lenet5_forward.1} parent=5 // pred_fallthru
        _
    $region6: #{lenet5_forward.1} parent=1 // loop_footer
      %s24 = sadd.s32 1, %s20
    $region7: #{lenet5_forward.1} parent=1 // loop_footer_branch
      %19 = sbr.rel target = $region3
    $region8: #{lenet5_forward.1} parent=1 // loop_exit
      _
    %6685 = vsyncpa [#allocation4], 1
    %s6686 = scalar_lea.sflag [#allocation4], 1
    %6687 = vsyncpa %s6686, 1

</llo_original>
